<compile_context>
chip_gen: v7x
topology: tpu7x:2x2x1
jax: 0.10.0
libtpu: 0.0.40
codegen_flags: <defaults>
</compile_context>

<pallas_src>
import functools
import math

import jax
import jax.numpy as jnp
from jax.experimental import pallas as pl
from jax.experimental.pallas import tpu as pltpu


_SQRT_2_OVER_PI = 0.7978845608028654


def _bf16(t):
    return t.astype(jnp.bfloat16)


def _gelu_tanh(x):
    return 0.5 * x * (1.0 + jnp.tanh(_SQRT_2_OVER_PI * (x + 0.044715 * x * x * x)))


def _layernorm(x, gamma, beta, eps=1e-5):
    mean = jnp.mean(x, axis=-1, keepdims=True)
    var = jnp.mean((x - mean) ** 2, axis=-1, keepdims=True)
    return (x - mean) * jax.lax.rsqrt(var + eps) * gamma + beta


def _softmax_last(sim, *, in_kernel):
    sim = sim - jnp.max(sim, axis=-1, keepdims=True)
    p = jnp.exp(sim)
    s = jnp.sum(p, axis=-1, keepdims=True)
    if in_kernel:
        return p * pl.reciprocal(s, approx=True)     # EUP slot, frees VPU
    return p / s


# ----------------------------------------------------------------------------
# Shared sublayer math (used both inside the Pallas kernel and by the pure-JAX
# reference, so numerics match; bf16 MXU operands, f32 accumulation/elementwise)
# ----------------------------------------------------------------------------
def _attn_block(x2, gamma, beta, wqkv, wout, bout, *, nb, nt, heads, dim_head,
                in_kernel):
    """PreNorm(Residual(Attention)) on a (nb*nt, d_model) slab.

    Attention attends within each group of `nt` consecutive rows (batch dim nb).
    """
    f32 = jnp.float32
    xn = _layernorm(x2, gamma.astype(f32), beta.astype(f32))
    qkv = jnp.dot(_bf16(xn), _bf16(wqkv), preferred_element_type=f32)
    inner = heads * dim_head
    scale = float(dim_head) ** -0.5
    q = qkv[:, :inner]
    k = qkv[:, inner:2 * inner]
    v = qkv[:, 2 * inner:]

    head_outs = []
    for h in range(heads):                        # static unroll; batched over nb
        sl = slice(h * dim_head, (h + 1) * dim_head)
        qh = _bf16(q[:, sl].reshape(nb, nt, dim_head))
        kh = _bf16(k[:, sl].reshape(nb, nt, dim_head))
        vh = _bf16(v[:, sl].reshape(nb, nt, dim_head))
        sim = jnp.einsum("bid,bjd->bij", qh, kh,
                         preferred_element_type=f32) * scale
        p = _softmax_last(sim, in_kernel=in_kernel)
        oh = jnp.einsum("bij,bjd->bid", _bf16(p), vh,
                        preferred_element_type=f32)
        head_outs.append(oh.reshape(nb * nt, dim_head))
    attn_out = jnp.concatenate(head_outs, axis=-1)            # (nb*nt, inner)

    proj = jnp.dot(_bf16(attn_out), _bf16(wout), preferred_element_type=f32)
    proj = proj + bout.astype(f32)
    # Residual connects to the *normalized* input (PreNorm wraps Residual).
    return xn + proj


def _ff_block(x2, gamma, beta, w1, b1, w2, b2, *, hidden):
    """PreNorm(Residual(GEGLU FeedForward)) on a (rows, d_model) slab."""
    f32 = jnp.float32
    xn = _layernorm(x2, gamma.astype(f32), beta.astype(f32))
    h = jnp.dot(_bf16(xn), _bf16(w1), preferred_element_type=f32) + b1.astype(f32)
    a = h[:, :hidden]
    gates = h[:, hidden:]
    glu = a * _gelu_tanh(gates)
    out = jnp.dot(_bf16(glu), _bf16(w2), preferred_element_type=f32) + b2.astype(f32)
    return xn + out


# ----------------------------------------------------------------------------
# In-kernel layout conversions for 'b n d -> 1 b (n d)' and back.
# Built only from 2-D slices + concatenates (no minor-dim-changing reshapes),
# which are guaranteed-supported Mosaic ops; tiny shapes so cost is negligible.
# ----------------------------------------------------------------------------
def _col_to_row(x_col, B, N, D):
    # (B*N, D) -> (B, N*D)   with x_row[b, n*D + d] == x_col[b*N + n, d]
    rows = []
    for b in range(B):
        rows.append(jnp.concatenate(
            [x_col[b * N + n: b * N + n + 1, :] for n in range(N)], axis=-1))
    return jnp.concatenate(rows, axis=0)


def _row_to_col(x_row, B, N, D):
    # (B, N*D) -> (B*N, D)
    pieces = []
    for b in range(B):
        for n in range(N):
            pieces.append(x_row[b:b + 1, n * D:(n + 1) * D])
    return jnp.concatenate(pieces, axis=0)


# ----------------------------------------------------------------------------
# Fused whole-network kernel: grid=(depth,), activation lives in VMEM scratch.
# ----------------------------------------------------------------------------
def _make_rowcol_kernel(*, style, B, N, D, heads, dim_head, mult):
    H1 = D * mult
    H2 = (N * D) * mult

    def kernel(*refs):
        x_ref = refs[0]
        o_ref = refs[-2]
        act_ref = refs[-1]
        w = refs[1:-2]

        layer = pl.program_id(0)

        @pl.when(layer == 0)
        def _init():
            act_ref[...] = x_ref[...].reshape(B * N, D).astype(jnp.float32)

        x_col = act_ref[...]                                   # (B*N, D) f32

        if style == "colrow":
            (a1g, a1b, a1_wqkv, a1_wout, a1_bout,
             f1g, f1b, f1_w1, f1_b1, f1_w2, f1_b2,
             a2g, a2b, a2_wqkv, a2_wout, a2_bout,
             f2g, f2b, f2_w1, f2_b1, f2_w2, f2_b2) = w

            # ---- column attention + FF (per batch element, over N tokens) ----
            x_col = _attn_block(x_col, a1g[...], a1b[...], a1_wqkv[...],
                                a1_wout[...], a1_bout[...],
                                nb=B, nt=N, heads=heads, dim_head=dim_head,
                                in_kernel=True)
            x_col = _ff_block(x_col, f1g[...], f1b[...], f1_w1[...], f1_b1[...],
                              f1_w2[...], f1_b2[...], hidden=H1)

            # ---- row attention + FF on 'b n d -> 1 b (n d)' ----
            x_row = _col_to_row(x_col, B, N, D)                # (B, N*D)
            x_row = _attn_block(x_row, a2g[...], a2b[...], a2_wqkv[...],
                                a2_wout[...], a2_bout[...],
                                nb=1, nt=B, heads=heads, dim_head=64,
                                in_kernel=True)
            x_row = _ff_block(x_row, f2g[...], f2b[...], f2_w1[...], f2_b1[...],
                              f2_w2[...], f2_b2[...], hidden=H2)
            x_col = _row_to_col(x_row, B, N, D)
        else:  # 'col' style: only row attention + FF per layer
            (a1g, a1b, a1_wqkv, a1_wout, a1_bout,
             f1g, f1b, f1_w1, f1_b1, f1_w2, f1_b2) = w
            x_row = _col_to_row(x_col, B, N, D)
            x_row = _attn_block(x_row, a1g[...], a1b[...], a1_wqkv[...],
                                a1_wout[...], a1_bout[...],
                                nb=1, nt=B, heads=heads, dim_head=64,
                                in_kernel=True)
            x_row = _ff_block(x_row, f1g[...], f1b[...], f1_w1[...], f1_b1[...],
                              f1_w2[...], f1_b2[...], hidden=H2)
            x_col = _row_to_col(x_row, B, N, D)

        act_ref[...] = x_col

        @pl.when(layer == pl.num_programs(0) - 1)
        def _finalize():
            o_ref[...] = x_col.reshape(B, N, D).astype(o_ref.dtype)

    return kernel


def rowcol_transformer_forward(x, params, *, style, heads, dim_head, mult=4):
    """Fused RowColTransformer forward. `params` is the flat tuple returned by
    init_rowcol_params (every array has a leading `depth` axis)."""
    B, N, D = x.shape
    depth = params[0].shape[0]
    kernel = _make_rowcol_kernel(style=style, B=B, N=N, D=D, heads=heads,
                                 dim_head=dim_head, mult=mult)

    x_spec = pl.BlockSpec((B, N, D), lambda l: (0, 0, 0))       # resident block
    # Per-layer weight slab: leading depth axis squeezed, indexed by the layer id
    # -> next layer's weights prefetch (double-buffer) while this layer computes.
    w_specs = [pl.BlockSpec((None,) + p.shape[1:], lambda l: (l, 0, 0))
               for p in params]

    return pl.pallas_call(
        kernel,
        out_shape=jax.ShapeDtypeStruct((B, N, D), x.dtype),
        grid=(depth,),
        in_specs=[x_spec] + w_specs,
        out_specs=pl.BlockSpec((B, N, D), lambda l: (0, 0, 0)),
        scratch_shapes=[pltpu.VMEM((B * N, D), jnp.float32)],   # carried activation
        compiler_params=pltpu.CompilerParams(dimension_semantics=("arbitrary",)),
    )(x, *params)


# ----------------------------------------------------------------------------
# Pure-JAX reference (same math / same bf16 operand casts; exact softmax divide)
# ----------------------------------------------------------------------------
def reference_forward(x, params, *, style, heads, dim_head, mult=4):
    B, N, D = x.shape
    H1 = D * mult
    H2 = (N * D) * mult
    depth = params[0].shape[0]
    xc = x.astype(jnp.float32).reshape(B * N, D)
    for l in range(depth):
        w = [p[l] for p in params]
        if style == "colrow":
            (a1g, a1b, a1_wqkv, a1_wout, a1_bout,
             f1g, f1b, f1_w1, f1_b1, f1_w2, f1_b2,
             a2g, a2b, a2_wqkv, a2_wout, a2_bout,
             f2g, f2b, f2_w1, f2_b1, f2_w2, f2_b2) = w
            xc = _attn_block(xc, a1g, a1b, a1_wqkv, a1_wout, a1_bout,
                             nb=B, nt=N, heads=heads, dim_head=dim_head,
                             in_kernel=False)
            xc = _ff_block(xc, f1g, f1b, f1_w1, f1_b1, f1_w2, f1_b2, hidden=H1)
            xr = xc.reshape(B, N * D)
            xr = _attn_block(xr, a2g, a2b, a2_wqkv, a2_wout, a2_bout,
                             nb=1, nt=B, heads=heads, dim_head=64,
                             in_kernel=False)
            xr = _ff_block(xr, f2g, f2b, f2_w1, f2_b1, f2_w2, f2_b2, hidden=H2)
            xc = xr.reshape(B * N, D)
        else:
            (a1g, a1b, a1_wqkv, a1_wout, a1_bout,
             f1g, f1b, f1_w1, f1_b1, f1_w2, f1_b2) = w
            xr = xc.reshape(B, N * D)
            xr = _attn_block(xr, a1g, a1b, a1_wqkv, a1_wout, a1_bout,
                             nb=1, nt=B, heads=heads, dim_head=64,
                             in_kernel=False)
            xr = _ff_block(xr, f1g, f1b, f1_w1, f1_b1, f1_w2, f1_b2, hidden=H2)
            xc = xr.reshape(B * N, D)
    return xc.reshape(B, N, D)


# ----------------------------------------------------------------------------
# Parameter init (PyTorch-Linear-like uniform; matmul weights stored bf16,
# LayerNorm params and biases stored f32; all arrays have a leading depth axis)
# ----------------------------------------------------------------------------
def init_rowcol_params(key, depth, dim, nfeats, heads, dim_head, *, mult=4,
                       style="colrow"):
    D, DR = dim, dim * nfeats
    inner1, inner2 = heads * dim_head, heads * 64
    H1, H2 = D * mult, DR * mult
    f32, wdt = jnp.float32, jnp.bfloat16

    def uniform(k, shape, fan_in, dtype):
        lim = 1.0 / math.sqrt(fan_in)
        return jax.random.uniform(k, shape, f32, -lim, lim).astype(dtype)

    def attn_params(k, d_model, inner):
        ks = jax.random.split(k, 5)
        return (
            1.0 + 0.1 * jax.random.normal(ks[0], (depth, 1, d_model), f32),  # LN gamma
            0.1 * jax.random.normal(ks[1], (depth, 1, d_model), f32),        # LN beta
            uniform(ks[2], (depth, d_model, 3 * inner), d_model, wdt),       # to_qkv (no bias)
            uniform(ks[3], (depth, inner, d_model), inner, wdt),             # to_out weight
            uniform(ks[4], (depth, 1, d_model), inner, f32),                 # to_out bias
        )

    def ff_params(k, d_model, hidden):
        ks = jax.random.split(k, 6)
        return (
            1.0 + 0.1 * jax.random.normal(ks[0], (depth, 1, d_model), f32),
            0.1 * jax.random.normal(ks[1], (depth, 1, d_model), f32),
            uniform(ks[2], (depth, d_model, 2 * hidden), d_model, wdt),      # W1
            uniform(ks[3], (depth, 1, 2 * hidden), d_model, f32),            # b1
            uniform(ks[4], (depth, hidden, d_model), hidden, wdt),           # W2
            uniform(ks[5], (depth, 1, d_model), hidden, f32),                # b2
        )

    k1, k2, k3, k4 = jax.random.split(key, 4)
    if style == "colrow":
        return (attn_params(k1, D, inner1) + ff_params(k2, D, H1)
                + attn_params(k3, DR, inner2) + ff_params(k4, DR, H2))
    return attn_params(k1, DR, inner2) + ff_params(k2, DR, H2)


if __name__ == "__main__":
    # Small config: batch=2, nfeats=8 tokens, dim=32, heads=8, dim_head=16,
    # depth=2, style='colrow' (row attention at dim*nfeats=256, dim_head=64).
    batch, nfeats, dim = 2, 8, 32
    heads, dim_head, depth = 8, 16, 2
    style = "colrow"

    key = jax.random.PRNGKey(0)
    kx, kp = jax.random.split(key)
    x = jax.random.normal(kx, (batch, nfeats, dim), jnp.float32)
    params = init_rowcol_params(kp, depth, dim, nfeats, heads, dim_head, style=style)

    fwd = jax.jit(functools.partial(rowcol_transformer_forward,
                                    style=style, heads=heads, dim_head=dim_head))
    out = jax.block_until_ready(fwd(x, params))

    ref = reference_forward(x, params, style=style, heads=heads, dim_head=dim_head)
    assert out.shape == (batch, nfeats, dim)
    max_err = float(jnp.max(jnp.abs(out.astype(jnp.float32) - ref)))
    # Tolerance accounts for approx-reciprocal softmax + bf16 MXU operand rounding
    # (the reference uses the same bf16 operand casts but exact division).
    assert max_err < 2e-2, f"mismatch vs reference: max abs err = {max_err}"

    print("KERNEL_OK")
</pallas_src>

<mosaic_0001>
module attributes {stable_mosaic.version = 11 : i64} {
  func.func @kernel(%arg0: i32, %arg1: memref<2x8x32xf32, #tpu.memory_space<vmem>>, %arg2: memref<1x1x32xf32, #tpu.memory_space<vmem>>, %arg3: memref<1x1x32xf32, #tpu.memory_space<vmem>>, %arg4: memref<1x32x384xbf16, #tpu.memory_space<vmem>>, %arg5: memref<1x128x32xbf16, #tpu.memory_space<vmem>>, %arg6: memref<1x1x32xf32, #tpu.memory_space<vmem>>, %arg7: memref<1x1x32xf32, #tpu.memory_space<vmem>>, %arg8: memref<1x1x32xf32, #tpu.memory_space<vmem>>, %arg9: memref<1x32x256xbf16, #tpu.memory_space<vmem>>, %arg10: memref<1x1x256xf32, #tpu.memory_space<vmem>>, %arg11: memref<1x128x32xbf16, #tpu.memory_space<vmem>>, %arg12: memref<1x1x32xf32, #tpu.memory_space<vmem>>, %arg13: memref<1x1x256xf32, #tpu.memory_space<vmem>>, %arg14: memref<1x1x256xf32, #tpu.memory_space<vmem>>, %arg15: memref<1x256x1536xbf16, #tpu.memory_space<vmem>>, %arg16: memref<1x512x256xbf16, #tpu.memory_space<vmem>>, %arg17: memref<1x1x256xf32, #tpu.memory_space<vmem>>, %arg18: memref<1x1x256xf32, #tpu.memory_space<vmem>>, %arg19: memref<1x1x256xf32, #tpu.memory_space<vmem>>, %arg20: memref<1x256x2048xbf16, #tpu.memory_space<vmem>>, %arg21: memref<1x1x2048xf32, #tpu.memory_space<vmem>>, %arg22: memref<1x1024x256xbf16, #tpu.memory_space<vmem>>, %arg23: memref<1x1x256xf32, #tpu.memory_space<vmem>>, %arg24: memref<2x8x32xf32, #tpu.memory_space<vmem>>, %arg25: memref<16x32xf32, #tpu.memory_space<vmem>>) attributes {dimension_semantics = [#tpu.dimension_semantics<arbitrary>], iteration_bounds = array<i64: 2>, scalar_prefetch = 0 : i64, scratch_operands = 1 : i64, tpu.core_type = #tpu.core_type<tc>, window_params = [{pipeline_mode = #tpu.pipeline_mode<synchronous>, transform_indices = @transform_0, window_bounds = array<i64: 2, 8, 32>}, {transform_indices = @transform_1, window_bounds = array<i64: 1, 1, 32>}, {transform_indices = @transform_2, window_bounds = array<i64: 1, 1, 32>}, {transform_indices = @transform_3, window_bounds = array<i64: 1, 32, 384>}, {transform_indices = @transform_4, window_bounds = array<i64: 1, 128, 32>}, {transform_indices = @transform_5, window_bounds = array<i64: 1, 1, 32>}, {transform_indices = @transform_6, window_bounds = array<i64: 1, 1, 32>}, {transform_indices = @transform_7, window_bounds = array<i64: 1, 1, 32>}, {transform_indices = @transform_8, window_bounds = array<i64: 1, 32, 256>}, {transform_indices = @transform_9, window_bounds = array<i64: 1, 1, 256>}, {transform_indices = @transform_10, window_bounds = array<i64: 1, 128, 32>}, {transform_indices = @transform_11, window_bounds = array<i64: 1, 1, 32>}, {transform_indices = @transform_12, window_bounds = array<i64: 1, 1, 256>}, {transform_indices = @transform_13, window_bounds = array<i64: 1, 1, 256>}, {transform_indices = @transform_14, window_bounds = array<i64: 1, 256, 1536>}, {transform_indices = @transform_15, window_bounds = array<i64: 1, 512, 256>}, {transform_indices = @transform_16, window_bounds = array<i64: 1, 1, 256>}, {transform_indices = @transform_17, window_bounds = array<i64: 1, 1, 256>}, {transform_indices = @transform_18, window_bounds = array<i64: 1, 1, 256>}, {transform_indices = @transform_19, window_bounds = array<i64: 1, 256, 2048>}, {transform_indices = @transform_20, window_bounds = array<i64: 1, 1, 2048>}, {transform_indices = @transform_21, window_bounds = array<i64: 1, 1024, 256>}, {transform_indices = @transform_22, window_bounds = array<i64: 1, 1, 256>}, {pipeline_mode = #tpu.pipeline_mode<synchronous>, transform_indices = @transform_23, window_bounds = array<i64: 2, 8, 32>}]} {
    %c0_i32 = arith.constant 0 : i32
    %0 = arith.cmpi eq, %arg0, %c0_i32 : i32
    %1 = arith.extui %0 : i1 to i32
    %c0_i32_0 = arith.constant 0 : i32
    %2 = arith.cmpi ne, %1, %c0_i32_0 : i32
    scf.if %2 {
      %c0_186 = arith.constant 0 : index
      %c0_187 = arith.constant 0 : index
      %c0_188 = arith.constant 0 : index
      %648 = vector.load %arg1[%c0_186, %c0_187, %c0_188] : memref<2x8x32xf32, #tpu.memory_space<vmem>>, vector<2x8x32xf32>
      %649 = vector.shape_cast %648 : vector<2x8x32xf32> to vector<16x32xf32>
      %c0_189 = arith.constant 0 : index
      %c0_190 = arith.constant 0 : index
      %650 = vector.load %arg25[%c0_189, %c0_190] : memref<16x32xf32, #tpu.memory_space<vmem>>, vector<16x32xf32>
      tpu.vector_store %arg25[%c0_189, %c0_190], %649 {strides = array<i32>} : memref<16x32xf32, #tpu.memory_space<vmem>>, vector<16x32xf32>,
    } else {
    }
    %c0 = arith.constant 0 : index
    %c0_1 = arith.constant 0 : index
    %3 = vector.load %arg25[%c0, %c0_1] : memref<16x32xf32, #tpu.memory_space<vmem>>, vector<16x32xf32>
    %c0_2 = arith.constant 0 : index
    %c0_3 = arith.constant 0 : index
    %c0_4 = arith.constant 0 : index
    %4 = vector.load %arg2[%c0_2, %c0_3, %c0_4] : memref<1x1x32xf32, #tpu.memory_space<vmem>>, vector<1x1x32xf32>
    %5 = vector.shape_cast %4 : vector<1x1x32xf32> to vector<1x32xf32>
    %c0_5 = arith.constant 0 : index
    %c0_6 = arith.constant 0 : index
    %c0_7 = arith.constant 0 : index
    %6 = vector.load %arg3[%c0_5, %c0_6, %c0_7] : memref<1x1x32xf32, #tpu.memory_space<vmem>>, vector<1x1x32xf32>
    %7 = vector.shape_cast %6 : vector<1x1x32xf32> to vector<1x32xf32>
    %c0_8 = arith.constant 0 : index
    %c0_9 = arith.constant 0 : index
    %c0_10 = arith.constant 0 : index
    %8 = vector.load %arg4[%c0_8, %c0_9, %c0_10] : memref<1x32x384xbf16, #tpu.memory_space<vmem>>, vector<1x32x384xbf16>
    %9 = vector.shape_cast %8 : vector<1x32x384xbf16> to vector<32x384xbf16>
    %c0_11 = arith.constant 0 : index
    %c0_12 = arith.constant 0 : index
    %c0_13 = arith.constant 0 : index
    %10 = vector.load %arg5[%c0_11, %c0_12, %c0_13] : memref<1x128x32xbf16, #tpu.memory_space<vmem>>, vector<1x128x32xbf16>
    %11 = vector.shape_cast %10 : vector<1x128x32xbf16> to vector<128x32xbf16>
    %c0_14 = arith.constant 0 : index
    %c0_15 = arith.constant 0 : index
    %c0_16 = arith.constant 0 : index
    %12 = vector.load %arg6[%c0_14, %c0_15, %c0_16] : memref<1x1x32xf32, #tpu.memory_space<vmem>>, vector<1x1x32xf32>
    %13 = vector.shape_cast %12 : vector<1x1x32xf32> to vector<1x32xf32>
    %cst = arith.constant dense<0.000000e+00> : vector<16xf32>
    %14 = vector.multi_reduction <add>, %3, %cst [1] : vector<16x32xf32> to vector<16xf32>
    %15 = vector.shape_cast %14 : vector<16xf32> to vector<16x1xf32>
    %cst_17 = arith.constant 3.200000e+01 : f32
    %16 = vector.broadcast %cst_17 : f32 to vector<16x1xf32>
    %17 = arith.divf %15, %16 : vector<16x1xf32>
    %18 = vector.broadcast %17 : vector<16x1xf32> to vector<16x32xf32>
    %19 = arith.subf %3, %18 : vector<16x32xf32>
    %20 = arith.mulf %19, %19 : vector<16x32xf32>
    %cst_18 = arith.constant dense<0.000000e+00> : vector<16xf32>
    %21 = vector.multi_reduction <add>, %20, %cst_18 [1] : vector<16x32xf32> to vector<16xf32>
    %22 = vector.shape_cast %21 : vector<16xf32> to vector<16x1xf32>
    %cst_19 = arith.constant 3.200000e+01 : f32
    %23 = vector.broadcast %cst_19 : f32 to vector<16x1xf32>
    %24 = arith.divf %22, %23 : vector<16x1xf32>
    %25 = vector.broadcast %17 : vector<16x1xf32> to vector<16x32xf32>
    %26 = arith.subf %3, %25 : vector<16x32xf32>
    %cst_20 = arith.constant 9.99999974E-6 : f32
    %27 = vector.broadcast %cst_20 : f32 to vector<16x1xf32>
    %28 = arith.addf %24, %27 : vector<16x1xf32>
    %29 = math.rsqrt %28 : vector<16x1xf32>
    %30 = vector.broadcast %29 : vector<16x1xf32> to vector<16x32xf32>
    %31 = arith.mulf %26, %30 : vector<16x32xf32>
    %32 = vector.broadcast %5 : vector<1x32xf32> to vector<16x32xf32>
    %33 = arith.mulf %31, %32 : vector<16x32xf32>
    %34 = vector.broadcast %7 : vector<1x32xf32> to vector<16x32xf32>
    %35 = arith.addf %33, %34 : vector<16x32xf32>
    %36 = arith.truncf %35 : vector<16x32xf32> to vector<16x32xbf16>
    %cst_21 = arith.constant dense<0.000000e+00> : vector<16x384xf32>
    %37 = tpu.matmul %36, %9, %cst_21 {dimension_numbers = #tpu.dot_dimension_numbers<[1], [0], [0], [1], [0, 0, 1, 1], [], []>} : vector<16x32xbf16>, vector<32x384xbf16>, vector<16x384xf32> -> vector<16x384xf32>
    %38 = vector.extract_strided_slice %37 {offsets = [0, 0], sizes = [16, 128], strides = [1, 1]} : vector<16x384xf32> to vector<16x128xf32>
    %39 = vector.extract_strided_slice %37 {offsets = [0, 128], sizes = [16, 128], strides = [1, 1]} : vector<16x384xf32> to vector<16x128xf32>
    %40 = vector.extract_strided_slice %37 {offsets = [0, 256], sizes = [16, 128], strides = [1, 1]} : vector<16x384xf32> to vector<16x128xf32>
    %41 = vector.extract_strided_slice %38 {offsets = [0, 0], sizes = [16, 16], strides = [1, 1]} : vector<16x128xf32> to vector<16x16xf32>
    %42 = vector.shape_cast %41 : vector<16x16xf32> to vector<2x8x16xf32>
    %43 = arith.truncf %42 : vector<2x8x16xf32> to vector<2x8x16xbf16>
    %44 = vector.extract_strided_slice %39 {offsets = [0, 0], sizes = [16, 16], strides = [1, 1]} : vector<16x128xf32> to vector<16x16xf32>
    %45 = vector.shape_cast %44 : vector<16x16xf32> to vector<2x8x16xf32>
    %46 = arith.truncf %45 : vector<2x8x16xf32> to vector<2x8x16xbf16>
    %47 = vector.extract_strided_slice %40 {offsets = [0, 0], sizes = [16, 16], strides = [1, 1]} : vector<16x128xf32> to vector<16x16xf32>
    %48 = vector.shape_cast %47 : vector<16x16xf32> to vector<2x8x16xf32>
    %49 = arith.truncf %48 : vector<2x8x16xf32> to vector<2x8x16xbf16>
    "tpu.trace_start"() <{level = 10 : i32, message = "bid,bjd->bij"}> : () -> ()
    %cst_22 = arith.constant dense<0.000000e+00> : vector<2x8x8xf32>
    %50 = tpu.matmul %43, %46, %cst_22 {dimension_numbers = #tpu.dot_dimension_numbers<[2], [2], [1], [1], [0, 0, 0, 1, 1, 1], [0], [0]>} : vector<2x8x16xbf16>, vector<2x8x16xbf16>, vector<2x8x8xf32> -> vector<2x8x8xf32>
    "tpu.trace_stop"() : () -> ()
    %cst_23 = arith.constant 2.500000e-01 : f32
    %51 = vector.broadcast %cst_23 : f32 to vector<2x8x8xf32>
    %52 = arith.mulf %50, %51 : vector<2x8x8xf32>
    %cst_24 = arith.constant dense<0xFF800000> : vector<2x8xf32>
    %53 = vector.multi_reduction <maximumf>, %52, %cst_24 [2] : vector<2x8x8xf32> to vector<2x8xf32>
    %54 = vector.shape_cast %53 : vector<2x8xf32> to vector<2x8x1xf32>
    %55 = vector.broadcast %54 : vector<2x8x1xf32> to vector<2x8x8xf32>
    %56 = arith.subf %52, %55 : vector<2x8x8xf32>
    %57 = math.exp %56 : vector<2x8x8xf32>
    %cst_25 = arith.constant dense<0.000000e+00> : vector<2x8xf32>
    %58 = vector.multi_reduction <add>, %57, %cst_25 [2] : vector<2x8x8xf32> to vector<2x8xf32>
    %59 = vector.shape_cast %58 : vector<2x8xf32> to vector<2x8x1xf32>
    %60 = tpu.reciprocal %59 {approx = true} : vector<2x8x1xf32> -> vector<2x8x1xf32>
    %61 = vector.broadcast %60 : vector<2x8x1xf32> to vector<2x8x8xf32>
    %62 = arith.mulf %57, %61 : vector<2x8x8xf32>
    %63 = arith.truncf %62 : vector<2x8x8xf32> to vector<2x8x8xbf16>
    "tpu.trace_start"() <{level = 10 : i32, message = "bij,bjd->bid"}> : () -> ()
    %cst_26 = arith.constant dense<0.000000e+00> : vector<2x8x16xf32>
    %64 = tpu.matmul %63, %49, %cst_26 {dimension_numbers = #tpu.dot_dimension_numbers<[2], [1], [1], [2], [0, 0, 0, 1, 1, 2], [0], [0]>} : vector<2x8x8xbf16>, vector<2x8x16xbf16>, vector<2x8x16xf32> -> vector<2x8x16xf32>
    "tpu.trace_stop"() : () -> ()
    %65 = vector.shape_cast %64 : vector<2x8x16xf32> to vector<16x16xf32>
    %66 = vector.extract_strided_slice %38 {offsets = [0, 16], sizes = [16, 16], strides = [1, 1]} : vector<16x128xf32> to vector<16x16xf32>
    %67 = vector.shape_cast %66 : vector<16x16xf32> to vector<2x8x16xf32>
    %68 = arith.truncf %67 : vector<2x8x16xf32> to vector<2x8x16xbf16>
    %69 = vector.extract_strided_slice %39 {offsets = [0, 16], sizes = [16, 16], strides = [1, 1]} : vector<16x128xf32> to vector<16x16xf32>
    %70 = vector.shape_cast %69 : vector<16x16xf32> to vector<2x8x16xf32>
    %71 = arith.truncf %70 : vector<2x8x16xf32> to vector<2x8x16xbf16>
    %72 = vector.extract_strided_slice %40 {offsets = [0, 16], sizes = [16, 16], strides = [1, 1]} : vector<16x128xf32> to vector<16x16xf32>
    %73 = vector.shape_cast %72 : vector<16x16xf32> to vector<2x8x16xf32>
    %74 = arith.truncf %73 : vector<2x8x16xf32> to vector<2x8x16xbf16>
    "tpu.trace_start"() <{level = 10 : i32, message = "bid,bjd->bij"}> : () -> ()
    %cst_27 = arith.constant dense<0.000000e+00> : vector<2x8x8xf32>
    %75 = tpu.matmul %68, %71, %cst_27 {dimension_numbers = #tpu.dot_dimension_numbers<[2], [2], [1], [1], [0, 0, 0, 1, 1, 1], [0], [0]>} : vector<2x8x16xbf16>, vector<2x8x16xbf16>, vector<2x8x8xf32> -> vector<2x8x8xf32>
    "tpu.trace_stop"() : () -> ()
    %cst_28 = arith.constant 2.500000e-01 : f32
    %76 = vector.broadcast %cst_28 : f32 to vector<2x8x8xf32>
    %77 = arith.mulf %75, %76 : vector<2x8x8xf32>
    %cst_29 = arith.constant dense<0xFF800000> : vector<2x8xf32>
    %78 = vector.multi_reduction <maximumf>, %77, %cst_29 [2] : vector<2x8x8xf32> to vector<2x8xf32>
    %79 = vector.shape_cast %78 : vector<2x8xf32> to vector<2x8x1xf32>
    %80 = vector.broadcast %79 : vector<2x8x1xf32> to vector<2x8x8xf32>
    %81 = arith.subf %77, %80 : vector<2x8x8xf32>
    %82 = math.exp %81 : vector<2x8x8xf32>
    %cst_30 = arith.constant dense<0.000000e+00> : vector<2x8xf32>
    %83 = vector.multi_reduction <add>, %82, %cst_30 [2] : vector<2x8x8xf32> to vector<2x8xf32>
    %84 = vector.shape_cast %83 : vector<2x8xf32> to vector<2x8x1xf32>
    %85 = tpu.reciprocal %84 {approx = true} : vector<2x8x1xf32> -> vector<2x8x1xf32>
    %86 = vector.broadcast %85 : vector<2x8x1xf32> to vector<2x8x8xf32>
    %87 = arith.mulf %82, %86 : vector<2x8x8xf32>
    %88 = arith.truncf %87 : vector<2x8x8xf32> to vector<2x8x8xbf16>
    "tpu.trace_start"() <{level = 10 : i32, message = "bij,bjd->bid"}> : () -> ()
    %cst_31 = arith.constant dense<0.000000e+00> : vector<2x8x16xf32>
    %89 = tpu.matmul %88, %74, %cst_31 {dimension_numbers = #tpu.dot_dimension_numbers<[2], [1], [1], [2], [0, 0, 0, 1, 1, 2], [0], [0]>} : vector<2x8x8xbf16>, vector<2x8x16xbf16>, vector<2x8x16xf32> -> vector<2x8x16xf32>
    "tpu.trace_stop"() : () -> ()
    %90 = vector.shape_cast %89 : vector<2x8x16xf32> to vector<16x16xf32>
    %91 = vector.extract_strided_slice %38 {offsets = [0, 32], sizes = [16, 16], strides = [1, 1]} : vector<16x128xf32> to vector<16x16xf32>
    %92 = vector.shape_cast %91 : vector<16x16xf32> to vector<2x8x16xf32>
    %93 = arith.truncf %92 : vector<2x8x16xf32> to vector<2x8x16xbf16>
    %94 = vector.extract_strided_slice %39 {offsets = [0, 32], sizes = [16, 16], strides = [1, 1]} : vector<16x128xf32> to vector<16x16xf32>
    %95 = vector.shape_cast %94 : vector<16x16xf32> to vector<2x8x16xf32>
    %96 = arith.truncf %95 : vector<2x8x16xf32> to vector<2x8x16xbf16>
    %97 = vector.extract_strided_slice %40 {offsets = [0, 32], sizes = [16, 16], strides = [1, 1]} : vector<16x128xf32> to vector<16x16xf32>
    %98 = vector.shape_cast %97 : vector<16x16xf32> to vector<2x8x16xf32>
    %99 = arith.truncf %98 : vector<2x8x16xf32> to vector<2x8x16xbf16>
    "tpu.trace_start"() <{level = 10 : i32, message = "bid,bjd->bij"}> : () -> ()
    %cst_32 = arith.constant dense<0.000000e+00> : vector<2x8x8xf32>
    %100 = tpu.matmul %93, %96, %cst_32 {dimension_numbers = #tpu.dot_dimension_numbers<[2], [2], [1], [1], [0, 0, 0, 1, 1, 1], [0], [0]>} : vector<2x8x16xbf16>, vector<2x8x16xbf16>, vector<2x8x8xf32> -> vector<2x8x8xf32>
    "tpu.trace_stop"() : () -> ()
    %cst_33 = arith.constant 2.500000e-01 : f32
    %101 = vector.broadcast %cst_33 : f32 to vector<2x8x8xf32>
    %102 = arith.mulf %100, %101 : vector<2x8x8xf32>
    %cst_34 = arith.constant dense<0xFF800000> : vector<2x8xf32>
    %103 = vector.multi_reduction <maximumf>, %102, %cst_34 [2] : vector<2x8x8xf32> to vector<2x8xf32>
    %104 = vector.shape_cast %103 : vector<2x8xf32> to vector<2x8x1xf32>
    %105 = vector.broadcast %104 : vector<2x8x1xf32> to vector<2x8x8xf32>
    %106 = arith.subf %102, %105 : vector<2x8x8xf32>
    %107 = math.exp %106 : vector<2x8x8xf32>
    %cst_35 = arith.constant dense<0.000000e+00> : vector<2x8xf32>
    %108 = vector.multi_reduction <add>, %107, %cst_35 [2] : vector<2x8x8xf32> to vector<2x8xf32>
    %109 = vector.shape_cast %108 : vector<2x8xf32> to vector<2x8x1xf32>
    %110 = tpu.reciprocal %109 {approx = true} : vector<2x8x1xf32> -> vector<2x8x1xf32>
    %111 = vector.broadcast %110 : vector<2x8x1xf32> to vector<2x8x8xf32>
    %112 = arith.mulf %107, %111 : vector<2x8x8xf32>
    %113 = arith.truncf %112 : vector<2x8x8xf32> to vector<2x8x8xbf16>
    "tpu.trace_start"() <{level = 10 : i32, message = "bij,bjd->bid"}> : () -> ()
    %cst_36 = arith.constant dense<0.000000e+00> : vector<2x8x16xf32>
    %114 = tpu.matmul %113, %99, %cst_36 {dimension_numbers = #tpu.dot_dimension_numbers<[2], [1], [1], [2], [0, 0, 0, 1, 1, 2], [0], [0]>} : vector<2x8x8xbf16>, vector<2x8x16xbf16>, vector<2x8x16xf32> -> vector<2x8x16xf32>
    "tpu.trace_stop"() : () -> ()
    %115 = vector.shape_cast %114 : vector<2x8x16xf32> to vector<16x16xf32>
    %116 = vector.extract_strided_slice %38 {offsets = [0, 48], sizes = [16, 16], strides = [1, 1]} : vector<16x128xf32> to vector<16x16xf32>
    %117 = vector.shape_cast %116 : vector<16x16xf32> to vector<2x8x16xf32>
    %118 = arith.truncf %117 : vector<2x8x16xf32> to vector<2x8x16xbf16>
    %119 = vector.extract_strided_slice %39 {offsets = [0, 48], sizes = [16, 16], strides = [1, 1]} : vector<16x128xf32> to vector<16x16xf32>
    %120 = vector.shape_cast %119 : vector<16x16xf32> to vector<2x8x16xf32>
    %121 = arith.truncf %120 : vector<2x8x16xf32> to vector<2x8x16xbf16>
    %122 = vector.extract_strided_slice %40 {offsets = [0, 48], sizes = [16, 16], strides = [1, 1]} : vector<16x128xf32> to vector<16x16xf32>
    %123 = vector.shape_cast %122 : vector<16x16xf32> to vector<2x8x16xf32>
    %124 = arith.truncf %123 : vector<2x8x16xf32> to vector<2x8x16xbf16>
    "tpu.trace_start"() <{level = 10 : i32, message = "bid,bjd->bij"}> : () -> ()
    %cst_37 = arith.constant dense<0.000000e+00> : vector<2x8x8xf32>
    %125 = tpu.matmul %118, %121, %cst_37 {dimension_numbers = #tpu.dot_dimension_numbers<[2], [2], [1], [1], [0, 0, 0, 1, 1, 1], [0], [0]>} : vector<2x8x16xbf16>, vector<2x8x16xbf16>, vector<2x8x8xf32> -> vector<2x8x8xf32>
    "tpu.trace_stop"() : () -> ()
    %cst_38 = arith.constant 2.500000e-01 : f32
    %126 = vector.broadcast %cst_38 : f32 to vector<2x8x8xf32>
    %127 = arith.mulf %125, %126 : vector<2x8x8xf32>
    %cst_39 = arith.constant dense<0xFF800000> : vector<2x8xf32>
    %128 = vector.multi_reduction <maximumf>, %127, %cst_39 [2] : vector<2x8x8xf32> to vector<2x8xf32>
    %129 = vector.shape_cast %128 : vector<2x8xf32> to vector<2x8x1xf32>
    %130 = vector.broadcast %129 : vector<2x8x1xf32> to vector<2x8x8xf32>
    %131 = arith.subf %127, %130 : vector<2x8x8xf32>
    %132 = math.exp %131 : vector<2x8x8xf32>
    %cst_40 = arith.constant dense<0.000000e+00> : vector<2x8xf32>
    %133 = vector.multi_reduction <add>, %132, %cst_40 [2] : vector<2x8x8xf32> to vector<2x8xf32>
    %134 = vector.shape_cast %133 : vector<2x8xf32> to vector<2x8x1xf32>
    %135 = tpu.reciprocal %134 {approx = true} : vector<2x8x1xf32> -> vector<2x8x1xf32>
    %136 = vector.broadcast %135 : vector<2x8x1xf32> to vector<2x8x8xf32>
    %137 = arith.mulf %132, %136 : vector<2x8x8xf32>
    %138 = arith.truncf %137 : vector<2x8x8xf32> to vector<2x8x8xbf16>
    "tpu.trace_start"() <{level = 10 : i32, message = "bij,bjd->bid"}> : () -> ()
    %cst_41 = arith.constant dense<0.000000e+00> : vector<2x8x16xf32>
    %139 = tpu.matmul %138, %124, %cst_41 {dimension_numbers = #tpu.dot_dimension_numbers<[2], [1], [1], [2], [0, 0, 0, 1, 1, 2], [0], [0]>} : vector<2x8x8xbf16>, vector<2x8x16xbf16>, vector<2x8x16xf32> -> vector<2x8x16xf32>
    "tpu.trace_stop"() : () -> ()
    %140 = vector.shape_cast %139 : vector<2x8x16xf32> to vector<16x16xf32>
    %141 = vector.extract_strided_slice %38 {offsets = [0, 64], sizes = [16, 16], strides = [1, 1]} : vector<16x128xf32> to vector<16x16xf32>
    %142 = vector.shape_cast %141 : vector<16x16xf32> to vector<2x8x16xf32>
    %143 = arith.truncf %142 : vector<2x8x16xf32> to vector<2x8x16xbf16>
    %144 = vector.extract_strided_slice %39 {offsets = [0, 64], sizes = [16, 16], strides = [1, 1]} : vector<16x128xf32> to vector<16x16xf32>
    %145 = vector.shape_cast %144 : vector<16x16xf32> to vector<2x8x16xf32>
    %146 = arith.truncf %145 : vector<2x8x16xf32> to vector<2x8x16xbf16>
    %147 = vector.extract_strided_slice %40 {offsets = [0, 64], sizes = [16, 16], strides = [1, 1]} : vector<16x128xf32> to vector<16x16xf32>
    %148 = vector.shape_cast %147 : vector<16x16xf32> to vector<2x8x16xf32>
    %149 = arith.truncf %148 : vector<2x8x16xf32> to vector<2x8x16xbf16>
    "tpu.trace_start"() <{level = 10 : i32, message = "bid,bjd->bij"}> : () -> ()
    %cst_42 = arith.constant dense<0.000000e+00> : vector<2x8x8xf32>
    %150 = tpu.matmul %143, %146, %cst_42 {dimension_numbers = #tpu.dot_dimension_numbers<[2], [2], [1], [1], [0, 0, 0, 1, 1, 1], [0], [0]>} : vector<2x8x16xbf16>, vector<2x8x16xbf16>, vector<2x8x8xf32> -> vector<2x8x8xf32>
    "tpu.trace_stop"() : () -> ()
    %cst_43 = arith.constant 2.500000e-01 : f32
    %151 = vector.broadcast %cst_43 : f32 to vector<2x8x8xf32>
    %152 = arith.mulf %150, %151 : vector<2x8x8xf32>
    %cst_44 = arith.constant dense<0xFF800000> : vector<2x8xf32>
    %153 = vector.multi_reduction <maximumf>, %152, %cst_44 [2] : vector<2x8x8xf32> to vector<2x8xf32>
    %154 = vector.shape_cast %153 : vector<2x8xf32> to vector<2x8x1xf32>
    %155 = vector.broadcast %154 : vector<2x8x1xf32> to vector<2x8x8xf32>
    %156 = arith.subf %152, %155 : vector<2x8x8xf32>
    %157 = math.exp %156 : vector<2x8x8xf32>
    %cst_45 = arith.constant dense<0.000000e+00> : vector<2x8xf32>
    %158 = vector.multi_reduction <add>, %157, %cst_45 [2] : vector<2x8x8xf32> to vector<2x8xf32>
    %159 = vector.shape_cast %158 : vector<2x8xf32> to vector<2x8x1xf32>
    %160 = tpu.reciprocal %159 {approx = true} : vector<2x8x1xf32> -> vector<2x8x1xf32>
    %161 = vector.broadcast %160 : vector<2x8x1xf32> to vector<2x8x8xf32>
    %162 = arith.mulf %157, %161 : vector<2x8x8xf32>
    %163 = arith.truncf %162 : vector<2x8x8xf32> to vector<2x8x8xbf16>
    "tpu.trace_start"() <{level = 10 : i32, message = "bij,bjd->bid"}> : () -> ()
    %cst_46 = arith.constant dense<0.000000e+00> : vector<2x8x16xf32>
    %164 = tpu.matmul %163, %149, %cst_46 {dimension_numbers = #tpu.dot_dimension_numbers<[2], [1], [1], [2], [0, 0, 0, 1, 1, 2], [0], [0]>} : vector<2x8x8xbf16>, vector<2x8x16xbf16>, vector<2x8x16xf32> -> vector<2x8x16xf32>
    "tpu.trace_stop"() : () -> ()
    %165 = vector.shape_cast %164 : vector<2x8x16xf32> to vector<16x16xf32>
    %166 = vector.extract_strided_slice %38 {offsets = [0, 80], sizes = [16, 16], strides = [1, 1]} : vector<16x128xf32> to vector<16x16xf32>
    %167 = vector.shape_cast %166 : vector<16x16xf32> to vector<2x8x16xf32>
    %168 = arith.truncf %167 : vector<2x8x16xf32> to vector<2x8x16xbf16>
    %169 = vector.extract_strided_slice %39 {offsets = [0, 80], sizes = [16, 16], strides = [1, 1]} : vector<16x128xf32> to vector<16x16xf32>
    %170 = vector.shape_cast %169 : vector<16x16xf32> to vector<2x8x16xf32>
    %171 = arith.truncf %170 : vector<2x8x16xf32> to vector<2x8x16xbf16>
    %172 = vector.extract_strided_slice %40 {offsets = [0, 80], sizes = [16, 16], strides = [1, 1]} : vector<16x128xf32> to vector<16x16xf32>
    %173 = vector.shape_cast %172 : vector<16x16xf32> to vector<2x8x16xf32>
    %174 = arith.truncf %173 : vector<2x8x16xf32> to vector<2x8x16xbf16>
    "tpu.trace_start"() <{level = 10 : i32, message = "bid,bjd->bij"}> : () -> ()
    %cst_47 = arith.constant dense<0.000000e+00> : vector<2x8x8xf32>
    %175 = tpu.matmul %168, %171, %cst_47 {dimension_numbers = #tpu.dot_dimension_numbers<[2], [2], [1], [1], [0, 0, 0, 1, 1, 1], [0], [0]>} : vector<2x8x16xbf16>, vector<2x8x16xbf16>, vector<2x8x8xf32> -> vector<2x8x8xf32>
    "tpu.trace_stop"() : () -> ()
    %cst_48 = arith.constant 2.500000e-01 : f32
    %176 = vector.broadcast %cst_48 : f32 to vector<2x8x8xf32>
    %177 = arith.mulf %175, %176 : vector<2x8x8xf32>
    %cst_49 = arith.constant dense<0xFF800000> : vector<2x8xf32>
    %178 = vector.multi_reduction <maximumf>, %177, %cst_49 [2] : vector<2x8x8xf32> to vector<2x8xf32>
    %179 = vector.shape_cast %178 : vector<2x8xf32> to vector<2x8x1xf32>
    %180 = vector.broadcast %179 : vector<2x8x1xf32> to vector<2x8x8xf32>
    %181 = arith.subf %177, %180 : vector<2x8x8xf32>
    %182 = math.exp %181 : vector<2x8x8xf32>
    %cst_50 = arith.constant dense<0.000000e+00> : vector<2x8xf32>
    %183 = vector.multi_reduction <add>, %182, %cst_50 [2] : vector<2x8x8xf32> to vector<2x8xf32>
    %184 = vector.shape_cast %183 : vector<2x8xf32> to vector<2x8x1xf32>
    %185 = tpu.reciprocal %184 {approx = true} : vector<2x8x1xf32> -> vector<2x8x1xf32>
    %186 = vector.broadcast %185 : vector<2x8x1xf32> to vector<2x8x8xf32>
    %187 = arith.mulf %182, %186 : vector<2x8x8xf32>
    %188 = arith.truncf %187 : vector<2x8x8xf32> to vector<2x8x8xbf16>
    "tpu.trace_start"() <{level = 10 : i32, message = "bij,bjd->bid"}> : () -> ()
    %cst_51 = arith.constant dense<0.000000e+00> : vector<2x8x16xf32>
    %189 = tpu.matmul %188, %174, %cst_51 {dimension_numbers = #tpu.dot_dimension_numbers<[2], [1], [1], [2], [0, 0, 0, 1, 1, 2], [0], [0]>} : vector<2x8x8xbf16>, vector<2x8x16xbf16>, vector<2x8x16xf32> -> vector<2x8x16xf32>
    "tpu.trace_stop"() : () -> ()
    %190 = vector.shape_cast %189 : vector<2x8x16xf32> to vector<16x16xf32>
    %191 = vector.extract_strided_slice %38 {offsets = [0, 96], sizes = [16, 16], strides = [1, 1]} : vector<16x128xf32> to vector<16x16xf32>
    %192 = vector.shape_cast %191 : vector<16x16xf32> to vector<2x8x16xf32>
    %193 = arith.truncf %192 : vector<2x8x16xf32> to vector<2x8x16xbf16>
    %194 = vector.extract_strided_slice %39 {offsets = [0, 96], sizes = [16, 16], strides = [1, 1]} : vector<16x128xf32> to vector<16x16xf32>
    %195 = vector.shape_cast %194 : vector<16x16xf32> to vector<2x8x16xf32>
    %196 = arith.truncf %195 : vector<2x8x16xf32> to vector<2x8x16xbf16>
    %197 = vector.extract_strided_slice %40 {offsets = [0, 96], sizes = [16, 16], strides = [1, 1]} : vector<16x128xf32> to vector<16x16xf32>
    %198 = vector.shape_cast %197 : vector<16x16xf32> to vector<2x8x16xf32>
    %199 = arith.truncf %198 : vector<2x8x16xf32> to vector<2x8x16xbf16>
    "tpu.trace_start"() <{level = 10 : i32, message = "bid,bjd->bij"}> : () -> ()
    %cst_52 = arith.constant dense<0.000000e+00> : vector<2x8x8xf32>
    %200 = tpu.matmul %193, %196, %cst_52 {dimension_numbers = #tpu.dot_dimension_numbers<[2], [2], [1], [1], [0, 0, 0, 1, 1, 1], [0], [0]>} : vector<2x8x16xbf16>, vector<2x8x16xbf16>, vector<2x8x8xf32> -> vector<2x8x8xf32>
    "tpu.trace_stop"() : () -> ()
    %cst_53 = arith.constant 2.500000e-01 : f32
    %201 = vector.broadcast %cst_53 : f32 to vector<2x8x8xf32>
    %202 = arith.mulf %200, %201 : vector<2x8x8xf32>
    %cst_54 = arith.constant dense<0xFF800000> : vector<2x8xf32>
    %203 = vector.multi_reduction <maximumf>, %202, %cst_54 [2] : vector<2x8x8xf32> to vector<2x8xf32>
    %204 = vector.shape_cast %203 : vector<2x8xf32> to vector<2x8x1xf32>
    %205 = vector.broadcast %204 : vector<2x8x1xf32> to vector<2x8x8xf32>
    %206 = arith.subf %202, %205 : vector<2x8x8xf32>
    %207 = math.exp %206 : vector<2x8x8xf32>
    %cst_55 = arith.constant dense<0.000000e+00> : vector<2x8xf32>
    %208 = vector.multi_reduction <add>, %207, %cst_55 [2] : vector<2x8x8xf32> to vector<2x8xf32>
    %209 = vector.shape_cast %208 : vector<2x8xf32> to vector<2x8x1xf32>
    %210 = tpu.reciprocal %209 {approx = true} : vector<2x8x1xf32> -> vector<2x8x1xf32>
    %211 = vector.broadcast %210 : vector<2x8x1xf32> to vector<2x8x8xf32>
    %212 = arith.mulf %207, %211 : vector<2x8x8xf32>
    %213 = arith.truncf %212 : vector<2x8x8xf32> to vector<2x8x8xbf16>
    "tpu.trace_start"() <{level = 10 : i32, message = "bij,bjd->bid"}> : () -> ()
    %cst_56 = arith.constant dense<0.000000e+00> : vector<2x8x16xf32>
    %214 = tpu.matmul %213, %199, %cst_56 {dimension_numbers = #tpu.dot_dimension_numbers<[2], [1], [1], [2], [0, 0, 0, 1, 1, 2], [0], [0]>} : vector<2x8x8xbf16>, vector<2x8x16xbf16>, vector<2x8x16xf32> -> vector<2x8x16xf32>
    "tpu.trace_stop"() : () -> ()
    %215 = vector.shape_cast %214 : vector<2x8x16xf32> to vector<16x16xf32>
    %216 = vector.extract_strided_slice %38 {offsets = [0, 112], sizes = [16, 16], strides = [1, 1]} : vector<16x128xf32> to vector<16x16xf32>
    %217 = vector.shape_cast %216 : vector<16x16xf32> to vector<2x8x16xf32>
    %218 = arith.truncf %217 : vector<2x8x16xf32> to vector<2x8x16xbf16>
    %219 = vector.extract_strided_slice %39 {offsets = [0, 112], sizes = [16, 16], strides = [1, 1]} : vector<16x128xf32> to vector<16x16xf32>
    %220 = vector.shape_cast %219 : vector<16x16xf32> to vector<2x8x16xf32>
    %221 = arith.truncf %220 : vector<2x8x16xf32> to vector<2x8x16xbf16>
    %222 = vector.extract_strided_slice %40 {offsets = [0, 112], sizes = [16, 16], strides = [1, 1]} : vector<16x128xf32> to vector<16x16xf32>
    %223 = vector.shape_cast %222 : vector<16x16xf32> to vector<2x8x16xf32>
    %224 = arith.truncf %223 : vector<2x8x16xf32> to vector<2x8x16xbf16>
    "tpu.trace_start"() <{level = 10 : i32, message = "bid,bjd->bij"}> : () -> ()
    %cst_57 = arith.constant dense<0.000000e+00> : vector<2x8x8xf32>
    %225 = tpu.matmul %218, %221, %cst_57 {dimension_numbers = #tpu.dot_dimension_numbers<[2], [2], [1], [1], [0, 0, 0, 1, 1, 1], [0], [0]>} : vector<2x8x16xbf16>, vector<2x8x16xbf16>, vector<2x8x8xf32> -> vector<2x8x8xf32>
    "tpu.trace_stop"() : () -> ()
    %cst_58 = arith.constant 2.500000e-01 : f32
    %226 = vector.broadcast %cst_58 : f32 to vector<2x8x8xf32>
    %227 = arith.mulf %225, %226 : vector<2x8x8xf32>
    %cst_59 = arith.constant dense<0xFF800000> : vector<2x8xf32>
    %228 = vector.multi_reduction <maximumf>, %227, %cst_59 [2] : vector<2x8x8xf32> to vector<2x8xf32>
    %229 = vector.shape_cast %228 : vector<2x8xf32> to vector<2x8x1xf32>
    %230 = vector.broadcast %229 : vector<2x8x1xf32> to vector<2x8x8xf32>
    %231 = arith.subf %227, %230 : vector<2x8x8xf32>
    %232 = math.exp %231 : vector<2x8x8xf32>
    %cst_60 = arith.constant dense<0.000000e+00> : vector<2x8xf32>
    %233 = vector.multi_reduction <add>, %232, %cst_60 [2] : vector<2x8x8xf32> to vector<2x8xf32>
    %234 = vector.shape_cast %233 : vector<2x8xf32> to vector<2x8x1xf32>
    %235 = tpu.reciprocal %234 {approx = true} : vector<2x8x1xf32> -> vector<2x8x1xf32>
    %236 = vector.broadcast %235 : vector<2x8x1xf32> to vector<2x8x8xf32>
    %237 = arith.mulf %232, %236 : vector<2x8x8xf32>
    %238 = arith.truncf %237 : vector<2x8x8xf32> to vector<2x8x8xbf16>
    "tpu.trace_start"() <{level = 10 : i32, message = "bij,bjd->bid"}> : () -> ()
    %cst_61 = arith.constant dense<0.000000e+00> : vector<2x8x16xf32>
    %239 = tpu.matmul %238, %224, %cst_61 {dimension_numbers = #tpu.dot_dimension_numbers<[2], [1], [1], [2], [0, 0, 0, 1, 1, 2], [0], [0]>} : vector<2x8x8xbf16>, vector<2x8x16xbf16>, vector<2x8x16xf32> -> vector<2x8x16xf32>
    "tpu.trace_stop"() : () -> ()
    %240 = vector.shape_cast %239 : vector<2x8x16xf32> to vector<16x16xf32>
    %241 = tpu.concatenate %65, %90, %115, %140, %165, %190, %215, %240 in 1 : vector<16x16xf32>, vector<16x16xf32>, vector<16x16xf32>, vector<16x16xf32>, vector<16x16xf32>, vector<16x16xf32>, vector<16x16xf32>, vector<16x16xf32> -> vector<16x128xf32>
    %242 = arith.truncf %241 : vector<16x128xf32> to vector<16x128xbf16>
    %cst_62 = arith.constant dense<0.000000e+00> : vector<16x32xf32>
    %243 = tpu.matmul %242, %11, %cst_62 {dimension_numbers = #tpu.dot_dimension_numbers<[1], [0], [0], [1], [0, 0, 1, 1], [], []>} : vector<16x128xbf16>, vector<128x32xbf16>, vector<16x32xf32> -> vector<16x32xf32>
    %244 = vector.broadcast %13 : vector<1x32xf32> to vector<16x32xf32>
    %245 = arith.addf %243, %244 : vector<16x32xf32>
    %246 = arith.addf %35, %245 : vector<16x32xf32>
    %c0_63 = arith.constant 0 : index
    %c0_64 = arith.constant 0 : index
    %c0_65 = arith.constant 0 : index
    %247 = vector.load %arg7[%c0_63, %c0_64, %c0_65] : memref<1x1x32xf32, #tpu.memory_space<vmem>>, vector<1x1x32xf32>
    %248 = vector.shape_cast %247 : vector<1x1x32xf32> to vector<1x32xf32>
    %c0_66 = arith.constant 0 : index
    %c0_67 = arith.constant 0 : index
    %c0_68 = arith.constant 0 : index
    %249 = vector.load %arg8[%c0_66, %c0_67, %c0_68] : memref<1x1x32xf32, #tpu.memory_space<vmem>>, vector<1x1x32xf32>
    %250 = vector.shape_cast %249 : vector<1x1x32xf32> to vector<1x32xf32>
    %c0_69 = arith.constant 0 : index
    %c0_70 = arith.constant 0 : index
    %c0_71 = arith.constant 0 : index
    %251 = vector.load %arg9[%c0_69, %c0_70, %c0_71] : memref<1x32x256xbf16, #tpu.memory_space<vmem>>, vector<1x32x256xbf16>
    %252 = vector.shape_cast %251 : vector<1x32x256xbf16> to vector<32x256xbf16>
    %c0_72 = arith.constant 0 : index
    %c0_73 = arith.constant 0 : index
    %c0_74 = arith.constant 0 : index
    %253 = vector.load %arg10[%c0_72, %c0_73, %c0_74] : memref<1x1x256xf32, #tpu.memory_space<vmem>>, vector<1x1x256xf32>
    %254 = vector.shape_cast %253 : vector<1x1x256xf32> to vector<1x256xf32>
    %c0_75 = arith.constant 0 : index
    %c0_76 = arith.constant 0 : index
    %c0_77 = arith.constant 0 : index
    %255 = vector.load %arg11[%c0_75, %c0_76, %c0_77] : memref<1x128x32xbf16, #tpu.memory_space<vmem>>, vector<1x128x32xbf16>
    %256 = vector.shape_cast %255 : vector<1x128x32xbf16> to vector<128x32xbf16>
    %c0_78 = arith.constant 0 : index
    %c0_79 = arith.constant 0 : index
    %c0_80 = arith.constant 0 : index
    %257 = vector.load %arg12[%c0_78, %c0_79, %c0_80] : memref<1x1x32xf32, #tpu.memory_space<vmem>>, vector<1x1x32xf32>
    %258 = vector.shape_cast %257 : vector<1x1x32xf32> to vector<1x32xf32>
    %cst_81 = arith.constant dense<0.000000e+00> : vector<16xf32>
    %259 = vector.multi_reduction <add>, %246, %cst_81 [1] : vector<16x32xf32> to vector<16xf32>
    %260 = vector.shape_cast %259 : vector<16xf32> to vector<16x1xf32>
    %cst_82 = arith.constant 3.200000e+01 : f32
    %261 = vector.broadcast %cst_82 : f32 to vector<16x1xf32>
    %262 = arith.divf %260, %261 : vector<16x1xf32>
    %263 = vector.broadcast %262 : vector<16x1xf32> to vector<16x32xf32>
    %264 = arith.subf %246, %263 : vector<16x32xf32>
    %265 = arith.mulf %264, %264 : vector<16x32xf32>
    %cst_83 = arith.constant dense<0.000000e+00> : vector<16xf32>
    %266 = vector.multi_reduction <add>, %265, %cst_83 [1] : vector<16x32xf32> to vector<16xf32>
    %267 = vector.shape_cast %266 : vector<16xf32> to vector<16x1xf32>
    %cst_84 = arith.constant 3.200000e+01 : f32
    %268 = vector.broadcast %cst_84 : f32 to vector<16x1xf32>
    %269 = arith.divf %267, %268 : vector<16x1xf32>
    %270 = vector.broadcast %262 : vector<16x1xf32> to vector<16x32xf32>
    %271 = arith.subf %246, %270 : vector<16x32xf32>
    %cst_85 = arith.constant 9.99999974E-6 : f32
    %272 = vector.broadcast %cst_85 : f32 to vector<16x1xf32>
    %273 = arith.addf %269, %272 : vector<16x1xf32>
    %274 = math.rsqrt %273 : vector<16x1xf32>
    %275 = vector.broadcast %274 : vector<16x1xf32> to vector<16x32xf32>
    %276 = arith.mulf %271, %275 : vector<16x32xf32>
    %277 = vector.broadcast %248 : vector<1x32xf32> to vector<16x32xf32>
    %278 = arith.mulf %276, %277 : vector<16x32xf32>
    %279 = vector.broadcast %250 : vector<1x32xf32> to vector<16x32xf32>
    %280 = arith.addf %278, %279 : vector<16x32xf32>
    %281 = arith.truncf %280 : vector<16x32xf32> to vector<16x32xbf16>
    %cst_86 = arith.constant dense<0.000000e+00> : vector<16x256xf32>
    %282 = tpu.matmul %281, %252, %cst_86 {dimension_numbers = #tpu.dot_dimension_numbers<[1], [0], [0], [1], [0, 0, 1, 1], [], []>} : vector<16x32xbf16>, vector<32x256xbf16>, vector<16x256xf32> -> vector<16x256xf32>
    %283 = vector.broadcast %254 : vector<1x256xf32> to vector<16x256xf32>
    %284 = arith.addf %282, %283 : vector<16x256xf32>
    %285 = vector.extract_strided_slice %284 {offsets = [0, 0], sizes = [16, 128], strides = [1, 1]} : vector<16x256xf32> to vector<16x128xf32>
    %286 = vector.extract_strided_slice %284 {offsets = [0, 128], sizes = [16, 128], strides = [1, 1]} : vector<16x256xf32> to vector<16x128xf32>
    %cst_87 = arith.constant 5.000000e-01 : f32
    %287 = vector.broadcast %cst_87 : f32 to vector<16x128xf32>
    %288 = arith.mulf %287, %286 : vector<16x128xf32>
    %cst_88 = arith.constant 4.471500e-02 : f32
    %289 = vector.broadcast %cst_88 : f32 to vector<16x128xf32>
    %290 = arith.mulf %289, %286 : vector<16x128xf32>
    %291 = arith.mulf %290, %286 : vector<16x128xf32>
    %292 = arith.mulf %291, %286 : vector<16x128xf32>
    %293 = arith.addf %286, %292 : vector<16x128xf32>
    %cst_89 = arith.constant 0.797884583 : f32
    %294 = vector.broadcast %cst_89 : f32 to vector<16x128xf32>
    %295 = arith.mulf %294, %293 : vector<16x128xf32>
    %296 = math.tanh %295 : vector<16x128xf32>
    %cst_90 = arith.constant 1.000000e+00 : f32
    %297 = vector.broadcast %cst_90 : f32 to vector<16x128xf32>
    %298 = arith.addf %297, %296 : vector<16x128xf32>
    %299 = arith.mulf %288, %298 : vector<16x128xf32>
    %300 = arith.mulf %285, %299 : vector<16x128xf32>
    %301 = arith.truncf %300 : vector<16x128xf32> to vector<16x128xbf16>
    %cst_91 = arith.constant dense<0.000000e+00> : vector<16x32xf32>
    %302 = tpu.matmul %301, %256, %cst_91 {dimension_numbers = #tpu.dot_dimension_numbers<[1], [0], [0], [1], [0, 0, 1, 1], [], []>} : vector<16x128xbf16>, vector<128x32xbf16>, vector<16x32xf32> -> vector<16x32xf32>
    %303 = vector.broadcast %258 : vector<1x32xf32> to vector<16x32xf32>
    %304 = arith.addf %302, %303 : vector<16x32xf32>
    %305 = arith.addf %280, %304 : vector<16x32xf32>
    %306 = vector.extract_strided_slice %305 {offsets = [0, 0], sizes = [1, 32], strides = [1, 1]} : vector<16x32xf32> to vector<1x32xf32>
    %307 = vector.extract_strided_slice %305 {offsets = [1, 0], sizes = [1, 32], strides = [1, 1]} : vector<16x32xf32> to vector<1x32xf32>
    %308 = vector.extract_strided_slice %305 {offsets = [2, 0], sizes = [1, 32], strides = [1, 1]} : vector<16x32xf32> to vector<1x32xf32>
    %309 = vector.extract_strided_slice %305 {offsets = [3, 0], sizes = [1, 32], strides = [1, 1]} : vector<16x32xf32> to vector<1x32xf32>
    %310 = vector.extract_strided_slice %305 {offsets = [4, 0], sizes = [1, 32], strides = [1, 1]} : vector<16x32xf32> to vector<1x32xf32>
    %311 = vector.extract_strided_slice %305 {offsets = [5, 0], sizes = [1, 32], strides = [1, 1]} : vector<16x32xf32> to vector<1x32xf32>
    %312 = vector.extract_strided_slice %305 {offsets = [6, 0], sizes = [1, 32], strides = [1, 1]} : vector<16x32xf32> to vector<1x32xf32>
    %313 = vector.extract_strided_slice %305 {offsets = [7, 0], sizes = [1, 32], strides = [1, 1]} : vector<16x32xf32> to vector<1x32xf32>
    %314 = tpu.concatenate %306, %307, %308, %309, %310, %311, %312, %313 in 1 : vector<1x32xf32>, vector<1x32xf32>, vector<1x32xf32>, vector<1x32xf32>, vector<1x32xf32>, vector<1x32xf32>, vector<1x32xf32>, vector<1x32xf32> -> vector<1x256xf32>
    %315 = vector.extract_strided_slice %305 {offsets = [8, 0], sizes = [1, 32], strides = [1, 1]} : vector<16x32xf32> to vector<1x32xf32>
    %316 = vector.extract_strided_slice %305 {offsets = [9, 0], sizes = [1, 32], strides = [1, 1]} : vector<16x32xf32> to vector<1x32xf32>
    %317 = vector.extract_strided_slice %305 {offsets = [10, 0], sizes = [1, 32], strides = [1, 1]} : vector<16x32xf32> to vector<1x32xf32>
    %318 = vector.extract_strided_slice %305 {offsets = [11, 0], sizes = [1, 32], strides = [1, 1]} : vector<16x32xf32> to vector<1x32xf32>
    %319 = vector.extract_strided_slice %305 {offsets = [12, 0], sizes = [1, 32], strides = [1, 1]} : vector<16x32xf32> to vector<1x32xf32>
    %320 = vector.extract_strided_slice %305 {offsets = [13, 0], sizes = [1, 32], strides = [1, 1]} : vector<16x32xf32> to vector<1x32xf32>
    %321 = vector.extract_strided_slice %305 {offsets = [14, 0], sizes = [1, 32], strides = [1, 1]} : vector<16x32xf32> to vector<1x32xf32>
    %322 = vector.extract_strided_slice %305 {offsets = [15, 0], sizes = [1, 32], strides = [1, 1]} : vector<16x32xf32> to vector<1x32xf32>
    %323 = tpu.concatenate %315, %316, %317, %318, %319, %320, %321, %322 in 1 : vector<1x32xf32>, vector<1x32xf32>, vector<1x32xf32>, vector<1x32xf32>, vector<1x32xf32>, vector<1x32xf32>, vector<1x32xf32>, vector<1x32xf32> -> vector<1x256xf32>
    %324 = tpu.concatenate %314, %323 in 0 : vector<1x256xf32>, vector<1x256xf32> -> vector<2x256xf32>
    %c0_92 = arith.constant 0 : index
    %c0_93 = arith.constant 0 : index
    %c0_94 = arith.constant 0 : index
    %325 = vector.load %arg13[%c0_92, %c0_93, %c0_94] : memref<1x1x256xf32, #tpu.memory_space<vmem>>, vector<1x1x256xf32>
    %326 = vector.shape_cast %325 : vector<1x1x256xf32> to vector<1x256xf32>
    %c0_95 = arith.constant 0 : index
    %c0_96 = arith.constant 0 : index
    %c0_97 = arith.constant 0 : index
    %327 = vector.load %arg14[%c0_95, %c0_96, %c0_97] : memref<1x1x256xf32, #tpu.memory_space<vmem>>, vector<1x1x256xf32>
    %328 = vector.shape_cast %327 : vector<1x1x256xf32> to vector<1x256xf32>
    %c0_98 = arith.constant 0 : index
    %c0_99 = arith.constant 0 : index
    %c0_100 = arith.constant 0 : index
    %329 = vector.load %arg15[%c0_98, %c0_99, %c0_100] : memref<1x256x1536xbf16, #tpu.memory_space<vmem>>, vector<1x256x1536xbf16>
    %330 = vector.shape_cast %329 : vector<1x256x1536xbf16> to vector<256x1536xbf16>
    %c0_101 = arith.constant 0 : index
    %c0_102 = arith.constant 0 : index
    %c0_103 = arith.constant 0 : index
    %331 = vector.load %arg16[%c0_101, %c0_102, %c0_103] : memref<1x512x256xbf16, #tpu.memory_space<vmem>>, vector<1x512x256xbf16>
    %332 = vector.shape_cast %331 : vector<1x512x256xbf16> to vector<512x256xbf16>
    %c0_104 = arith.constant 0 : index
    %c0_105 = arith.constant 0 : index
    %c0_106 = arith.constant 0 : index
    %333 = vector.load %arg17[%c0_104, %c0_105, %c0_106] : memref<1x1x256xf32, #tpu.memory_space<vmem>>, vector<1x1x256xf32>
    %334 = vector.shape_cast %333 : vector<1x1x256xf32> to vector<1x256xf32>
    %cst_107 = arith.constant dense<0.000000e+00> : vector<2xf32>
    %335 = vector.multi_reduction <add>, %324, %cst_107 [1] : vector<2x256xf32> to vector<2xf32>
    %336 = vector.shape_cast %335 : vector<2xf32> to vector<2x1xf32>
    %cst_108 = arith.constant 2.560000e+02 : f32
    %337 = vector.broadcast %cst_108 : f32 to vector<2x1xf32>
    %338 = arith.divf %336, %337 : vector<2x1xf32>
    %339 = vector.broadcast %338 : vector<2x1xf32> to vector<2x256xf32>
    %340 = arith.subf %324, %339 : vector<2x256xf32>
    %341 = arith.mulf %340, %340 : vector<2x256xf32>
    %cst_109 = arith.constant dense<0.000000e+00> : vector<2xf32>
    %342 = vector.multi_reduction <add>, %341, %cst_109 [1] : vector<2x256xf32> to vector<2xf32>
    %343 = vector.shape_cast %342 : vector<2xf32> to vector<2x1xf32>
    %cst_110 = arith.constant 2.560000e+02 : f32
    %344 = vector.broadcast %cst_110 : f32 to vector<2x1xf32>
    %345 = arith.divf %343, %344 : vector<2x1xf32>
    %346 = vector.broadcast %338 : vector<2x1xf32> to vector<2x256xf32>
    %347 = arith.subf %324, %346 : vector<2x256xf32>
    %cst_111 = arith.constant 9.99999974E-6 : f32
    %348 = vector.broadcast %cst_111 : f32 to vector<2x1xf32>
    %349 = arith.addf %345, %348 : vector<2x1xf32>
    %350 = math.rsqrt %349 : vector<2x1xf32>
    %351 = vector.broadcast %350 : vector<2x1xf32> to vector<2x256xf32>
    %352 = arith.mulf %347, %351 : vector<2x256xf32>
    %353 = vector.broadcast %326 : vector<1x256xf32> to vector<2x256xf32>
    %354 = arith.mulf %352, %353 : vector<2x256xf32>
    %355 = vector.broadcast %328 : vector<1x256xf32> to vector<2x256xf32>
    %356 = arith.addf %354, %355 : vector<2x256xf32>
    %357 = arith.truncf %356 : vector<2x256xf32> to vector<2x256xbf16>
    %cst_112 = arith.constant dense<0.000000e+00> : vector<2x1536xf32>
    %358 = tpu.matmul %357, %330, %cst_112 {dimension_numbers = #tpu.dot_dimension_numbers<[1], [0], [0], [1], [0, 0, 1, 1], [], []>} : vector<2x256xbf16>, vector<256x1536xbf16>, vector<2x1536xf32> -> vector<2x1536xf32>
    %359 = vector.extract_strided_slice %358 {offsets = [0, 0], sizes = [2, 512], strides = [1, 1]} : vector<2x1536xf32> to vector<2x512xf32>
    %360 = vector.extract_strided_slice %358 {offsets = [0, 512], sizes = [2, 512], strides = [1, 1]} : vector<2x1536xf32> to vector<2x512xf32>
    %361 = vector.extract_strided_slice %358 {offsets = [0, 1024], sizes = [2, 512], strides = [1, 1]} : vector<2x1536xf32> to vector<2x512xf32>
    %362 = vector.extract_strided_slice %359 {offsets = [0, 0], sizes = [2, 64], strides = [1, 1]} : vector<2x512xf32> to vector<2x64xf32>
    %363 = vector.shape_cast %362 : vector<2x64xf32> to vector<1x2x64xf32>
    %364 = arith.truncf %363 : vector<1x2x64xf32> to vector<1x2x64xbf16>
    %365 = vector.extract_strided_slice %360 {offsets = [0, 0], sizes = [2, 64], strides = [1, 1]} : vector<2x512xf32> to vector<2x64xf32>
    %366 = vector.shape_cast %365 : vector<2x64xf32> to vector<1x2x64xf32>
    %367 = arith.truncf %366 : vector<1x2x64xf32> to vector<1x2x64xbf16>
    %368 = vector.extract_strided_slice %361 {offsets = [0, 0], sizes = [2, 64], strides = [1, 1]} : vector<2x512xf32> to vector<2x64xf32>
    %369 = vector.shape_cast %368 : vector<2x64xf32> to vector<1x2x64xf32>
    %370 = arith.truncf %369 : vector<1x2x64xf32> to vector<1x2x64xbf16>
    "tpu.trace_start"() <{level = 10 : i32, message = "bid,bjd->bij"}> : () -> ()
    %cst_113 = arith.constant dense<0.000000e+00> : vector<1x2x2xf32>
    %371 = tpu.matmul %364, %367, %cst_113 {dimension_numbers = #tpu.dot_dimension_numbers<[2], [2], [1], [1], [0, 0, 0, 1, 1, 1], [0], [0]>} : vector<1x2x64xbf16>, vector<1x2x64xbf16>, vector<1x2x2xf32> -> vector<1x2x2xf32>
    "tpu.trace_stop"() : () -> ()
    %cst_114 = arith.constant 1.250000e-01 : f32
    %372 = vector.broadcast %cst_114 : f32 to vector<1x2x2xf32>
    %373 = arith.mulf %371, %372 : vector<1x2x2xf32>
    %cst_115 = arith.constant dense<0xFF800000> : vector<1x2xf32>
    %374 = vector.multi_reduction <maximumf>, %373, %cst_115 [2] : vector<1x2x2xf32> to vector<1x2xf32>
    %375 = vector.shape_cast %374 : vector<1x2xf32> to vector<1x2x1xf32>
    %376 = vector.broadcast %375 : vector<1x2x1xf32> to vector<1x2x2xf32>
    %377 = arith.subf %373, %376 : vector<1x2x2xf32>
    %378 = math.exp %377 : vector<1x2x2xf32>
    %cst_116 = arith.constant dense<0.000000e+00> : vector<1x2xf32>
    %379 = vector.multi_reduction <add>, %378, %cst_116 [2] : vector<1x2x2xf32> to vector<1x2xf32>
    %380 = vector.shape_cast %379 : vector<1x2xf32> to vector<1x2x1xf32>
    %381 = tpu.reciprocal %380 {approx = true} : vector<1x2x1xf32> -> vector<1x2x1xf32>
    %382 = vector.broadcast %381 : vector<1x2x1xf32> to vector<1x2x2xf32>
    %383 = arith.mulf %378, %382 : vector<1x2x2xf32>
    %384 = arith.truncf %383 : vector<1x2x2xf32> to vector<1x2x2xbf16>
    "tpu.trace_start"() <{level = 10 : i32, message = "bij,bjd->bid"}> : () -> ()
    %cst_117 = arith.constant dense<0.000000e+00> : vector<1x2x64xf32>
    %385 = tpu.matmul %384, %370, %cst_117 {dimension_numbers = #tpu.dot_dimension_numbers<[2], [1], [1], [2], [0, 0, 0, 1, 1, 2], [0], [0]>} : vector<1x2x2xbf16>, vector<1x2x64xbf16>, vector<1x2x64xf32> -> vector<1x2x64xf32>
    "tpu.trace_stop"() : () -> ()
    %386 = vector.shape_cast %385 : vector<1x2x64xf32> to vector<2x64xf32>
    %387 = vector.extract_strided_slice %359 {offsets = [0, 64], sizes = [2, 64], strides = [1, 1]} : vector<2x512xf32> to vector<2x64xf32>
    %388 = vector.shape_cast %387 : vector<2x64xf32> to vector<1x2x64xf32>
    %389 = arith.truncf %388 : vector<1x2x64xf32> to vector<1x2x64xbf16>
    %390 = vector.extract_strided_slice %360 {offsets = [0, 64], sizes = [2, 64], strides = [1, 1]} : vector<2x512xf32> to vector<2x64xf32>
    %391 = vector.shape_cast %390 : vector<2x64xf32> to vector<1x2x64xf32>
    %392 = arith.truncf %391 : vector<1x2x64xf32> to vector<1x2x64xbf16>
    %393 = vector.extract_strided_slice %361 {offsets = [0, 64], sizes = [2, 64], strides = [1, 1]} : vector<2x512xf32> to vector<2x64xf32>
    %394 = vector.shape_cast %393 : vector<2x64xf32> to vector<1x2x64xf32>
    %395 = arith.truncf %394 : vector<1x2x64xf32> to vector<1x2x64xbf16>
    "tpu.trace_start"() <{level = 10 : i32, message = "bid,bjd->bij"}> : () -> ()
    %cst_118 = arith.constant dense<0.000000e+00> : vector<1x2x2xf32>
    %396 = tpu.matmul %389, %392, %cst_118 {dimension_numbers = #tpu.dot_dimension_numbers<[2], [2], [1], [1], [0, 0, 0, 1, 1, 1], [0], [0]>} : vector<1x2x64xbf16>, vector<1x2x64xbf16>, vector<1x2x2xf32> -> vector<1x2x2xf32>
    "tpu.trace_stop"() : () -> ()
    %cst_119 = arith.constant 1.250000e-01 : f32
    %397 = vector.broadcast %cst_119 : f32 to vector<1x2x2xf32>
    %398 = arith.mulf %396, %397 : vector<1x2x2xf32>
    %cst_120 = arith.constant dense<0xFF800000> : vector<1x2xf32>
    %399 = vector.multi_reduction <maximumf>, %398, %cst_120 [2] : vector<1x2x2xf32> to vector<1x2xf32>
    %400 = vector.shape_cast %399 : vector<1x2xf32> to vector<1x2x1xf32>
    %401 = vector.broadcast %400 : vector<1x2x1xf32> to vector<1x2x2xf32>
    %402 = arith.subf %398, %401 : vector<1x2x2xf32>
    %403 = math.exp %402 : vector<1x2x2xf32>
    %cst_121 = arith.constant dense<0.000000e+00> : vector<1x2xf32>
    %404 = vector.multi_reduction <add>, %403, %cst_121 [2] : vector<1x2x2xf32> to vector<1x2xf32>
    %405 = vector.shape_cast %404 : vector<1x2xf32> to vector<1x2x1xf32>
    %406 = tpu.reciprocal %405 {approx = true} : vector<1x2x1xf32> -> vector<1x2x1xf32>
    %407 = vector.broadcast %406 : vector<1x2x1xf32> to vector<1x2x2xf32>
    %408 = arith.mulf %403, %407 : vector<1x2x2xf32>
    %409 = arith.truncf %408 : vector<1x2x2xf32> to vector<1x2x2xbf16>
    "tpu.trace_start"() <{level = 10 : i32, message = "bij,bjd->bid"}> : () -> ()
    %cst_122 = arith.constant dense<0.000000e+00> : vector<1x2x64xf32>
    %410 = tpu.matmul %409, %395, %cst_122 {dimension_numbers = #tpu.dot_dimension_numbers<[2], [1], [1], [2], [0, 0, 0, 1, 1, 2], [0], [0]>} : vector<1x2x2xbf16>, vector<1x2x64xbf16>, vector<1x2x64xf32> -> vector<1x2x64xf32>
    "tpu.trace_stop"() : () -> ()
    %411 = vector.shape_cast %410 : vector<1x2x64xf32> to vector<2x64xf32>
    %412 = vector.extract_strided_slice %359 {offsets = [0, 128], sizes = [2, 64], strides = [1, 1]} : vector<2x512xf32> to vector<2x64xf32>
    %413 = vector.shape_cast %412 : vector<2x64xf32> to vector<1x2x64xf32>
    %414 = arith.truncf %413 : vector<1x2x64xf32> to vector<1x2x64xbf16>
    %415 = vector.extract_strided_slice %360 {offsets = [0, 128], sizes = [2, 64], strides = [1, 1]} : vector<2x512xf32> to vector<2x64xf32>
    %416 = vector.shape_cast %415 : vector<2x64xf32> to vector<1x2x64xf32>
    %417 = arith.truncf %416 : vector<1x2x64xf32> to vector<1x2x64xbf16>
    %418 = vector.extract_strided_slice %361 {offsets = [0, 128], sizes = [2, 64], strides = [1, 1]} : vector<2x512xf32> to vector<2x64xf32>
    %419 = vector.shape_cast %418 : vector<2x64xf32> to vector<1x2x64xf32>
    %420 = arith.truncf %419 : vector<1x2x64xf32> to vector<1x2x64xbf16>
    "tpu.trace_start"() <{level = 10 : i32, message = "bid,bjd->bij"}> : () -> ()
    %cst_123 = arith.constant dense<0.000000e+00> : vector<1x2x2xf32>
    %421 = tpu.matmul %414, %417, %cst_123 {dimension_numbers = #tpu.dot_dimension_numbers<[2], [2], [1], [1], [0, 0, 0, 1, 1, 1], [0], [0]>} : vector<1x2x64xbf16>, vector<1x2x64xbf16>, vector<1x2x2xf32> -> vector<1x2x2xf32>
    "tpu.trace_stop"() : () -> ()
    %cst_124 = arith.constant 1.250000e-01 : f32
    %422 = vector.broadcast %cst_124 : f32 to vector<1x2x2xf32>
    %423 = arith.mulf %421, %422 : vector<1x2x2xf32>
    %cst_125 = arith.constant dense<0xFF800000> : vector<1x2xf32>
    %424 = vector.multi_reduction <maximumf>, %423, %cst_125 [2] : vector<1x2x2xf32> to vector<1x2xf32>
    %425 = vector.shape_cast %424 : vector<1x2xf32> to vector<1x2x1xf32>
    %426 = vector.broadcast %425 : vector<1x2x1xf32> to vector<1x2x2xf32>
    %427 = arith.subf %423, %426 : vector<1x2x2xf32>
    %428 = math.exp %427 : vector<1x2x2xf32>
    %cst_126 = arith.constant dense<0.000000e+00> : vector<1x2xf32>
    %429 = vector.multi_reduction <add>, %428, %cst_126 [2] : vector<1x2x2xf32> to vector<1x2xf32>
    %430 = vector.shape_cast %429 : vector<1x2xf32> to vector<1x2x1xf32>
    %431 = tpu.reciprocal %430 {approx = true} : vector<1x2x1xf32> -> vector<1x2x1xf32>
    %432 = vector.broadcast %431 : vector<1x2x1xf32> to vector<1x2x2xf32>
    %433 = arith.mulf %428, %432 : vector<1x2x2xf32>
    %434 = arith.truncf %433 : vector<1x2x2xf32> to vector<1x2x2xbf16>
    "tpu.trace_start"() <{level = 10 : i32, message = "bij,bjd->bid"}> : () -> ()
    %cst_127 = arith.constant dense<0.000000e+00> : vector<1x2x64xf32>
    %435 = tpu.matmul %434, %420, %cst_127 {dimension_numbers = #tpu.dot_dimension_numbers<[2], [1], [1], [2], [0, 0, 0, 1, 1, 2], [0], [0]>} : vector<1x2x2xbf16>, vector<1x2x64xbf16>, vector<1x2x64xf32> -> vector<1x2x64xf32>
    "tpu.trace_stop"() : () -> ()
    %436 = vector.shape_cast %435 : vector<1x2x64xf32> to vector<2x64xf32>
    %437 = vector.extract_strided_slice %359 {offsets = [0, 192], sizes = [2, 64], strides = [1, 1]} : vector<2x512xf32> to vector<2x64xf32>
    %438 = vector.shape_cast %437 : vector<2x64xf32> to vector<1x2x64xf32>
    %439 = arith.truncf %438 : vector<1x2x64xf32> to vector<1x2x64xbf16>
    %440 = vector.extract_strided_slice %360 {offsets = [0, 192], sizes = [2, 64], strides = [1, 1]} : vector<2x512xf32> to vector<2x64xf32>
    %441 = vector.shape_cast %440 : vector<2x64xf32> to vector<1x2x64xf32>
    %442 = arith.truncf %441 : vector<1x2x64xf32> to vector<1x2x64xbf16>
    %443 = vector.extract_strided_slice %361 {offsets = [0, 192], sizes = [2, 64], strides = [1, 1]} : vector<2x512xf32> to vector<2x64xf32>
    %444 = vector.shape_cast %443 : vector<2x64xf32> to vector<1x2x64xf32>
    %445 = arith.truncf %444 : vector<1x2x64xf32> to vector<1x2x64xbf16>
    "tpu.trace_start"() <{level = 10 : i32, message = "bid,bjd->bij"}> : () -> ()
    %cst_128 = arith.constant dense<0.000000e+00> : vector<1x2x2xf32>
    %446 = tpu.matmul %439, %442, %cst_128 {dimension_numbers = #tpu.dot_dimension_numbers<[2], [2], [1], [1], [0, 0, 0, 1, 1, 1], [0], [0]>} : vector<1x2x64xbf16>, vector<1x2x64xbf16>, vector<1x2x2xf32> -> vector<1x2x2xf32>
    "tpu.trace_stop"() : () -> ()
    %cst_129 = arith.constant 1.250000e-01 : f32
    %447 = vector.broadcast %cst_129 : f32 to vector<1x2x2xf32>
    %448 = arith.mulf %446, %447 : vector<1x2x2xf32>
    %cst_130 = arith.constant dense<0xFF800000> : vector<1x2xf32>
    %449 = vector.multi_reduction <maximumf>, %448, %cst_130 [2] : vector<1x2x2xf32> to vector<1x2xf32>
    %450 = vector.shape_cast %449 : vector<1x2xf32> to vector<1x2x1xf32>
    %451 = vector.broadcast %450 : vector<1x2x1xf32> to vector<1x2x2xf32>
    %452 = arith.subf %448, %451 : vector<1x2x2xf32>
    %453 = math.exp %452 : vector<1x2x2xf32>
    %cst_131 = arith.constant dense<0.000000e+00> : vector<1x2xf32>
    %454 = vector.multi_reduction <add>, %453, %cst_131 [2] : vector<1x2x2xf32> to vector<1x2xf32>
    %455 = vector.shape_cast %454 : vector<1x2xf32> to vector<1x2x1xf32>
    %456 = tpu.reciprocal %455 {approx = true} : vector<1x2x1xf32> -> vector<1x2x1xf32>
    %457 = vector.broadcast %456 : vector<1x2x1xf32> to vector<1x2x2xf32>
    %458 = arith.mulf %453, %457 : vector<1x2x2xf32>
    %459 = arith.truncf %458 : vector<1x2x2xf32> to vector<1x2x2xbf16>
    "tpu.trace_start"() <{level = 10 : i32, message = "bij,bjd->bid"}> : () -> ()
    %cst_132 = arith.constant dense<0.000000e+00> : vector<1x2x64xf32>
    %460 = tpu.matmul %459, %445, %cst_132 {dimension_numbers = #tpu.dot_dimension_numbers<[2], [1], [1], [2], [0, 0, 0, 1, 1, 2], [0], [0]>} : vector<1x2x2xbf16>, vector<1x2x64xbf16>, vector<1x2x64xf32> -> vector<1x2x64xf32>
    "tpu.trace_stop"() : () -> ()
    %461 = vector.shape_cast %460 : vector<1x2x64xf32> to vector<2x64xf32>
    %462 = vector.extract_strided_slice %359 {offsets = [0, 256], sizes = [2, 64], strides = [1, 1]} : vector<2x512xf32> to vector<2x64xf32>
    %463 = vector.shape_cast %462 : vector<2x64xf32> to vector<1x2x64xf32>
    %464 = arith.truncf %463 : vector<1x2x64xf32> to vector<1x2x64xbf16>
    %465 = vector.extract_strided_slice %360 {offsets = [0, 256], sizes = [2, 64], strides = [1, 1]} : vector<2x512xf32> to vector<2x64xf32>
    %466 = vector.shape_cast %465 : vector<2x64xf32> to vector<1x2x64xf32>
    %467 = arith.truncf %466 : vector<1x2x64xf32> to vector<1x2x64xbf16>
    %468 = vector.extract_strided_slice %361 {offsets = [0, 256], sizes = [2, 64], strides = [1, 1]} : vector<2x512xf32> to vector<2x64xf32>
    %469 = vector.shape_cast %468 : vector<2x64xf32> to vector<1x2x64xf32>
    %470 = arith.truncf %469 : vector<1x2x64xf32> to vector<1x2x64xbf16>
    "tpu.trace_start"() <{level = 10 : i32, message = "bid,bjd->bij"}> : () -> ()
    %cst_133 = arith.constant dense<0.000000e+00> : vector<1x2x2xf32>
    %471 = tpu.matmul %464, %467, %cst_133 {dimension_numbers = #tpu.dot_dimension_numbers<[2], [2], [1], [1], [0, 0, 0, 1, 1, 1], [0], [0]>} : vector<1x2x64xbf16>, vector<1x2x64xbf16>, vector<1x2x2xf32> -> vector<1x2x2xf32>
    "tpu.trace_stop"() : () -> ()
    %cst_134 = arith.constant 1.250000e-01 : f32
    %472 = vector.broadcast %cst_134 : f32 to vector<1x2x2xf32>
    %473 = arith.mulf %471, %472 : vector<1x2x2xf32>
    %cst_135 = arith.constant dense<0xFF800000> : vector<1x2xf32>
    %474 = vector.multi_reduction <maximumf>, %473, %cst_135 [2] : vector<1x2x2xf32> to vector<1x2xf32>
    %475 = vector.shape_cast %474 : vector<1x2xf32> to vector<1x2x1xf32>
    %476 = vector.broadcast %475 : vector<1x2x1xf32> to vector<1x2x2xf32>
    %477 = arith.subf %473, %476 : vector<1x2x2xf32>
    %478 = math.exp %477 : vector<1x2x2xf32>
    %cst_136 = arith.constant dense<0.000000e+00> : vector<1x2xf32>
    %479 = vector.multi_reduction <add>, %478, %cst_136 [2] : vector<1x2x2xf32> to vector<1x2xf32>
    %480 = vector.shape_cast %479 : vector<1x2xf32> to vector<1x2x1xf32>
    %481 = tpu.reciprocal %480 {approx = true} : vector<1x2x1xf32> -> vector<1x2x1xf32>
    %482 = vector.broadcast %481 : vector<1x2x1xf32> to vector<1x2x2xf32>
    %483 = arith.mulf %478, %482 : vector<1x2x2xf32>
    %484 = arith.truncf %483 : vector<1x2x2xf32> to vector<1x2x2xbf16>
    "tpu.trace_start"() <{level = 10 : i32, message = "bij,bjd->bid"}> : () -> ()
    %cst_137 = arith.constant dense<0.000000e+00> : vector<1x2x64xf32>
    %485 = tpu.matmul %484, %470, %cst_137 {dimension_numbers = #tpu.dot_dimension_numbers<[2], [1], [1], [2], [0, 0, 0, 1, 1, 2], [0], [0]>} : vector<1x2x2xbf16>, vector<1x2x64xbf16>, vector<1x2x64xf32> -> vector<1x2x64xf32>
    "tpu.trace_stop"() : () -> ()
    %486 = vector.shape_cast %485 : vector<1x2x64xf32> to vector<2x64xf32>
    %487 = vector.extract_strided_slice %359 {offsets = [0, 320], sizes = [2, 64], strides = [1, 1]} : vector<2x512xf32> to vector<2x64xf32>
    %488 = vector.shape_cast %487 : vector<2x64xf32> to vector<1x2x64xf32>
    %489 = arith.truncf %488 : vector<1x2x64xf32> to vector<1x2x64xbf16>
    %490 = vector.extract_strided_slice %360 {offsets = [0, 320], sizes = [2, 64], strides = [1, 1]} : vector<2x512xf32> to vector<2x64xf32>
    %491 = vector.shape_cast %490 : vector<2x64xf32> to vector<1x2x64xf32>
    %492 = arith.truncf %491 : vector<1x2x64xf32> to vector<1x2x64xbf16>
    %493 = vector.extract_strided_slice %361 {offsets = [0, 320], sizes = [2, 64], strides = [1, 1]} : vector<2x512xf32> to vector<2x64xf32>
    %494 = vector.shape_cast %493 : vector<2x64xf32> to vector<1x2x64xf32>
    %495 = arith.truncf %494 : vector<1x2x64xf32> to vector<1x2x64xbf16>
    "tpu.trace_start"() <{level = 10 : i32, message = "bid,bjd->bij"}> : () -> ()
    %cst_138 = arith.constant dense<0.000000e+00> : vector<1x2x2xf32>
    %496 = tpu.matmul %489, %492, %cst_138 {dimension_numbers = #tpu.dot_dimension_numbers<[2], [2], [1], [1], [0, 0, 0, 1, 1, 1], [0], [0]>} : vector<1x2x64xbf16>, vector<1x2x64xbf16>, vector<1x2x2xf32> -> vector<1x2x2xf32>
    "tpu.trace_stop"() : () -> ()
    %cst_139 = arith.constant 1.250000e-01 : f32
    %497 = vector.broadcast %cst_139 : f32 to vector<1x2x2xf32>
    %498 = arith.mulf %496, %497 : vector<1x2x2xf32>
    %cst_140 = arith.constant dense<0xFF800000> : vector<1x2xf32>
    %499 = vector.multi_reduction <maximumf>, %498, %cst_140 [2] : vector<1x2x2xf32> to vector<1x2xf32>
    %500 = vector.shape_cast %499 : vector<1x2xf32> to vector<1x2x1xf32>
    %501 = vector.broadcast %500 : vector<1x2x1xf32> to vector<1x2x2xf32>
    %502 = arith.subf %498, %501 : vector<1x2x2xf32>
    %503 = math.exp %502 : vector<1x2x2xf32>
    %cst_141 = arith.constant dense<0.000000e+00> : vector<1x2xf32>
    %504 = vector.multi_reduction <add>, %503, %cst_141 [2] : vector<1x2x2xf32> to vector<1x2xf32>
    %505 = vector.shape_cast %504 : vector<1x2xf32> to vector<1x2x1xf32>
    %506 = tpu.reciprocal %505 {approx = true} : vector<1x2x1xf32> -> vector<1x2x1xf32>
    %507 = vector.broadcast %506 : vector<1x2x1xf32> to vector<1x2x2xf32>
    %508 = arith.mulf %503, %507 : vector<1x2x2xf32>
    %509 = arith.truncf %508 : vector<1x2x2xf32> to vector<1x2x2xbf16>
    "tpu.trace_start"() <{level = 10 : i32, message = "bij,bjd->bid"}> : () -> ()
    %cst_142 = arith.constant dense<0.000000e+00> : vector<1x2x64xf32>
    %510 = tpu.matmul %509, %495, %cst_142 {dimension_numbers = #tpu.dot_dimension_numbers<[2], [1], [1], [2], [0, 0, 0, 1, 1, 2], [0], [0]>} : vector<1x2x2xbf16>, vector<1x2x64xbf16>, vector<1x2x64xf32> -> vector<1x2x64xf32>
    "tpu.trace_stop"() : () -> ()
    %511 = vector.shape_cast %510 : vector<1x2x64xf32> to vector<2x64xf32>
    %512 = vector.extract_strided_slice %359 {offsets = [0, 384], sizes = [2, 64], strides = [1, 1]} : vector<2x512xf32> to vector<2x64xf32>
    %513 = vector.shape_cast %512 : vector<2x64xf32> to vector<1x2x64xf32>
    %514 = arith.truncf %513 : vector<1x2x64xf32> to vector<1x2x64xbf16>
    %515 = vector.extract_strided_slice %360 {offsets = [0, 384], sizes = [2, 64], strides = [1, 1]} : vector<2x512xf32> to vector<2x64xf32>
    %516 = vector.shape_cast %515 : vector<2x64xf32> to vector<1x2x64xf32>
    %517 = arith.truncf %516 : vector<1x2x64xf32> to vector<1x2x64xbf16>
    %518 = vector.extract_strided_slice %361 {offsets = [0, 384], sizes = [2, 64], strides = [1, 1]} : vector<2x512xf32> to vector<2x64xf32>
    %519 = vector.shape_cast %518 : vector<2x64xf32> to vector<1x2x64xf32>
    %520 = arith.truncf %519 : vector<1x2x64xf32> to vector<1x2x64xbf16>
    "tpu.trace_start"() <{level = 10 : i32, message = "bid,bjd->bij"}> : () -> ()
    %cst_143 = arith.constant dense<0.000000e+00> : vector<1x2x2xf32>
    %521 = tpu.matmul %514, %517, %cst_143 {dimension_numbers = #tpu.dot_dimension_numbers<[2], [2], [1], [1], [0, 0, 0, 1, 1, 1], [0], [0]>} : vector<1x2x64xbf16>, vector<1x2x64xbf16>, vector<1x2x2xf32> -> vector<1x2x2xf32>
    "tpu.trace_stop"() : () -> ()
    %cst_144 = arith.constant 1.250000e-01 : f32
    %522 = vector.broadcast %cst_144 : f32 to vector<1x2x2xf32>
    %523 = arith.mulf %521, %522 : vector<1x2x2xf32>
    %cst_145 = arith.constant dense<0xFF800000> : vector<1x2xf32>
    %524 = vector.multi_reduction <maximumf>, %523, %cst_145 [2] : vector<1x2x2xf32> to vector<1x2xf32>
    %525 = vector.shape_cast %524 : vector<1x2xf32> to vector<1x2x1xf32>
    %526 = vector.broadcast %525 : vector<1x2x1xf32> to vector<1x2x2xf32>
    %527 = arith.subf %523, %526 : vector<1x2x2xf32>
    %528 = math.exp %527 : vector<1x2x2xf32>
    %cst_146 = arith.constant dense<0.000000e+00> : vector<1x2xf32>
    %529 = vector.multi_reduction <add>, %528, %cst_146 [2] : vector<1x2x2xf32> to vector<1x2xf32>
    %530 = vector.shape_cast %529 : vector<1x2xf32> to vector<1x2x1xf32>
    %531 = tpu.reciprocal %530 {approx = true} : vector<1x2x1xf32> -> vector<1x2x1xf32>
    %532 = vector.broadcast %531 : vector<1x2x1xf32> to vector<1x2x2xf32>
    %533 = arith.mulf %528, %532 : vector<1x2x2xf32>
    %534 = arith.truncf %533 : vector<1x2x2xf32> to vector<1x2x2xbf16>
    "tpu.trace_start"() <{level = 10 : i32, message = "bij,bjd->bid"}> : () -> ()
    %cst_147 = arith.constant dense<0.000000e+00> : vector<1x2x64xf32>
    %535 = tpu.matmul %534, %520, %cst_147 {dimension_numbers = #tpu.dot_dimension_numbers<[2], [1], [1], [2], [0, 0, 0, 1, 1, 2], [0], [0]>} : vector<1x2x2xbf16>, vector<1x2x64xbf16>, vector<1x2x64xf32> -> vector<1x2x64xf32>
    "tpu.trace_stop"() : () -> ()
    %536 = vector.shape_cast %535 : vector<1x2x64xf32> to vector<2x64xf32>
    %537 = vector.extract_strided_slice %359 {offsets = [0, 448], sizes = [2, 64], strides = [1, 1]} : vector<2x512xf32> to vector<2x64xf32>
    %538 = vector.shape_cast %537 : vector<2x64xf32> to vector<1x2x64xf32>
    %539 = arith.truncf %538 : vector<1x2x64xf32> to vector<1x2x64xbf16>
    %540 = vector.extract_strided_slice %360 {offsets = [0, 448], sizes = [2, 64], strides = [1, 1]} : vector<2x512xf32> to vector<2x64xf32>
    %541 = vector.shape_cast %540 : vector<2x64xf32> to vector<1x2x64xf32>
    %542 = arith.truncf %541 : vector<1x2x64xf32> to vector<1x2x64xbf16>
    %543 = vector.extract_strided_slice %361 {offsets = [0, 448], sizes = [2, 64], strides = [1, 1]} : vector<2x512xf32> to vector<2x64xf32>
    %544 = vector.shape_cast %543 : vector<2x64xf32> to vector<1x2x64xf32>
    %545 = arith.truncf %544 : vector<1x2x64xf32> to vector<1x2x64xbf16>
    "tpu.trace_start"() <{level = 10 : i32, message = "bid,bjd->bij"}> : () -> ()
    %cst_148 = arith.constant dense<0.000000e+00> : vector<1x2x2xf32>
    %546 = tpu.matmul %539, %542, %cst_148 {dimension_numbers = #tpu.dot_dimension_numbers<[2], [2], [1], [1], [0, 0, 0, 1, 1, 1], [0], [0]>} : vector<1x2x64xbf16>, vector<1x2x64xbf16>, vector<1x2x2xf32> -> vector<1x2x2xf32>
    "tpu.trace_stop"() : () -> ()
    %cst_149 = arith.constant 1.250000e-01 : f32
    %547 = vector.broadcast %cst_149 : f32 to vector<1x2x2xf32>
    %548 = arith.mulf %546, %547 : vector<1x2x2xf32>
    %cst_150 = arith.constant dense<0xFF800000> : vector<1x2xf32>
    %549 = vector.multi_reduction <maximumf>, %548, %cst_150 [2] : vector<1x2x2xf32> to vector<1x2xf32>
    %550 = vector.shape_cast %549 : vector<1x2xf32> to vector<1x2x1xf32>
    %551 = vector.broadcast %550 : vector<1x2x1xf32> to vector<1x2x2xf32>
    %552 = arith.subf %548, %551 : vector<1x2x2xf32>
    %553 = math.exp %552 : vector<1x2x2xf32>
    %cst_151 = arith.constant dense<0.000000e+00> : vector<1x2xf32>
    %554 = vector.multi_reduction <add>, %553, %cst_151 [2] : vector<1x2x2xf32> to vector<1x2xf32>
    %555 = vector.shape_cast %554 : vector<1x2xf32> to vector<1x2x1xf32>
    %556 = tpu.reciprocal %555 {approx = true} : vector<1x2x1xf32> -> vector<1x2x1xf32>
    %557 = vector.broadcast %556 : vector<1x2x1xf32> to vector<1x2x2xf32>
    %558 = arith.mulf %553, %557 : vector<1x2x2xf32>
    %559 = arith.truncf %558 : vector<1x2x2xf32> to vector<1x2x2xbf16>
    "tpu.trace_start"() <{level = 10 : i32, message = "bij,bjd->bid"}> : () -> ()
    %cst_152 = arith.constant dense<0.000000e+00> : vector<1x2x64xf32>
    %560 = tpu.matmul %559, %545, %cst_152 {dimension_numbers = #tpu.dot_dimension_numbers<[2], [1], [1], [2], [0, 0, 0, 1, 1, 2], [0], [0]>} : vector<1x2x2xbf16>, vector<1x2x64xbf16>, vector<1x2x64xf32> -> vector<1x2x64xf32>
    "tpu.trace_stop"() : () -> ()
    %561 = vector.shape_cast %560 : vector<1x2x64xf32> to vector<2x64xf32>
    %562 = tpu.concatenate %386, %411, %436, %461, %486, %511, %536, %561 in 1 : vector<2x64xf32>, vector<2x64xf32>, vector<2x64xf32>, vector<2x64xf32>, vector<2x64xf32>, vector<2x64xf32>, vector<2x64xf32>, vector<2x64xf32> -> vector<2x512xf32>
    %563 = arith.truncf %562 : vector<2x512xf32> to vector<2x512xbf16>
    %cst_153 = arith.constant dense<0.000000e+00> : vector<2x256xf32>
    %564 = tpu.matmul %563, %332, %cst_153 {dimension_numbers = #tpu.dot_dimension_numbers<[1], [0], [0], [1], [0, 0, 1, 1], [], []>} : vector<2x512xbf16>, vector<512x256xbf16>, vector<2x256xf32> -> vector<2x256xf32>
    %565 = vector.broadcast %334 : vector<1x256xf32> to vector<2x256xf32>
    %566 = arith.addf %564, %565 : vector<2x256xf32>
    %567 = arith.addf %356, %566 : vector<2x256xf32>
    %c0_154 = arith.constant 0 : index
    %c0_155 = arith.constant 0 : index
    %c0_156 = arith.constant 0 : index
    %568 = vector.load %arg18[%c0_154, %c0_155, %c0_156] : memref<1x1x256xf32, #tpu.memory_space<vmem>>, vector<1x1x256xf32>
    %569 = vector.shape_cast %568 : vector<1x1x256xf32> to vector<1x256xf32>
    %c0_157 = arith.constant 0 : index
    %c0_158 = arith.constant 0 : index
    %c0_159 = arith.constant 0 : index
    %570 = vector.load %arg19[%c0_157, %c0_158, %c0_159] : memref<1x1x256xf32, #tpu.memory_space<vmem>>, vector<1x1x256xf32>
    %571 = vector.shape_cast %570 : vector<1x1x256xf32> to vector<1x256xf32>
    %c0_160 = arith.constant 0 : index
    %c0_161 = arith.constant 0 : index
    %c0_162 = arith.constant 0 : index
    %572 = vector.load %arg20[%c0_160, %c0_161, %c0_162] : memref<1x256x2048xbf16, #tpu.memory_space<vmem>>, vector<1x256x2048xbf16>
    %573 = vector.shape_cast %572 : vector<1x256x2048xbf16> to vector<256x2048xbf16>
    %c0_163 = arith.constant 0 : index
    %c0_164 = arith.constant 0 : index
    %c0_165 = arith.constant 0 : index
    %574 = vector.load %arg21[%c0_163, %c0_164, %c0_165] : memref<1x1x2048xf32, #tpu.memory_space<vmem>>, vector<1x1x2048xf32>
    %575 = vector.shape_cast %574 : vector<1x1x2048xf32> to vector<1x2048xf32>
    %c0_166 = arith.constant 0 : index
    %c0_167 = arith.constant 0 : index
    %c0_168 = arith.constant 0 : index
    %576 = vector.load %arg22[%c0_166, %c0_167, %c0_168] : memref<1x1024x256xbf16, #tpu.memory_space<vmem>>, vector<1x1024x256xbf16>
    %577 = vector.shape_cast %576 : vector<1x1024x256xbf16> to vector<1024x256xbf16>
    %c0_169 = arith.constant 0 : index
    %c0_170 = arith.constant 0 : index
    %c0_171 = arith.constant 0 : index
    %578 = vector.load %arg23[%c0_169, %c0_170, %c0_171] : memref<1x1x256xf32, #tpu.memory_space<vmem>>, vector<1x1x256xf32>
    %579 = vector.shape_cast %578 : vector<1x1x256xf32> to vector<1x256xf32>
    %cst_172 = arith.constant dense<0.000000e+00> : vector<2xf32>
    %580 = vector.multi_reduction <add>, %567, %cst_172 [1] : vector<2x256xf32> to vector<2xf32>
    %581 = vector.shape_cast %580 : vector<2xf32> to vector<2x1xf32>
    %cst_173 = arith.constant 2.560000e+02 : f32
    %582 = vector.broadcast %cst_173 : f32 to vector<2x1xf32>
    %583 = arith.divf %581, %582 : vector<2x1xf32>
    %584 = vector.broadcast %583 : vector<2x1xf32> to vector<2x256xf32>
    %585 = arith.subf %567, %584 : vector<2x256xf32>
    %586 = arith.mulf %585, %585 : vector<2x256xf32>
    %cst_174 = arith.constant dense<0.000000e+00> : vector<2xf32>
    %587 = vector.multi_reduction <add>, %586, %cst_174 [1] : vector<2x256xf32> to vector<2xf32>
    %588 = vector.shape_cast %587 : vector<2xf32> to vector<2x1xf32>
    %cst_175 = arith.constant 2.560000e+02 : f32
    %589 = vector.broadcast %cst_175 : f32 to vector<2x1xf32>
    %590 = arith.divf %588, %589 : vector<2x1xf32>
    %591 = vector.broadcast %583 : vector<2x1xf32> to vector<2x256xf32>
    %592 = arith.subf %567, %591 : vector<2x256xf32>
    %cst_176 = arith.constant 9.99999974E-6 : f32
    %593 = vector.broadcast %cst_176 : f32 to vector<2x1xf32>
    %594 = arith.addf %590, %593 : vector<2x1xf32>
    %595 = math.rsqrt %594 : vector<2x1xf32>
    %596 = vector.broadcast %595 : vector<2x1xf32> to vector<2x256xf32>
    %597 = arith.mulf %592, %596 : vector<2x256xf32>
    %598 = vector.broadcast %569 : vector<1x256xf32> to vector<2x256xf32>
    %599 = arith.mulf %597, %598 : vector<2x256xf32>
    %600 = vector.broadcast %571 : vector<1x256xf32> to vector<2x256xf32>
    %601 = arith.addf %599, %600 : vector<2x256xf32>
    %602 = arith.truncf %601 : vector<2x256xf32> to vector<2x256xbf16>
    %cst_177 = arith.constant dense<0.000000e+00> : vector<2x2048xf32>
    %603 = tpu.matmul %602, %573, %cst_177 {dimension_numbers = #tpu.dot_dimension_numbers<[1], [0], [0], [1], [0, 0, 1, 1], [], []>} : vector<2x256xbf16>, vector<256x2048xbf16>, vector<2x2048xf32> -> vector<2x2048xf32>
    %604 = vector.broadcast %575 : vector<1x2048xf32> to vector<2x2048xf32>
    %605 = arith.addf %603, %604 : vector<2x2048xf32>
    %606 = vector.extract_strided_slice %605 {offsets = [0, 0], sizes = [2, 1024], strides = [1, 1]} : vector<2x2048xf32> to vector<2x1024xf32>
    %607 = vector.extract_strided_slice %605 {offsets = [0, 1024], sizes = [2, 1024], strides = [1, 1]} : vector<2x2048xf32> to vector<2x1024xf32>
    %cst_178 = arith.constant 5.000000e-01 : f32
    %608 = vector.broadcast %cst_178 : f32 to vector<2x1024xf32>
    %609 = arith.mulf %608, %607 : vector<2x1024xf32>
    %cst_179 = arith.constant 4.471500e-02 : f32
    %610 = vector.broadcast %cst_179 : f32 to vector<2x1024xf32>
    %611 = arith.mulf %610, %607 : vector<2x1024xf32>
    %612 = arith.mulf %611, %607 : vector<2x1024xf32>
    %613 = arith.mulf %612, %607 : vector<2x1024xf32>
    %614 = arith.addf %607, %613 : vector<2x1024xf32>
    %cst_180 = arith.constant 0.797884583 : f32
    %615 = vector.broadcast %cst_180 : f32 to vector<2x1024xf32>
    %616 = arith.mulf %615, %614 : vector<2x1024xf32>
    %617 = math.tanh %616 : vector<2x1024xf32>
    %cst_181 = arith.constant 1.000000e+00 : f32
    %618 = vector.broadcast %cst_181 : f32 to vector<2x1024xf32>
    %619 = arith.addf %618, %617 : vector<2x1024xf32>
    %620 = arith.mulf %609, %619 : vector<2x1024xf32>
    %621 = arith.mulf %606, %620 : vector<2x1024xf32>
    %622 = arith.truncf %621 : vector<2x1024xf32> to vector<2x1024xbf16>
    %cst_182 = arith.constant dense<0.000000e+00> : vector<2x256xf32>
    %623 = tpu.matmul %622, %577, %cst_182 {dimension_numbers = #tpu.dot_dimension_numbers<[1], [0], [0], [1], [0, 0, 1, 1], [], []>} : vector<2x1024xbf16>, vector<1024x256xbf16>, vector<2x256xf32> -> vector<2x256xf32>
    %624 = vector.broadcast %579 : vector<1x256xf32> to vector<2x256xf32>
    %625 = arith.addf %623, %624 : vector<2x256xf32>
    %626 = arith.addf %601, %625 : vector<2x256xf32>
    %627 = vector.extract_strided_slice %626 {offsets = [0, 0], sizes = [1, 32], strides = [1, 1]} : vector<2x256xf32> to vector<1x32xf32>
    %628 = vector.extract_strided_slice %626 {offsets = [0, 32], sizes = [1, 32], strides = [1, 1]} : vector<2x256xf32> to vector<1x32xf32>
    %629 = vector.extract_strided_slice %626 {offsets = [0, 64], sizes = [1, 32], strides = [1, 1]} : vector<2x256xf32> to vector<1x32xf32>
    %630 = vector.extract_strided_slice %626 {offsets = [0, 96], sizes = [1, 32], strides = [1, 1]} : vector<2x256xf32> to vector<1x32xf32>
    %631 = vector.extract_strided_slice %626 {offsets = [0, 128], sizes = [1, 32], strides = [1, 1]} : vector<2x256xf32> to vector<1x32xf32>
    %632 = vector.extract_strided_slice %626 {offsets = [0, 160], sizes = [1, 32], strides = [1, 1]} : vector<2x256xf32> to vector<1x32xf32>
    %633 = vector.extract_strided_slice %626 {offsets = [0, 192], sizes = [1, 32], strides = [1, 1]} : vector<2x256xf32> to vector<1x32xf32>
    %634 = vector.extract_strided_slice %626 {offsets = [0, 224], sizes = [1, 32], strides = [1, 1]} : vector<2x256xf32> to vector<1x32xf32>
    %635 = vector.extract_strided_slice %626 {offsets = [1, 0], sizes = [1, 32], strides = [1, 1]} : vector<2x256xf32> to vector<1x32xf32>
    %636 = vector.extract_strided_slice %626 {offsets = [1, 32], sizes = [1, 32], strides = [1, 1]} : vector<2x256xf32> to vector<1x32xf32>
    %637 = vector.extract_strided_slice %626 {offsets = [1, 64], sizes = [1, 32], strides = [1, 1]} : vector<2x256xf32> to vector<1x32xf32>
    %638 = vector.extract_strided_slice %626 {offsets = [1, 96], sizes = [1, 32], strides = [1, 1]} : vector<2x256xf32> to vector<1x32xf32>
    %639 = vector.extract_strided_slice %626 {offsets = [1, 128], sizes = [1, 32], strides = [1, 1]} : vector<2x256xf32> to vector<1x32xf32>
    %640 = vector.extract_strided_slice %626 {offsets = [1, 160], sizes = [1, 32], strides = [1, 1]} : vector<2x256xf32> to vector<1x32xf32>
    %641 = vector.extract_strided_slice %626 {offsets = [1, 192], sizes = [1, 32], strides = [1, 1]} : vector<2x256xf32> to vector<1x32xf32>
    %642 = vector.extract_strided_slice %626 {offsets = [1, 224], sizes = [1, 32], strides = [1, 1]} : vector<2x256xf32> to vector<1x32xf32>
    %643 = tpu.concatenate %627, %628, %629, %630, %631, %632, %633, %634, %635, %636, %637, %638, %639, %640, %641, %642 in 0 : vector<1x32xf32>, vector<1x32xf32>, vector<1x32xf32>, vector<1x32xf32>, vector<1x32xf32>, vector<1x32xf32>, vector<1x32xf32>, vector<1x32xf32>, vector<1x32xf32>, vector<1x32xf32>, vector<1x32xf32>, vector<1x32xf32>, vector<1x32xf32>, vector<1x32xf32>, vector<1x32xf32>, vector<1x32xf32> -> vector<16x32xf32>
    %c0_183 = arith.constant 0 : index
    %c0_184 = arith.constant 0 : index
    %644 = vector.load %arg25[%c0_183, %c0_184] : memref<16x32xf32, #tpu.memory_space<vmem>>, vector<16x32xf32>
    tpu.vector_store %arg25[%c0_183, %c0_184], %643 {strides = array<i32>} : memref<16x32xf32, #tpu.memory_space<vmem>>, vector<16x32xf32>,
    %c1_i32 = arith.constant 1 : i32
    %645 = arith.cmpi eq, %arg0, %c1_i32 : i32
    %646 = arith.extui %645 : i1 to i32
    %c0_i32_185 = arith.constant 0 : i32
    %647 = arith.cmpi ne, %646, %c0_i32_185 : i32
    scf.if %647 {
      %648 = vector.shape_cast %643 : vector<16x32xf32> to vector<2x8x32xf32>
      %c0_186 = arith.constant 0 : index
      %c0_187 = arith.constant 0 : index
      %c0_188 = arith.constant 0 : index
      %649 = vector.load %arg24[%c0_186, %c0_187, %c0_188] : memref<2x8x32xf32, #tpu.memory_space<vmem>>, vector<2x8x32xf32>
      tpu.vector_store %arg24[%c0_186, %c0_187, %c0_188], %648 {strides = array<i32>} : memref<2x8x32xf32, #tpu.memory_space<vmem>>, vector<2x8x32xf32>,
    } else {
    }
    return
  }
  func.func @transform_0(%arg0: i32) -> (i32, i32, i32) {
    %c0_i32 = arith.constant 0 : i32
    %c0_i32_0 = arith.constant 0 : i32
    %c0_i32_1 = arith.constant 0 : i32
    %c0_i32_2 = arith.constant 0 : i32
    return %c0_i32, %c0_i32_0, %c0_i32_1 : i32, i32, i32
  }
  func.func @transform_1(%arg0: i32) -> (i32, i32, i32) {
    %c0_i32 = arith.constant 0 : i32
    %c0_i32_0 = arith.constant 0 : i32
    %c0_i32_1 = arith.constant 0 : i32
    return %arg0, %c0_i32, %c0_i32_0 : i32, i32, i32
  }
  func.func @transform_2(%arg0: i32) -> (i32, i32, i32) {
    %c0_i32 = arith.constant 0 : i32
    %c0_i32_0 = arith.constant 0 : i32
    %c0_i32_1 = arith.constant 0 : i32
    return %arg0, %c0_i32, %c0_i32_0 : i32, i32, i32
  }
  func.func @transform_3(%arg0: i32) -> (i32, i32, i32) {
    %c0_i32 = arith.constant 0 : i32
    %c0_i32_0 = arith.constant 0 : i32
    %c0_i32_1 = arith.constant 0 : i32
    return %arg0, %c0_i32, %c0_i32_0 : i32, i32, i32
  }
  func.func @transform_4(%arg0: i32) -> (i32, i32, i32) {
    %c0_i32 = arith.constant 0 : i32
    %c0_i32_0 = arith.constant 0 : i32
    %c0_i32_1 = arith.constant 0 : i32
    return %arg0, %c0_i32, %c0_i32_0 : i32, i32, i32
  }
  func.func @transform_5(%arg0: i32) -> (i32, i32, i32) {
    %c0_i32 = arith.constant 0 : i32
    %c0_i32_0 = arith.constant 0 : i32
    %c0_i32_1 = arith.constant 0 : i32
    return %arg0, %c0_i32, %c0_i32_0 : i32, i32, i32
  }
  func.func @transform_6(%arg0: i32) -> (i32, i32, i32) {
    %c0_i32 = arith.constant 0 : i32
    %c0_i32_0 = arith.constant 0 : i32
    %c0_i32_1 = arith.constant 0 : i32
    return %arg0, %c0_i32, %c0_i32_0 : i32, i32, i32
  }
  func.func @transform_7(%arg0: i32) -> (i32, i32, i32) {
    %c0_i32 = arith.constant 0 : i32
    %c0_i32_0 = arith.constant 0 : i32
    %c0_i32_1 = arith.constant 0 : i32
    return %arg0, %c0_i32, %c0_i32_0 : i32, i32, i32
  }
  func.func @transform_8(%arg0: i32) -> (i32, i32, i32) {
    %c0_i32 = arith.constant 0 : i32
    %c0_i32_0 = arith.constant 0 : i32
    %c0_i32_1 = arith.constant 0 : i32
    return %arg0, %c0_i32, %c0_i32_0 : i32, i32, i32
  }
  func.func @transform_9(%arg0: i32) -> (i32, i32, i32) {
    %c0_i32 = arith.constant 0 : i32
    %c0_i32_0 = arith.constant 0 : i32
    %c0_i32_1 = arith.constant 0 : i32
    return %arg0, %c0_i32, %c0_i32_0 : i32, i32, i32
  }
  func.func @transform_10(%arg0: i32) -> (i32, i32, i32) {
    %c0_i32 = arith.constant 0 : i32
    %c0_i32_0 = arith.constant 0 : i32
    %c0_i32_1 = arith.constant 0 : i32
    return %arg0, %c0_i32, %c0_i32_0 : i32, i32, i32
  }
  func.func @transform_11(%arg0: i32) -> (i32, i32, i32) {
    %c0_i32 = arith.constant 0 : i32
    %c0_i32_0 = arith.constant 0 : i32
    %c0_i32_1 = arith.constant 0 : i32
    return %arg0, %c0_i32, %c0_i32_0 : i32, i32, i32
  }
  func.func @transform_12(%arg0: i32) -> (i32, i32, i32) {
    %c0_i32 = arith.constant 0 : i32
    %c0_i32_0 = arith.constant 0 : i32
    %c0_i32_1 = arith.constant 0 : i32
    return %arg0, %c0_i32, %c0_i32_0 : i32, i32, i32
  }
  func.func @transform_13(%arg0: i32) -> (i32, i32, i32) {
    %c0_i32 = arith.constant 0 : i32
    %c0_i32_0 = arith.constant 0 : i32
    %c0_i32_1 = arith.constant 0 : i32
    return %arg0, %c0_i32, %c0_i32_0 : i32, i32, i32
  }
  func.func @transform_14(%arg0: i32) -> (i32, i32, i32) {
    %c0_i32 = arith.constant 0 : i32
    %c0_i32_0 = arith.constant 0 : i32
    %c0_i32_1 = arith.constant 0 : i32
    return %arg0, %c0_i32, %c0_i32_0 : i32, i32, i32
  }
  func.func @transform_15(%arg0: i32) -> (i32, i32, i32) {
    %c0_i32 = arith.constant 0 : i32
    %c0_i32_0 = arith.constant 0 : i32
    %c0_i32_1 = arith.constant 0 : i32
    return %arg0, %c0_i32, %c0_i32_0 : i32, i32, i32
  }
  func.func @transform_16(%arg0: i32) -> (i32, i32, i32) {
    %c0_i32 = arith.constant 0 : i32
    %c0_i32_0 = arith.constant 0 : i32
    %c0_i32_1 = arith.constant 0 : i32
    return %arg0, %c0_i32, %c0_i32_0 : i32, i32, i32
  }
  func.func @transform_17(%arg0: i32) -> (i32, i32, i32) {
    %c0_i32 = arith.constant 0 : i32
    %c0_i32_0 = arith.constant 0 : i32
    %c0_i32_1 = arith.constant 0 : i32
    return %arg0, %c0_i32, %c0_i32_0 : i32, i32, i32
  }
  func.func @transform_18(%arg0: i32) -> (i32, i32, i32) {
    %c0_i32 = arith.constant 0 : i32
    %c0_i32_0 = arith.constant 0 : i32
    %c0_i32_1 = arith.constant 0 : i32
    return %arg0, %c0_i32, %c0_i32_0 : i32, i32, i32
  }
  func.func @transform_19(%arg0: i32) -> (i32, i32, i32) {
    %c0_i32 = arith.constant 0 : i32
    %c0_i32_0 = arith.constant 0 : i32
    %c0_i32_1 = arith.constant 0 : i32
    return %arg0, %c0_i32, %c0_i32_0 : i32, i32, i32
  }
  func.func @transform_20(%arg0: i32) -> (i32, i32, i32) {
    %c0_i32 = arith.constant 0 : i32
    %c0_i32_0 = arith.constant 0 : i32
    %c0_i32_1 = arith.constant 0 : i32
    return %arg0, %c0_i32, %c0_i32_0 : i32, i32, i32
  }
  func.func @transform_21(%arg0: i32) -> (i32, i32, i32) {
    %c0_i32 = arith.constant 0 : i32
    %c0_i32_0 = arith.constant 0 : i32
    %c0_i32_1 = arith.constant 0 : i32
    return %arg0, %c0_i32, %c0_i32_0 : i32, i32, i32
  }
  func.func @transform_22(%arg0: i32) -> (i32, i32, i32) {
    %c0_i32 = arith.constant 0 : i32
    %c0_i32_0 = arith.constant 0 : i32
    %c0_i32_1 = arith.constant 0 : i32
    return %arg0, %c0_i32, %c0_i32_0 : i32, i32, i32
  }
  func.func @transform_23(%arg0: i32) -> (i32, i32, i32) {
    %c0_i32 = arith.constant 0 : i32
    %c0_i32_0 = arith.constant 0 : i32
    %c0_i32_1 = arith.constant 0 : i32
    %c0_i32_2 = arith.constant 0 : i32
    return %c0_i32, %c0_i32_0, %c0_i32_1 : i32, i32, i32
  }
}

</mosaic_0001>

<llo_original>
// kernel: rowcol_transformer_forward.1
$region0: #{rowcol_transformer_forward.1}
  #allocation0 [shape = 'u32[]', space=smem, size = 0x4, offset = 0x4, fixed_abs, tag = 'smem constant byte address 0x4 - core index']
  #allocation1 [shape = 'u32[144,128]{1,0:T(1,128)}', space=vmem, size = 0x12000, scoped, tag = 'internal scratch']
  #allocation2 [shape = 'f32[16,32]{1,0:T(8,128)}', space=vmem, size = 0x2000, scoped, tag = 'scratch operand']
  %s0 = inlined_call_operand.hbm [shape: f32[2,8,32], index: 0, kind: input, shape index: {}]
  %s1 = inlined_call_operand.hbm [shape: f32[2,1,32], index: 1, kind: input, shape index: {}]
  %s2 = inlined_call_operand.hbm [shape: f32[2,1,32], index: 2, kind: input, shape index: {}]
  %s3 = inlined_call_operand.hbm [shape: bf16[2,32,384], index: 3, kind: input, shape index: {}]
  %s4 = inlined_call_operand.vmem [shape: bf16[2,128,32], index: 4, kind: input, shape index: {}]
  %s5 = inlined_call_operand.hbm [shape: f32[2,1,32], index: 5, kind: input, shape index: {}]
  %s6 = inlined_call_operand.hbm [shape: f32[2,1,32], index: 6, kind: input, shape index: {}]
  %s7 = inlined_call_operand.hbm [shape: f32[2,1,32], index: 7, kind: input, shape index: {}]
  %s8 = inlined_call_operand.hbm [shape: bf16[2,32,256], index: 8, kind: input, shape index: {}]
  %s9 = inlined_call_operand.hbm [shape: f32[2,1,256], index: 9, kind: input, shape index: {}]
  %s10 = inlined_call_operand.vmem [shape: bf16[2,128,32], index: 10, kind: input, shape index: {}]
  %s11 = inlined_call_operand.hbm [shape: f32[2,1,32], index: 11, kind: input, shape index: {}]
  %s12 = inlined_call_operand.hbm [shape: f32[2,1,256], index: 12, kind: input, shape index: {}]
  %s13 = inlined_call_operand.hbm [shape: f32[2,1,256], index: 13, kind: input, shape index: {}]
  %s14 = inlined_call_operand.hbm [shape: bf16[2,256,1536], index: 14, kind: input, shape index: {}]
  %s15 = inlined_call_operand.hbm [shape: bf16[2,512,256], index: 15, kind: input, shape index: {}]
  %s16 = inlined_call_operand.hbm [shape: f32[2,1,256], index: 16, kind: input, shape index: {}]
  %s17 = inlined_call_operand.hbm [shape: f32[2,1,256], index: 17, kind: input, shape index: {}]
  %s18 = inlined_call_operand.hbm [shape: f32[2,1,256], index: 18, kind: input, shape index: {}]
  %s19 = inlined_call_operand.hbm [shape: bf16[2,256,2048], index: 19, kind: input, shape index: {}]
  %s20 = inlined_call_operand.hbm [shape: f32[2,1,2048], index: 20, kind: input, shape index: {}]
  %s21 = inlined_call_operand.hbm [shape: bf16[2,1024,256], index: 21, kind: input, shape index: {}]
  %s22 = inlined_call_operand.hbm [shape: f32[2,1,256], index: 22, kind: input, shape index: {}]
  %s23 = inlined_call_operand.hbm [shape: f32[2,8,32], index: 23, kind: output, shape index: {}]
  %s24 = sld [smem:[#allocation0]]
  $region217: #{rowcol_transformer_forward.1} parent=0
    _
  %s26 = ssub.s32 1, %s24
  %s27 = scalar_select 0, %s26, %s24
  $region1: #{rowcol_transformer_forward.1} parent=0
    #allocation3 [shape = 'u8[8192]{0}', space=vmem, size = 0x2000, scoped, tag = 'input window, operand 0, single buffered']
    #allocation4 [shape = 's32[2]{0}', space=sflag, size = 0x8, scoped, tag = 'scoped memory for rowcol_transformer_forward.1']
    #allocation5 [shape = 's32[2]{0}', space=sflag, size = 0x8, scoped, tag = 'scoped memory for rowcol_transformer_forward.1']
    #allocation6 [shape = 'u8[1024]{0}', space=vmem, size = 0x400, scoped, tag = 'input window, operand 1']
    #allocation7 [shape = 's32[2]{0}', space=sflag, size = 0x8, scoped, tag = 'scoped memory for rowcol_transformer_forward.1']
    #allocation8 [shape = 'u8[1024]{0}', space=vmem, size = 0x400, scoped, tag = 'input window, operand 2']
    #allocation9 [shape = 'u8[49152]{0}', space=vmem, size = 0xc000, scoped, tag = 'input window, operand 3']
    #allocation10 [shape = 's32[2]{0}', space=sflag, size = 0x8, scoped, tag = 'scoped memory for rowcol_transformer_forward.1']
    #allocation11 [shape = 'u8[1024]{0}', space=vmem, size = 0x400, scoped, tag = 'input window, operand 5']
    #allocation12 [shape = 'u8[1024]{0}', space=vmem, size = 0x400, scoped, tag = 'input window, operand 6']
    #allocation13 [shape = 's32[2]{0}', space=sflag, size = 0x8, scoped, tag = 'scoped memory for rowcol_transformer_forward.1']
    #allocation14 [shape = 'u8[1024]{0}', space=vmem, size = 0x400, scoped, tag = 'input window, operand 7']
    #allocation15 [shape = 'u8[32768]{0}', space=vmem, size = 0x8000, scoped, tag = 'input window, operand 8']
    #allocation16 [shape = 's32[2]{0}', space=sflag, size = 0x8, scoped, tag = 'scoped memory for rowcol_transformer_forward.1']
    #allocation17 [shape = 'u8[2048]{0}', space=vmem, size = 0x800, scoped, tag = 'input window, operand 9']
    #allocation18 [shape = 'u8[1024]{0}', space=vmem, size = 0x400, scoped, tag = 'input window, operand 11']
    #allocation19 [shape = 's32[2]{0}', space=sflag, size = 0x8, scoped, tag = 'scoped memory for rowcol_transformer_forward.1']
    #allocation20 [shape = 'u8[2048]{0}', space=vmem, size = 0x800, scoped, tag = 'input window, operand 12']
    #allocation21 [shape = 'u8[2048]{0}', space=vmem, size = 0x800, scoped, tag = 'input window, operand 13']
    #allocation22 [shape = 's32[2]{0}', space=sflag, size = 0x8, scoped, tag = 'scoped memory for rowcol_transformer_forward.1']
    #allocation23 [shape = 'u8[1572864]{0}', space=vmem, size = 0x180000, scoped, tag = 'input window, operand 14']
    #allocation24 [shape = 'u8[524288]{0}', space=vmem, size = 0x80000, scoped, tag = 'input window, operand 15']
    #allocation25 [shape = 's32[2]{0}', space=sflag, size = 0x8, scoped, tag = 'scoped memory for rowcol_transformer_forward.1']
    #allocation26 [shape = 'u8[2048]{0}', space=vmem, size = 0x800, scoped, tag = 'input window, operand 16']
    #allocation27 [shape = 'u8[2048]{0}', space=vmem, size = 0x800, scoped, tag = 'input window, operand 17']
    #allocation28 [shape = 's32[2]{0}', space=sflag, size = 0x8, scoped, tag = 'scoped memory for rowcol_transformer_forward.1']
    #allocation29 [shape = 'u8[2048]{0}', space=vmem, size = 0x800, scoped, tag = 'input window, operand 18']
    #allocation30 [shape = 'u8[2097152]{0}', space=vmem, size = 0x200000, scoped, tag = 'input window, operand 19']
    #allocation31 [shape = 's32[2]{0}', space=sflag, size = 0x8, scoped, tag = 'scoped memory for rowcol_transformer_forward.1']
    #allocation32 [shape = 'u8[16384]{0}', space=vmem, size = 0x4000, scoped, tag = 'input window, operand 20']
    #allocation33 [shape = 'u8[1048576]{0}', space=vmem, size = 0x100000, scoped, tag = 'input window, operand 21']
    #allocation34 [shape = 's32[2]{0}', space=sflag, size = 0x8, scoped, tag = 'scoped memory for rowcol_transformer_forward.1']
    #allocation35 [shape = 'u8[2048]{0}', space=vmem, size = 0x800, scoped, tag = 'input window, operand 22']
    #allocation36 [shape = 'u8[8192]{0}', space=vmem, size = 0x2000, scoped, tag = 'output window, operand 0, single buffered']
    %28 = vsyncpa [#allocation4], 0
    %29 = vsyncpa [#allocation7], 0
    %s30 = scalar_lea.sflag [#allocation7], 1
    %31 = vsyncpa %s30, 0
    %32 = vsyncpa [#allocation10], 0
    %s33 = scalar_lea.sflag [#allocation10], 1
    %34 = vsyncpa %s33, 0
    %35 = vsyncpa [#allocation13], 0
    %s36 = scalar_lea.sflag [#allocation13], 1
    %37 = vsyncpa %s36, 0
    %38 = vsyncpa [#allocation16], 0
    %s39 = scalar_lea.sflag [#allocation16], 1
    %40 = vsyncpa %s39, 0
    %41 = vsyncpa [#allocation19], 0
    %s42 = scalar_lea.sflag [#allocation19], 1
    %43 = vsyncpa %s42, 0
    %44 = vsyncpa [#allocation22], 0
    %s45 = scalar_lea.sflag [#allocation22], 1
    %46 = vsyncpa %s45, 0
    %47 = vsyncpa [#allocation25], 0
    %s48 = scalar_lea.sflag [#allocation25], 1
    %49 = vsyncpa %s48, 0
    %50 = vsyncpa [#allocation28], 0
    %s51 = scalar_lea.sflag [#allocation28], 1
    %52 = vsyncpa %s51, 0
    %53 = vsyncpa [#allocation31], 0
    %s54 = scalar_lea.sflag [#allocation31], 1
    %55 = vsyncpa %s54, 0
    %56 = vsyncpa [#allocation34], 0
    %s57 = scalar_lea.sflag [#allocation34], 1
    %58 = vsyncpa %s57, 0
    %59 = vsyncpa [#allocation5], 0
    loop: start=0, step=1, limit=4
    $region2: #{rowcol_transformer_forward.1} parent=1 // loop_pre_header
      _
    $region3: #{rowcol_transformer_forward.1} parent=1 // loop_header
      %s61 = sphi 0, %s65
      %p62 = scmp.ge.s32.totalorder %s61, 4
      %s69 = sphi 0, %s69
      %s71 = sphi 0, %s69
      %s72 = sphi 0, %s71
      %s86 = sphi 0, %s72
      %s92 = sphi 0, %s94
      %s95 = sphi 0, %s92
      %s96 = sphi 0, %s95
      %s112 = sphi 0, %s96
      %s118 = sphi 0, %s120
      %s121 = sphi 0, %s118
      %s122 = sphi 0, %s121
      %s138 = sphi 0, %s122
      %s144 = sphi 0, %s146
      %s147 = sphi 0, %s144
      %s148 = sphi 0, %s147
      %s164 = sphi 0, %s148
      %s170 = sphi 0, %s172
      %s173 = sphi 0, %s170
      %s174 = sphi 0, %s173
      %s190 = sphi 0, %s174
      %s196 = sphi 0, %s198
      %s199 = sphi 0, %s196
      %s200 = sphi 0, %s199
      %s216 = sphi 0, %s200
      %s222 = sphi 0, %s224
      %s225 = sphi 0, %s222
      %s226 = sphi 0, %s225
      %s242 = sphi 0, %s226
      %s248 = sphi 0, %s250
      %s251 = sphi 0, %s248
      %s252 = sphi 0, %s251
      %s268 = sphi 0, %s252
      %s274 = sphi 0, %s276
      %s277 = sphi 0, %s274
      %s278 = sphi 0, %s277
      %s294 = sphi 0, %s278
      %s300 = sphi 0, %s302
      %s303 = sphi 0, %s300
      %s304 = sphi 0, %s303
      %s320 = sphi 0, %s304
      %s326 = sphi 0, %s328
      %s329 = sphi 0, %s326
      %s330 = sphi 0, %s329
      %s346 = sphi 0, %s330
      %s352 = sphi 0, %s354
      %s355 = sphi 0, %s352
      %s356 = sphi 0, %s355
      %s372 = sphi 0, %s356
      %s378 = sphi 0, %s380
      %s381 = sphi 0, %s378
      %s382 = sphi 0, %s381
      %s398 = sphi 0, %s382
      %s404 = sphi 0, %s406
      %s407 = sphi 0, %s404
      %s408 = sphi 0, %s407
      %s424 = sphi 0, %s408
      %s430 = sphi 0, %s432
      %s433 = sphi 0, %s430
      %s434 = sphi 0, %s433
      %s450 = sphi 0, %s434
      %s456 = sphi 0, %s458
      %s459 = sphi 0, %s456
      %s460 = sphi 0, %s459
      %s476 = sphi 0, %s460
      %s482 = sphi 0, %s484
      %s485 = sphi 0, %s482
      %s486 = sphi 0, %s485
      %s502 = sphi 0, %s486
      %s508 = sphi 0, %s510
      %s511 = sphi 0, %s508
      %s512 = sphi 0, %s511
      %s528 = sphi 0, %s512
      %s534 = sphi 0, %s536
      %s537 = sphi 0, %s534
      %s538 = sphi 0, %s537
      %s554 = sphi 0, %s538
      %s560 = sphi 0, %s562
      %s563 = sphi 0, %s560
      %s564 = sphi 0, %s563
      %s580 = sphi 0, %s564
      %s586 = sphi 0, %s588
      %s589 = sphi 0, %s586
      %s590 = sphi 0, %s589
      %s606 = sphi 0, %s590
      %s612 = sphi 0, %s614
      %s615 = sphi 0, %s612
      %s616 = sphi 0, %s615
      %s632 = sphi 0, %s616
      %s638 = sphi 0, %s640
      %s641 = sphi 0, %s638
      %s642 = sphi 0, %s641
      %s658 = sphi 0, %s642
      %s662 = sphi 0, %s662
      %s664 = sphi 0, %s662
      %s665 = sphi 0, %s664
      %s679 = sphi 0, %s665
    $region4: #{rowcol_transformer_forward.1} parent=1 // loop_header_branch
      %64 = sbr.rel (%p62) target = $region8
    $region5: #{rowcol_transformer_forward.1} parent=1 // loop_body
      %s66 = ssub.s32 %s61, 1
      %s67 = ssub.s32 %s61, 2
      %s68 = sadd.s32 %s61, 1
      %s70 = sadd.s32 %s69, 1
      %p73 = scmp.eq.s32.totalorder %s61, 1
      %p74 = scmp.ne.s32.totalorder %s69, %s71
      %p75 = scmp.eq.s32.totalorder %s61, 0
      %p76 = por %p74, %p75
      %p77 = scmp.ne.s32.totalorder %s69, %s71
      %p78 = scmp.eq.s32.totalorder %s66, 1
      %p79 = por %p77, %p78
      %p80 = scmp.ne.s32.totalorder %s71, %s72
      %p81 = scmp.eq.s32.totalorder %s66, 0
      %p82 = por %p80, %p81
      %p83 = scmp.ne.s32.totalorder %s71, %s72
      %p84 = scmp.eq.s32.totalorder %s67, 1
      %p85 = por %p83, %p84
      %p87 = scmp.ne.s32.totalorder %s72, %s86
      %p88 = scmp.eq.s32.totalorder %s67, 0
      %p89 = por %p87, %p88
      %s90 = ssub.s32 %s61, %s68
      %p91 = scmp.eq.s32.totalorder %s90, 0
      %s93 = sadd.s32 %s92, 1
      %s94 = scalar_select %p91, %s92, %s93
      %p97 = pneg %p91
      %p98 = scmp.eq.s32.totalorder %s61, 1
      %p99 = por %p97, %p98
      %p100 = scmp.ne.s32.totalorder %s92, %s95
      %p101 = scmp.eq.s32.totalorder %s61, 0
      %p102 = por %p100, %p101
      %p103 = scmp.ne.s32.totalorder %s92, %s95
      %p104 = scmp.eq.s32.totalorder %s66, 1
      %p105 = por %p103, %p104
      %p106 = scmp.ne.s32.totalorder %s95, %s96
      %p107 = scmp.eq.s32.totalorder %s66, 0
      %p108 = por %p106, %p107
      %p109 = scmp.ne.s32.totalorder %s95, %s96
      %p110 = scmp.eq.s32.totalorder %s67, 1
      %p111 = por %p109, %p110
      %p113 = scmp.ne.s32.totalorder %s96, %s112
      %p114 = scmp.eq.s32.totalorder %s67, 0
      %p115 = por %p113, %p114
      %s116 = ssub.s32 %s61, %s68
      %p117 = scmp.eq.s32.totalorder %s116, 0
      %s119 = sadd.s32 %s118, 1
      %s120 = scalar_select %p117, %s118, %s119
      %p123 = pneg %p117
      %p124 = scmp.eq.s32.totalorder %s61, 1
      %p125 = por %p123, %p124
      %p126 = scmp.ne.s32.totalorder %s118, %s121
      %p127 = scmp.eq.s32.totalorder %s61, 0
      %p128 = por %p126, %p127
      %p129 = scmp.ne.s32.totalorder %s118, %s121
      %p130 = scmp.eq.s32.totalorder %s66, 1
      %p131 = por %p129, %p130
      %p132 = scmp.ne.s32.totalorder %s121, %s122
      %p133 = scmp.eq.s32.totalorder %s66, 0
      %p134 = por %p132, %p133
      %p135 = scmp.ne.s32.totalorder %s121, %s122
      %p136 = scmp.eq.s32.totalorder %s67, 1
      %p137 = por %p135, %p136
      %p139 = scmp.ne.s32.totalorder %s122, %s138
      %p140 = scmp.eq.s32.totalorder %s67, 0
      %p141 = por %p139, %p140
      %s142 = ssub.s32 %s61, %s68
      %p143 = scmp.eq.s32.totalorder %s142, 0
      %s145 = sadd.s32 %s144, 1
      %s146 = scalar_select %p143, %s144, %s145
      %p149 = pneg %p143
      %p150 = scmp.eq.s32.totalorder %s61, 1
      %p151 = por %p149, %p150
      %p152 = scmp.ne.s32.totalorder %s144, %s147
      %p153 = scmp.eq.s32.totalorder %s61, 0
      %p154 = por %p152, %p153
      %p155 = scmp.ne.s32.totalorder %s144, %s147
      %p156 = scmp.eq.s32.totalorder %s66, 1
      %p157 = por %p155, %p156
      %p158 = scmp.ne.s32.totalorder %s147, %s148
      %p159 = scmp.eq.s32.totalorder %s66, 0
      %p160 = por %p158, %p159
      %p161 = scmp.ne.s32.totalorder %s147, %s148
      %p162 = scmp.eq.s32.totalorder %s67, 1
      %p163 = por %p161, %p162
      %p165 = scmp.ne.s32.totalorder %s148, %s164
      %p166 = scmp.eq.s32.totalorder %s67, 0
      %p167 = por %p165, %p166
      %s168 = ssub.s32 %s61, %s68
      %p169 = scmp.eq.s32.totalorder %s168, 0
      %s171 = sadd.s32 %s170, 1
      %s172 = scalar_select %p169, %s170, %s171
      %p175 = pneg %p169
      %p176 = scmp.eq.s32.totalorder %s61, 1
      %p177 = por %p175, %p176
      %p178 = scmp.ne.s32.totalorder %s170, %s173
      %p179 = scmp.eq.s32.totalorder %s61, 0
      %p180 = por %p178, %p179
      %p181 = scmp.ne.s32.totalorder %s170, %s173
      %p182 = scmp.eq.s32.totalorder %s66, 1
      %p183 = por %p181, %p182
      %p184 = scmp.ne.s32.totalorder %s173, %s174
      %p185 = scmp.eq.s32.totalorder %s66, 0
      %p186 = por %p184, %p185
      %p187 = scmp.ne.s32.totalorder %s173, %s174
      %p188 = scmp.eq.s32.totalorder %s67, 1
      %p189 = por %p187, %p188
      %p191 = scmp.ne.s32.totalorder %s174, %s190
      %p192 = scmp.eq.s32.totalorder %s67, 0
      %p193 = por %p191, %p192
      %s194 = ssub.s32 %s61, %s68
      %p195 = scmp.eq.s32.totalorder %s194, 0
      %s197 = sadd.s32 %s196, 1
      %s198 = scalar_select %p195, %s196, %s197
      %p201 = pneg %p195
      %p202 = scmp.eq.s32.totalorder %s61, 1
      %p203 = por %p201, %p202
      %p204 = scmp.ne.s32.totalorder %s196, %s199
      %p205 = scmp.eq.s32.totalorder %s61, 0
      %p206 = por %p204, %p205
      %p207 = scmp.ne.s32.totalorder %s196, %s199
      %p208 = scmp.eq.s32.totalorder %s66, 1
      %p209 = por %p207, %p208
      %p210 = scmp.ne.s32.totalorder %s199, %s200
      %p211 = scmp.eq.s32.totalorder %s66, 0
      %p212 = por %p210, %p211
      %p213 = scmp.ne.s32.totalorder %s199, %s200
      %p214 = scmp.eq.s32.totalorder %s67, 1
      %p215 = por %p213, %p214
      %p217 = scmp.ne.s32.totalorder %s200, %s216
      %p218 = scmp.eq.s32.totalorder %s67, 0
      %p219 = por %p217, %p218
      %s220 = ssub.s32 %s61, %s68
      %p221 = scmp.eq.s32.totalorder %s220, 0
      %s223 = sadd.s32 %s222, 1
      %s224 = scalar_select %p221, %s222, %s223
      %p227 = pneg %p221
      %p228 = scmp.eq.s32.totalorder %s61, 1
      %p229 = por %p227, %p228
      %p230 = scmp.ne.s32.totalorder %s222, %s225
      %p231 = scmp.eq.s32.totalorder %s61, 0
      %p232 = por %p230, %p231
      %p233 = scmp.ne.s32.totalorder %s222, %s225
      %p234 = scmp.eq.s32.totalorder %s66, 1
      %p235 = por %p233, %p234
      %p236 = scmp.ne.s32.totalorder %s225, %s226
      %p237 = scmp.eq.s32.totalorder %s66, 0
      %p238 = por %p236, %p237
      %p239 = scmp.ne.s32.totalorder %s225, %s226
      %p240 = scmp.eq.s32.totalorder %s67, 1
      %p241 = por %p239, %p240
      %p243 = scmp.ne.s32.totalorder %s226, %s242
      %p244 = scmp.eq.s32.totalorder %s67, 0
      %p245 = por %p243, %p244
      %s246 = ssub.s32 %s61, %s68
      %p247 = scmp.eq.s32.totalorder %s246, 0
      %s249 = sadd.s32 %s248, 1
      %s250 = scalar_select %p247, %s248, %s249
      %p253 = pneg %p247
      %p254 = scmp.eq.s32.totalorder %s61, 1
      %p255 = por %p253, %p254
      %p256 = scmp.ne.s32.totalorder %s248, %s251
      %p257 = scmp.eq.s32.totalorder %s61, 0
      %p258 = por %p256, %p257
      %p259 = scmp.ne.s32.totalorder %s248, %s251
      %p260 = scmp.eq.s32.totalorder %s66, 1
      %p261 = por %p259, %p260
      %p262 = scmp.ne.s32.totalorder %s251, %s252
      %p263 = scmp.eq.s32.totalorder %s66, 0
      %p264 = por %p262, %p263
      %p265 = scmp.ne.s32.totalorder %s251, %s252
      %p266 = scmp.eq.s32.totalorder %s67, 1
      %p267 = por %p265, %p266
      %p269 = scmp.ne.s32.totalorder %s252, %s268
      %p270 = scmp.eq.s32.totalorder %s67, 0
      %p271 = por %p269, %p270
      %s272 = ssub.s32 %s61, %s68
      %p273 = scmp.eq.s32.totalorder %s272, 0
      %s275 = sadd.s32 %s274, 1
      %s276 = scalar_select %p273, %s274, %s275
      %p279 = pneg %p273
      %p280 = scmp.eq.s32.totalorder %s61, 1
      %p281 = por %p279, %p280
      %p282 = scmp.ne.s32.totalorder %s274, %s277
      %p283 = scmp.eq.s32.totalorder %s61, 0
      %p284 = por %p282, %p283
      %p285 = scmp.ne.s32.totalorder %s274, %s277
      %p286 = scmp.eq.s32.totalorder %s66, 1
      %p287 = por %p285, %p286
      %p288 = scmp.ne.s32.totalorder %s277, %s278
      %p289 = scmp.eq.s32.totalorder %s66, 0
      %p290 = por %p288, %p289
      %p291 = scmp.ne.s32.totalorder %s277, %s278
      %p292 = scmp.eq.s32.totalorder %s67, 1
      %p293 = por %p291, %p292
      %p295 = scmp.ne.s32.totalorder %s278, %s294
      %p296 = scmp.eq.s32.totalorder %s67, 0
      %p297 = por %p295, %p296
      %s298 = ssub.s32 %s61, %s68
      %p299 = scmp.eq.s32.totalorder %s298, 0
      %s301 = sadd.s32 %s300, 1
      %s302 = scalar_select %p299, %s300, %s301
      %p305 = pneg %p299
      %p306 = scmp.eq.s32.totalorder %s61, 1
      %p307 = por %p305, %p306
      %p308 = scmp.ne.s32.totalorder %s300, %s303
      %p309 = scmp.eq.s32.totalorder %s61, 0
      %p310 = por %p308, %p309
      %p311 = scmp.ne.s32.totalorder %s300, %s303
      %p312 = scmp.eq.s32.totalorder %s66, 1
      %p313 = por %p311, %p312
      %p314 = scmp.ne.s32.totalorder %s303, %s304
      %p315 = scmp.eq.s32.totalorder %s66, 0
      %p316 = por %p314, %p315
      %p317 = scmp.ne.s32.totalorder %s303, %s304
      %p318 = scmp.eq.s32.totalorder %s67, 1
      %p319 = por %p317, %p318
      %p321 = scmp.ne.s32.totalorder %s304, %s320
      %p322 = scmp.eq.s32.totalorder %s67, 0
      %p323 = por %p321, %p322
      %s324 = ssub.s32 %s61, %s68
      %p325 = scmp.eq.s32.totalorder %s324, 0
      %s327 = sadd.s32 %s326, 1
      %s328 = scalar_select %p325, %s326, %s327
      %p331 = pneg %p325
      %p332 = scmp.eq.s32.totalorder %s61, 1
      %p333 = por %p331, %p332
      %p334 = scmp.ne.s32.totalorder %s326, %s329
      %p335 = scmp.eq.s32.totalorder %s61, 0
      %p336 = por %p334, %p335
      %p337 = scmp.ne.s32.totalorder %s326, %s329
      %p338 = scmp.eq.s32.totalorder %s66, 1
      %p339 = por %p337, %p338
      %p340 = scmp.ne.s32.totalorder %s329, %s330
      %p341 = scmp.eq.s32.totalorder %s66, 0
      %p342 = por %p340, %p341
      %p343 = scmp.ne.s32.totalorder %s329, %s330
      %p344 = scmp.eq.s32.totalorder %s67, 1
      %p345 = por %p343, %p344
      %p347 = scmp.ne.s32.totalorder %s330, %s346
      %p348 = scmp.eq.s32.totalorder %s67, 0
      %p349 = por %p347, %p348
      %s350 = ssub.s32 %s61, %s68
      %p351 = scmp.eq.s32.totalorder %s350, 0
      %s353 = sadd.s32 %s352, 1
      %s354 = scalar_select %p351, %s352, %s353
      %p357 = pneg %p351
      %p358 = scmp.eq.s32.totalorder %s61, 1
      %p359 = por %p357, %p358
      %p360 = scmp.ne.s32.totalorder %s352, %s355
      %p361 = scmp.eq.s32.totalorder %s61, 0
      %p362 = por %p360, %p361
      %p363 = scmp.ne.s32.totalorder %s352, %s355
      %p364 = scmp.eq.s32.totalorder %s66, 1
      %p365 = por %p363, %p364
      %p366 = scmp.ne.s32.totalorder %s355, %s356
      %p367 = scmp.eq.s32.totalorder %s66, 0
      %p368 = por %p366, %p367
      %p369 = scmp.ne.s32.totalorder %s355, %s356
      %p370 = scmp.eq.s32.totalorder %s67, 1
      %p371 = por %p369, %p370
      %p373 = scmp.ne.s32.totalorder %s356, %s372
      %p374 = scmp.eq.s32.totalorder %s67, 0
      %p375 = por %p373, %p374
      %s376 = ssub.s32 %s61, %s68
      %p377 = scmp.eq.s32.totalorder %s376, 0
      %s379 = sadd.s32 %s378, 1
      %s380 = scalar_select %p377, %s378, %s379
      %p383 = pneg %p377
      %p384 = scmp.eq.s32.totalorder %s61, 1
      %p385 = por %p383, %p384
      %p386 = scmp.ne.s32.totalorder %s378, %s381
      %p387 = scmp.eq.s32.totalorder %s61, 0
      %p388 = por %p386, %p387
      %p389 = scmp.ne.s32.totalorder %s378, %s381
      %p390 = scmp.eq.s32.totalorder %s66, 1
      %p391 = por %p389, %p390
      %p392 = scmp.ne.s32.totalorder %s381, %s382
      %p393 = scmp.eq.s32.totalorder %s66, 0
      %p394 = por %p392, %p393
      %p395 = scmp.ne.s32.totalorder %s381, %s382
      %p396 = scmp.eq.s32.totalorder %s67, 1
      %p397 = por %p395, %p396
      %p399 = scmp.ne.s32.totalorder %s382, %s398
      %p400 = scmp.eq.s32.totalorder %s67, 0
      %p401 = por %p399, %p400
      %s402 = ssub.s32 %s61, %s68
      %p403 = scmp.eq.s32.totalorder %s402, 0
      %s405 = sadd.s32 %s404, 1
      %s406 = scalar_select %p403, %s404, %s405
      %p409 = pneg %p403
      %p410 = scmp.eq.s32.totalorder %s61, 1
      %p411 = por %p409, %p410
      %p412 = scmp.ne.s32.totalorder %s404, %s407
      %p413 = scmp.eq.s32.totalorder %s61, 0
      %p414 = por %p412, %p413
      %p415 = scmp.ne.s32.totalorder %s404, %s407
      %p416 = scmp.eq.s32.totalorder %s66, 1
      %p417 = por %p415, %p416
      %p418 = scmp.ne.s32.totalorder %s407, %s408
      %p419 = scmp.eq.s32.totalorder %s66, 0
      %p420 = por %p418, %p419
      %p421 = scmp.ne.s32.totalorder %s407, %s408
      %p422 = scmp.eq.s32.totalorder %s67, 1
      %p423 = por %p421, %p422
      %p425 = scmp.ne.s32.totalorder %s408, %s424
      %p426 = scmp.eq.s32.totalorder %s67, 0
      %p427 = por %p425, %p426
      %s428 = ssub.s32 %s61, %s68
      %p429 = scmp.eq.s32.totalorder %s428, 0
      %s431 = sadd.s32 %s430, 1
      %s432 = scalar_select %p429, %s430, %s431
      %p435 = pneg %p429
      %p436 = scmp.eq.s32.totalorder %s61, 1
      %p437 = por %p435, %p436
      %p438 = scmp.ne.s32.totalorder %s430, %s433
      %p439 = scmp.eq.s32.totalorder %s61, 0
      %p440 = por %p438, %p439
      %p441 = scmp.ne.s32.totalorder %s430, %s433
      %p442 = scmp.eq.s32.totalorder %s66, 1
      %p443 = por %p441, %p442
      %p444 = scmp.ne.s32.totalorder %s433, %s434
      %p445 = scmp.eq.s32.totalorder %s66, 0
      %p446 = por %p444, %p445
      %p447 = scmp.ne.s32.totalorder %s433, %s434
      %p448 = scmp.eq.s32.totalorder %s67, 1
      %p449 = por %p447, %p448
      %p451 = scmp.ne.s32.totalorder %s434, %s450
      %p452 = scmp.eq.s32.totalorder %s67, 0
      %p453 = por %p451, %p452
      %s454 = ssub.s32 %s61, %s68
      %p455 = scmp.eq.s32.totalorder %s454, 0
      %s457 = sadd.s32 %s456, 1
      %s458 = scalar_select %p455, %s456, %s457
      %p461 = pneg %p455
      %p462 = scmp.eq.s32.totalorder %s61, 1
      %p463 = por %p461, %p462
      %p464 = scmp.ne.s32.totalorder %s456, %s459
      %p465 = scmp.eq.s32.totalorder %s61, 0
      %p466 = por %p464, %p465
      %p467 = scmp.ne.s32.totalorder %s456, %s459
      %p468 = scmp.eq.s32.totalorder %s66, 1
      %p469 = por %p467, %p468
      %p470 = scmp.ne.s32.totalorder %s459, %s460
      %p471 = scmp.eq.s32.totalorder %s66, 0
      %p472 = por %p470, %p471
      %p473 = scmp.ne.s32.totalorder %s459, %s460
      %p474 = scmp.eq.s32.totalorder %s67, 1
      %p475 = por %p473, %p474
      %p477 = scmp.ne.s32.totalorder %s460, %s476
      %p478 = scmp.eq.s32.totalorder %s67, 0
      %p479 = por %p477, %p478
      %s480 = ssub.s32 %s61, %s68
      %p481 = scmp.eq.s32.totalorder %s480, 0
      %s483 = sadd.s32 %s482, 1
      %s484 = scalar_select %p481, %s482, %s483
      %p487 = pneg %p481
      %p488 = scmp.eq.s32.totalorder %s61, 1
      %p489 = por %p487, %p488
      %p490 = scmp.ne.s32.totalorder %s482, %s485
      %p491 = scmp.eq.s32.totalorder %s61, 0
      %p492 = por %p490, %p491
      %p493 = scmp.ne.s32.totalorder %s482, %s485
      %p494 = scmp.eq.s32.totalorder %s66, 1
      %p495 = por %p493, %p494
      %p496 = scmp.ne.s32.totalorder %s485, %s486
      %p497 = scmp.eq.s32.totalorder %s66, 0
      %p498 = por %p496, %p497
      %p499 = scmp.ne.s32.totalorder %s485, %s486
      %p500 = scmp.eq.s32.totalorder %s67, 1
      %p501 = por %p499, %p500
      %p503 = scmp.ne.s32.totalorder %s486, %s502
      %p504 = scmp.eq.s32.totalorder %s67, 0
      %p505 = por %p503, %p504
      %s506 = ssub.s32 %s61, %s68
      %p507 = scmp.eq.s32.totalorder %s506, 0
      %s509 = sadd.s32 %s508, 1
      %s510 = scalar_select %p507, %s508, %s509
      %p513 = pneg %p507
      %p514 = scmp.eq.s32.totalorder %s61, 1
      %p515 = por %p513, %p514
      %p516 = scmp.ne.s32.totalorder %s508, %s511
      %p517 = scmp.eq.s32.totalorder %s61, 0
      %p518 = por %p516, %p517
      %p519 = scmp.ne.s32.totalorder %s508, %s511
      %p520 = scmp.eq.s32.totalorder %s66, 1
      %p521 = por %p519, %p520
      %p522 = scmp.ne.s32.totalorder %s511, %s512
      %p523 = scmp.eq.s32.totalorder %s66, 0
      %p524 = por %p522, %p523
      %p525 = scmp.ne.s32.totalorder %s511, %s512
      %p526 = scmp.eq.s32.totalorder %s67, 1
      %p527 = por %p525, %p526
      %p529 = scmp.ne.s32.totalorder %s512, %s528
      %p530 = scmp.eq.s32.totalorder %s67, 0
      %p531 = por %p529, %p530
      %s532 = ssub.s32 %s61, %s68
      %p533 = scmp.eq.s32.totalorder %s532, 0
      %s535 = sadd.s32 %s534, 1
      %s536 = scalar_select %p533, %s534, %s535
      %p539 = pneg %p533
      %p540 = scmp.eq.s32.totalorder %s61, 1
      %p541 = por %p539, %p540
      %p542 = scmp.ne.s32.totalorder %s534, %s537
      %p543 = scmp.eq.s32.totalorder %s61, 0
      %p544 = por %p542, %p543
      %p545 = scmp.ne.s32.totalorder %s534, %s537
      %p546 = scmp.eq.s32.totalorder %s66, 1
      %p547 = por %p545, %p546
      %p548 = scmp.ne.s32.totalorder %s537, %s538
      %p549 = scmp.eq.s32.totalorder %s66, 0
      %p550 = por %p548, %p549
      %p551 = scmp.ne.s32.totalorder %s537, %s538
      %p552 = scmp.eq.s32.totalorder %s67, 1
      %p553 = por %p551, %p552
      %p555 = scmp.ne.s32.totalorder %s538, %s554
      %p556 = scmp.eq.s32.totalorder %s67, 0
      %p557 = por %p555, %p556
      %s558 = ssub.s32 %s61, %s68
      %p559 = scmp.eq.s32.totalorder %s558, 0
      %s561 = sadd.s32 %s560, 1
      %s562 = scalar_select %p559, %s560, %s561
      %p565 = pneg %p559
      %p566 = scmp.eq.s32.totalorder %s61, 1
      %p567 = por %p565, %p566
      %p568 = scmp.ne.s32.totalorder %s560, %s563
      %p569 = scmp.eq.s32.totalorder %s61, 0
      %p570 = por %p568, %p569
      %p571 = scmp.ne.s32.totalorder %s560, %s563
      %p572 = scmp.eq.s32.totalorder %s66, 1
      %p573 = por %p571, %p572
      %p574 = scmp.ne.s32.totalorder %s563, %s564
      %p575 = scmp.eq.s32.totalorder %s66, 0
      %p576 = por %p574, %p575
      %p577 = scmp.ne.s32.totalorder %s563, %s564
      %p578 = scmp.eq.s32.totalorder %s67, 1
      %p579 = por %p577, %p578
      %p581 = scmp.ne.s32.totalorder %s564, %s580
      %p582 = scmp.eq.s32.totalorder %s67, 0
      %p583 = por %p581, %p582
      %s584 = ssub.s32 %s61, %s68
      %p585 = scmp.eq.s32.totalorder %s584, 0
      %s587 = sadd.s32 %s586, 1
      %s588 = scalar_select %p585, %s586, %s587
      %p591 = pneg %p585
      %p592 = scmp.eq.s32.totalorder %s61, 1
      %p593 = por %p591, %p592
      %p594 = scmp.ne.s32.totalorder %s586, %s589
      %p595 = scmp.eq.s32.totalorder %s61, 0
      %p596 = por %p594, %p595
      %p597 = scmp.ne.s32.totalorder %s586, %s589
      %p598 = scmp.eq.s32.totalorder %s66, 1
      %p599 = por %p597, %p598
      %p600 = scmp.ne.s32.totalorder %s589, %s590
      %p601 = scmp.eq.s32.totalorder %s66, 0
      %p602 = por %p600, %p601
      %p603 = scmp.ne.s32.totalorder %s589, %s590
      %p604 = scmp.eq.s32.totalorder %s67, 1
      %p605 = por %p603, %p604
      %p607 = scmp.ne.s32.totalorder %s590, %s606
      %p608 = scmp.eq.s32.totalorder %s67, 0
      %p609 = por %p607, %p608
      %s610 = ssub.s32 %s61, %s68
      %p611 = scmp.eq.s32.totalorder %s610, 0
      %s613 = sadd.s32 %s612, 1
      %s614 = scalar_select %p611, %s612, %s613
      %p617 = pneg %p611
      %p618 = scmp.eq.s32.totalorder %s61, 1
      %p619 = por %p617, %p618
      %p620 = scmp.ne.s32.totalorder %s612, %s615
      %p621 = scmp.eq.s32.totalorder %s61, 0
      %p622 = por %p620, %p621
      %p623 = scmp.ne.s32.totalorder %s612, %s615
      %p624 = scmp.eq.s32.totalorder %s66, 1
      %p625 = por %p623, %p624
      %p626 = scmp.ne.s32.totalorder %s615, %s616
      %p627 = scmp.eq.s32.totalorder %s66, 0
      %p628 = por %p626, %p627
      %p629 = scmp.ne.s32.totalorder %s615, %s616
      %p630 = scmp.eq.s32.totalorder %s67, 1
      %p631 = por %p629, %p630
      %p633 = scmp.ne.s32.totalorder %s616, %s632
      %p634 = scmp.eq.s32.totalorder %s67, 0
      %p635 = por %p633, %p634
      %s636 = ssub.s32 %s61, %s68
      %p637 = scmp.eq.s32.totalorder %s636, 0
      %s639 = sadd.s32 %s638, 1
      %s640 = scalar_select %p637, %s638, %s639
      %p643 = pneg %p637
      %p644 = scmp.eq.s32.totalorder %s61, 1
      %p645 = por %p643, %p644
      %p646 = scmp.ne.s32.totalorder %s638, %s641
      %p647 = scmp.eq.s32.totalorder %s61, 0
      %p648 = por %p646, %p647
      %p649 = scmp.ne.s32.totalorder %s638, %s641
      %p650 = scmp.eq.s32.totalorder %s66, 1
      %p651 = por %p649, %p650
      %p652 = scmp.ne.s32.totalorder %s641, %s642
      %p653 = scmp.eq.s32.totalorder %s66, 0
      %p654 = por %p652, %p653
      %p655 = scmp.ne.s32.totalorder %s641, %s642
      %p656 = scmp.eq.s32.totalorder %s67, 1
      %p657 = por %p655, %p656
      %p659 = scmp.ne.s32.totalorder %s642, %s658
      %p660 = scmp.eq.s32.totalorder %s67, 0
      %p661 = por %p659, %p660
      %s663 = sadd.s32 %s662, 1
      %p666 = scmp.eq.s32.totalorder %s61, 1
      %p667 = scmp.ne.s32.totalorder %s662, %s664
      %p668 = scmp.eq.s32.totalorder %s61, 0
      %p669 = por %p667, %p668
      %p670 = scmp.ne.s32.totalorder %s662, %s664
      %p671 = scmp.eq.s32.totalorder %s66, 1
      %p672 = por %p670, %p671
      %p673 = scmp.ne.s32.totalorder %s664, %s665
      %p674 = scmp.eq.s32.totalorder %s66, 0
      %p675 = por %p673, %p674
      %p676 = scmp.ne.s32.totalorder %s664, %s665
      %p677 = scmp.eq.s32.totalorder %s67, 1
      %p678 = por %p676, %p677
      %p680 = scmp.ne.s32.totalorder %s665, %s679
      %p681 = scmp.eq.s32.totalorder %s67, 0
      %p682 = por %p680, %p681
      %p683 = scmp.le.s32.totalorder 1, %s61
      %p684 = scmp.lt.s32.totalorder %s61, 3
      %p685 = pnand %p683, %p684
      %p686 = pneg %p685
      // Predicated region
      $region9: #{rowcol_transformer_forward.1} parent=5 // pred_check
        _
      $region10: #{rowcol_transformer_forward.1} parent=5 // pred_check_branch
        %688 = sbr.rel (%p685) target = $region12
      $region11: #{rowcol_transformer_forward.1} parent=5 // pred_region
        %s689 = ssub.s32 %s61, 1
        // Predicated region
        $region13: #{rowcol_transformer_forward.1} parent=11 // pred_check
          %p690 = pneg %p82
        $region14: #{rowcol_transformer_forward.1} parent=11 // pred_check_branch
          %692 = sbr.rel (%p690) target = $region16
        $region15: #{rowcol_transformer_forward.1} parent=11 // pred_region
          %s694 = ssub.s32 256, 256
          %695 = vsyncadd [#allocation4], %s694
          %s696 = sshll.u32 [#allocation3], 4
          %s697 = int_to_ptr.vmem [resolvable:$true] %s696
          %702 = dma.hbm_to_vmem [thread:$0]  %s0, 256, %s697, [#allocation4], 128, 128, 8
        $region16: #{rowcol_transformer_forward.1} parent=11 // pred_fallthru
          _
      $region12: #{rowcol_transformer_forward.1} parent=5 // pred_fallthru
        _
      %p703 = scmp.lt.s32.totalorder %s61, 2
      // Predicated region
      $region17: #{rowcol_transformer_forward.1} parent=5 // pred_check
        %p704 = pneg %p703
      $region18: #{rowcol_transformer_forward.1} parent=5 // pred_check_branch
        %706 = sbr.rel (%p704) target = $region20
      $region19: #{rowcol_transformer_forward.1} parent=5 // pred_region
        // Predicated region
        $region21: #{rowcol_transformer_forward.1} parent=19 // pred_check
          %p707 = pneg %p102
        $region22: #{rowcol_transformer_forward.1} parent=19 // pred_check_branch
          %709 = sbr.rel (%p707) target = $region24
        $region23: #{rowcol_transformer_forward.1} parent=19 // pred_region
          %s710 = sand.u32 %s61, 1
          %s711 = scalar_lea.sflag [#allocation7], %s710
          %s712 = sand.u32 %s92, 1
          %s713 = scalar_lea.vmem [#allocation6], %s712
          %s715 = ssub.s32 16, 16
          %716 = vsyncadd %s711, %s715
          %s717 = smul.addr %s61, 16
          %s718 = scalar_lea.hbm %s1, %s717
          %s720 = sshll.u32 %s713, 4
          %s721 = int_to_ptr.vmem [resolvable:$true] %s720
          %723 = dma.hbm_to_vmem [thread:$0]  %s718, 16, %s721, %s711
        $region24: #{rowcol_transformer_forward.1} parent=19 // pred_fallthru
          _
        // Predicated region
        $region25: #{rowcol_transformer_forward.1} parent=19 // pred_check
          %p724 = pneg %p128
        $region26: #{rowcol_transformer_forward.1} parent=19 // pred_check_branch
          %726 = sbr.rel (%p724) target = $region28
        $region27: #{rowcol_transformer_forward.1} parent=19 // pred_region
          %s727 = sand.u32 %s61, 1
          %s728 = scalar_lea.sflag [#allocation7], %s727
          %s729 = sand.u32 %s118, 1
          %s730 = scalar_lea.vmem [#allocation8], %s729
          %s732 = ssub.s32 16, 16
          %733 = vsyncadd %s728, %s732
          %s734 = smul.addr %s61, 16
          %s735 = scalar_lea.hbm %s2, %s734
          %s737 = sshll.u32 %s730, 4
          %s738 = int_to_ptr.vmem [resolvable:$true] %s737
          %740 = dma.hbm_to_vmem [thread:$0]  %s735, 16, %s738, %s728
        $region28: #{rowcol_transformer_forward.1} parent=19 // pred_fallthru
          _
        // Predicated region
        $region29: #{rowcol_transformer_forward.1} parent=19 // pred_check
          %p741 = pneg %p154
        $region30: #{rowcol_transformer_forward.1} parent=19 // pred_check_branch
          %743 = sbr.rel (%p741) target = $region32
        $region31: #{rowcol_transformer_forward.1} parent=19 // pred_region
          %s744 = sand.u32 %s61, 1
          %s745 = scalar_lea.sflag [#allocation10], %s744
          %s746 = sand.u32 %s144, 1
          %s747 = smul.addr %s746, 48
          %s748 = scalar_lea.vmem [#allocation9], %s747
          %s750 = ssub.s32 768, 768
          %751 = vsyncadd %s745, %s750
          %s752 = smul.addr %s61, 12
          %s753 = smul.addr %s752, 64
          %s754 = scalar_lea.hbm %s3, %s753
          %s755 = sshll.u32 %s748, 4
          %s756 = int_to_ptr.vmem [resolvable:$true] %s755
          %761 = dma.hbm_to_vmem [thread:$0]  %s754, 768, %s756, %s745, 192, 192, 12
        $region32: #{rowcol_transformer_forward.1} parent=19 // pred_fallthru
          _
        // Predicated region
        $region33: #{rowcol_transformer_forward.1} parent=19 // pred_check
          %p762 = pneg %p180
        $region34: #{rowcol_transformer_forward.1} parent=19 // pred_check_branch
          %764 = sbr.rel (%p762) target = $region36
        $region35: #{rowcol_transformer_forward.1} parent=19 // pred_region
          %p765 = scmp.lt.s32.totalorder %s61, 1
          %s766 = scalar_select %p765, %s61, 1
          %s767 = smul.addr %s766, 16
          %s768 = smul.addr %s767, 4
          %s769 = scalar_lea.vmem %s4, %s768
        $region36: #{rowcol_transformer_forward.1} parent=19 // pred_fallthru
          _
        // Predicated region
        $region37: #{rowcol_transformer_forward.1} parent=19 // pred_check
          %p770 = pneg %p206
        $region38: #{rowcol_transformer_forward.1} parent=19 // pred_check_branch
          %772 = sbr.rel (%p770) target = $region40
        $region39: #{rowcol_transformer_forward.1} parent=19 // pred_region
          %s773 = sand.u32 %s61, 1
          %s774 = scalar_lea.sflag [#allocation10], %s773
          %s775 = sand.u32 %s196, 1
          %s776 = scalar_lea.vmem [#allocation11], %s775
          %s778 = ssub.s32 16, 16
          %779 = vsyncadd %s774, %s778
          %s780 = smul.addr %s61, 16
          %s781 = scalar_lea.hbm %s5, %s780
          %s783 = sshll.u32 %s776, 4
          %s784 = int_to_ptr.vmem [resolvable:$true] %s783
          %786 = dma.hbm_to_vmem [thread:$0]  %s781, 16, %s784, %s774
        $region40: #{rowcol_transformer_forward.1} parent=19 // pred_fallthru
          _
        // Predicated region
        $region41: #{rowcol_transformer_forward.1} parent=19 // pred_check
          %p787 = pneg %p232
        $region42: #{rowcol_transformer_forward.1} parent=19 // pred_check_branch
          %789 = sbr.rel (%p787) target = $region44
        $region43: #{rowcol_transformer_forward.1} parent=19 // pred_region
          %s790 = sand.u32 %s61, 1
          %s791 = scalar_lea.sflag [#allocation13], %s790
          %s792 = sand.u32 %s222, 1
          %s793 = scalar_lea.vmem [#allocation12], %s792
          %s795 = ssub.s32 16, 16
          %796 = vsyncadd %s791, %s795
          %s797 = smul.addr %s61, 16
          %s798 = scalar_lea.hbm %s6, %s797
          %s800 = sshll.u32 %s793, 4
          %s801 = int_to_ptr.vmem [resolvable:$true] %s800
          %803 = dma.hbm_to_vmem [thread:$0]  %s798, 16, %s801, %s791
        $region44: #{rowcol_transformer_forward.1} parent=19 // pred_fallthru
          _
        // Predicated region
        $region45: #{rowcol_transformer_forward.1} parent=19 // pred_check
          %p804 = pneg %p258
        $region46: #{rowcol_transformer_forward.1} parent=19 // pred_check_branch
          %806 = sbr.rel (%p804) target = $region48
        $region47: #{rowcol_transformer_forward.1} parent=19 // pred_region
          %s807 = sand.u32 %s61, 1
          %s808 = scalar_lea.sflag [#allocation13], %s807
          %s809 = sand.u32 %s248, 1
          %s810 = scalar_lea.vmem [#allocation14], %s809
          %s812 = ssub.s32 16, 16
          %813 = vsyncadd %s808, %s812
          %s814 = smul.addr %s61, 16
          %s815 = scalar_lea.hbm %s7, %s814
          %s817 = sshll.u32 %s810, 4
          %s818 = int_to_ptr.vmem [resolvable:$true] %s817
          %820 = dma.hbm_to_vmem [thread:$0]  %s815, 16, %s818, %s808
        $region48: #{rowcol_transformer_forward.1} parent=19 // pred_fallthru
          _
        // Predicated region
        $region49: #{rowcol_transformer_forward.1} parent=19 // pred_check
          %p821 = pneg %p284
        $region50: #{rowcol_transformer_forward.1} parent=19 // pred_check_branch
          %823 = sbr.rel (%p821) target = $region52
        $region51: #{rowcol_transformer_forward.1} parent=19 // pred_region
          %s824 = sand.u32 %s61, 1
          %s825 = scalar_lea.sflag [#allocation16], %s824
          %s826 = sand.u32 %s274, 1
          %s827 = smul.addr %s826, 32
          %s828 = scalar_lea.vmem [#allocation15], %s827
          %s830 = ssub.s32 512, 512
          %831 = vsyncadd %s825, %s830
          %s832 = smul.addr %s61, 8
          %s833 = smul.addr %s832, 64
          %s834 = scalar_lea.hbm %s8, %s833
          %s835 = sshll.u32 %s828, 4
          %s836 = int_to_ptr.vmem [resolvable:$true] %s835
          %841 = dma.hbm_to_vmem [thread:$0]  %s834, 512, %s836, %s825, 128, 128, 8
        $region52: #{rowcol_transformer_forward.1} parent=19 // pred_fallthru
          _
        // Predicated region
        $region53: #{rowcol_transformer_forward.1} parent=19 // pred_check
          %p842 = pneg %p310
        $region54: #{rowcol_transformer_forward.1} parent=19 // pred_check_branch
          %844 = sbr.rel (%p842) target = $region56
        $region55: #{rowcol_transformer_forward.1} parent=19 // pred_region
          %s845 = sand.u32 %s61, 1
          %s846 = scalar_lea.sflag [#allocation16], %s845
          %s847 = sand.u32 %s300, 1
          %s848 = smul.addr %s847, 2
          %s849 = scalar_lea.vmem [#allocation17], %s848
          %s851 = ssub.s32 32, 32
          %852 = vsyncadd %s846, %s851
          %s853 = smul.addr %s61, 2
          %s854 = smul.addr %s853, 16
          %s855 = scalar_lea.hbm %s9, %s854
          %s857 = sshll.u32 %s849, 4
          %s858 = int_to_ptr.vmem [resolvable:$true] %s857
          %860 = dma.hbm_to_vmem [thread:$0]  %s855, 32, %s858, %s846
        $region56: #{rowcol_transformer_forward.1} parent=19 // pred_fallthru
          _
        // Predicated region
        $region57: #{rowcol_transformer_forward.1} parent=19 // pred_check
          %p861 = pneg %p336
        $region58: #{rowcol_transformer_forward.1} parent=19 // pred_check_branch
          %863 = sbr.rel (%p861) target = $region60
        $region59: #{rowcol_transformer_forward.1} parent=19 // pred_region
          %p864 = scmp.lt.s32.totalorder %s61, 1
          %s865 = scalar_select %p864, %s61, 1
          %s866 = smul.addr %s865, 16
          %s867 = smul.addr %s866, 4
          %s868 = scalar_lea.vmem %s10, %s867
        $region60: #{rowcol_transformer_forward.1} parent=19 // pred_fallthru
          _
        // Predicated region
        $region61: #{rowcol_transformer_forward.1} parent=19 // pred_check
          %p869 = pneg %p362
        $region62: #{rowcol_transformer_forward.1} parent=19 // pred_check_branch
          %871 = sbr.rel (%p869) target = $region64
        $region63: #{rowcol_transformer_forward.1} parent=19 // pred_region
          %s872 = sand.u32 %s61, 1
          %s873 = scalar_lea.sflag [#allocation19], %s872
          %s874 = sand.u32 %s352, 1
          %s875 = scalar_lea.vmem [#allocation18], %s874
          %s877 = ssub.s32 16, 16
          %878 = vsyncadd %s873, %s877
          %s879 = smul.addr %s61, 16
          %s880 = scalar_lea.hbm %s11, %s879
          %s882 = sshll.u32 %s875, 4
          %s883 = int_to_ptr.vmem [resolvable:$true] %s882
          %885 = dma.hbm_to_vmem [thread:$0]  %s880, 16, %s883, %s873
        $region64: #{rowcol_transformer_forward.1} parent=19 // pred_fallthru
          _
        // Predicated region
        $region65: #{rowcol_transformer_forward.1} parent=19 // pred_check
          %p886 = pneg %p388
        $region66: #{rowcol_transformer_forward.1} parent=19 // pred_check_branch
          %888 = sbr.rel (%p886) target = $region68
        $region67: #{rowcol_transformer_forward.1} parent=19 // pred_region
          %s889 = sand.u32 %s61, 1
          %s890 = scalar_lea.sflag [#allocation19], %s889
          %s891 = sand.u32 %s378, 1
          %s892 = smul.addr %s891, 2
          %s893 = scalar_lea.vmem [#allocation20], %s892
          %s895 = ssub.s32 32, 32
          %896 = vsyncadd %s890, %s895
          %s897 = smul.addr %s61, 2
          %s898 = smul.addr %s897, 16
          %s899 = scalar_lea.hbm %s12, %s898
          %s901 = sshll.u32 %s893, 4
          %s902 = int_to_ptr.vmem [resolvable:$true] %s901
          %904 = dma.hbm_to_vmem [thread:$0]  %s899, 32, %s902, %s890
        $region68: #{rowcol_transformer_forward.1} parent=19 // pred_fallthru
          _
        // Predicated region
        $region69: #{rowcol_transformer_forward.1} parent=19 // pred_check
          %p905 = pneg %p414
        $region70: #{rowcol_transformer_forward.1} parent=19 // pred_check_branch
          %907 = sbr.rel (%p905) target = $region72
        $region71: #{rowcol_transformer_forward.1} parent=19 // pred_region
          %s908 = sand.u32 %s61, 1
          %s909 = scalar_lea.sflag [#allocation22], %s908
          %s910 = sand.u32 %s404, 1
          %s911 = smul.addr %s910, 2
          %s912 = scalar_lea.vmem [#allocation21], %s911
          %s914 = ssub.s32 32, 32
          %915 = vsyncadd %s909, %s914
          %s916 = smul.addr %s61, 2
          %s917 = smul.addr %s916, 16
          %s918 = scalar_lea.hbm %s13, %s917
          %s920 = sshll.u32 %s912, 4
          %s921 = int_to_ptr.vmem [resolvable:$true] %s920
          %923 = dma.hbm_to_vmem [thread:$0]  %s918, 32, %s921, %s909
        $region72: #{rowcol_transformer_forward.1} parent=19 // pred_fallthru
          _
        // Predicated region
        $region73: #{rowcol_transformer_forward.1} parent=19 // pred_check
          %p924 = pneg %p440
        $region74: #{rowcol_transformer_forward.1} parent=19 // pred_check_branch
          %926 = sbr.rel (%p924) target = $region76
        $region75: #{rowcol_transformer_forward.1} parent=19 // pred_region
          %s927 = sand.u32 %s61, 1
          %s928 = scalar_lea.sflag [#allocation22], %s927
          %s929 = sand.u32 %s430, 1
          %s930 = smul.addr %s929, 1536
          %s931 = scalar_lea.vmem [#allocation23], %s930
          %s933 = ssub.s32 24576, 24576
          %934 = vsyncadd %s928, %s933
          %s935 = smul.addr %s61, 384
          %s936 = smul.addr %s935, 64
          %s937 = scalar_lea.hbm %s14, %s936
          %s938 = sshll.u32 %s931, 4
          %s939 = int_to_ptr.vmem [resolvable:$true] %s938
          %944 = dma.hbm_to_vmem [thread:$0]  %s937, 24576, %s939, %s928, 768, 768, 48
        $region76: #{rowcol_transformer_forward.1} parent=19 // pred_fallthru
          _
        // Predicated region
        $region77: #{rowcol_transformer_forward.1} parent=19 // pred_check
          %p945 = pneg %p466
        $region78: #{rowcol_transformer_forward.1} parent=19 // pred_check_branch
          %947 = sbr.rel (%p945) target = $region80
        $region79: #{rowcol_transformer_forward.1} parent=19 // pred_region
          %s948 = sand.u32 %s61, 1
          %s949 = scalar_lea.sflag [#allocation25], %s948
          %s950 = sand.u32 %s456, 1
          %s951 = smul.addr %s950, 512
          %s952 = scalar_lea.vmem [#allocation24], %s951
          %s954 = ssub.s32 8192, 8192
          %955 = vsyncadd %s949, %s954
          %s956 = smul.addr %s61, 128
          %s957 = smul.addr %s956, 64
          %s958 = scalar_lea.hbm %s15, %s957
          %s959 = sshll.u32 %s952, 4
          %s960 = int_to_ptr.vmem [resolvable:$true] %s959
          %965 = dma.hbm_to_vmem [thread:$0]  %s958, 8192, %s960, %s949, 128, 128, 8
        $region80: #{rowcol_transformer_forward.1} parent=19 // pred_fallthru
          _
        // Predicated region
        $region81: #{rowcol_transformer_forward.1} parent=19 // pred_check
          %p966 = pneg %p492
        $region82: #{rowcol_transformer_forward.1} parent=19 // pred_check_branch
          %968 = sbr.rel (%p966) target = $region84
        $region83: #{rowcol_transformer_forward.1} parent=19 // pred_region
          %s969 = sand.u32 %s61, 1
          %s970 = scalar_lea.sflag [#allocation25], %s969
          %s971 = sand.u32 %s482, 1
          %s972 = smul.addr %s971, 2
          %s973 = scalar_lea.vmem [#allocation26], %s972
          %s975 = ssub.s32 32, 32
          %976 = vsyncadd %s970, %s975
          %s977 = smul.addr %s61, 2
          %s978 = smul.addr %s977, 16
          %s979 = scalar_lea.hbm %s16, %s978
          %s981 = sshll.u32 %s973, 4
          %s982 = int_to_ptr.vmem [resolvable:$true] %s981
          %984 = dma.hbm_to_vmem [thread:$0]  %s979, 32, %s982, %s970
        $region84: #{rowcol_transformer_forward.1} parent=19 // pred_fallthru
          _
        // Predicated region
        $region85: #{rowcol_transformer_forward.1} parent=19 // pred_check
          %p985 = pneg %p518
        $region86: #{rowcol_transformer_forward.1} parent=19 // pred_check_branch
          %987 = sbr.rel (%p985) target = $region88
        $region87: #{rowcol_transformer_forward.1} parent=19 // pred_region
          %s988 = sand.u32 %s61, 1
          %s989 = scalar_lea.sflag [#allocation28], %s988
          %s990 = sand.u32 %s508, 1
          %s991 = smul.addr %s990, 2
          %s992 = scalar_lea.vmem [#allocation27], %s991
          %s994 = ssub.s32 32, 32
          %995 = vsyncadd %s989, %s994
          %s996 = smul.addr %s61, 2
          %s997 = smul.addr %s996, 16
          %s998 = scalar_lea.hbm %s17, %s997
          %s1000 = sshll.u32 %s992, 4
          %s1001 = int_to_ptr.vmem [resolvable:$true] %s1000
          %1003 = dma.hbm_to_vmem [thread:$0]  %s998, 32, %s1001, %s989
        $region88: #{rowcol_transformer_forward.1} parent=19 // pred_fallthru
          _
        // Predicated region
        $region89: #{rowcol_transformer_forward.1} parent=19 // pred_check
          %p1004 = pneg %p544
        $region90: #{rowcol_transformer_forward.1} parent=19 // pred_check_branch
          %1006 = sbr.rel (%p1004) target = $region92
        $region91: #{rowcol_transformer_forward.1} parent=19 // pred_region
          %s1007 = sand.u32 %s61, 1
          %s1008 = scalar_lea.sflag [#allocation28], %s1007
          %s1009 = sand.u32 %s534, 1
          %s1010 = smul.addr %s1009, 2
          %s1011 = scalar_lea.vmem [#allocation29], %s1010
          %s1013 = ssub.s32 32, 32
          %1014 = vsyncadd %s1008, %s1013
          %s1015 = smul.addr %s61, 2
          %s1016 = smul.addr %s1015, 16
          %s1017 = scalar_lea.hbm %s18, %s1016
          %s1019 = sshll.u32 %s1011, 4
          %s1020 = int_to_ptr.vmem [resolvable:$true] %s1019
          %1022 = dma.hbm_to_vmem [thread:$0]  %s1017, 32, %s1020, %s1008
        $region92: #{rowcol_transformer_forward.1} parent=19 // pred_fallthru
          _
        // Predicated region
        $region93: #{rowcol_transformer_forward.1} parent=19 // pred_check
          %p1023 = pneg %p570
        $region94: #{rowcol_transformer_forward.1} parent=19 // pred_check_branch
          %1025 = sbr.rel (%p1023) target = $region96
        $region95: #{rowcol_transformer_forward.1} parent=19 // pred_region
          %s1026 = sand.u32 %s61, 1
          %s1027 = scalar_lea.sflag [#allocation31], %s1026
          %s1028 = sand.u32 %s560, 1
          %s1029 = smul.addr %s1028, 2048
          %s1030 = scalar_lea.vmem [#allocation30], %s1029
          %s1032 = ssub.s32 32768, 32768
          %1033 = vsyncadd %s1027, %s1032
          %s1034 = smul.addr %s61, 512
          %s1035 = smul.addr %s1034, 64
          %s1036 = scalar_lea.hbm %s19, %s1035
          %s1037 = sshll.u32 %s1030, 4
          %s1038 = int_to_ptr.vmem [resolvable:$true] %s1037
          %1043 = dma.hbm_to_vmem [thread:$0]  %s1036, 32768, %s1038, %s1027, 1024, 1024, 64
        $region96: #{rowcol_transformer_forward.1} parent=19 // pred_fallthru
          _
        // Predicated region
        $region97: #{rowcol_transformer_forward.1} parent=19 // pred_check
          %p1044 = pneg %p596
        $region98: #{rowcol_transformer_forward.1} parent=19 // pred_check_branch
          %1046 = sbr.rel (%p1044) target = $region100
        $region99: #{rowcol_transformer_forward.1} parent=19 // pred_region
          %s1047 = sand.u32 %s61, 1
          %s1048 = scalar_lea.sflag [#allocation31], %s1047
          %s1049 = sand.u32 %s586, 1
          %s1050 = smul.addr %s1049, 16
          %s1051 = scalar_lea.vmem [#allocation32], %s1050
          %s1053 = ssub.s32 256, 256
          %1054 = vsyncadd %s1048, %s1053
          %s1055 = smul.addr %s61, 16
          %s1056 = smul.addr %s1055, 16
          %s1057 = scalar_lea.hbm %s20, %s1056
          %s1059 = sshll.u32 %s1051, 4
          %s1060 = int_to_ptr.vmem [resolvable:$true] %s1059
          %1062 = dma.hbm_to_vmem [thread:$0]  %s1057, 256, %s1060, %s1048
        $region100: #{rowcol_transformer_forward.1} parent=19 // pred_fallthru
          _
        // Predicated region
        $region101: #{rowcol_transformer_forward.1} parent=19 // pred_check
          %p1063 = pneg %p622
        $region102: #{rowcol_transformer_forward.1} parent=19 // pred_check_branch
          %1065 = sbr.rel (%p1063) target = $region104
        $region103: #{rowcol_transformer_forward.1} parent=19 // pred_region
          %s1066 = sand.u32 %s61, 1
          %s1067 = scalar_lea.sflag [#allocation34], %s1066
          %s1068 = sand.u32 %s612, 1
          %s1069 = smul.addr %s1068, 1024
          %s1070 = scalar_lea.vmem [#allocation33], %s1069
          %s1072 = ssub.s32 16384, 16384
          %1073 = vsyncadd %s1067, %s1072
          %s1074 = smul.addr %s61, 256
          %s1075 = smul.addr %s1074, 64
          %s1076 = scalar_lea.hbm %s21, %s1075
          %s1077 = sshll.u32 %s1070, 4
          %s1078 = int_to_ptr.vmem [resolvable:$true] %s1077
          %1083 = dma.hbm_to_vmem [thread:$0]  %s1076, 16384, %s1078, %s1067, 128, 128, 8
        $region104: #{rowcol_transformer_forward.1} parent=19 // pred_fallthru
          _
        // Predicated region
        $region105: #{rowcol_transformer_forward.1} parent=19 // pred_check
          %p1084 = pneg %p648
        $region106: #{rowcol_transformer_forward.1} parent=19 // pred_check_branch
          %1086 = sbr.rel (%p1084) target = $region108
        $region107: #{rowcol_transformer_forward.1} parent=19 // pred_region
          %s1087 = sand.u32 %s61, 1
          %s1088 = scalar_lea.sflag [#allocation34], %s1087
          %s1089 = sand.u32 %s638, 1
          %s1090 = smul.addr %s1089, 2
          %s1091 = scalar_lea.vmem [#allocation35], %s1090
          %s1093 = ssub.s32 32, 32
          %1094 = vsyncadd %s1088, %s1093
          %s1095 = smul.addr %s61, 2
          %s1096 = smul.addr %s1095, 16
          %s1097 = scalar_lea.hbm %s22, %s1096
          %s1099 = sshll.u32 %s1091, 4
          %s1100 = int_to_ptr.vmem [resolvable:$true] %s1099
          %1102 = dma.hbm_to_vmem [thread:$0]  %s1097, 32, %s1100, %s1088
        $region108: #{rowcol_transformer_forward.1} parent=19 // pred_fallthru
          _
      $region20: #{rowcol_transformer_forward.1} parent=5 // pred_fallthru
        _
      %p1103 = scmp.le.s32.totalorder 1, %s61
      %p1104 = scmp.lt.s32.totalorder %s61, 3
      %p1105 = pnand %p1103, %p1104
      %p1106 = pneg %p1105
      // Predicated region
      $region109: #{rowcol_transformer_forward.1} parent=5 // pred_check
        _
      $region110: #{rowcol_transformer_forward.1} parent=5 // pred_check_branch
        %1108 = sbr.rel (%p1105) target = $region112
      $region111: #{rowcol_transformer_forward.1} parent=5 // pred_region
        %s1109 = ssub.s32 %s61, 1
        // Predicated region
        $region113: #{rowcol_transformer_forward.1} parent=111 // pred_check
          %p1110 = pneg %p82
        $region114: #{rowcol_transformer_forward.1} parent=111 // pred_check_branch
          %1112 = sbr.rel (%p1110) target = $region116
        $region115: #{rowcol_transformer_forward.1} parent=111 // pred_region
          %1113 = dma.done [#allocation4], 256
        $region116: #{rowcol_transformer_forward.1} parent=111 // pred_fallthru
          _
        %s1114 = sand.u32 %s66, 1
        %s1115 = scalar_lea.sflag [#allocation7], %s1114
        %s1116 = sand.u32 %s95, 1
        %s1117 = scalar_lea.vmem [#allocation6], %s1116
        // Predicated region
        $region117: #{rowcol_transformer_forward.1} parent=111 // pred_check
          %p1118 = pneg %p108
        $region118: #{rowcol_transformer_forward.1} parent=111 // pred_check_branch
          %1120 = sbr.rel (%p1118) target = $region120
        $region119: #{rowcol_transformer_forward.1} parent=111 // pred_region
          %1121 = dma.done %s1115, 16
        $region120: #{rowcol_transformer_forward.1} parent=111 // pred_fallthru
          _
        %s1122 = sand.u32 %s66, 1
        %s1123 = scalar_lea.sflag [#allocation7], %s1122
        %s1124 = sand.u32 %s121, 1
        %s1125 = scalar_lea.vmem [#allocation8], %s1124
        // Predicated region
        $region121: #{rowcol_transformer_forward.1} parent=111 // pred_check
          %p1126 = pneg %p134
        $region122: #{rowcol_transformer_forward.1} parent=111 // pred_check_branch
          %1128 = sbr.rel (%p1126) target = $region124
        $region123: #{rowcol_transformer_forward.1} parent=111 // pred_region
          %1129 = dma.done %s1123, 16
        $region124: #{rowcol_transformer_forward.1} parent=111 // pred_fallthru
          _
        %s1130 = sand.u32 %s66, 1
        %s1131 = scalar_lea.sflag [#allocation10], %s1130
        %s1132 = sand.u32 %s147, 1
        %s1133 = smul.addr %s1132, 48
        %s1134 = scalar_lea.vmem [#allocation9], %s1133
        // Predicated region
        $region125: #{rowcol_transformer_forward.1} parent=111 // pred_check
          %p1135 = pneg %p160
        $region126: #{rowcol_transformer_forward.1} parent=111 // pred_check_branch
          %1137 = sbr.rel (%p1135) target = $region128
        $region127: #{rowcol_transformer_forward.1} parent=111 // pred_region
          %1138 = dma.done %s1131, 768
        $region128: #{rowcol_transformer_forward.1} parent=111 // pred_fallthru
          _
        %s1139 = sand.u32 %s66, 1
        %s1140 = scalar_lea.sflag [#allocation10], %s1139
        %s1141 = sand.u32 %s199, 1
        %s1142 = scalar_lea.vmem [#allocation11], %s1141
        // Predicated region
        $region129: #{rowcol_transformer_forward.1} parent=111 // pred_check
          %p1143 = pneg %p212
        $region130: #{rowcol_transformer_forward.1} parent=111 // pred_check_branch
          %1145 = sbr.rel (%p1143) target = $region132
        $region131: #{rowcol_transformer_forward.1} parent=111 // pred_region
          %1146 = dma.done %s1140, 16
        $region132: #{rowcol_transformer_forward.1} parent=111 // pred_fallthru
          _
        %s1147 = sand.u32 %s66, 1
        %s1148 = scalar_lea.sflag [#allocation13], %s1147
        %s1149 = sand.u32 %s225, 1
        %s1150 = scalar_lea.vmem [#allocation12], %s1149
        // Predicated region
        $region133: #{rowcol_transformer_forward.1} parent=111 // pred_check
          %p1151 = pneg %p238
        $region134: #{rowcol_transformer_forward.1} parent=111 // pred_check_branch
          %1153 = sbr.rel (%p1151) target = $region136
        $region135: #{rowcol_transformer_forward.1} parent=111 // pred_region
          %1154 = dma.done %s1148, 16
        $region136: #{rowcol_transformer_forward.1} parent=111 // pred_fallthru
          _
        %s1155 = sand.u32 %s66, 1
        %s1156 = scalar_lea.sflag [#allocation13], %s1155
        %s1157 = sand.u32 %s251, 1
        %s1158 = scalar_lea.vmem [#allocation14], %s1157
        // Predicated region
        $region137: #{rowcol_transformer_forward.1} parent=111 // pred_check
          %p1159 = pneg %p264
        $region138: #{rowcol_transformer_forward.1} parent=111 // pred_check_branch
          %1161 = sbr.rel (%p1159) target = $region140
        $region139: #{rowcol_transformer_forward.1} parent=111 // pred_region
          %1162 = dma.done %s1156, 16
        $region140: #{rowcol_transformer_forward.1} parent=111 // pred_fallthru
          _
        %s1163 = sand.u32 %s66, 1
        %s1164 = scalar_lea.sflag [#allocation16], %s1163
        %s1165 = sand.u32 %s277, 1
        %s1166 = smul.addr %s1165, 32
        %s1167 = scalar_lea.vmem [#allocation15], %s1166
        // Predicated region
        $region141: #{rowcol_transformer_forward.1} parent=111 // pred_check
          %p1168 = pneg %p290
        $region142: #{rowcol_transformer_forward.1} parent=111 // pred_check_branch
          %1170 = sbr.rel (%p1168) target = $region144
        $region143: #{rowcol_transformer_forward.1} parent=111 // pred_region
          %1171 = dma.done %s1164, 512
        $region144: #{rowcol_transformer_forward.1} parent=111 // pred_fallthru
          _
        %s1172 = sand.u32 %s66, 1
        %s1173 = scalar_lea.sflag [#allocation16], %s1172
        %s1174 = sand.u32 %s303, 1
        %s1175 = smul.addr %s1174, 2
        %s1176 = scalar_lea.vmem [#allocation17], %s1175
        // Predicated region
        $region145: #{rowcol_transformer_forward.1} parent=111 // pred_check
          %p1177 = pneg %p316
        $region146: #{rowcol_transformer_forward.1} parent=111 // pred_check_branch
          %1179 = sbr.rel (%p1177) target = $region148
        $region147: #{rowcol_transformer_forward.1} parent=111 // pred_region
          %1180 = dma.done %s1173, 32
        $region148: #{rowcol_transformer_forward.1} parent=111 // pred_fallthru
          _
        %s1181 = sand.u32 %s66, 1
        %s1182 = scalar_lea.sflag [#allocation19], %s1181
        %s1183 = sand.u32 %s355, 1
        %s1184 = scalar_lea.vmem [#allocation18], %s1183
        // Predicated region
        $region149: #{rowcol_transformer_forward.1} parent=111 // pred_check
          %p1185 = pneg %p368
        $region150: #{rowcol_transformer_forward.1} parent=111 // pred_check_branch
          %1187 = sbr.rel (%p1185) target = $region152
        $region151: #{rowcol_transformer_forward.1} parent=111 // pred_region
          %1188 = dma.done %s1182, 16
        $region152: #{rowcol_transformer_forward.1} parent=111 // pred_fallthru
          _
        %s1189 = sand.u32 %s66, 1
        %s1190 = scalar_lea.sflag [#allocation19], %s1189
        %s1191 = sand.u32 %s381, 1
        %s1192 = smul.addr %s1191, 2
        %s1193 = scalar_lea.vmem [#allocation20], %s1192
        // Predicated region
        $region153: #{rowcol_transformer_forward.1} parent=111 // pred_check
          %p1194 = pneg %p394
        $region154: #{rowcol_transformer_forward.1} parent=111 // pred_check_branch
          %1196 = sbr.rel (%p1194) target = $region156
        $region155: #{rowcol_transformer_forward.1} parent=111 // pred_region
          %1197 = dma.done %s1190, 32
        $region156: #{rowcol_transformer_forward.1} parent=111 // pred_fallthru
          _
        %s1198 = sand.u32 %s66, 1
        %s1199 = scalar_lea.sflag [#allocation22], %s1198
        %s1200 = sand.u32 %s407, 1
        %s1201 = smul.addr %s1200, 2
        %s1202 = scalar_lea.vmem [#allocation21], %s1201
        // Predicated region
        $region157: #{rowcol_transformer_forward.1} parent=111 // pred_check
          %p1203 = pneg %p420
        $region158: #{rowcol_transformer_forward.1} parent=111 // pred_check_branch
          %1205 = sbr.rel (%p1203) target = $region160
        $region159: #{rowcol_transformer_forward.1} parent=111 // pred_region
          %1206 = dma.done %s1199, 32
        $region160: #{rowcol_transformer_forward.1} parent=111 // pred_fallthru
          _
        %s1207 = sand.u32 %s66, 1
        %s1208 = scalar_lea.sflag [#allocation22], %s1207
        %s1209 = sand.u32 %s433, 1
        %s1210 = smul.addr %s1209, 1536
        %s1211 = scalar_lea.vmem [#allocation23], %s1210
        // Predicated region
        $region161: #{rowcol_transformer_forward.1} parent=111 // pred_check
          %p1212 = pneg %p446
        $region162: #{rowcol_transformer_forward.1} parent=111 // pred_check_branch
          %1214 = sbr.rel (%p1212) target = $region164
        $region163: #{rowcol_transformer_forward.1} parent=111 // pred_region
          %1215 = dma.done %s1208, 24576
        $region164: #{rowcol_transformer_forward.1} parent=111 // pred_fallthru
          _
        %s1216 = sand.u32 %s66, 1
        %s1217 = scalar_lea.sflag [#allocation25], %s1216
        %s1218 = sand.u32 %s459, 1
        %s1219 = smul.addr %s1218, 512
        %s1220 = scalar_lea.vmem [#allocation24], %s1219
        // Predicated region
        $region165: #{rowcol_transformer_forward.1} parent=111 // pred_check
          %p1221 = pneg %p472
        $region166: #{rowcol_transformer_forward.1} parent=111 // pred_check_branch
          %1223 = sbr.rel (%p1221) target = $region168
        $region167: #{rowcol_transformer_forward.1} parent=111 // pred_region
          %1224 = dma.done %s1217, 8192
        $region168: #{rowcol_transformer_forward.1} parent=111 // pred_fallthru
          _
        %s1225 = sand.u32 %s66, 1
        %s1226 = scalar_lea.sflag [#allocation25], %s1225
        %s1227 = sand.u32 %s485, 1
        %s1228 = smul.addr %s1227, 2
        %s1229 = scalar_lea.vmem [#allocation26], %s1228
        // Predicated region
        $region169: #{rowcol_transformer_forward.1} parent=111 // pred_check
          %p1230 = pneg %p498
        $region170: #{rowcol_transformer_forward.1} parent=111 // pred_check_branch
          %1232 = sbr.rel (%p1230) target = $region172
        $region171: #{rowcol_transformer_forward.1} parent=111 // pred_region
          %1233 = dma.done %s1226, 32
        $region172: #{rowcol_transformer_forward.1} parent=111 // pred_fallthru
          _
        %s1234 = sand.u32 %s66, 1
        %s1235 = scalar_lea.sflag [#allocation28], %s1234
        %s1236 = sand.u32 %s511, 1
        %s1237 = smul.addr %s1236, 2
        %s1238 = scalar_lea.vmem [#allocation27], %s1237
        // Predicated region
        $region173: #{rowcol_transformer_forward.1} parent=111 // pred_check
          %p1239 = pneg %p524
        $region174: #{rowcol_transformer_forward.1} parent=111 // pred_check_branch
          %1241 = sbr.rel (%p1239) target = $region176
        $region175: #{rowcol_transformer_forward.1} parent=111 // pred_region
          %1242 = dma.done %s1235, 32
        $region176: #{rowcol_transformer_forward.1} parent=111 // pred_fallthru
          _
        %s1243 = sand.u32 %s66, 1
        %s1244 = scalar_lea.sflag [#allocation28], %s1243
        %s1245 = sand.u32 %s537, 1
        %s1246 = smul.addr %s1245, 2
        %s1247 = scalar_lea.vmem [#allocation29], %s1246
        // Predicated region
        $region177: #{rowcol_transformer_forward.1} parent=111 // pred_check
          %p1248 = pneg %p550
        $region178: #{rowcol_transformer_forward.1} parent=111 // pred_check_branch
          %1250 = sbr.rel (%p1248) target = $region180
        $region179: #{rowcol_transformer_forward.1} parent=111 // pred_region
          %1251 = dma.done %s1244, 32
        $region180: #{rowcol_transformer_forward.1} parent=111 // pred_fallthru
          _
        %s1252 = sand.u32 %s66, 1
        %s1253 = scalar_lea.sflag [#allocation31], %s1252
        %s1254 = sand.u32 %s563, 1
        %s1255 = smul.addr %s1254, 2048
        %s1256 = scalar_lea.vmem [#allocation30], %s1255
        // Predicated region
        $region181: #{rowcol_transformer_forward.1} parent=111 // pred_check
          %p1257 = pneg %p576
        $region182: #{rowcol_transformer_forward.1} parent=111 // pred_check_branch
          %1259 = sbr.rel (%p1257) target = $region184
        $region183: #{rowcol_transformer_forward.1} parent=111 // pred_region
          %1260 = dma.done %s1253, 32768
        $region184: #{rowcol_transformer_forward.1} parent=111 // pred_fallthru
          _
        %s1261 = sand.u32 %s66, 1
        %s1262 = scalar_lea.sflag [#allocation31], %s1261
        %s1263 = sand.u32 %s589, 1
        %s1264 = smul.addr %s1263, 16
        %s1265 = scalar_lea.vmem [#allocation32], %s1264
        // Predicated region
        $region185: #{rowcol_transformer_forward.1} parent=111 // pred_check
          %p1266 = pneg %p602
        $region186: #{rowcol_transformer_forward.1} parent=111 // pred_check_branch
          %1268 = sbr.rel (%p1266) target = $region188
        $region187: #{rowcol_transformer_forward.1} parent=111 // pred_region
          %1269 = dma.done %s1262, 256
        $region188: #{rowcol_transformer_forward.1} parent=111 // pred_fallthru
          _
        %s1270 = sand.u32 %s66, 1
        %s1271 = scalar_lea.sflag [#allocation34], %s1270
        %s1272 = sand.u32 %s615, 1
        %s1273 = smul.addr %s1272, 1024
        %s1274 = scalar_lea.vmem [#allocation33], %s1273
        // Predicated region
        $region189: #{rowcol_transformer_forward.1} parent=111 // pred_check
          %p1275 = pneg %p628
        $region190: #{rowcol_transformer_forward.1} parent=111 // pred_check_branch
          %1277 = sbr.rel (%p1275) target = $region192
        $region191: #{rowcol_transformer_forward.1} parent=111 // pred_region
          %1278 = dma.done %s1271, 16384
        $region192: #{rowcol_transformer_forward.1} parent=111 // pred_fallthru
          _
        %s1279 = sand.u32 %s66, 1
        %s1280 = scalar_lea.sflag [#allocation34], %s1279
        %s1281 = sand.u32 %s641, 1
        %s1282 = smul.addr %s1281, 2
        %s1283 = scalar_lea.vmem [#allocation35], %s1282
        // Predicated region
        $region193: #{rowcol_transformer_forward.1} parent=111 // pred_check
          %p1284 = pneg %p654
        $region194: #{rowcol_transformer_forward.1} parent=111 // pred_check_branch
          %1286 = sbr.rel (%p1284) target = $region196
        $region195: #{rowcol_transformer_forward.1} parent=111 // pred_region
          %1287 = dma.done %s1280, 32
        $region196: #{rowcol_transformer_forward.1} parent=111 // pred_fallthru
          _
        %p1288 = pneg %p82
        %p1289 = pneg %p79
        %s1290 = sand.u32 %s66, 1
        %s1291 = scalar_lea.sflag [#allocation7], %s1290
        %s1292 = sand.u32 %s95, 1
        %s1293 = scalar_lea.vmem [#allocation6], %s1292
        %p1294 = pneg %p108
        %p1295 = pneg %p105
        %s1296 = sand.u32 %s66, 1
        %s1297 = scalar_lea.sflag [#allocation7], %s1296
        %s1298 = sand.u32 %s121, 1
        %s1299 = scalar_lea.vmem [#allocation8], %s1298
        %p1300 = pneg %p134
        %p1301 = pneg %p131
        %s1302 = sand.u32 %s66, 1
        %s1303 = scalar_lea.sflag [#allocation10], %s1302
        %s1304 = sand.u32 %s147, 1
        %s1305 = smul.addr %s1304, 48
        %s1306 = scalar_lea.vmem [#allocation9], %s1305
        %p1307 = pneg %p160
        %p1308 = pneg %p157
        %p1309 = scmp.lt.s32.totalorder %s66, 1
        %s1310 = scalar_select %p1309, %s66, 1
        %s1311 = smul.addr %s1310, 16
        %s1312 = smul.addr %s1311, 4
        %s1313 = scalar_lea.vmem %s4, %s1312
        %p1314 = pneg %p186
        %p1315 = pneg %p183
        %s1316 = sand.u32 %s66, 1
        %s1317 = scalar_lea.sflag [#allocation10], %s1316
        %s1318 = sand.u32 %s199, 1
        %s1319 = scalar_lea.vmem [#allocation11], %s1318
        %p1320 = pneg %p212
        %p1321 = pneg %p209
        %s1322 = sand.u32 %s66, 1
        %s1323 = scalar_lea.sflag [#allocation13], %s1322
        %s1324 = sand.u32 %s225, 1
        %s1325 = scalar_lea.vmem [#allocation12], %s1324
        %p1326 = pneg %p238
        %p1327 = pneg %p235
        %s1328 = sand.u32 %s66, 1
        %s1329 = scalar_lea.sflag [#allocation13], %s1328
        %s1330 = sand.u32 %s251, 1
        %s1331 = scalar_lea.vmem [#allocation14], %s1330
        %p1332 = pneg %p264
        %p1333 = pneg %p261
        %s1334 = sand.u32 %s66, 1
        %s1335 = scalar_lea.sflag [#allocation16], %s1334
        %s1336 = sand.u32 %s277, 1
        %s1337 = smul.addr %s1336, 32
        %s1338 = scalar_lea.vmem [#allocation15], %s1337
        %p1339 = pneg %p290
        %p1340 = pneg %p287
        %s1341 = sand.u32 %s66, 1
        %s1342 = scalar_lea.sflag [#allocation16], %s1341
        %s1343 = sand.u32 %s303, 1
        %s1344 = smul.addr %s1343, 2
        %s1345 = scalar_lea.vmem [#allocation17], %s1344
        %p1346 = pneg %p316
        %p1347 = pneg %p313
        %p1348 = scmp.lt.s32.totalorder %s66, 1
        %s1349 = scalar_select %p1348, %s66, 1
        %s1350 = smul.addr %s1349, 16
        %s1351 = smul.addr %s1350, 4
        %s1352 = scalar_lea.vmem %s10, %s1351
        %p1353 = pneg %p342
        %p1354 = pneg %p339
        %s1355 = sand.u32 %s66, 1
        %s1356 = scalar_lea.sflag [#allocation19], %s1355
        %s1357 = sand.u32 %s355, 1
        %s1358 = scalar_lea.vmem [#allocation18], %s1357
        %p1359 = pneg %p368
        %p1360 = pneg %p365
        %s1361 = sand.u32 %s66, 1
        %s1362 = scalar_lea.sflag [#allocation19], %s1361
        %s1363 = sand.u32 %s381, 1
        %s1364 = smul.addr %s1363, 2
        %s1365 = scalar_lea.vmem [#allocation20], %s1364
        %p1366 = pneg %p394
        %p1367 = pneg %p391
        %s1368 = sand.u32 %s66, 1
        %s1369 = scalar_lea.sflag [#allocation22], %s1368
        %s1370 = sand.u32 %s407, 1
        %s1371 = smul.addr %s1370, 2
        %s1372 = scalar_lea.vmem [#allocation21], %s1371
        %p1373 = pneg %p420
        %p1374 = pneg %p417
        %s1375 = sand.u32 %s66, 1
        %s1376 = scalar_lea.sflag [#allocation22], %s1375
        %s1377 = sand.u32 %s433, 1
        %s1378 = smul.addr %s1377, 1536
        %s1379 = scalar_lea.vmem [#allocation23], %s1378
        %p1380 = pneg %p446
        %p1381 = pneg %p443
        %s1382 = sand.u32 %s66, 1
        %s1383 = scalar_lea.sflag [#allocation25], %s1382
        %s1384 = sand.u32 %s459, 1
        %s1385 = smul.addr %s1384, 512
        %s1386 = scalar_lea.vmem [#allocation24], %s1385
        %p1387 = pneg %p472
        %p1388 = pneg %p469
        %s1389 = sand.u32 %s66, 1
        %s1390 = scalar_lea.sflag [#allocation25], %s1389
        %s1391 = sand.u32 %s485, 1
        %s1392 = smul.addr %s1391, 2
        %s1393 = scalar_lea.vmem [#allocation26], %s1392
        %p1394 = pneg %p498
        %p1395 = pneg %p495
        %s1396 = sand.u32 %s66, 1
        %s1397 = scalar_lea.sflag [#allocation28], %s1396
        %s1398 = sand.u32 %s511, 1
        %s1399 = smul.addr %s1398, 2
        %s1400 = scalar_lea.vmem [#allocation27], %s1399
        %p1401 = pneg %p524
        %p1402 = pneg %p521
        %s1403 = sand.u32 %s66, 1
        %s1404 = scalar_lea.sflag [#allocation28], %s1403
        %s1405 = sand.u32 %s537, 1
        %s1406 = smul.addr %s1405, 2
        %s1407 = scalar_lea.vmem [#allocation29], %s1406
        %p1408 = pneg %p550
        %p1409 = pneg %p547
        %s1410 = sand.u32 %s66, 1
        %s1411 = scalar_lea.sflag [#allocation31], %s1410
        %s1412 = sand.u32 %s563, 1
        %s1413 = smul.addr %s1412, 2048
        %s1414 = scalar_lea.vmem [#allocation30], %s1413
        %p1415 = pneg %p576
        %p1416 = pneg %p573
        %s1417 = sand.u32 %s66, 1
        %s1418 = scalar_lea.sflag [#allocation31], %s1417
        %s1419 = sand.u32 %s589, 1
        %s1420 = smul.addr %s1419, 16
        %s1421 = scalar_lea.vmem [#allocation32], %s1420
        %p1422 = pneg %p602
        %p1423 = pneg %p599
        %s1424 = sand.u32 %s66, 1
        %s1425 = scalar_lea.sflag [#allocation34], %s1424
        %s1426 = sand.u32 %s615, 1
        %s1427 = smul.addr %s1426, 1024
        %s1428 = scalar_lea.vmem [#allocation33], %s1427
        %p1429 = pneg %p628
        %p1430 = pneg %p625
        %s1431 = sand.u32 %s66, 1
        %s1432 = scalar_lea.sflag [#allocation34], %s1431
        %s1433 = sand.u32 %s641, 1
        %s1434 = smul.addr %s1433, 2
        %s1435 = scalar_lea.vmem [#allocation35], %s1434
        %p1436 = pneg %p654
        %p1437 = pneg %p651
        %p1438 = pneg %p675
        %p1439 = pneg %p672
        %p1440 = scmp.lt.s32.totalorder %s66, 1
        %s1441 = scalar_select %p1440, %s66, 1
        %s1442 = smul.addr %s1441, 16
        %s1443 = smul.addr %s1442, 4
        %s1444 = scalar_lea.vmem %s4, %s1443
        %p1445 = scmp.lt.s32.totalorder %s66, 1
        %s1446 = scalar_select %p1445, %s66, 1
        %s1447 = smul.addr %s1446, 16
        %s1448 = smul.addr %s1447, 4
        %s1449 = scalar_lea.vmem %s10, %s1448
        %p1451 = scmp.eq.s32.totalorder %s66, 0
        // Predicated region
        $region197: #{rowcol_transformer_forward.1} parent=111 // pred_check
          %p1452 = pneg %p1451
        $region198: #{rowcol_transformer_forward.1} parent=111 // pred_check_branch
          %1454 = sbr.rel (%p1452) target = $region200
        $region199: #{rowcol_transformer_forward.1} parent=111 // pred_region
          %v1455 = vld [vmem:[#allocation3] sm:$0xff]
          %v1456 = vld [vmem:[#allocation3 + $0x8] sm:$0xff]
          %vm1457 = vcmask 261120
          %1458 = vst.msk [vmem:[#allocation2] sm:$0xff] %vm1457, %v1455
          %1459 = vst.msk [vmem:[#allocation2 + $0x8] sm:$0xff] %vm1457, %v1456
        $region200: #{rowcol_transformer_forward.1} parent=111 // pred_fallthru
          _
        %v1460 = vld [vmem:[#allocation2] sm:$0xff]
        %v1461 = vld [vmem:[#allocation2 + $0x8] sm:$0xff]
        %v1462 = vld [vmem:[%s1117] sm:$0x1]
        %v1463 = vld [vmem:[%s1125] sm:$0x1]
        %v1464 = vld [vmem:[%s1134] sm:$0xff]
        %v1465 = vld [vmem:[%s1134 + $0x8] sm:$0xf]
        %v1466 = vld [vmem:[%s1134 + $0xc] sm:$0xff]
        %v1467 = vld [vmem:[%s1134 + $0x14] sm:$0xf]
        %v1468 = vld [vmem:[%s1134 + $0x18] sm:$0xff]
        %v1469 = vld [vmem:[%s1134 + $0x20] sm:$0xf]
        %v1470 = vld [vmem:[%s1134 + $0x24] sm:$0xff]
        %v1471 = vld [vmem:[%s1134 + $0x2c] sm:$0xf]
        %v1472 = vld [vmem:[%s1444] sm:$0xf]
        %v1473 = vld [vmem:[%s1444 + $0x4] sm:$0xf]
        %v1474 = vld [vmem:[%s1444 + $0x8] sm:$0xf]
        %v1475 = vld [vmem:[%s1444 + $0xc] sm:$0xf]
        %v1476 = vld [vmem:[%s1444 + $0x10] sm:$0xf]
        %v1477 = vld [vmem:[%s1444 + $0x14] sm:$0xf]
        %v1478 = vld [vmem:[%s1444 + $0x18] sm:$0xf]
        %v1479 = vld [vmem:[%s1444 + $0x1c] sm:$0xf]
        %v1480 = vld [vmem:[%s1444 + $0x20] sm:$0xf]
        %v1481 = vld [vmem:[%s1444 + $0x24] sm:$0xf]
        %v1482 = vld [vmem:[%s1444 + $0x28] sm:$0xf]
        %v1483 = vld [vmem:[%s1444 + $0x2c] sm:$0xf]
        %v1484 = vld [vmem:[%s1444 + $0x30] sm:$0xf]
        %v1485 = vld [vmem:[%s1444 + $0x34] sm:$0xf]
        %v1486 = vld [vmem:[%s1444 + $0x38] sm:$0xf]
        %v1487 = vld [vmem:[%s1444 + $0x3c] sm:$0xf]
        %v1488 = vld [vmem:[%s1142] sm:$0x1]
        %vm1489 = vcmask 261120
        %v1490 = vsel %vm1489, %v1460, 0.0
        %1491 = vadd.xlane.f32.xlu0 %v1490
        %v1492 = vpop.xlane.xlu0 %1491
        %v1493 = vsel %vm1489, %v1461, 0.0
        %1494 = vadd.xlane.f32.xlu0 %v1493
        %v1495 = vpop.xlane.xlu0 %1494
        %v1496 = vrcp.pop 32.0
        %v1497 = vmul.f32 %v1492, %v1496
        %v1498 = vmul.f32 %v1495, %v1496
        %v1499 = vsub.f32 %v1460, %v1497
        %v1500 = vsub.f32 %v1461, %v1498
        %v1501 = vmul.f32 %v1499, %v1499
        %v1502 = vmul.f32 %v1500, %v1500
        %v1503 = vsel %vm1489, %v1501, 0.0
        %1504 = vadd.xlane.f32.xlu0 %v1503
        %v1505 = vpop.xlane.xlu0 %1504
        %v1506 = vsel %vm1489, %v1502, 0.0
        %1507 = vadd.xlane.f32.xlu0 %v1506
        %v1508 = vpop.xlane.xlu0 %1507
        %v1509 = vmul.f32 %v1505, %v1496
        %v1510 = vmul.f32 %v1508, %v1496
        %v1511 = vadd.f32 %v1509, 1e-05
        %v1512 = vadd.f32 %v1510, 1e-05
        %v1513 = vrsqrt.pop %v1511
        %v1514 = vrsqrt.pop %v1512
        %v1515 = vmul.f32 %v1499, %v1513
        %v1516 = vmul.f32 %v1500, %v1514
        %v1518 = vlaneseq
        %v1519 = vshrl.u32 %v1518, 7
        %v1520 = vsub.s32 0, %v1519
        %v1521 = vrot.slane %v1462, %v1520
        %v1523 = vmul.f32 %v1515, %v1521
        %v1524 = vmul.f32 %v1516, %v1521
        %v1526 = vlaneseq
        %v1527 = vshrl.u32 %v1526, 7
        %v1528 = vsub.s32 0, %v1527
        %v1529 = vrot.slane %v1463, %v1528
        %v1531 = vadd.f32 %v1523, %v1529
        %v1532 = vadd.f32 %v1524, %v1529
        %v1533 = vpack.c.bf16 %v1532, %v1531
        %v1542 = vunpack.c.l.b16 %v1464
        %v1543 = vunpack.c.h.b16 %v1464
        %v1544 = vunpack.c.l.b16 %v1465
        %v1545 = vunpack.c.l.b16 %v1466
        %v1546 = vunpack.c.h.b16 %v1466
        %v1547 = vunpack.c.l.b16 %v1467
        %v1548 = vunpack.c.l.b16 %v1468
        %v1549 = vunpack.c.h.b16 %v1468
        %v1550 = vunpack.c.l.b16 %v1469
        %v1551 = vunpack.c.l.b16 %v1470
        %v1552 = vunpack.c.h.b16 %v1470
        %v1553 = vunpack.c.l.b16 %v1471
        %v1554 = vpack.c.b16 %v1545, %v1542
        %v1555 = vpack.c.b16 %v1546, %v1543
        %v1556 = vpack.c.b16 %v1547, %v1544
        %v1557 = vpack.c.b16 %v1551, %v1548
        %v1558 = vpack.c.b16 %v1552, %v1549
        %v1559 = vpack.c.b16 %v1553, %v1550
        %v1567 = vsel %vm1489, %v1533, 0
        %1569 = vmatprep.subr.bf16.mxu0 %v1555
        %1570 = vmatpush1.bf16.msra.mxu0 %v1554
        %1571 = vmatprep.subr.bf16.mxu0 %v1558
        %1572 = vmatpush1.bf16.msra.mxu0 %v1557
        %1573 = vmatprep.subr.bf16.mxu0 0
        %1574 = vmatpush1.bf16.msra.mxu0 0
        %1575 = vmatprep.subr.bf16.mxu0 0
        %1576 = vmatpush1.bf16.msra.mxu0 0
        %1577 = vmatprep.subr.bf16.mxu0 0
        %1578 = vmatpush1.bf16.msra.mxu0 0
        %1579 = vmatprep.subr.bf16.mxu0 0
        %1580 = vmatpush1.bf16.msra.mxu0 0
        %1581 = vmatprep.subr.bf16.mxu0 0
        %1582 = vmatpush1.bf16.msra.mxu0 0
        %1583 = vmatprep.subr.bf16.mxu0 0
        %1584 = vmatpush1.bf16.msra.mxu0 0
        %1585 = vmatprep.subr.bf16.mxu0 0
        %1586 = vmatpush1.bf16.msra.mxu0 0
        %1587 = vmatprep.subr.bf16.mxu0 0
        %1588 = vmatpush1.bf16.msra.mxu0 0
        %1589 = vmatprep.subr.bf16.mxu0 0
        %1590 = vmatpush1.bf16.msra.mxu0 0
        %1591 = vmatprep.subr.bf16.mxu0 0
        %1592 = vmatpush1.bf16.msra.mxu0 0
        %1593 = vmatprep.subr.bf16.mxu0 0
        %1594 = vmatpush1.bf16.msra.mxu0 0
        %1595 = vmatprep.subr.bf16.mxu0 0
        %1596 = vmatpush1.bf16.msra.mxu0 0
        %1597 = vmatprep.subr.bf16.mxu0 0
        %1598 = vmatpush1.bf16.msra.mxu0 0
        %1599 = vmatprep.subr.bf16.mxu0 0
        %1600 = vmatpush1.bf16.msra.mxu0 0
        %1601 = vmatprep.mubr.bf16.mxu0 0
        %1602 = vmatmul.mubr.bf16.gmra.mrb[0].mxu0 %v1567
        %v1603 = vpop.f32.mrb[0].mxu0
        %v1604 = vadd.f32 0.0, %v1603
        %v1605 = vpop.f32.mrb[0].mxu0
        %v1606 = vadd.f32 0.0, %v1605
        %v1607 = vpop.f32.mrb[0].mxu0
        %v1608 = vadd.f32 0.0, %v1607
        %v1609 = vpop.f32.mrb[0].mxu0
        %v1610 = vadd.f32 0.0, %v1609
        %1611 = vdwg.mxu0
        %1612 = vmatprep.subr.bf16.mxu0 0
        %1613 = vmatpush1.bf16.msra.mxu0 %v1556
        %1614 = vmatprep.subr.bf16.mxu0 0
        %1615 = vmatpush1.bf16.msra.mxu0 %v1559
        %1616 = vmatprep.subr.bf16.mxu0 0
        %1617 = vmatpush1.bf16.msra.mxu0 0
        %1618 = vmatprep.subr.bf16.mxu0 0
        %1619 = vmatpush1.bf16.msra.mxu0 0
        %1620 = vmatprep.subr.bf16.mxu0 0
        %1621 = vmatpush1.bf16.msra.mxu0 0
        %1622 = vmatprep.subr.bf16.mxu0 0
        %1623 = vmatpush1.bf16.msra.mxu0 0
        %1624 = vmatprep.subr.bf16.mxu0 0
        %1625 = vmatpush1.bf16.msra.mxu0 0
        %1626 = vmatprep.subr.bf16.mxu0 0
        %1627 = vmatpush1.bf16.msra.mxu0 0
        %1628 = vmatprep.subr.bf16.mxu0 0
        %1629 = vmatpush1.bf16.msra.mxu0 0
        %1630 = vmatprep.subr.bf16.mxu0 0
        %1631 = vmatpush1.bf16.msra.mxu0 0
        %1632 = vmatprep.subr.bf16.mxu0 0
        %1633 = vmatpush1.bf16.msra.mxu0 0
        %1634 = vmatprep.subr.bf16.mxu0 0
        %1635 = vmatpush1.bf16.msra.mxu0 0
        %1636 = vmatprep.subr.bf16.mxu0 0
        %1637 = vmatpush1.bf16.msra.mxu0 0
        %1638 = vmatprep.subr.bf16.mxu0 0
        %1639 = vmatpush1.bf16.msra.mxu0 0
        %1640 = vmatprep.subr.bf16.mxu0 0
        %1641 = vmatpush1.bf16.msra.mxu0 0
        %1642 = vmatprep.subr.bf16.mxu0 0
        %1643 = vmatpush1.bf16.msra.mxu0 0
        %1644 = vmatprep.mubr.bf16.mxu0 0
        %1645 = vmatmul.mubr.bf16.gmra.mrb[0].mxu0 %v1567
        %v1646 = vpop.f32.mrb[0].mxu0
        %v1647 = vadd.f32 0.0, %v1646
        %v1648 = vpop.f32.mrb[0].mxu0
        %v1649 = vpop.f32.mrb[0].mxu0
        %v1650 = vadd.f32 0.0, %v1649
        %v1651 = vpop.f32.mrb[0].mxu0
        %1652 = vdwg.mxu0
        %v1653 = vpack.c.bf16 %v1604, %v1604
        %v1654 = vpack.c.bf16 %v1608, %v1608
        %v1655 = vpack.c.bf16 %v1606, %v1606
        %v1656 = vpack.c.bf16 %v1610, %v1610
        %v1657 = vpack.c.bf16 %v1647, %v1647
        %v1658 = vpack.c.bf16 %v1650, %v1650
        %vm1659 = vcmask 130048
        %v1661 = vsel %vm1659, %v1653, 0
        %v1664 = vsel %vm1659, %v1655, 0
        %1666 = vmatprep.subr.bf16.mxu0 0
        %1667 = vmatpush1.bf16.xpose.msra.mxu0 %v1664
        %1668 = vmatprep.subr.bf16.mxu0 0
        %1669 = vmatpush1.bf16.xpose.msra.mxu0 0
        %1670 = vmatprep.subr.bf16.mxu0 0
        %1671 = vmatpush1.bf16.xpose.msra.mxu0 0
        %1672 = vmatprep.subr.bf16.mxu0 0
        %1673 = vmatpush1.bf16.xpose.msra.mxu0 0
        %1674 = vmatprep.subr.bf16.mxu0 0
        %1675 = vmatpush1.bf16.xpose.msra.mxu0 0
        %1676 = vmatprep.subr.bf16.mxu0 0
        %1677 = vmatpush1.bf16.xpose.msra.mxu0 0
        %1678 = vmatprep.subr.bf16.mxu0 0
        %1679 = vmatpush1.bf16.xpose.msra.mxu0 0
        %1680 = vmatprep.subr.bf16.mxu0 0
        %1681 = vmatpush1.bf16.xpose.msra.mxu0 0
        %1682 = vmatprep.subr.bf16.mxu0 0
        %1683 = vmatpush1.bf16.xpose.msra.mxu0 0
        %1684 = vmatprep.subr.bf16.mxu0 0
        %1685 = vmatpush1.bf16.xpose.msra.mxu0 0
        %1686 = vmatprep.subr.bf16.mxu0 0
        %1687 = vmatpush1.bf16.xpose.msra.mxu0 0
        %1688 = vmatprep.subr.bf16.mxu0 0
        %1689 = vmatpush1.bf16.xpose.msra.mxu0 0
        %1690 = vmatprep.subr.bf16.mxu0 0
        %1691 = vmatpush1.bf16.xpose.msra.mxu0 0
        %1692 = vmatprep.subr.bf16.mxu0 0
        %1693 = vmatpush1.bf16.xpose.msra.mxu0 0
        %1694 = vmatprep.subr.bf16.mxu0 0
        %1695 = vmatpush1.bf16.xpose.msra.mxu0 0
        %1696 = vmatprep.subr.bf16.mxu0 0
        %1697 = vmatpush1.bf16.xpose.msra.mxu0 0
        %1698 = vmatprep.mubr.bf16.mxu0 0
        %1699 = vmatmul.mubr.bf16.gmra.mrb[0].mxu0 %v1661
        %v1700 = vpop.f32.mrb[0].mxu0
        %v1701 = vadd.f32 0.0, %v1700
        %v1702 = vpop.f32.mrb[0].mxu0
        %v1703 = vpop.f32.mrb[0].mxu0
        %v1704 = vpop.f32.mrb[0].mxu0
        %1705 = vdwg.mxu0
        %v1707 = vsel %vm1659, %v1654, 0
        %v1710 = vsel %vm1659, %v1656, 0
        %1712 = vmatprep.subr.bf16.mxu0 0
        %1713 = vmatpush1.bf16.xpose.msra.mxu0 %v1710
        %1714 = vmatprep.subr.bf16.mxu0 0
        %1715 = vmatpush1.bf16.xpose.msra.mxu0 0
        %1716 = vmatprep.subr.bf16.mxu0 0
        %1717 = vmatpush1.bf16.xpose.msra.mxu0 0
        %1718 = vmatprep.subr.bf16.mxu0 0
        %1719 = vmatpush1.bf16.xpose.msra.mxu0 0
        %1720 = vmatprep.subr.bf16.mxu0 0
        %1721 = vmatpush1.bf16.xpose.msra.mxu0 0
        %1722 = vmatprep.subr.bf16.mxu0 0
        %1723 = vmatpush1.bf16.xpose.msra.mxu0 0
        %1724 = vmatprep.subr.bf16.mxu0 0
        %1725 = vmatpush1.bf16.xpose.msra.mxu0 0
        %1726 = vmatprep.subr.bf16.mxu0 0
        %1727 = vmatpush1.bf16.xpose.msra.mxu0 0
        %1728 = vmatprep.subr.bf16.mxu0 0
        %1729 = vmatpush1.bf16.xpose.msra.mxu0 0
        %1730 = vmatprep.subr.bf16.mxu0 0
        %1731 = vmatpush1.bf16.xpose.msra.mxu0 0
        %1732 = vmatprep.subr.bf16.mxu0 0
        %1733 = vmatpush1.bf16.xpose.msra.mxu0 0
        %1734 = vmatprep.subr.bf16.mxu0 0
        %1735 = vmatpush1.bf16.xpose.msra.mxu0 0
        %1736 = vmatprep.subr.bf16.mxu0 0
        %1737 = vmatpush1.bf16.xpose.msra.mxu0 0
        %1738 = vmatprep.subr.bf16.mxu0 0
        %1739 = vmatpush1.bf16.xpose.msra.mxu0 0
        %1740 = vmatprep.subr.bf16.mxu0 0
        %1741 = vmatpush1.bf16.xpose.msra.mxu0 0
        %1742 = vmatprep.subr.bf16.mxu0 0
        %1743 = vmatpush1.bf16.xpose.msra.mxu0 0
        %1744 = vmatprep.mubr.bf16.mxu0 0
        %1745 = vmatmul.mubr.bf16.gmra.mrb[0].mxu0 %v1707
        %v1746 = vpop.f32.mrb[0].mxu0
        %v1747 = vadd.f32 0.0, %v1746
        %v1748 = vpop.f32.mrb[0].mxu0
        %v1749 = vpop.f32.mrb[0].mxu0
        %v1750 = vpop.f32.mrb[0].mxu0
        %1751 = vdwg.mxu0
        %v1752 = vmul.f32 %v1701, 0.25
        %v1753 = vmul.f32 %v1747, 0.25
        %vm1754 = vcmask 64512
        %v1755 = vsel %vm1754, %v1752, -inf
        %1756 = vmax.xlane.f32.xlu0 %v1755
        %v1757 = vpop.xlane.xlu0 %1756
        %v1758 = vsel %vm1754, %v1753, -inf
        %1759 = vmax.xlane.f32.xlu0 %v1758
        %v1760 = vpop.xlane.xlu0 %1759
        %v1761 = vsub.f32 %v1752, %v1757
        %v1762 = vsub.f32 %v1753, %v1760
        %v1763 = vmul.f32 %v1761, 1.442695
        %v1764 = vpow.pop %v1763
        %v1765 = vmul.f32 %v1762, 1.442695
        %v1766 = vpow.pop %v1765
        %v1767 = vsel %vm1754, %v1764, 0.0
        %1768 = vadd.xlane.f32.xlu0 %v1767
        %v1769 = vpop.xlane.xlu0 %1768
        %v1770 = vsel %vm1754, %v1766, 0.0
        %1771 = vadd.xlane.f32.xlu0 %v1770
        %v1772 = vpop.xlane.xlu0 %1771
        %v1773 = vrcp.pop %v1769
        %v1774 = vrcp.pop %v1772
        %v1775 = vmul.f32 %v1764, %v1773
        %v1776 = vmul.f32 %v1766, %v1774
        %v1777 = vpack.c.bf16 %v1775, %v1775
        %v1778 = vpack.c.bf16 %v1776, %v1776
        %v1780 = vsel %vm1754, %v1777, 0
        %vm1782 = vcmask 1043456
        %v1784 = vsel %vm1782, %v1657, 0
        %1786 = vmatprep.subr.bf16.mxu0 0
        %1787 = vmatpush1.bf16.msra.mxu0 %v1784
        %1788 = vmatprep.subr.bf16.mxu0 0
        %1789 = vmatpush1.bf16.msra.mxu0 0
        %1790 = vmatprep.subr.bf16.mxu0 0
        %1791 = vmatpush1.bf16.msra.mxu0 0
        %1792 = vmatprep.subr.bf16.mxu0 0
        %1793 = vmatpush1.bf16.msra.mxu0 0
        %1794 = vmatprep.subr.bf16.mxu0 0
        %1795 = vmatpush1.bf16.msra.mxu0 0
        %1796 = vmatprep.subr.bf16.mxu0 0
        %1797 = vmatpush1.bf16.msra.mxu0 0
        %1798 = vmatprep.subr.bf16.mxu0 0
        %1799 = vmatpush1.bf16.msra.mxu0 0
        %1800 = vmatprep.subr.bf16.mxu0 0
        %1801 = vmatpush1.bf16.msra.mxu0 0
        %1802 = vmatprep.subr.bf16.mxu0 0
        %1803 = vmatpush1.bf16.msra.mxu0 0
        %1804 = vmatprep.subr.bf16.mxu0 0
        %1805 = vmatpush1.bf16.msra.mxu0 0
        %1806 = vmatprep.subr.bf16.mxu0 0
        %1807 = vmatpush1.bf16.msra.mxu0 0
        %1808 = vmatprep.subr.bf16.mxu0 0
        %1809 = vmatpush1.bf16.msra.mxu0 0
        %1810 = vmatprep.subr.bf16.mxu0 0
        %1811 = vmatpush1.bf16.msra.mxu0 0
        %1812 = vmatprep.subr.bf16.mxu0 0
        %1813 = vmatpush1.bf16.msra.mxu0 0
        %1814 = vmatprep.subr.bf16.mxu0 0
        %1815 = vmatpush1.bf16.msra.mxu0 0
        %1816 = vmatprep.subr.bf16.mxu0 0
        %1817 = vmatpush1.bf16.msra.mxu0 0
        %1818 = vmatprep.mubr.bf16.mxu0 0
        %1819 = vmatmul.mubr.bf16.gmra.mrb[0].mxu0 %v1780
        %v1820 = vpop.f32.mrb[0].mxu0
        %v1821 = vadd.f32 0.0, %v1820
        %v1822 = vpop.f32.mrb[0].mxu0
        %v1823 = vpop.f32.mrb[0].mxu0
        %v1824 = vpop.f32.mrb[0].mxu0
        %1825 = vdwg.mxu0
        %v1827 = vsel %vm1754, %v1778, 0
        %v1830 = vsel %vm1782, %v1658, 0
        %1832 = vmatprep.subr.bf16.mxu0 0
        %1833 = vmatpush1.bf16.msra.mxu0 %v1830
        %1834 = vmatprep.subr.bf16.mxu0 0
        %1835 = vmatpush1.bf16.msra.mxu0 0
        %1836 = vmatprep.subr.bf16.mxu0 0
        %1837 = vmatpush1.bf16.msra.mxu0 0
        %1838 = vmatprep.subr.bf16.mxu0 0
        %1839 = vmatpush1.bf16.msra.mxu0 0
        %1840 = vmatprep.subr.bf16.mxu0 0
        %1841 = vmatpush1.bf16.msra.mxu0 0
        %1842 = vmatprep.subr.bf16.mxu0 0
        %1843 = vmatpush1.bf16.msra.mxu0 0
        %1844 = vmatprep.subr.bf16.mxu0 0
        %1845 = vmatpush1.bf16.msra.mxu0 0
        %1846 = vmatprep.subr.bf16.mxu0 0
        %1847 = vmatpush1.bf16.msra.mxu0 0
        %1848 = vmatprep.subr.bf16.mxu0 0
        %1849 = vmatpush1.bf16.msra.mxu0 0
        %1850 = vmatprep.subr.bf16.mxu0 0
        %1851 = vmatpush1.bf16.msra.mxu0 0
        %1852 = vmatprep.subr.bf16.mxu0 0
        %1853 = vmatpush1.bf16.msra.mxu0 0
        %1854 = vmatprep.subr.bf16.mxu0 0
        %1855 = vmatpush1.bf16.msra.mxu0 0
        %1856 = vmatprep.subr.bf16.mxu0 0
        %1857 = vmatpush1.bf16.msra.mxu0 0
        %1858 = vmatprep.subr.bf16.mxu0 0
        %1859 = vmatpush1.bf16.msra.mxu0 0
        %1860 = vmatprep.subr.bf16.mxu0 0
        %1861 = vmatpush1.bf16.msra.mxu0 0
        %1862 = vmatprep.subr.bf16.mxu0 0
        %1863 = vmatpush1.bf16.msra.mxu0 0
        %1864 = vmatprep.mubr.bf16.mxu0 0
        %1865 = vmatmul.mubr.bf16.gmra.mrb[0].mxu0 %v1827
        %v1866 = vpop.f32.mrb[0].mxu0
        %v1867 = vadd.f32 0.0, %v1866
        %v1868 = vpop.f32.mrb[0].mxu0
        %v1869 = vpop.f32.mrb[0].mxu0
        %v1870 = vpop.f32.mrb[0].mxu0
        %1871 = vdwg.mxu0
        %1873 = vrot.lane.b32.xlu0 %v1653, 112
        %v1874 = vpop.permute.xlu0 %1873
        %1876 = vrot.lane.b32.xlu0 %v1655, 112
        %v1877 = vpop.permute.xlu0 %1876
        %v1879 = vsel %vm1659, %v1874, 0
        %v1882 = vsel %vm1659, %v1877, 0
        %1884 = vmatprep.subr.bf16.mxu0 0
        %1885 = vmatpush1.bf16.xpose.msra.mxu0 %v1882
        %1886 = vmatprep.subr.bf16.mxu0 0
        %1887 = vmatpush1.bf16.xpose.msra.mxu0 0
        %1888 = vmatprep.subr.bf16.mxu0 0
        %1889 = vmatpush1.bf16.xpose.msra.mxu0 0
        %1890 = vmatprep.subr.bf16.mxu0 0
        %1891 = vmatpush1.bf16.xpose.msra.mxu0 0
        %1892 = vmatprep.subr.bf16.mxu0 0
        %1893 = vmatpush1.bf16.xpose.msra.mxu0 0
        %1894 = vmatprep.subr.bf16.mxu0 0
        %1895 = vmatpush1.bf16.xpose.msra.mxu0 0
        %1896 = vmatprep.subr.bf16.mxu0 0
        %1897 = vmatpush1.bf16.xpose.msra.mxu0 0
        %1898 = vmatprep.subr.bf16.mxu0 0
        %1899 = vmatpush1.bf16.xpose.msra.mxu0 0
        %1900 = vmatprep.subr.bf16.mxu0 0
        %1901 = vmatpush1.bf16.xpose.msra.mxu0 0
        %1902 = vmatprep.subr.bf16.mxu0 0
        %1903 = vmatpush1.bf16.xpose.msra.mxu0 0
        %1904 = vmatprep.subr.bf16.mxu0 0
        %1905 = vmatpush1.bf16.xpose.msra.mxu0 0
        %1906 = vmatprep.subr.bf16.mxu0 0
        %1907 = vmatpush1.bf16.xpose.msra.mxu0 0
        %1908 = vmatprep.subr.bf16.mxu0 0
        %1909 = vmatpush1.bf16.xpose.msra.mxu0 0
        %1910 = vmatprep.subr.bf16.mxu0 0
        %1911 = vmatpush1.bf16.xpose.msra.mxu0 0
        %1912 = vmatprep.subr.bf16.mxu0 0
        %1913 = vmatpush1.bf16.xpose.msra.mxu0 0
        %1914 = vmatprep.subr.bf16.mxu0 0
        %1915 = vmatpush1.bf16.xpose.msra.mxu0 0
        %1916 = vmatprep.mubr.bf16.mxu0 0
        %1917 = vmatmul.mubr.bf16.gmra.mrb[0].mxu0 %v1879
        %v1918 = vpop.f32.mrb[0].mxu0
        %v1919 = vadd.f32 0.0, %v1918
        %v1920 = vpop.f32.mrb[0].mxu0
        %v1921 = vpop.f32.mrb[0].mxu0
        %v1922 = vpop.f32.mrb[0].mxu0
        %1923 = vdwg.mxu0
        %1925 = vrot.lane.b32.xlu0 %v1654, 112
        %v1926 = vpop.permute.xlu0 %1925
        %1928 = vrot.lane.b32.xlu0 %v1656, 112
        %v1929 = vpop.permute.xlu0 %1928
        %v1931 = vsel %vm1659, %v1926, 0
        %v1934 = vsel %vm1659, %v1929, 0
        %1936 = vmatprep.subr.bf16.mxu0 0
        %1937 = vmatpush1.bf16.xpose.msra.mxu0 %v1934
        %1938 = vmatprep.subr.bf16.mxu0 0
        %1939 = vmatpush1.bf16.xpose.msra.mxu0 0
        %1940 = vmatprep.subr.bf16.mxu0 0
        %1941 = vmatpush1.bf16.xpose.msra.mxu0 0
        %1942 = vmatprep.subr.bf16.mxu0 0
        %1943 = vmatpush1.bf16.xpose.msra.mxu0 0
        %1944 = vmatprep.subr.bf16.mxu0 0
        %1945 = vmatpush1.bf16.xpose.msra.mxu0 0
        %1946 = vmatprep.subr.bf16.mxu0 0
        %1947 = vmatpush1.bf16.xpose.msra.mxu0 0
        %1948 = vmatprep.subr.bf16.mxu0 0
        %1949 = vmatpush1.bf16.xpose.msra.mxu0 0
        %1950 = vmatprep.subr.bf16.mxu0 0
        %1951 = vmatpush1.bf16.xpose.msra.mxu0 0
        %1952 = vmatprep.subr.bf16.mxu0 0
        %1953 = vmatpush1.bf16.xpose.msra.mxu0 0
        %1954 = vmatprep.subr.bf16.mxu0 0
        %1955 = vmatpush1.bf16.xpose.msra.mxu0 0
        %1956 = vmatprep.subr.bf16.mxu0 0
        %1957 = vmatpush1.bf16.xpose.msra.mxu0 0
        %1958 = vmatprep.subr.bf16.mxu0 0
        %1959 = vmatpush1.bf16.xpose.msra.mxu0 0
        %1960 = vmatprep.subr.bf16.mxu0 0
        %1961 = vmatpush1.bf16.xpose.msra.mxu0 0
        %1962 = vmatprep.subr.bf16.mxu0 0
        %1963 = vmatpush1.bf16.xpose.msra.mxu0 0
        %1964 = vmatprep.subr.bf16.mxu0 0
        %1965 = vmatpush1.bf16.xpose.msra.mxu0 0
        %1966 = vmatprep.subr.bf16.mxu0 0
        %1967 = vmatpush1.bf16.xpose.msra.mxu0 0
        %1968 = vmatprep.mubr.bf16.mxu0 0
        %1969 = vmatmul.mubr.bf16.gmra.mrb[0].mxu0 %v1931
        %v1970 = vpop.f32.mrb[0].mxu0
        %v1971 = vadd.f32 0.0, %v1970
        %v1972 = vpop.f32.mrb[0].mxu0
        %v1973 = vpop.f32.mrb[0].mxu0
        %v1974 = vpop.f32.mrb[0].mxu0
        %1975 = vdwg.mxu0
        %v1976 = vmul.f32 %v1919, 0.25
        %v1977 = vmul.f32 %v1971, 0.25
        %v1978 = vsel %vm1754, %v1976, -inf
        %1979 = vmax.xlane.f32.xlu0 %v1978
        %v1980 = vpop.xlane.xlu0 %1979
        %v1981 = vsel %vm1754, %v1977, -inf
        %1982 = vmax.xlane.f32.xlu0 %v1981
        %v1983 = vpop.xlane.xlu0 %1982
        %v1984 = vsub.f32 %v1976, %v1980
        %v1985 = vsub.f32 %v1977, %v1983
        %v1986 = vmul.f32 %v1984, 1.442695
        %v1987 = vpow.pop %v1986
        %v1988 = vmul.f32 %v1985, 1.442695
        %v1989 = vpow.pop %v1988
        %v1990 = vsel %vm1754, %v1987, 0.0
        %1991 = vadd.xlane.f32.xlu0 %v1990
        %v1992 = vpop.xlane.xlu0 %1991
        %v1993 = vsel %vm1754, %v1989, 0.0
        %1994 = vadd.xlane.f32.xlu0 %v1993
        %v1995 = vpop.xlane.xlu0 %1994
        %v1996 = vrcp.pop %v1992
        %v1997 = vrcp.pop %v1995
        %v1998 = vmul.f32 %v1987, %v1996
        %v1999 = vmul.f32 %v1989, %v1997
        %v2000 = vpack.c.bf16 %v1998, %v1998
        %v2001 = vpack.c.bf16 %v1999, %v1999
        %2003 = vrot.lane.b32.xlu0 %v1657, 112
        %v2004 = vpop.permute.xlu0 %2003
        %v2006 = vsel %vm1754, %v2000, 0
        %v2009 = vsel %vm1782, %v2004, 0
        %2011 = vmatprep.subr.bf16.mxu0 0
        %2012 = vmatpush1.bf16.msra.mxu0 %v2009
        %2013 = vmatprep.subr.bf16.mxu0 0
        %2014 = vmatpush1.bf16.msra.mxu0 0
        %2015 = vmatprep.subr.bf16.mxu0 0
        %2016 = vmatpush1.bf16.msra.mxu0 0
        %2017 = vmatprep.subr.bf16.mxu0 0
        %2018 = vmatpush1.bf16.msra.mxu0 0
        %2019 = vmatprep.subr.bf16.mxu0 0
        %2020 = vmatpush1.bf16.msra.mxu0 0
        %2021 = vmatprep.subr.bf16.mxu0 0
        %2022 = vmatpush1.bf16.msra.mxu0 0
        %2023 = vmatprep.subr.bf16.mxu0 0
        %2024 = vmatpush1.bf16.msra.mxu0 0
        %2025 = vmatprep.subr.bf16.mxu0 0
        %2026 = vmatpush1.bf16.msra.mxu0 0
        %2027 = vmatprep.subr.bf16.mxu0 0
        %2028 = vmatpush1.bf16.msra.mxu0 0
        %2029 = vmatprep.subr.bf16.mxu0 0
        %2030 = vmatpush1.bf16.msra.mxu0 0
        %2031 = vmatprep.subr.bf16.mxu0 0
        %2032 = vmatpush1.bf16.msra.mxu0 0
        %2033 = vmatprep.subr.bf16.mxu0 0
        %2034 = vmatpush1.bf16.msra.mxu0 0
        %2035 = vmatprep.subr.bf16.mxu0 0
        %2036 = vmatpush1.bf16.msra.mxu0 0
        %2037 = vmatprep.subr.bf16.mxu0 0
        %2038 = vmatpush1.bf16.msra.mxu0 0
        %2039 = vmatprep.subr.bf16.mxu0 0
        %2040 = vmatpush1.bf16.msra.mxu0 0
        %2041 = vmatprep.subr.bf16.mxu0 0
        %2042 = vmatpush1.bf16.msra.mxu0 0
        %2043 = vmatprep.mubr.bf16.mxu0 0
        %2044 = vmatmul.mubr.bf16.gmra.mrb[0].mxu0 %v2006
        %v2045 = vpop.f32.mrb[0].mxu0
        %v2046 = vadd.f32 0.0, %v2045
        %v2047 = vpop.f32.mrb[0].mxu0
        %v2048 = vpop.f32.mrb[0].mxu0
        %v2049 = vpop.f32.mrb[0].mxu0
        %2050 = vdwg.mxu0
        %2052 = vrot.lane.b32.xlu0 %v1658, 112
        %v2053 = vpop.permute.xlu0 %2052
        %v2055 = vsel %vm1754, %v2001, 0
        %v2058 = vsel %vm1782, %v2053, 0
        %2060 = vmatprep.subr.bf16.mxu0 0
        %2061 = vmatpush1.bf16.msra.mxu0 %v2058
        %2062 = vmatprep.subr.bf16.mxu0 0
        %2063 = vmatpush1.bf16.msra.mxu0 0
        %2064 = vmatprep.subr.bf16.mxu0 0
        %2065 = vmatpush1.bf16.msra.mxu0 0
        %2066 = vmatprep.subr.bf16.mxu0 0
        %2067 = vmatpush1.bf16.msra.mxu0 0
        %2068 = vmatprep.subr.bf16.mxu0 0
        %2069 = vmatpush1.bf16.msra.mxu0 0
        %2070 = vmatprep.subr.bf16.mxu0 0
        %2071 = vmatpush1.bf16.msra.mxu0 0
        %2072 = vmatprep.subr.bf16.mxu0 0
        %2073 = vmatpush1.bf16.msra.mxu0 0
        %2074 = vmatprep.subr.bf16.mxu0 0
        %2075 = vmatpush1.bf16.msra.mxu0 0
        %2076 = vmatprep.subr.bf16.mxu0 0
        %2077 = vmatpush1.bf16.msra.mxu0 0
        %2078 = vmatprep.subr.bf16.mxu0 0
        %2079 = vmatpush1.bf16.msra.mxu0 0
        %2080 = vmatprep.subr.bf16.mxu0 0
        %2081 = vmatpush1.bf16.msra.mxu0 0
        %2082 = vmatprep.subr.bf16.mxu0 0
        %2083 = vmatpush1.bf16.msra.mxu0 0
        %2084 = vmatprep.subr.bf16.mxu0 0
        %2085 = vmatpush1.bf16.msra.mxu0 0
        %2086 = vmatprep.subr.bf16.mxu0 0
        %2087 = vmatpush1.bf16.msra.mxu0 0
        %2088 = vmatprep.subr.bf16.mxu0 0
        %2089 = vmatpush1.bf16.msra.mxu0 0
        %2090 = vmatprep.subr.bf16.mxu0 0
        %2091 = vmatpush1.bf16.msra.mxu0 0
        %2092 = vmatprep.mubr.bf16.mxu0 0
        %2093 = vmatmul.mubr.bf16.gmra.mrb[0].mxu0 %v2055
        %v2094 = vpop.f32.mrb[0].mxu0
        %v2095 = vadd.f32 0.0, %v2094
        %v2096 = vpop.f32.mrb[0].mxu0
        %v2097 = vpop.f32.mrb[0].mxu0
        %v2098 = vpop.f32.mrb[0].mxu0
        %2099 = vdwg.mxu0
        %2100 = vrot.lane.b32.xlu0 %v1653, 96
        %v2101 = vpop.permute.xlu0 %2100
        %2102 = vrot.lane.b32.xlu0 %v1655, 96
        %v2103 = vpop.permute.xlu0 %2102
        %v2105 = vsel %vm1659, %v2101, 0
        %v2108 = vsel %vm1659, %v2103, 0
        %2110 = vmatprep.subr.bf16.mxu0 0
        %2111 = vmatpush1.bf16.xpose.msra.mxu0 %v2108
        %2112 = vmatprep.subr.bf16.mxu0 0
        %2113 = vmatpush1.bf16.xpose.msra.mxu0 0
        %2114 = vmatprep.subr.bf16.mxu0 0
        %2115 = vmatpush1.bf16.xpose.msra.mxu0 0
        %2116 = vmatprep.subr.bf16.mxu0 0
        %2117 = vmatpush1.bf16.xpose.msra.mxu0 0
        %2118 = vmatprep.subr.bf16.mxu0 0
        %2119 = vmatpush1.bf16.xpose.msra.mxu0 0
        %2120 = vmatprep.subr.bf16.mxu0 0
        %2121 = vmatpush1.bf16.xpose.msra.mxu0 0
        %2122 = vmatprep.subr.bf16.mxu0 0
        %2123 = vmatpush1.bf16.xpose.msra.mxu0 0
        %2124 = vmatprep.subr.bf16.mxu0 0
        %2125 = vmatpush1.bf16.xpose.msra.mxu0 0
        %2126 = vmatprep.subr.bf16.mxu0 0
        %2127 = vmatpush1.bf16.xpose.msra.mxu0 0
        %2128 = vmatprep.subr.bf16.mxu0 0
        %2129 = vmatpush1.bf16.xpose.msra.mxu0 0
        %2130 = vmatprep.subr.bf16.mxu0 0
        %2131 = vmatpush1.bf16.xpose.msra.mxu0 0
        %2132 = vmatprep.subr.bf16.mxu0 0
        %2133 = vmatpush1.bf16.xpose.msra.mxu0 0
        %2134 = vmatprep.subr.bf16.mxu0 0
        %2135 = vmatpush1.bf16.xpose.msra.mxu0 0
        %2136 = vmatprep.subr.bf16.mxu0 0
        %2137 = vmatpush1.bf16.xpose.msra.mxu0 0
        %2138 = vmatprep.subr.bf16.mxu0 0
        %2139 = vmatpush1.bf16.xpose.msra.mxu0 0
        %2140 = vmatprep.subr.bf16.mxu0 0
        %2141 = vmatpush1.bf16.xpose.msra.mxu0 0
        %2142 = vmatprep.mubr.bf16.mxu0 0
        %2143 = vmatmul.mubr.bf16.gmra.mrb[0].mxu0 %v2105
        %v2144 = vpop.f32.mrb[0].mxu0
        %v2145 = vadd.f32 0.0, %v2144
        %v2146 = vpop.f32.mrb[0].mxu0
        %v2147 = vpop.f32.mrb[0].mxu0
        %v2148 = vpop.f32.mrb[0].mxu0
        %2149 = vdwg.mxu0
        %2150 = vrot.lane.b32.xlu0 %v1654, 96
        %v2151 = vpop.permute.xlu0 %2150
        %2152 = vrot.lane.b32.xlu0 %v1656, 96
        %v2153 = vpop.permute.xlu0 %2152
        %v2155 = vsel %vm1659, %v2151, 0
        %v2158 = vsel %vm1659, %v2153, 0
        %2160 = vmatprep.subr.bf16.mxu0 0
        %2161 = vmatpush1.bf16.xpose.msra.mxu0 %v2158
        %2162 = vmatprep.subr.bf16.mxu0 0
        %2163 = vmatpush1.bf16.xpose.msra.mxu0 0
        %2164 = vmatprep.subr.bf16.mxu0 0
        %2165 = vmatpush1.bf16.xpose.msra.mxu0 0
        %2166 = vmatprep.subr.bf16.mxu0 0
        %2167 = vmatpush1.bf16.xpose.msra.mxu0 0
        %2168 = vmatprep.subr.bf16.mxu0 0
        %2169 = vmatpush1.bf16.xpose.msra.mxu0 0
        %2170 = vmatprep.subr.bf16.mxu0 0
        %2171 = vmatpush1.bf16.xpose.msra.mxu0 0
        %2172 = vmatprep.subr.bf16.mxu0 0
        %2173 = vmatpush1.bf16.xpose.msra.mxu0 0
        %2174 = vmatprep.subr.bf16.mxu0 0
        %2175 = vmatpush1.bf16.xpose.msra.mxu0 0
        %2176 = vmatprep.subr.bf16.mxu0 0
        %2177 = vmatpush1.bf16.xpose.msra.mxu0 0
        %2178 = vmatprep.subr.bf16.mxu0 0
        %2179 = vmatpush1.bf16.xpose.msra.mxu0 0
        %2180 = vmatprep.subr.bf16.mxu0 0
        %2181 = vmatpush1.bf16.xpose.msra.mxu0 0
        %2182 = vmatprep.subr.bf16.mxu0 0
        %2183 = vmatpush1.bf16.xpose.msra.mxu0 0
        %2184 = vmatprep.subr.bf16.mxu0 0
        %2185 = vmatpush1.bf16.xpose.msra.mxu0 0
        %2186 = vmatprep.subr.bf16.mxu0 0
        %2187 = vmatpush1.bf16.xpose.msra.mxu0 0
        %2188 = vmatprep.subr.bf16.mxu0 0
        %2189 = vmatpush1.bf16.xpose.msra.mxu0 0
        %2190 = vmatprep.subr.bf16.mxu0 0
        %2191 = vmatpush1.bf16.xpose.msra.mxu0 0
        %2192 = vmatprep.mubr.bf16.mxu0 0
        %2193 = vmatmul.mubr.bf16.gmra.mrb[0].mxu0 %v2155
        %v2194 = vpop.f32.mrb[0].mxu0
        %v2195 = vadd.f32 0.0, %v2194
        %v2196 = vpop.f32.mrb[0].mxu0
        %v2197 = vpop.f32.mrb[0].mxu0
        %v2198 = vpop.f32.mrb[0].mxu0
        %2199 = vdwg.mxu0
        %v2200 = vmul.f32 %v2145, 0.25
        %v2201 = vmul.f32 %v2195, 0.25
        %v2202 = vsel %vm1754, %v2200, -inf
        %2203 = vmax.xlane.f32.xlu0 %v2202
        %v2204 = vpop.xlane.xlu0 %2203
        %v2205 = vsel %vm1754, %v2201, -inf
        %2206 = vmax.xlane.f32.xlu0 %v2205
        %v2207 = vpop.xlane.xlu0 %2206
        %v2208 = vsub.f32 %v2200, %v2204
        %v2209 = vsub.f32 %v2201, %v2207
        %v2210 = vmul.f32 %v2208, 1.442695
        %v2211 = vpow.pop %v2210
        %v2212 = vmul.f32 %v2209, 1.442695
        %v2213 = vpow.pop %v2212
        %v2214 = vsel %vm1754, %v2211, 0.0
        %2215 = vadd.xlane.f32.xlu0 %v2214
        %v2216 = vpop.xlane.xlu0 %2215
        %v2217 = vsel %vm1754, %v2213, 0.0
        %2218 = vadd.xlane.f32.xlu0 %v2217
        %v2219 = vpop.xlane.xlu0 %2218
        %v2220 = vrcp.pop %v2216
        %v2221 = vrcp.pop %v2219
        %v2222 = vmul.f32 %v2211, %v2220
        %v2223 = vmul.f32 %v2213, %v2221
        %v2224 = vpack.c.bf16 %v2222, %v2222
        %v2225 = vpack.c.bf16 %v2223, %v2223
        %2226 = vrot.lane.b32.xlu0 %v1657, 96
        %v2227 = vpop.permute.xlu0 %2226
        %v2229 = vsel %vm1754, %v2224, 0
        %v2232 = vsel %vm1782, %v2227, 0
        %2234 = vmatprep.subr.bf16.mxu0 0
        %2235 = vmatpush1.bf16.msra.mxu0 %v2232
        %2236 = vmatprep.subr.bf16.mxu0 0
        %2237 = vmatpush1.bf16.msra.mxu0 0
        %2238 = vmatprep.subr.bf16.mxu0 0
        %2239 = vmatpush1.bf16.msra.mxu0 0
        %2240 = vmatprep.subr.bf16.mxu0 0
        %2241 = vmatpush1.bf16.msra.mxu0 0
        %2242 = vmatprep.subr.bf16.mxu0 0
        %2243 = vmatpush1.bf16.msra.mxu0 0
        %2244 = vmatprep.subr.bf16.mxu0 0
        %2245 = vmatpush1.bf16.msra.mxu0 0
        %2246 = vmatprep.subr.bf16.mxu0 0
        %2247 = vmatpush1.bf16.msra.mxu0 0
        %2248 = vmatprep.subr.bf16.mxu0 0
        %2249 = vmatpush1.bf16.msra.mxu0 0
        %2250 = vmatprep.subr.bf16.mxu0 0
        %2251 = vmatpush1.bf16.msra.mxu0 0
        %2252 = vmatprep.subr.bf16.mxu0 0
        %2253 = vmatpush1.bf16.msra.mxu0 0
        %2254 = vmatprep.subr.bf16.mxu0 0
        %2255 = vmatpush1.bf16.msra.mxu0 0
        %2256 = vmatprep.subr.bf16.mxu0 0
        %2257 = vmatpush1.bf16.msra.mxu0 0
        %2258 = vmatprep.subr.bf16.mxu0 0
        %2259 = vmatpush1.bf16.msra.mxu0 0
        %2260 = vmatprep.subr.bf16.mxu0 0
        %2261 = vmatpush1.bf16.msra.mxu0 0
        %2262 = vmatprep.subr.bf16.mxu0 0
        %2263 = vmatpush1.bf16.msra.mxu0 0
        %2264 = vmatprep.subr.bf16.mxu0 0
        %2265 = vmatpush1.bf16.msra.mxu0 0
        %2266 = vmatprep.mubr.bf16.mxu0 0
        %2267 = vmatmul.mubr.bf16.gmra.mrb[0].mxu0 %v2229
        %v2268 = vpop.f32.mrb[0].mxu0
        %v2269 = vadd.f32 0.0, %v2268
        %v2270 = vpop.f32.mrb[0].mxu0
        %v2271 = vpop.f32.mrb[0].mxu0
        %v2272 = vpop.f32.mrb[0].mxu0
        %2273 = vdwg.mxu0
        %2274 = vrot.lane.b32.xlu0 %v1658, 96
        %v2275 = vpop.permute.xlu0 %2274
        %v2277 = vsel %vm1754, %v2225, 0
        %v2280 = vsel %vm1782, %v2275, 0
        %2282 = vmatprep.subr.bf16.mxu0 0
        %2283 = vmatpush1.bf16.msra.mxu0 %v2280
        %2284 = vmatprep.subr.bf16.mxu0 0
        %2285 = vmatpush1.bf16.msra.mxu0 0
        %2286 = vmatprep.subr.bf16.mxu0 0
        %2287 = vmatpush1.bf16.msra.mxu0 0
        %2288 = vmatprep.subr.bf16.mxu0 0
        %2289 = vmatpush1.bf16.msra.mxu0 0
        %2290 = vmatprep.subr.bf16.mxu0 0
        %2291 = vmatpush1.bf16.msra.mxu0 0
        %2292 = vmatprep.subr.bf16.mxu0 0
        %2293 = vmatpush1.bf16.msra.mxu0 0
        %2294 = vmatprep.subr.bf16.mxu0 0
        %2295 = vmatpush1.bf16.msra.mxu0 0
        %2296 = vmatprep.subr.bf16.mxu0 0
        %2297 = vmatpush1.bf16.msra.mxu0 0
        %2298 = vmatprep.subr.bf16.mxu0 0
        %2299 = vmatpush1.bf16.msra.mxu0 0
        %2300 = vmatprep.subr.bf16.mxu0 0
        %2301 = vmatpush1.bf16.msra.mxu0 0
        %2302 = vmatprep.subr.bf16.mxu0 0
        %2303 = vmatpush1.bf16.msra.mxu0 0
        %2304 = vmatprep.subr.bf16.mxu0 0
        %2305 = vmatpush1.bf16.msra.mxu0 0
        %2306 = vmatprep.subr.bf16.mxu0 0
        %2307 = vmatpush1.bf16.msra.mxu0 0
        %2308 = vmatprep.subr.bf16.mxu0 0
        %2309 = vmatpush1.bf16.msra.mxu0 0
        %2310 = vmatprep.subr.bf16.mxu0 0
        %2311 = vmatpush1.bf16.msra.mxu0 0
        %2312 = vmatprep.subr.bf16.mxu0 0
        %2313 = vmatpush1.bf16.msra.mxu0 0
        %2314 = vmatprep.mubr.bf16.mxu0 0
        %2315 = vmatmul.mubr.bf16.gmra.mrb[0].mxu0 %v2277
        %v2316 = vpop.f32.mrb[0].mxu0
        %v2317 = vadd.f32 0.0, %v2316
        %v2318 = vpop.f32.mrb[0].mxu0
        %v2319 = vpop.f32.mrb[0].mxu0
        %v2320 = vpop.f32.mrb[0].mxu0
        %2321 = vdwg.mxu0
        %2322 = vrot.lane.b32.xlu0 %v1653, 80
        %v2323 = vpop.permute.xlu0 %2322
        %2324 = vrot.lane.b32.xlu0 %v1655, 80
        %v2325 = vpop.permute.xlu0 %2324
        %v2327 = vsel %vm1659, %v2323, 0
        %v2330 = vsel %vm1659, %v2325, 0
        %2332 = vmatprep.subr.bf16.mxu0 0
        %2333 = vmatpush1.bf16.xpose.msra.mxu0 %v2330
        %2334 = vmatprep.subr.bf16.mxu0 0
        %2335 = vmatpush1.bf16.xpose.msra.mxu0 0
        %2336 = vmatprep.subr.bf16.mxu0 0
        %2337 = vmatpush1.bf16.xpose.msra.mxu0 0
        %2338 = vmatprep.subr.bf16.mxu0 0
        %2339 = vmatpush1.bf16.xpose.msra.mxu0 0
        %2340 = vmatprep.subr.bf16.mxu0 0
        %2341 = vmatpush1.bf16.xpose.msra.mxu0 0
        %2342 = vmatprep.subr.bf16.mxu0 0
        %2343 = vmatpush1.bf16.xpose.msra.mxu0 0
        %2344 = vmatprep.subr.bf16.mxu0 0
        %2345 = vmatpush1.bf16.xpose.msra.mxu0 0
        %2346 = vmatprep.subr.bf16.mxu0 0
        %2347 = vmatpush1.bf16.xpose.msra.mxu0 0
        %2348 = vmatprep.subr.bf16.mxu0 0
        %2349 = vmatpush1.bf16.xpose.msra.mxu0 0
        %2350 = vmatprep.subr.bf16.mxu0 0
        %2351 = vmatpush1.bf16.xpose.msra.mxu0 0
        %2352 = vmatprep.subr.bf16.mxu0 0
        %2353 = vmatpush1.bf16.xpose.msra.mxu0 0
        %2354 = vmatprep.subr.bf16.mxu0 0
        %2355 = vmatpush1.bf16.xpose.msra.mxu0 0
        %2356 = vmatprep.subr.bf16.mxu0 0
        %2357 = vmatpush1.bf16.xpose.msra.mxu0 0
        %2358 = vmatprep.subr.bf16.mxu0 0
        %2359 = vmatpush1.bf16.xpose.msra.mxu0 0
        %2360 = vmatprep.subr.bf16.mxu0 0
        %2361 = vmatpush1.bf16.xpose.msra.mxu0 0
        %2362 = vmatprep.subr.bf16.mxu0 0
        %2363 = vmatpush1.bf16.xpose.msra.mxu0 0
        %2364 = vmatprep.mubr.bf16.mxu0 0
        %2365 = vmatmul.mubr.bf16.gmra.mrb[0].mxu0 %v2327
        %v2366 = vpop.f32.mrb[0].mxu0
        %v2367 = vadd.f32 0.0, %v2366
        %v2368 = vpop.f32.mrb[0].mxu0
        %v2369 = vpop.f32.mrb[0].mxu0
        %v2370 = vpop.f32.mrb[0].mxu0
        %2371 = vdwg.mxu0
        %2372 = vrot.lane.b32.xlu0 %v1654, 80
        %v2373 = vpop.permute.xlu0 %2372
        %2374 = vrot.lane.b32.xlu0 %v1656, 80
        %v2375 = vpop.permute.xlu0 %2374
        %v2377 = vsel %vm1659, %v2373, 0
        %v2380 = vsel %vm1659, %v2375, 0
        %2382 = vmatprep.subr.bf16.mxu0 0
        %2383 = vmatpush1.bf16.xpose.msra.mxu0 %v2380
        %2384 = vmatprep.subr.bf16.mxu0 0
        %2385 = vmatpush1.bf16.xpose.msra.mxu0 0
        %2386 = vmatprep.subr.bf16.mxu0 0
        %2387 = vmatpush1.bf16.xpose.msra.mxu0 0
        %2388 = vmatprep.subr.bf16.mxu0 0
        %2389 = vmatpush1.bf16.xpose.msra.mxu0 0
        %2390 = vmatprep.subr.bf16.mxu0 0
        %2391 = vmatpush1.bf16.xpose.msra.mxu0 0
        %2392 = vmatprep.subr.bf16.mxu0 0
        %2393 = vmatpush1.bf16.xpose.msra.mxu0 0
        %2394 = vmatprep.subr.bf16.mxu0 0
        %2395 = vmatpush1.bf16.xpose.msra.mxu0 0
        %2396 = vmatprep.subr.bf16.mxu0 0
        %2397 = vmatpush1.bf16.xpose.msra.mxu0 0
        %2398 = vmatprep.subr.bf16.mxu0 0
        %2399 = vmatpush1.bf16.xpose.msra.mxu0 0
        %2400 = vmatprep.subr.bf16.mxu0 0
        %2401 = vmatpush1.bf16.xpose.msra.mxu0 0
        %2402 = vmatprep.subr.bf16.mxu0 0
        %2403 = vmatpush1.bf16.xpose.msra.mxu0 0
        %2404 = vmatprep.subr.bf16.mxu0 0
        %2405 = vmatpush1.bf16.xpose.msra.mxu0 0
        %2406 = vmatprep.subr.bf16.mxu0 0
        %2407 = vmatpush1.bf16.xpose.msra.mxu0 0
        %2408 = vmatprep.subr.bf16.mxu0 0
        %2409 = vmatpush1.bf16.xpose.msra.mxu0 0
        %2410 = vmatprep.subr.bf16.mxu0 0
        %2411 = vmatpush1.bf16.xpose.msra.mxu0 0
        %2412 = vmatprep.subr.bf16.mxu0 0
        %2413 = vmatpush1.bf16.xpose.msra.mxu0 0
        %2414 = vmatprep.mubr.bf16.mxu0 0
        %2415 = vmatmul.mubr.bf16.gmra.mrb[0].mxu0 %v2377
        %v2416 = vpop.f32.mrb[0].mxu0
        %v2417 = vadd.f32 0.0, %v2416
        %v2418 = vpop.f32.mrb[0].mxu0
        %v2419 = vpop.f32.mrb[0].mxu0
        %v2420 = vpop.f32.mrb[0].mxu0
        %2421 = vdwg.mxu0
        %v2422 = vmul.f32 %v2367, 0.25
        %v2423 = vmul.f32 %v2417, 0.25
        %v2424 = vsel %vm1754, %v2422, -inf
        %2425 = vmax.xlane.f32.xlu0 %v2424
        %v2426 = vpop.xlane.xlu0 %2425
        %v2427 = vsel %vm1754, %v2423, -inf
        %2428 = vmax.xlane.f32.xlu0 %v2427
        %v2429 = vpop.xlane.xlu0 %2428
        %v2430 = vsub.f32 %v2422, %v2426
        %v2431 = vsub.f32 %v2423, %v2429
        %v2432 = vmul.f32 %v2430, 1.442695
        %v2433 = vpow.pop %v2432
        %v2434 = vmul.f32 %v2431, 1.442695
        %v2435 = vpow.pop %v2434
        %v2436 = vsel %vm1754, %v2433, 0.0
        %2437 = vadd.xlane.f32.xlu0 %v2436
        %v2438 = vpop.xlane.xlu0 %2437
        %v2439 = vsel %vm1754, %v2435, 0.0
        %2440 = vadd.xlane.f32.xlu0 %v2439
        %v2441 = vpop.xlane.xlu0 %2440
        %v2442 = vrcp.pop %v2438
        %v2443 = vrcp.pop %v2441
        %v2444 = vmul.f32 %v2433, %v2442
        %v2445 = vmul.f32 %v2435, %v2443
        %v2446 = vpack.c.bf16 %v2444, %v2444
        %v2447 = vpack.c.bf16 %v2445, %v2445
        %2448 = vrot.lane.b32.xlu0 %v1657, 80
        %v2449 = vpop.permute.xlu0 %2448
        %v2451 = vsel %vm1754, %v2446, 0
        %v2454 = vsel %vm1782, %v2449, 0
        %2456 = vmatprep.subr.bf16.mxu0 0
        %2457 = vmatpush1.bf16.msra.mxu0 %v2454
        %2458 = vmatprep.subr.bf16.mxu0 0
        %2459 = vmatpush1.bf16.msra.mxu0 0
        %2460 = vmatprep.subr.bf16.mxu0 0
        %2461 = vmatpush1.bf16.msra.mxu0 0
        %2462 = vmatprep.subr.bf16.mxu0 0
        %2463 = vmatpush1.bf16.msra.mxu0 0
        %2464 = vmatprep.subr.bf16.mxu0 0
        %2465 = vmatpush1.bf16.msra.mxu0 0
        %2466 = vmatprep.subr.bf16.mxu0 0
        %2467 = vmatpush1.bf16.msra.mxu0 0
        %2468 = vmatprep.subr.bf16.mxu0 0
        %2469 = vmatpush1.bf16.msra.mxu0 0
        %2470 = vmatprep.subr.bf16.mxu0 0
        %2471 = vmatpush1.bf16.msra.mxu0 0
        %2472 = vmatprep.subr.bf16.mxu0 0
        %2473 = vmatpush1.bf16.msra.mxu0 0
        %2474 = vmatprep.subr.bf16.mxu0 0
        %2475 = vmatpush1.bf16.msra.mxu0 0
        %2476 = vmatprep.subr.bf16.mxu0 0
        %2477 = vmatpush1.bf16.msra.mxu0 0
        %2478 = vmatprep.subr.bf16.mxu0 0
        %2479 = vmatpush1.bf16.msra.mxu0 0
        %2480 = vmatprep.subr.bf16.mxu0 0
        %2481 = vmatpush1.bf16.msra.mxu0 0
        %2482 = vmatprep.subr.bf16.mxu0 0
        %2483 = vmatpush1.bf16.msra.mxu0 0
        %2484 = vmatprep.subr.bf16.mxu0 0
        %2485 = vmatpush1.bf16.msra.mxu0 0
        %2486 = vmatprep.subr.bf16.mxu0 0
        %2487 = vmatpush1.bf16.msra.mxu0 0
        %2488 = vmatprep.mubr.bf16.mxu0 0
        %2489 = vmatmul.mubr.bf16.gmra.mrb[0].mxu0 %v2451
        %v2490 = vpop.f32.mrb[0].mxu0
        %v2491 = vadd.f32 0.0, %v2490
        %v2492 = vpop.f32.mrb[0].mxu0
        %v2493 = vpop.f32.mrb[0].mxu0
        %v2494 = vpop.f32.mrb[0].mxu0
        %2495 = vdwg.mxu0
        %2496 = vrot.lane.b32.xlu0 %v1658, 80
        %v2497 = vpop.permute.xlu0 %2496
        %v2499 = vsel %vm1754, %v2447, 0
        %v2502 = vsel %vm1782, %v2497, 0
        %2504 = vmatprep.subr.bf16.mxu0 0
        %2505 = vmatpush1.bf16.msra.mxu0 %v2502
        %2506 = vmatprep.subr.bf16.mxu0 0
        %2507 = vmatpush1.bf16.msra.mxu0 0
        %2508 = vmatprep.subr.bf16.mxu0 0
        %2509 = vmatpush1.bf16.msra.mxu0 0
        %2510 = vmatprep.subr.bf16.mxu0 0
        %2511 = vmatpush1.bf16.msra.mxu0 0
        %2512 = vmatprep.subr.bf16.mxu0 0
        %2513 = vmatpush1.bf16.msra.mxu0 0
        %2514 = vmatprep.subr.bf16.mxu0 0
        %2515 = vmatpush1.bf16.msra.mxu0 0
        %2516 = vmatprep.subr.bf16.mxu0 0
        %2517 = vmatpush1.bf16.msra.mxu0 0
        %2518 = vmatprep.subr.bf16.mxu0 0
        %2519 = vmatpush1.bf16.msra.mxu0 0
        %2520 = vmatprep.subr.bf16.mxu0 0
        %2521 = vmatpush1.bf16.msra.mxu0 0
        %2522 = vmatprep.subr.bf16.mxu0 0
        %2523 = vmatpush1.bf16.msra.mxu0 0
        %2524 = vmatprep.subr.bf16.mxu0 0
        %2525 = vmatpush1.bf16.msra.mxu0 0
        %2526 = vmatprep.subr.bf16.mxu0 0
        %2527 = vmatpush1.bf16.msra.mxu0 0
        %2528 = vmatprep.subr.bf16.mxu0 0
        %2529 = vmatpush1.bf16.msra.mxu0 0
        %2530 = vmatprep.subr.bf16.mxu0 0
        %2531 = vmatpush1.bf16.msra.mxu0 0
        %2532 = vmatprep.subr.bf16.mxu0 0
        %2533 = vmatpush1.bf16.msra.mxu0 0
        %2534 = vmatprep.subr.bf16.mxu0 0
        %2535 = vmatpush1.bf16.msra.mxu0 0
        %2536 = vmatprep.mubr.bf16.mxu0 0
        %2537 = vmatmul.mubr.bf16.gmra.mrb[0].mxu0 %v2499
        %v2538 = vpop.f32.mrb[0].mxu0
        %v2539 = vadd.f32 0.0, %v2538
        %v2540 = vpop.f32.mrb[0].mxu0
        %v2541 = vpop.f32.mrb[0].mxu0
        %v2542 = vpop.f32.mrb[0].mxu0
        %2543 = vdwg.mxu0
        %2544 = vrot.lane.b32.xlu0 %v1653, 64
        %v2545 = vpop.permute.xlu0 %2544
        %2546 = vrot.lane.b32.xlu0 %v1655, 64
        %v2547 = vpop.permute.xlu0 %2546
        %v2549 = vsel %vm1659, %v2545, 0
        %v2552 = vsel %vm1659, %v2547, 0
        %2554 = vmatprep.subr.bf16.mxu0 0
        %2555 = vmatpush1.bf16.xpose.msra.mxu0 %v2552
        %2556 = vmatprep.subr.bf16.mxu0 0
        %2557 = vmatpush1.bf16.xpose.msra.mxu0 0
        %2558 = vmatprep.subr.bf16.mxu0 0
        %2559 = vmatpush1.bf16.xpose.msra.mxu0 0
        %2560 = vmatprep.subr.bf16.mxu0 0
        %2561 = vmatpush1.bf16.xpose.msra.mxu0 0
        %2562 = vmatprep.subr.bf16.mxu0 0
        %2563 = vmatpush1.bf16.xpose.msra.mxu0 0
        %2564 = vmatprep.subr.bf16.mxu0 0
        %2565 = vmatpush1.bf16.xpose.msra.mxu0 0
        %2566 = vmatprep.subr.bf16.mxu0 0
        %2567 = vmatpush1.bf16.xpose.msra.mxu0 0
        %2568 = vmatprep.subr.bf16.mxu0 0
        %2569 = vmatpush1.bf16.xpose.msra.mxu0 0
        %2570 = vmatprep.subr.bf16.mxu0 0
        %2571 = vmatpush1.bf16.xpose.msra.mxu0 0
        %2572 = vmatprep.subr.bf16.mxu0 0
        %2573 = vmatpush1.bf16.xpose.msra.mxu0 0
        %2574 = vmatprep.subr.bf16.mxu0 0
        %2575 = vmatpush1.bf16.xpose.msra.mxu0 0
        %2576 = vmatprep.subr.bf16.mxu0 0
        %2577 = vmatpush1.bf16.xpose.msra.mxu0 0
        %2578 = vmatprep.subr.bf16.mxu0 0
        %2579 = vmatpush1.bf16.xpose.msra.mxu0 0
        %2580 = vmatprep.subr.bf16.mxu0 0
        %2581 = vmatpush1.bf16.xpose.msra.mxu0 0
        %2582 = vmatprep.subr.bf16.mxu0 0
        %2583 = vmatpush1.bf16.xpose.msra.mxu0 0
        %2584 = vmatprep.subr.bf16.mxu0 0
        %2585 = vmatpush1.bf16.xpose.msra.mxu0 0
        %2586 = vmatprep.mubr.bf16.mxu0 0
        %2587 = vmatmul.mubr.bf16.gmra.mrb[0].mxu0 %v2549
        %v2588 = vpop.f32.mrb[0].mxu0
        %v2589 = vadd.f32 0.0, %v2588
        %v2590 = vpop.f32.mrb[0].mxu0
        %v2591 = vpop.f32.mrb[0].mxu0
        %v2592 = vpop.f32.mrb[0].mxu0
        %2593 = vdwg.mxu0
        %2594 = vrot.lane.b32.xlu0 %v1654, 64
        %v2595 = vpop.permute.xlu0 %2594
        %2596 = vrot.lane.b32.xlu0 %v1656, 64
        %v2597 = vpop.permute.xlu0 %2596
        %v2599 = vsel %vm1659, %v2595, 0
        %v2602 = vsel %vm1659, %v2597, 0
        %2604 = vmatprep.subr.bf16.mxu0 0
        %2605 = vmatpush1.bf16.xpose.msra.mxu0 %v2602
        %2606 = vmatprep.subr.bf16.mxu0 0
        %2607 = vmatpush1.bf16.xpose.msra.mxu0 0
        %2608 = vmatprep.subr.bf16.mxu0 0
        %2609 = vmatpush1.bf16.xpose.msra.mxu0 0
        %2610 = vmatprep.subr.bf16.mxu0 0
        %2611 = vmatpush1.bf16.xpose.msra.mxu0 0
        %2612 = vmatprep.subr.bf16.mxu0 0
        %2613 = vmatpush1.bf16.xpose.msra.mxu0 0
        %2614 = vmatprep.subr.bf16.mxu0 0
        %2615 = vmatpush1.bf16.xpose.msra.mxu0 0
        %2616 = vmatprep.subr.bf16.mxu0 0
        %2617 = vmatpush1.bf16.xpose.msra.mxu0 0
        %2618 = vmatprep.subr.bf16.mxu0 0
        %2619 = vmatpush1.bf16.xpose.msra.mxu0 0
        %2620 = vmatprep.subr.bf16.mxu0 0
        %2621 = vmatpush1.bf16.xpose.msra.mxu0 0
        %2622 = vmatprep.subr.bf16.mxu0 0
        %2623 = vmatpush1.bf16.xpose.msra.mxu0 0
        %2624 = vmatprep.subr.bf16.mxu0 0
        %2625 = vmatpush1.bf16.xpose.msra.mxu0 0
        %2626 = vmatprep.subr.bf16.mxu0 0
        %2627 = vmatpush1.bf16.xpose.msra.mxu0 0
        %2628 = vmatprep.subr.bf16.mxu0 0
        %2629 = vmatpush1.bf16.xpose.msra.mxu0 0
        %2630 = vmatprep.subr.bf16.mxu0 0
        %2631 = vmatpush1.bf16.xpose.msra.mxu0 0
        %2632 = vmatprep.subr.bf16.mxu0 0
        %2633 = vmatpush1.bf16.xpose.msra.mxu0 0
        %2634 = vmatprep.subr.bf16.mxu0 0
        %2635 = vmatpush1.bf16.xpose.msra.mxu0 0
        %2636 = vmatprep.mubr.bf16.mxu0 0
        %2637 = vmatmul.mubr.bf16.gmra.mrb[0].mxu0 %v2599
        %v2638 = vpop.f32.mrb[0].mxu0
        %v2639 = vadd.f32 0.0, %v2638
        %v2640 = vpop.f32.mrb[0].mxu0
        %v2641 = vpop.f32.mrb[0].mxu0
        %v2642 = vpop.f32.mrb[0].mxu0
        %2643 = vdwg.mxu0
        %v2644 = vmul.f32 %v2589, 0.25
        %v2645 = vmul.f32 %v2639, 0.25
        %v2646 = vsel %vm1754, %v2644, -inf
        %2647 = vmax.xlane.f32.xlu0 %v2646
        %v2648 = vpop.xlane.xlu0 %2647
        %v2649 = vsel %vm1754, %v2645, -inf
        %2650 = vmax.xlane.f32.xlu0 %v2649
        %v2651 = vpop.xlane.xlu0 %2650
        %v2652 = vsub.f32 %v2644, %v2648
        %v2653 = vsub.f32 %v2645, %v2651
        %v2654 = vmul.f32 %v2652, 1.442695
        %v2655 = vpow.pop %v2654
        %v2656 = vmul.f32 %v2653, 1.442695
        %v2657 = vpow.pop %v2656
        %v2658 = vsel %vm1754, %v2655, 0.0
        %2659 = vadd.xlane.f32.xlu0 %v2658
        %v2660 = vpop.xlane.xlu0 %2659
        %v2661 = vsel %vm1754, %v2657, 0.0
        %2662 = vadd.xlane.f32.xlu0 %v2661
        %v2663 = vpop.xlane.xlu0 %2662
        %v2664 = vrcp.pop %v2660
        %v2665 = vrcp.pop %v2663
        %v2666 = vmul.f32 %v2655, %v2664
        %v2667 = vmul.f32 %v2657, %v2665
        %v2668 = vpack.c.bf16 %v2666, %v2666
        %v2669 = vpack.c.bf16 %v2667, %v2667
        %2670 = vrot.lane.b32.xlu0 %v1657, 64
        %v2671 = vpop.permute.xlu0 %2670
        %v2673 = vsel %vm1754, %v2668, 0
        %v2676 = vsel %vm1782, %v2671, 0
        %2678 = vmatprep.subr.bf16.mxu0 0
        %2679 = vmatpush1.bf16.msra.mxu0 %v2676
        %2680 = vmatprep.subr.bf16.mxu0 0
        %2681 = vmatpush1.bf16.msra.mxu0 0
        %2682 = vmatprep.subr.bf16.mxu0 0
        %2683 = vmatpush1.bf16.msra.mxu0 0
        %2684 = vmatprep.subr.bf16.mxu0 0
        %2685 = vmatpush1.bf16.msra.mxu0 0
        %2686 = vmatprep.subr.bf16.mxu0 0
        %2687 = vmatpush1.bf16.msra.mxu0 0
        %2688 = vmatprep.subr.bf16.mxu0 0
        %2689 = vmatpush1.bf16.msra.mxu0 0
        %2690 = vmatprep.subr.bf16.mxu0 0
        %2691 = vmatpush1.bf16.msra.mxu0 0
        %2692 = vmatprep.subr.bf16.mxu0 0
        %2693 = vmatpush1.bf16.msra.mxu0 0
        %2694 = vmatprep.subr.bf16.mxu0 0
        %2695 = vmatpush1.bf16.msra.mxu0 0
        %2696 = vmatprep.subr.bf16.mxu0 0
        %2697 = vmatpush1.bf16.msra.mxu0 0
        %2698 = vmatprep.subr.bf16.mxu0 0
        %2699 = vmatpush1.bf16.msra.mxu0 0
        %2700 = vmatprep.subr.bf16.mxu0 0
        %2701 = vmatpush1.bf16.msra.mxu0 0
        %2702 = vmatprep.subr.bf16.mxu0 0
        %2703 = vmatpush1.bf16.msra.mxu0 0
        %2704 = vmatprep.subr.bf16.mxu0 0
        %2705 = vmatpush1.bf16.msra.mxu0 0
        %2706 = vmatprep.subr.bf16.mxu0 0
        %2707 = vmatpush1.bf16.msra.mxu0 0
        %2708 = vmatprep.subr.bf16.mxu0 0
        %2709 = vmatpush1.bf16.msra.mxu0 0
        %2710 = vmatprep.mubr.bf16.mxu0 0
        %2711 = vmatmul.mubr.bf16.gmra.mrb[0].mxu0 %v2673
        %v2712 = vpop.f32.mrb[0].mxu0
        %v2713 = vadd.f32 0.0, %v2712
        %v2714 = vpop.f32.mrb[0].mxu0
        %v2715 = vpop.f32.mrb[0].mxu0
        %v2716 = vpop.f32.mrb[0].mxu0
        %2717 = vdwg.mxu0
        %2718 = vrot.lane.b32.xlu0 %v1658, 64
        %v2719 = vpop.permute.xlu0 %2718
        %v2721 = vsel %vm1754, %v2669, 0
        %v2724 = vsel %vm1782, %v2719, 0
        %2726 = vmatprep.subr.bf16.mxu0 0
        %2727 = vmatpush1.bf16.msra.mxu0 %v2724
        %2728 = vmatprep.subr.bf16.mxu0 0
        %2729 = vmatpush1.bf16.msra.mxu0 0
        %2730 = vmatprep.subr.bf16.mxu0 0
        %2731 = vmatpush1.bf16.msra.mxu0 0
        %2732 = vmatprep.subr.bf16.mxu0 0
        %2733 = vmatpush1.bf16.msra.mxu0 0
        %2734 = vmatprep.subr.bf16.mxu0 0
        %2735 = vmatpush1.bf16.msra.mxu0 0
        %2736 = vmatprep.subr.bf16.mxu0 0
        %2737 = vmatpush1.bf16.msra.mxu0 0
        %2738 = vmatprep.subr.bf16.mxu0 0
        %2739 = vmatpush1.bf16.msra.mxu0 0
        %2740 = vmatprep.subr.bf16.mxu0 0
        %2741 = vmatpush1.bf16.msra.mxu0 0
        %2742 = vmatprep.subr.bf16.mxu0 0
        %2743 = vmatpush1.bf16.msra.mxu0 0
        %2744 = vmatprep.subr.bf16.mxu0 0
        %2745 = vmatpush1.bf16.msra.mxu0 0
        %2746 = vmatprep.subr.bf16.mxu0 0
        %2747 = vmatpush1.bf16.msra.mxu0 0
        %2748 = vmatprep.subr.bf16.mxu0 0
        %2749 = vmatpush1.bf16.msra.mxu0 0
        %2750 = vmatprep.subr.bf16.mxu0 0
        %2751 = vmatpush1.bf16.msra.mxu0 0
        %2752 = vmatprep.subr.bf16.mxu0 0
        %2753 = vmatpush1.bf16.msra.mxu0 0
        %2754 = vmatprep.subr.bf16.mxu0 0
        %2755 = vmatpush1.bf16.msra.mxu0 0
        %2756 = vmatprep.subr.bf16.mxu0 0
        %2757 = vmatpush1.bf16.msra.mxu0 0
        %2758 = vmatprep.mubr.bf16.mxu0 0
        %2759 = vmatmul.mubr.bf16.gmra.mrb[0].mxu0 %v2721
        %v2760 = vpop.f32.mrb[0].mxu0
        %v2761 = vadd.f32 0.0, %v2760
        %v2762 = vpop.f32.mrb[0].mxu0
        %v2763 = vpop.f32.mrb[0].mxu0
        %v2764 = vpop.f32.mrb[0].mxu0
        %2765 = vdwg.mxu0
        %2766 = vrot.lane.b32.xlu0 %v1653, 48
        %v2767 = vpop.permute.xlu0 %2766
        %2768 = vrot.lane.b32.xlu0 %v1655, 48
        %v2769 = vpop.permute.xlu0 %2768
        %v2771 = vsel %vm1659, %v2767, 0
        %v2774 = vsel %vm1659, %v2769, 0
        %2776 = vmatprep.subr.bf16.mxu0 0
        %2777 = vmatpush1.bf16.xpose.msra.mxu0 %v2774
        %2778 = vmatprep.subr.bf16.mxu0 0
        %2779 = vmatpush1.bf16.xpose.msra.mxu0 0
        %2780 = vmatprep.subr.bf16.mxu0 0
        %2781 = vmatpush1.bf16.xpose.msra.mxu0 0
        %2782 = vmatprep.subr.bf16.mxu0 0
        %2783 = vmatpush1.bf16.xpose.msra.mxu0 0
        %2784 = vmatprep.subr.bf16.mxu0 0
        %2785 = vmatpush1.bf16.xpose.msra.mxu0 0
        %2786 = vmatprep.subr.bf16.mxu0 0
        %2787 = vmatpush1.bf16.xpose.msra.mxu0 0
        %2788 = vmatprep.subr.bf16.mxu0 0
        %2789 = vmatpush1.bf16.xpose.msra.mxu0 0
        %2790 = vmatprep.subr.bf16.mxu0 0
        %2791 = vmatpush1.bf16.xpose.msra.mxu0 0
        %2792 = vmatprep.subr.bf16.mxu0 0
        %2793 = vmatpush1.bf16.xpose.msra.mxu0 0
        %2794 = vmatprep.subr.bf16.mxu0 0
        %2795 = vmatpush1.bf16.xpose.msra.mxu0 0
        %2796 = vmatprep.subr.bf16.mxu0 0
        %2797 = vmatpush1.bf16.xpose.msra.mxu0 0
        %2798 = vmatprep.subr.bf16.mxu0 0
        %2799 = vmatpush1.bf16.xpose.msra.mxu0 0
        %2800 = vmatprep.subr.bf16.mxu0 0
        %2801 = vmatpush1.bf16.xpose.msra.mxu0 0
        %2802 = vmatprep.subr.bf16.mxu0 0
        %2803 = vmatpush1.bf16.xpose.msra.mxu0 0
        %2804 = vmatprep.subr.bf16.mxu0 0
        %2805 = vmatpush1.bf16.xpose.msra.mxu0 0
        %2806 = vmatprep.subr.bf16.mxu0 0
        %2807 = vmatpush1.bf16.xpose.msra.mxu0 0
        %2808 = vmatprep.mubr.bf16.mxu0 0
        %2809 = vmatmul.mubr.bf16.gmra.mrb[0].mxu0 %v2771
        %v2810 = vpop.f32.mrb[0].mxu0
        %v2811 = vadd.f32 0.0, %v2810
        %v2812 = vpop.f32.mrb[0].mxu0
        %v2813 = vpop.f32.mrb[0].mxu0
        %v2814 = vpop.f32.mrb[0].mxu0
        %2815 = vdwg.mxu0
        %2816 = vrot.lane.b32.xlu0 %v1654, 48
        %v2817 = vpop.permute.xlu0 %2816
        %2818 = vrot.lane.b32.xlu0 %v1656, 48
        %v2819 = vpop.permute.xlu0 %2818
        %v2821 = vsel %vm1659, %v2817, 0
        %v2824 = vsel %vm1659, %v2819, 0
        %2826 = vmatprep.subr.bf16.mxu0 0
        %2827 = vmatpush1.bf16.xpose.msra.mxu0 %v2824
        %2828 = vmatprep.subr.bf16.mxu0 0
        %2829 = vmatpush1.bf16.xpose.msra.mxu0 0
        %2830 = vmatprep.subr.bf16.mxu0 0
        %2831 = vmatpush1.bf16.xpose.msra.mxu0 0
        %2832 = vmatprep.subr.bf16.mxu0 0
        %2833 = vmatpush1.bf16.xpose.msra.mxu0 0
        %2834 = vmatprep.subr.bf16.mxu0 0
        %2835 = vmatpush1.bf16.xpose.msra.mxu0 0
        %2836 = vmatprep.subr.bf16.mxu0 0
        %2837 = vmatpush1.bf16.xpose.msra.mxu0 0
        %2838 = vmatprep.subr.bf16.mxu0 0
        %2839 = vmatpush1.bf16.xpose.msra.mxu0 0
        %2840 = vmatprep.subr.bf16.mxu0 0
        %2841 = vmatpush1.bf16.xpose.msra.mxu0 0
        %2842 = vmatprep.subr.bf16.mxu0 0
        %2843 = vmatpush1.bf16.xpose.msra.mxu0 0
        %2844 = vmatprep.subr.bf16.mxu0 0
        %2845 = vmatpush1.bf16.xpose.msra.mxu0 0
        %2846 = vmatprep.subr.bf16.mxu0 0
        %2847 = vmatpush1.bf16.xpose.msra.mxu0 0
        %2848 = vmatprep.subr.bf16.mxu0 0
        %2849 = vmatpush1.bf16.xpose.msra.mxu0 0
        %2850 = vmatprep.subr.bf16.mxu0 0
        %2851 = vmatpush1.bf16.xpose.msra.mxu0 0
        %2852 = vmatprep.subr.bf16.mxu0 0
        %2853 = vmatpush1.bf16.xpose.msra.mxu0 0
        %2854 = vmatprep.subr.bf16.mxu0 0
        %2855 = vmatpush1.bf16.xpose.msra.mxu0 0
        %2856 = vmatprep.subr.bf16.mxu0 0
        %2857 = vmatpush1.bf16.xpose.msra.mxu0 0
        %2858 = vmatprep.mubr.bf16.mxu0 0
        %2859 = vmatmul.mubr.bf16.gmra.mrb[0].mxu0 %v2821
        %v2860 = vpop.f32.mrb[0].mxu0
        %v2861 = vadd.f32 0.0, %v2860
        %v2862 = vpop.f32.mrb[0].mxu0
        %v2863 = vpop.f32.mrb[0].mxu0
        %v2864 = vpop.f32.mrb[0].mxu0
        %2865 = vdwg.mxu0
        %v2866 = vmul.f32 %v2811, 0.25
        %v2867 = vmul.f32 %v2861, 0.25
        %v2868 = vsel %vm1754, %v2866, -inf
        %2869 = vmax.xlane.f32.xlu0 %v2868
        %v2870 = vpop.xlane.xlu0 %2869
        %v2871 = vsel %vm1754, %v2867, -inf
        %2872 = vmax.xlane.f32.xlu0 %v2871
        %v2873 = vpop.xlane.xlu0 %2872
        %v2874 = vsub.f32 %v2866, %v2870
        %v2875 = vsub.f32 %v2867, %v2873
        %v2876 = vmul.f32 %v2874, 1.442695
        %v2877 = vpow.pop %v2876
        %v2878 = vmul.f32 %v2875, 1.442695
        %v2879 = vpow.pop %v2878
        %v2880 = vsel %vm1754, %v2877, 0.0
        %2881 = vadd.xlane.f32.xlu0 %v2880
        %v2882 = vpop.xlane.xlu0 %2881
        %v2883 = vsel %vm1754, %v2879, 0.0
        %2884 = vadd.xlane.f32.xlu0 %v2883
        %v2885 = vpop.xlane.xlu0 %2884
        %v2886 = vrcp.pop %v2882
        %v2887 = vrcp.pop %v2885
        %v2888 = vmul.f32 %v2877, %v2886
        %v2889 = vmul.f32 %v2879, %v2887
        %v2890 = vpack.c.bf16 %v2888, %v2888
        %v2891 = vpack.c.bf16 %v2889, %v2889
        %2892 = vrot.lane.b32.xlu0 %v1657, 48
        %v2893 = vpop.permute.xlu0 %2892
        %v2895 = vsel %vm1754, %v2890, 0
        %v2898 = vsel %vm1782, %v2893, 0
        %2900 = vmatprep.subr.bf16.mxu0 0
        %2901 = vmatpush1.bf16.msra.mxu0 %v2898
        %2902 = vmatprep.subr.bf16.mxu0 0
        %2903 = vmatpush1.bf16.msra.mxu0 0
        %2904 = vmatprep.subr.bf16.mxu0 0
        %2905 = vmatpush1.bf16.msra.mxu0 0
        %2906 = vmatprep.subr.bf16.mxu0 0
        %2907 = vmatpush1.bf16.msra.mxu0 0
        %2908 = vmatprep.subr.bf16.mxu0 0
        %2909 = vmatpush1.bf16.msra.mxu0 0
        %2910 = vmatprep.subr.bf16.mxu0 0
        %2911 = vmatpush1.bf16.msra.mxu0 0
        %2912 = vmatprep.subr.bf16.mxu0 0
        %2913 = vmatpush1.bf16.msra.mxu0 0
        %2914 = vmatprep.subr.bf16.mxu0 0
        %2915 = vmatpush1.bf16.msra.mxu0 0
        %2916 = vmatprep.subr.bf16.mxu0 0
        %2917 = vmatpush1.bf16.msra.mxu0 0
        %2918 = vmatprep.subr.bf16.mxu0 0
        %2919 = vmatpush1.bf16.msra.mxu0 0
        %2920 = vmatprep.subr.bf16.mxu0 0
        %2921 = vmatpush1.bf16.msra.mxu0 0
        %2922 = vmatprep.subr.bf16.mxu0 0
        %2923 = vmatpush1.bf16.msra.mxu0 0
        %2924 = vmatprep.subr.bf16.mxu0 0
        %2925 = vmatpush1.bf16.msra.mxu0 0
        %2926 = vmatprep.subr.bf16.mxu0 0
        %2927 = vmatpush1.bf16.msra.mxu0 0
        %2928 = vmatprep.subr.bf16.mxu0 0
        %2929 = vmatpush1.bf16.msra.mxu0 0
        %2930 = vmatprep.subr.bf16.mxu0 0
        %2931 = vmatpush1.bf16.msra.mxu0 0
        %2932 = vmatprep.mubr.bf16.mxu0 0
        %2933 = vmatmul.mubr.bf16.gmra.mrb[0].mxu0 %v2895
        %v2934 = vpop.f32.mrb[0].mxu0
        %v2935 = vadd.f32 0.0, %v2934
        %v2936 = vpop.f32.mrb[0].mxu0
        %v2937 = vpop.f32.mrb[0].mxu0
        %v2938 = vpop.f32.mrb[0].mxu0
        %2939 = vdwg.mxu0
        %2940 = vrot.lane.b32.xlu0 %v1658, 48
        %v2941 = vpop.permute.xlu0 %2940
        %v2943 = vsel %vm1754, %v2891, 0
        %v2946 = vsel %vm1782, %v2941, 0
        %2948 = vmatprep.subr.bf16.mxu0 0
        %2949 = vmatpush1.bf16.msra.mxu0 %v2946
        %2950 = vmatprep.subr.bf16.mxu0 0
        %2951 = vmatpush1.bf16.msra.mxu0 0
        %2952 = vmatprep.subr.bf16.mxu0 0
        %2953 = vmatpush1.bf16.msra.mxu0 0
        %2954 = vmatprep.subr.bf16.mxu0 0
        %2955 = vmatpush1.bf16.msra.mxu0 0
        %2956 = vmatprep.subr.bf16.mxu0 0
        %2957 = vmatpush1.bf16.msra.mxu0 0
        %2958 = vmatprep.subr.bf16.mxu0 0
        %2959 = vmatpush1.bf16.msra.mxu0 0
        %2960 = vmatprep.subr.bf16.mxu0 0
        %2961 = vmatpush1.bf16.msra.mxu0 0
        %2962 = vmatprep.subr.bf16.mxu0 0
        %2963 = vmatpush1.bf16.msra.mxu0 0
        %2964 = vmatprep.subr.bf16.mxu0 0
        %2965 = vmatpush1.bf16.msra.mxu0 0
        %2966 = vmatprep.subr.bf16.mxu0 0
        %2967 = vmatpush1.bf16.msra.mxu0 0
        %2968 = vmatprep.subr.bf16.mxu0 0
        %2969 = vmatpush1.bf16.msra.mxu0 0
        %2970 = vmatprep.subr.bf16.mxu0 0
        %2971 = vmatpush1.bf16.msra.mxu0 0
        %2972 = vmatprep.subr.bf16.mxu0 0
        %2973 = vmatpush1.bf16.msra.mxu0 0
        %2974 = vmatprep.subr.bf16.mxu0 0
        %2975 = vmatpush1.bf16.msra.mxu0 0
        %2976 = vmatprep.subr.bf16.mxu0 0
        %2977 = vmatpush1.bf16.msra.mxu0 0
        %2978 = vmatprep.subr.bf16.mxu0 0
        %2979 = vmatpush1.bf16.msra.mxu0 0
        %2980 = vmatprep.mubr.bf16.mxu0 0
        %2981 = vmatmul.mubr.bf16.gmra.mrb[0].mxu0 %v2943
        %v2982 = vpop.f32.mrb[0].mxu0
        %v2983 = vadd.f32 0.0, %v2982
        %v2984 = vpop.f32.mrb[0].mxu0
        %v2985 = vpop.f32.mrb[0].mxu0
        %v2986 = vpop.f32.mrb[0].mxu0
        %2987 = vdwg.mxu0
        %2988 = vrot.lane.b32.xlu0 %v1653, 32
        %v2989 = vpop.permute.xlu0 %2988
        %2990 = vrot.lane.b32.xlu0 %v1655, 32
        %v2991 = vpop.permute.xlu0 %2990
        %v2993 = vsel %vm1659, %v2989, 0
        %v2996 = vsel %vm1659, %v2991, 0
        %2998 = vmatprep.subr.bf16.mxu0 0
        %2999 = vmatpush1.bf16.xpose.msra.mxu0 %v2996
        %3000 = vmatprep.subr.bf16.mxu0 0
        %3001 = vmatpush1.bf16.xpose.msra.mxu0 0
        %3002 = vmatprep.subr.bf16.mxu0 0
        %3003 = vmatpush1.bf16.xpose.msra.mxu0 0
        %3004 = vmatprep.subr.bf16.mxu0 0
        %3005 = vmatpush1.bf16.xpose.msra.mxu0 0
        %3006 = vmatprep.subr.bf16.mxu0 0
        %3007 = vmatpush1.bf16.xpose.msra.mxu0 0
        %3008 = vmatprep.subr.bf16.mxu0 0
        %3009 = vmatpush1.bf16.xpose.msra.mxu0 0
        %3010 = vmatprep.subr.bf16.mxu0 0
        %3011 = vmatpush1.bf16.xpose.msra.mxu0 0
        %3012 = vmatprep.subr.bf16.mxu0 0
        %3013 = vmatpush1.bf16.xpose.msra.mxu0 0
        %3014 = vmatprep.subr.bf16.mxu0 0
        %3015 = vmatpush1.bf16.xpose.msra.mxu0 0
        %3016 = vmatprep.subr.bf16.mxu0 0
        %3017 = vmatpush1.bf16.xpose.msra.mxu0 0
        %3018 = vmatprep.subr.bf16.mxu0 0
        %3019 = vmatpush1.bf16.xpose.msra.mxu0 0
        %3020 = vmatprep.subr.bf16.mxu0 0
        %3021 = vmatpush1.bf16.xpose.msra.mxu0 0
        %3022 = vmatprep.subr.bf16.mxu0 0
        %3023 = vmatpush1.bf16.xpose.msra.mxu0 0
        %3024 = vmatprep.subr.bf16.mxu0 0
        %3025 = vmatpush1.bf16.xpose.msra.mxu0 0
        %3026 = vmatprep.subr.bf16.mxu0 0
        %3027 = vmatpush1.bf16.xpose.msra.mxu0 0
        %3028 = vmatprep.subr.bf16.mxu0 0
        %3029 = vmatpush1.bf16.xpose.msra.mxu0 0
        %3030 = vmatprep.mubr.bf16.mxu0 0
        %3031 = vmatmul.mubr.bf16.gmra.mrb[0].mxu0 %v2993
        %v3032 = vpop.f32.mrb[0].mxu0
        %v3033 = vadd.f32 0.0, %v3032
        %v3034 = vpop.f32.mrb[0].mxu0
        %v3035 = vpop.f32.mrb[0].mxu0
        %v3036 = vpop.f32.mrb[0].mxu0
        %3037 = vdwg.mxu0
        %3038 = vrot.lane.b32.xlu0 %v1654, 32
        %v3039 = vpop.permute.xlu0 %3038
        %3040 = vrot.lane.b32.xlu0 %v1656, 32
        %v3041 = vpop.permute.xlu0 %3040
        %v3043 = vsel %vm1659, %v3039, 0
        %v3046 = vsel %vm1659, %v3041, 0
        %3048 = vmatprep.subr.bf16.mxu0 0
        %3049 = vmatpush1.bf16.xpose.msra.mxu0 %v3046
        %3050 = vmatprep.subr.bf16.mxu0 0
        %3051 = vmatpush1.bf16.xpose.msra.mxu0 0
        %3052 = vmatprep.subr.bf16.mxu0 0
        %3053 = vmatpush1.bf16.xpose.msra.mxu0 0
        %3054 = vmatprep.subr.bf16.mxu0 0
        %3055 = vmatpush1.bf16.xpose.msra.mxu0 0
        %3056 = vmatprep.subr.bf16.mxu0 0
        %3057 = vmatpush1.bf16.xpose.msra.mxu0 0
        %3058 = vmatprep.subr.bf16.mxu0 0
        %3059 = vmatpush1.bf16.xpose.msra.mxu0 0
        %3060 = vmatprep.subr.bf16.mxu0 0
        %3061 = vmatpush1.bf16.xpose.msra.mxu0 0
        %3062 = vmatprep.subr.bf16.mxu0 0
        %3063 = vmatpush1.bf16.xpose.msra.mxu0 0
        %3064 = vmatprep.subr.bf16.mxu0 0
        %3065 = vmatpush1.bf16.xpose.msra.mxu0 0
        %3066 = vmatprep.subr.bf16.mxu0 0
        %3067 = vmatpush1.bf16.xpose.msra.mxu0 0
        %3068 = vmatprep.subr.bf16.mxu0 0
        %3069 = vmatpush1.bf16.xpose.msra.mxu0 0
        %3070 = vmatprep.subr.bf16.mxu0 0
        %3071 = vmatpush1.bf16.xpose.msra.mxu0 0
        %3072 = vmatprep.subr.bf16.mxu0 0
        %3073 = vmatpush1.bf16.xpose.msra.mxu0 0
        %3074 = vmatprep.subr.bf16.mxu0 0
        %3075 = vmatpush1.bf16.xpose.msra.mxu0 0
        %3076 = vmatprep.subr.bf16.mxu0 0
        %3077 = vmatpush1.bf16.xpose.msra.mxu0 0
        %3078 = vmatprep.subr.bf16.mxu0 0
        %3079 = vmatpush1.bf16.xpose.msra.mxu0 0
        %3080 = vmatprep.mubr.bf16.mxu0 0
        %3081 = vmatmul.mubr.bf16.gmra.mrb[0].mxu0 %v3043
        %v3082 = vpop.f32.mrb[0].mxu0
        %v3083 = vadd.f32 0.0, %v3082
        %v3084 = vpop.f32.mrb[0].mxu0
        %v3085 = vpop.f32.mrb[0].mxu0
        %v3086 = vpop.f32.mrb[0].mxu0
        %3087 = vdwg.mxu0
        %v3088 = vmul.f32 %v3033, 0.25
        %v3089 = vmul.f32 %v3083, 0.25
        %v3090 = vsel %vm1754, %v3088, -inf
        %3091 = vmax.xlane.f32.xlu0 %v3090
        %v3092 = vpop.xlane.xlu0 %3091
        %v3093 = vsel %vm1754, %v3089, -inf
        %3094 = vmax.xlane.f32.xlu0 %v3093
        %v3095 = vpop.xlane.xlu0 %3094
        %v3096 = vsub.f32 %v3088, %v3092
        %v3097 = vsub.f32 %v3089, %v3095
        %v3098 = vmul.f32 %v3096, 1.442695
        %v3099 = vpow.pop %v3098
        %v3100 = vmul.f32 %v3097, 1.442695
        %v3101 = vpow.pop %v3100
        %v3102 = vsel %vm1754, %v3099, 0.0
        %3103 = vadd.xlane.f32.xlu0 %v3102
        %v3104 = vpop.xlane.xlu0 %3103
        %v3105 = vsel %vm1754, %v3101, 0.0
        %3106 = vadd.xlane.f32.xlu0 %v3105
        %v3107 = vpop.xlane.xlu0 %3106
        %v3108 = vrcp.pop %v3104
        %v3109 = vrcp.pop %v3107
        %v3110 = vmul.f32 %v3099, %v3108
        %v3111 = vmul.f32 %v3101, %v3109
        %v3112 = vpack.c.bf16 %v3110, %v3110
        %v3113 = vpack.c.bf16 %v3111, %v3111
        %3114 = vrot.lane.b32.xlu0 %v1657, 32
        %v3115 = vpop.permute.xlu0 %3114
        %v3117 = vsel %vm1754, %v3112, 0
        %v3120 = vsel %vm1782, %v3115, 0
        %3122 = vmatprep.subr.bf16.mxu0 0
        %3123 = vmatpush1.bf16.msra.mxu0 %v3120
        %3124 = vmatprep.subr.bf16.mxu0 0
        %3125 = vmatpush1.bf16.msra.mxu0 0
        %3126 = vmatprep.subr.bf16.mxu0 0
        %3127 = vmatpush1.bf16.msra.mxu0 0
        %3128 = vmatprep.subr.bf16.mxu0 0
        %3129 = vmatpush1.bf16.msra.mxu0 0
        %3130 = vmatprep.subr.bf16.mxu0 0
        %3131 = vmatpush1.bf16.msra.mxu0 0
        %3132 = vmatprep.subr.bf16.mxu0 0
        %3133 = vmatpush1.bf16.msra.mxu0 0
        %3134 = vmatprep.subr.bf16.mxu0 0
        %3135 = vmatpush1.bf16.msra.mxu0 0
        %3136 = vmatprep.subr.bf16.mxu0 0
        %3137 = vmatpush1.bf16.msra.mxu0 0
        %3138 = vmatprep.subr.bf16.mxu0 0
        %3139 = vmatpush1.bf16.msra.mxu0 0
        %3140 = vmatprep.subr.bf16.mxu0 0
        %3141 = vmatpush1.bf16.msra.mxu0 0
        %3142 = vmatprep.subr.bf16.mxu0 0
        %3143 = vmatpush1.bf16.msra.mxu0 0
        %3144 = vmatprep.subr.bf16.mxu0 0
        %3145 = vmatpush1.bf16.msra.mxu0 0
        %3146 = vmatprep.subr.bf16.mxu0 0
        %3147 = vmatpush1.bf16.msra.mxu0 0
        %3148 = vmatprep.subr.bf16.mxu0 0
        %3149 = vmatpush1.bf16.msra.mxu0 0
        %3150 = vmatprep.subr.bf16.mxu0 0
        %3151 = vmatpush1.bf16.msra.mxu0 0
        %3152 = vmatprep.subr.bf16.mxu0 0
        %3153 = vmatpush1.bf16.msra.mxu0 0
        %3154 = vmatprep.mubr.bf16.mxu0 0
        %3155 = vmatmul.mubr.bf16.gmra.mrb[0].mxu0 %v3117
        %v3156 = vpop.f32.mrb[0].mxu0
        %v3157 = vadd.f32 0.0, %v3156
        %v3158 = vpop.f32.mrb[0].mxu0
        %v3159 = vpop.f32.mrb[0].mxu0
        %v3160 = vpop.f32.mrb[0].mxu0
        %3161 = vdwg.mxu0
        %3162 = vrot.lane.b32.xlu0 %v1658, 32
        %v3163 = vpop.permute.xlu0 %3162
        %v3165 = vsel %vm1754, %v3113, 0
        %v3168 = vsel %vm1782, %v3163, 0
        %3170 = vmatprep.subr.bf16.mxu0 0
        %3171 = vmatpush1.bf16.msra.mxu0 %v3168
        %3172 = vmatprep.subr.bf16.mxu0 0
        %3173 = vmatpush1.bf16.msra.mxu0 0
        %3174 = vmatprep.subr.bf16.mxu0 0
        %3175 = vmatpush1.bf16.msra.mxu0 0
        %3176 = vmatprep.subr.bf16.mxu0 0
        %3177 = vmatpush1.bf16.msra.mxu0 0
        %3178 = vmatprep.subr.bf16.mxu0 0
        %3179 = vmatpush1.bf16.msra.mxu0 0
        %3180 = vmatprep.subr.bf16.mxu0 0
        %3181 = vmatpush1.bf16.msra.mxu0 0
        %3182 = vmatprep.subr.bf16.mxu0 0
        %3183 = vmatpush1.bf16.msra.mxu0 0
        %3184 = vmatprep.subr.bf16.mxu0 0
        %3185 = vmatpush1.bf16.msra.mxu0 0
        %3186 = vmatprep.subr.bf16.mxu0 0
        %3187 = vmatpush1.bf16.msra.mxu0 0
        %3188 = vmatprep.subr.bf16.mxu0 0
        %3189 = vmatpush1.bf16.msra.mxu0 0
        %3190 = vmatprep.subr.bf16.mxu0 0
        %3191 = vmatpush1.bf16.msra.mxu0 0
        %3192 = vmatprep.subr.bf16.mxu0 0
        %3193 = vmatpush1.bf16.msra.mxu0 0
        %3194 = vmatprep.subr.bf16.mxu0 0
        %3195 = vmatpush1.bf16.msra.mxu0 0
        %3196 = vmatprep.subr.bf16.mxu0 0
        %3197 = vmatpush1.bf16.msra.mxu0 0
        %3198 = vmatprep.subr.bf16.mxu0 0
        %3199 = vmatpush1.bf16.msra.mxu0 0
        %3200 = vmatprep.subr.bf16.mxu0 0
        %3201 = vmatpush1.bf16.msra.mxu0 0
        %3202 = vmatprep.mubr.bf16.mxu0 0
        %3203 = vmatmul.mubr.bf16.gmra.mrb[0].mxu0 %v3165
        %v3204 = vpop.f32.mrb[0].mxu0
        %v3205 = vadd.f32 0.0, %v3204
        %v3206 = vpop.f32.mrb[0].mxu0
        %v3207 = vpop.f32.mrb[0].mxu0
        %v3208 = vpop.f32.mrb[0].mxu0
        %3209 = vdwg.mxu0
        %3210 = vrot.lane.b32.xlu0 %v1653, 16
        %v3211 = vpop.permute.xlu0 %3210
        %3212 = vrot.lane.b32.xlu0 %v1655, 16
        %v3213 = vpop.permute.xlu0 %3212
        %v3215 = vsel %vm1659, %v3211, 0
        %v3218 = vsel %vm1659, %v3213, 0
        %3220 = vmatprep.subr.bf16.mxu0 0
        %3221 = vmatpush1.bf16.xpose.msra.mxu0 %v3218
        %3222 = vmatprep.subr.bf16.mxu0 0
        %3223 = vmatpush1.bf16.xpose.msra.mxu0 0
        %3224 = vmatprep.subr.bf16.mxu0 0
        %3225 = vmatpush1.bf16.xpose.msra.mxu0 0
        %3226 = vmatprep.subr.bf16.mxu0 0
        %3227 = vmatpush1.bf16.xpose.msra.mxu0 0
        %3228 = vmatprep.subr.bf16.mxu0 0
        %3229 = vmatpush1.bf16.xpose.msra.mxu0 0
        %3230 = vmatprep.subr.bf16.mxu0 0
        %3231 = vmatpush1.bf16.xpose.msra.mxu0 0
        %3232 = vmatprep.subr.bf16.mxu0 0
        %3233 = vmatpush1.bf16.xpose.msra.mxu0 0
        %3234 = vmatprep.subr.bf16.mxu0 0
        %3235 = vmatpush1.bf16.xpose.msra.mxu0 0
        %3236 = vmatprep.subr.bf16.mxu0 0
        %3237 = vmatpush1.bf16.xpose.msra.mxu0 0
        %3238 = vmatprep.subr.bf16.mxu0 0
        %3239 = vmatpush1.bf16.xpose.msra.mxu0 0
        %3240 = vmatprep.subr.bf16.mxu0 0
        %3241 = vmatpush1.bf16.xpose.msra.mxu0 0
        %3242 = vmatprep.subr.bf16.mxu0 0
        %3243 = vmatpush1.bf16.xpose.msra.mxu0 0
        %3244 = vmatprep.subr.bf16.mxu0 0
        %3245 = vmatpush1.bf16.xpose.msra.mxu0 0
        %3246 = vmatprep.subr.bf16.mxu0 0
        %3247 = vmatpush1.bf16.xpose.msra.mxu0 0
        %3248 = vmatprep.subr.bf16.mxu0 0
        %3249 = vmatpush1.bf16.xpose.msra.mxu0 0
        %3250 = vmatprep.subr.bf16.mxu0 0
        %3251 = vmatpush1.bf16.xpose.msra.mxu0 0
        %3252 = vmatprep.mubr.bf16.mxu0 0
        %3253 = vmatmul.mubr.bf16.gmra.mrb[0].mxu0 %v3215
        %v3254 = vpop.f32.mrb[0].mxu0
        %v3255 = vadd.f32 0.0, %v3254
        %v3256 = vpop.f32.mrb[0].mxu0
        %v3257 = vpop.f32.mrb[0].mxu0
        %v3258 = vpop.f32.mrb[0].mxu0
        %3259 = vdwg.mxu0
        %3260 = vrot.lane.b32.xlu0 %v1654, 16
        %v3261 = vpop.permute.xlu0 %3260
        %3262 = vrot.lane.b32.xlu0 %v1656, 16
        %v3263 = vpop.permute.xlu0 %3262
        %v3265 = vsel %vm1659, %v3261, 0
        %v3268 = vsel %vm1659, %v3263, 0
        %3270 = vmatprep.subr.bf16.mxu0 0
        %3271 = vmatpush1.bf16.xpose.msra.mxu0 %v3268
        %3272 = vmatprep.subr.bf16.mxu0 0
        %3273 = vmatpush1.bf16.xpose.msra.mxu0 0
        %3274 = vmatprep.subr.bf16.mxu0 0
        %3275 = vmatpush1.bf16.xpose.msra.mxu0 0
        %3276 = vmatprep.subr.bf16.mxu0 0
        %3277 = vmatpush1.bf16.xpose.msra.mxu0 0
        %3278 = vmatprep.subr.bf16.mxu0 0
        %3279 = vmatpush1.bf16.xpose.msra.mxu0 0
        %3280 = vmatprep.subr.bf16.mxu0 0
        %3281 = vmatpush1.bf16.xpose.msra.mxu0 0
        %3282 = vmatprep.subr.bf16.mxu0 0
        %3283 = vmatpush1.bf16.xpose.msra.mxu0 0
        %3284 = vmatprep.subr.bf16.mxu0 0
        %3285 = vmatpush1.bf16.xpose.msra.mxu0 0
        %3286 = vmatprep.subr.bf16.mxu0 0
        %3287 = vmatpush1.bf16.xpose.msra.mxu0 0
        %3288 = vmatprep.subr.bf16.mxu0 0
        %3289 = vmatpush1.bf16.xpose.msra.mxu0 0
        %3290 = vmatprep.subr.bf16.mxu0 0
        %3291 = vmatpush1.bf16.xpose.msra.mxu0 0
        %3292 = vmatprep.subr.bf16.mxu0 0
        %3293 = vmatpush1.bf16.xpose.msra.mxu0 0
        %3294 = vmatprep.subr.bf16.mxu0 0
        %3295 = vmatpush1.bf16.xpose.msra.mxu0 0
        %3296 = vmatprep.subr.bf16.mxu0 0
        %3297 = vmatpush1.bf16.xpose.msra.mxu0 0
        %3298 = vmatprep.subr.bf16.mxu0 0
        %3299 = vmatpush1.bf16.xpose.msra.mxu0 0
        %3300 = vmatprep.subr.bf16.mxu0 0
        %3301 = vmatpush1.bf16.xpose.msra.mxu0 0
        %3302 = vmatprep.mubr.bf16.mxu0 0
        %3303 = vmatmul.mubr.bf16.gmra.mrb[0].mxu0 %v3265
        %v3304 = vpop.f32.mrb[0].mxu0
        %v3305 = vadd.f32 0.0, %v3304
        %v3306 = vpop.f32.mrb[0].mxu0
        %v3307 = vpop.f32.mrb[0].mxu0
        %v3308 = vpop.f32.mrb[0].mxu0
        %3309 = vdwg.mxu0
        %v3310 = vmul.f32 %v3255, 0.25
        %v3311 = vmul.f32 %v3305, 0.25
        %v3312 = vsel %vm1754, %v3310, -inf
        %3313 = vmax.xlane.f32.xlu0 %v3312
        %v3314 = vpop.xlane.xlu0 %3313
        %v3315 = vsel %vm1754, %v3311, -inf
        %3316 = vmax.xlane.f32.xlu0 %v3315
        %v3317 = vpop.xlane.xlu0 %3316
        %v3318 = vsub.f32 %v3310, %v3314
        %v3319 = vsub.f32 %v3311, %v3317
        %v3320 = vmul.f32 %v3318, 1.442695
        %v3321 = vpow.pop %v3320
        %v3322 = vmul.f32 %v3319, 1.442695
        %v3323 = vpow.pop %v3322
        %v3324 = vsel %vm1754, %v3321, 0.0
        %3325 = vadd.xlane.f32.xlu0 %v3324
        %v3326 = vpop.xlane.xlu0 %3325
        %v3327 = vsel %vm1754, %v3323, 0.0
        %3328 = vadd.xlane.f32.xlu0 %v3327
        %v3329 = vpop.xlane.xlu0 %3328
        %v3330 = vrcp.pop %v3326
        %v3331 = vrcp.pop %v3329
        %v3332 = vmul.f32 %v3321, %v3330
        %v3333 = vmul.f32 %v3323, %v3331
        %v3334 = vpack.c.bf16 %v3332, %v3332
        %v3335 = vpack.c.bf16 %v3333, %v3333
        %3336 = vrot.lane.b32.xlu0 %v1657, 16
        %v3337 = vpop.permute.xlu0 %3336
        %v3339 = vsel %vm1754, %v3334, 0
        %v3342 = vsel %vm1782, %v3337, 0
        %3344 = vmatprep.subr.bf16.mxu0 0
        %3345 = vmatpush1.bf16.msra.mxu0 %v3342
        %3346 = vmatprep.subr.bf16.mxu0 0
        %3347 = vmatpush1.bf16.msra.mxu0 0
        %3348 = vmatprep.subr.bf16.mxu0 0
        %3349 = vmatpush1.bf16.msra.mxu0 0
        %3350 = vmatprep.subr.bf16.mxu0 0
        %3351 = vmatpush1.bf16.msra.mxu0 0
        %3352 = vmatprep.subr.bf16.mxu0 0
        %3353 = vmatpush1.bf16.msra.mxu0 0
        %3354 = vmatprep.subr.bf16.mxu0 0
        %3355 = vmatpush1.bf16.msra.mxu0 0
        %3356 = vmatprep.subr.bf16.mxu0 0
        %3357 = vmatpush1.bf16.msra.mxu0 0
        %3358 = vmatprep.subr.bf16.mxu0 0
        %3359 = vmatpush1.bf16.msra.mxu0 0
        %3360 = vmatprep.subr.bf16.mxu0 0
        %3361 = vmatpush1.bf16.msra.mxu0 0
        %3362 = vmatprep.subr.bf16.mxu0 0
        %3363 = vmatpush1.bf16.msra.mxu0 0
        %3364 = vmatprep.subr.bf16.mxu0 0
        %3365 = vmatpush1.bf16.msra.mxu0 0
        %3366 = vmatprep.subr.bf16.mxu0 0
        %3367 = vmatpush1.bf16.msra.mxu0 0
        %3368 = vmatprep.subr.bf16.mxu0 0
        %3369 = vmatpush1.bf16.msra.mxu0 0
        %3370 = vmatprep.subr.bf16.mxu0 0
        %3371 = vmatpush1.bf16.msra.mxu0 0
        %3372 = vmatprep.subr.bf16.mxu0 0
        %3373 = vmatpush1.bf16.msra.mxu0 0
        %3374 = vmatprep.subr.bf16.mxu0 0
        %3375 = vmatpush1.bf16.msra.mxu0 0
        %3376 = vmatprep.mubr.bf16.mxu0 0
        %3377 = vmatmul.mubr.bf16.gmra.mrb[0].mxu0 %v3339
        %v3378 = vpop.f32.mrb[0].mxu0
        %v3379 = vadd.f32 0.0, %v3378
        %v3380 = vpop.f32.mrb[0].mxu0
        %v3381 = vpop.f32.mrb[0].mxu0
        %v3382 = vpop.f32.mrb[0].mxu0
        %3383 = vdwg.mxu0
        %3384 = vrot.lane.b32.xlu0 %v1658, 16
        %v3385 = vpop.permute.xlu0 %3384
        %v3387 = vsel %vm1754, %v3335, 0
        %v3390 = vsel %vm1782, %v3385, 0
        %3392 = vmatprep.subr.bf16.mxu0 0
        %3393 = vmatpush1.bf16.msra.mxu0 %v3390
        %3394 = vmatprep.subr.bf16.mxu0 0
        %3395 = vmatpush1.bf16.msra.mxu0 0
        %3396 = vmatprep.subr.bf16.mxu0 0
        %3397 = vmatpush1.bf16.msra.mxu0 0
        %3398 = vmatprep.subr.bf16.mxu0 0
        %3399 = vmatpush1.bf16.msra.mxu0 0
        %3400 = vmatprep.subr.bf16.mxu0 0
        %3401 = vmatpush1.bf16.msra.mxu0 0
        %3402 = vmatprep.subr.bf16.mxu0 0
        %3403 = vmatpush1.bf16.msra.mxu0 0
        %3404 = vmatprep.subr.bf16.mxu0 0
        %3405 = vmatpush1.bf16.msra.mxu0 0
        %3406 = vmatprep.subr.bf16.mxu0 0
        %3407 = vmatpush1.bf16.msra.mxu0 0
        %3408 = vmatprep.subr.bf16.mxu0 0
        %3409 = vmatpush1.bf16.msra.mxu0 0
        %3410 = vmatprep.subr.bf16.mxu0 0
        %3411 = vmatpush1.bf16.msra.mxu0 0
        %3412 = vmatprep.subr.bf16.mxu0 0
        %3413 = vmatpush1.bf16.msra.mxu0 0
        %3414 = vmatprep.subr.bf16.mxu0 0
        %3415 = vmatpush1.bf16.msra.mxu0 0
        %3416 = vmatprep.subr.bf16.mxu0 0
        %3417 = vmatpush1.bf16.msra.mxu0 0
        %3418 = vmatprep.subr.bf16.mxu0 0
        %3419 = vmatpush1.bf16.msra.mxu0 0
        %3420 = vmatprep.subr.bf16.mxu0 0
        %3421 = vmatpush1.bf16.msra.mxu0 0
        %3422 = vmatprep.subr.bf16.mxu0 0
        %3423 = vmatpush1.bf16.msra.mxu0 0
        %3424 = vmatprep.mubr.bf16.mxu0 0
        %3425 = vmatmul.mubr.bf16.gmra.mrb[0].mxu0 %v3387
        %v3426 = vpop.f32.mrb[0].mxu0
        %v3427 = vadd.f32 0.0, %v3426
        %v3428 = vpop.f32.mrb[0].mxu0
        %v3429 = vpop.f32.mrb[0].mxu0
        %v3430 = vpop.f32.mrb[0].mxu0
        %3431 = vdwg.mxu0
        %3434 = vrot.lane.b32.xlu0 %v2046, 16
        %v3435 = vpop.permute.xlu0 %3434
        %3436 = vrot.lane.b32.xlu0 %v2095, 16
        %v3437 = vpop.permute.xlu0 %3436
        %3442 = vrot.lane.b32.xlu0 %v2269, 32
        %v3443 = vpop.permute.xlu0 %3442
        %3444 = vrot.lane.b32.xlu0 %v2317, 32
        %v3445 = vpop.permute.xlu0 %3444
        %3450 = vrot.lane.b32.xlu0 %v2491, 48
        %v3451 = vpop.permute.xlu0 %3450
        %3452 = vrot.lane.b32.xlu0 %v2539, 48
        %v3453 = vpop.permute.xlu0 %3452
        %3458 = vrot.lane.b32.xlu0 %v2713, 64
        %v3459 = vpop.permute.xlu0 %3458
        %3460 = vrot.lane.b32.xlu0 %v2761, 64
        %v3461 = vpop.permute.xlu0 %3460
        %3466 = vrot.lane.b32.xlu0 %v2935, 80
        %v3467 = vpop.permute.xlu0 %3466
        %3468 = vrot.lane.b32.xlu0 %v2983, 80
        %v3469 = vpop.permute.xlu0 %3468
        %3474 = vrot.lane.b32.xlu0 %v3157, 96
        %v3475 = vpop.permute.xlu0 %3474
        %3476 = vrot.lane.b32.xlu0 %v3205, 96
        %v3477 = vpop.permute.xlu0 %3476
        %3482 = vrot.lane.b32.xlu0 %v3379, 112
        %v3483 = vpop.permute.xlu0 %3482
        %3484 = vrot.lane.b32.xlu0 %v3427, 112
        %v3485 = vpop.permute.xlu0 %3484
        %v3488 = vsel %vm1659, %v1821, %v3435
        %v3489 = vsel %vm1659, %v1867, %v3437
        %v3490 = vsel %vm1489, %v3488, %v3443
        %v3491 = vsel %vm1489, %v3489, %v3445
        %vm3492 = vcmask 392192
        %v3493 = vsel %vm3492, %v3490, %v3451
        %v3494 = vsel %vm3492, %v3491, %v3453
        %vm3495 = vcmask 523264
        %v3496 = vsel %vm3495, %v3493, %v3459
        %v3497 = vsel %vm3495, %v3494, %v3461
        %vm3498 = vcmask 654336
        %v3499 = vsel %vm3498, %v3496, %v3467
        %v3500 = vsel %vm3498, %v3497, %v3469
        %vm3501 = vcmask 785408
        %v3502 = vsel %vm3501, %v3499, %v3475
        %v3503 = vsel %vm3501, %v3500, %v3477
        %vm3504 = vcmask 916480
        %v3505 = vsel %vm3504, %v3502, %v3483
        %v3506 = vsel %vm3504, %v3503, %v3485
        %v3507 = vpack.c.bf16 %v3506, %v3505
        %v3509 = vlaneseq
        %v3510 = vshrl.u32 %v3509, 7
        %v3511 = vsub.s32 0, %v3510
        %v3512 = vrot.slane %v1488, %v3511
        %v3530 = vunpack.c.l.b16 %v1472
        %v3531 = vunpack.c.l.b16 %v1473
        %v3532 = vunpack.c.l.b16 %v1474
        %v3533 = vunpack.c.l.b16 %v1475
        %v3534 = vunpack.c.l.b16 %v1476
        %v3535 = vunpack.c.l.b16 %v1477
        %v3536 = vunpack.c.l.b16 %v1478
        %v3537 = vunpack.c.l.b16 %v1479
        %v3538 = vunpack.c.l.b16 %v1480
        %v3539 = vunpack.c.l.b16 %v1481
        %v3540 = vunpack.c.l.b16 %v1482
        %v3541 = vunpack.c.l.b16 %v1483
        %v3542 = vunpack.c.l.b16 %v1484
        %v3543 = vunpack.c.l.b16 %v1485
        %v3544 = vunpack.c.l.b16 %v1486
        %v3545 = vunpack.c.l.b16 %v1487
        %v3546 = vpack.c.b16 %v3531, %v3530
        %v3547 = vpack.c.b16 %v3533, %v3532
        %v3548 = vpack.c.b16 %v3535, %v3534
        %v3549 = vpack.c.b16 %v3537, %v3536
        %v3550 = vpack.c.b16 %v3539, %v3538
        %v3551 = vpack.c.b16 %v3541, %v3540
        %v3552 = vpack.c.b16 %v3543, %v3542
        %v3553 = vpack.c.b16 %v3545, %v3544
        %3562 = vmatprep.subr.bf16.mxu0 0
        %3563 = vmatpush1.bf16.msra.mxu0 %v3546
        %3564 = vmatprep.subr.bf16.mxu0 0
        %3565 = vmatpush1.bf16.msra.mxu0 %v3547
        %3566 = vmatprep.subr.bf16.mxu0 0
        %3567 = vmatpush1.bf16.msra.mxu0 %v3548
        %3568 = vmatprep.subr.bf16.mxu0 0
        %3569 = vmatpush1.bf16.msra.mxu0 %v3549
        %3570 = vmatprep.subr.bf16.mxu0 0
        %3571 = vmatpush1.bf16.msra.mxu0 %v3550
        %3572 = vmatprep.subr.bf16.mxu0 0
        %3573 = vmatpush1.bf16.msra.mxu0 %v3551
        %3574 = vmatprep.subr.bf16.mxu0 0
        %3575 = vmatpush1.bf16.msra.mxu0 %v3552
        %3576 = vmatprep.subr.bf16.mxu0 0
        %3577 = vmatpush1.bf16.msra.mxu0 %v3553
        %3578 = vmatprep.subr.bf16.mxu0 0
        %3579 = vmatpush1.bf16.msra.mxu0 0
        %3580 = vmatprep.subr.bf16.mxu0 0
        %3581 = vmatpush1.bf16.msra.mxu0 0
        %3582 = vmatprep.subr.bf16.mxu0 0
        %3583 = vmatpush1.bf16.msra.mxu0 0
        %3584 = vmatprep.subr.bf16.mxu0 0
        %3585 = vmatpush1.bf16.msra.mxu0 0
        %3586 = vmatprep.subr.bf16.mxu0 0
        %3587 = vmatpush1.bf16.msra.mxu0 0
        %3588 = vmatprep.subr.bf16.mxu0 0
        %3589 = vmatpush1.bf16.msra.mxu0 0
        %3590 = vmatprep.subr.bf16.mxu0 0
        %3591 = vmatpush1.bf16.msra.mxu0 0
        %3592 = vmatprep.subr.bf16.mxu0 0
        %3593 = vmatpush1.bf16.msra.mxu0 0
        %3594 = vmatprep.mubr.bf16.mxu0 0
        %3595 = vmatmul.mubr.bf16.gmra.mrb[0].mxu0 %v3507
        %v3596 = vpop.f32.mrb[0].mxu0
        %v3597 = vadd.f32 %v3512, %v3596
        %v3598 = vpop.f32.mrb[0].mxu0
        %v3599 = vpop.f32.mrb[0].mxu0
        %v3600 = vadd.f32 %v3512, %v3599
        %v3601 = vpop.f32.mrb[0].mxu0
        %3602 = vdwg.mxu0
        %v3603 = vadd.f32 %v1531, %v3597
        %v3604 = vadd.f32 %v1532, %v3600
        %v3605 = vld [vmem:[%s1150] sm:$0x1]
        %v3606 = vld [vmem:[%s1158] sm:$0x1]
        %v3607 = vld [vmem:[%s1167] sm:$0xff]
        %v3608 = vld [vmem:[%s1167 + $0x8] sm:$0xff]
        %v3609 = vld [vmem:[%s1167 + $0x10] sm:$0xff]
        %v3610 = vld [vmem:[%s1167 + $0x18] sm:$0xff]
        %v3611 = vld [vmem:[%s1176] sm:$0x3]
        %v3612 = vld [vmem:[%s1449] sm:$0xf]
        %v3613 = vld [vmem:[%s1449 + $0x4] sm:$0xf]
        %v3614 = vld [vmem:[%s1449 + $0x8] sm:$0xf]
        %v3615 = vld [vmem:[%s1449 + $0xc] sm:$0xf]
        %v3616 = vld [vmem:[%s1449 + $0x10] sm:$0xf]
        %v3617 = vld [vmem:[%s1449 + $0x14] sm:$0xf]
        %v3618 = vld [vmem:[%s1449 + $0x18] sm:$0xf]
        %v3619 = vld [vmem:[%s1449 + $0x1c] sm:$0xf]
        %v3620 = vld [vmem:[%s1449 + $0x20] sm:$0xf]
        %v3621 = vld [vmem:[%s1449 + $0x24] sm:$0xf]
        %v3622 = vld [vmem:[%s1449 + $0x28] sm:$0xf]
        %v3623 = vld [vmem:[%s1449 + $0x2c] sm:$0xf]
        %v3624 = vld [vmem:[%s1449 + $0x30] sm:$0xf]
        %v3625 = vld [vmem:[%s1449 + $0x34] sm:$0xf]
        %v3626 = vld [vmem:[%s1449 + $0x38] sm:$0xf]
        %v3627 = vld [vmem:[%s1449 + $0x3c] sm:$0xf]
        %v3628 = vld [vmem:[%s1184] sm:$0x1]
        %v3629 = vsel %vm1489, %v3603, 0.0
        %3630 = vadd.xlane.f32.xlu0 %v3629
        %v3631 = vpop.xlane.xlu0 %3630
        %v3632 = vsel %vm1489, %v3604, 0.0
        %3633 = vadd.xlane.f32.xlu0 %v3632
        %v3634 = vpop.xlane.xlu0 %3633
        %v3635 = vmul.f32 %v3631, %v1496
        %v3636 = vmul.f32 %v3634, %v1496
        %v3637 = vsub.f32 %v3603, %v3635
        %v3638 = vsub.f32 %v3604, %v3636
        %v3639 = vmul.f32 %v3637, %v3637
        %v3640 = vmul.f32 %v3638, %v3638
        %v3641 = vsel %vm1489, %v3639, 0.0
        %3642 = vadd.xlane.f32.xlu0 %v3641
        %v3643 = vpop.xlane.xlu0 %3642
        %v3644 = vsel %vm1489, %v3640, 0.0
        %3645 = vadd.xlane.f32.xlu0 %v3644
        %v3646 = vpop.xlane.xlu0 %3645
        %v3647 = vmul.f32 %v3643, %v1496
        %v3648 = vmul.f32 %v3646, %v1496
        %v3649 = vadd.f32 %v3647, 1e-05
        %v3650 = vadd.f32 %v3648, 1e-05
        %v3651 = vrsqrt.pop %v3649
        %v3652 = vrsqrt.pop %v3650
        %v3653 = vmul.f32 %v3637, %v3651
        %v3654 = vmul.f32 %v3638, %v3652
        %v3656 = vlaneseq
        %v3657 = vshrl.u32 %v3656, 7
        %v3658 = vsub.s32 0, %v3657
        %v3659 = vrot.slane %v3605, %v3658
        %v3661 = vmul.f32 %v3653, %v3659
        %v3662 = vmul.f32 %v3654, %v3659
        %v3664 = vlaneseq
        %v3665 = vshrl.u32 %v3664, 7
        %v3666 = vsub.s32 0, %v3665
        %v3667 = vrot.slane %v3606, %v3666
        %v3669 = vadd.f32 %v3661, %v3667
        %v3670 = vadd.f32 %v3662, %v3667
        %v3671 = vpack.c.bf16 %v3670, %v3669
        %v3673 = vlaneseq
        %v3674 = vshrl.u32 %v3673, 7
        %v3675 = vsub.s32 0, %v3674
        %v3676 = vrot.slane %v3611, %v3675
        %v3677 = vlaneseq
        %v3678 = vshrl.u32 %v3677, 7
        %v3679 = vsub.s32 1, %v3678
        %v3680 = vrot.slane %v3611, %v3679
        %v3687 = vunpack.c.l.b16 %v3607
        %v3688 = vunpack.c.h.b16 %v3607
        %v3689 = vunpack.c.l.b16 %v3608
        %v3690 = vunpack.c.h.b16 %v3608
        %v3691 = vunpack.c.l.b16 %v3609
        %v3692 = vunpack.c.h.b16 %v3609
        %v3693 = vunpack.c.l.b16 %v3610
        %v3694 = vunpack.c.h.b16 %v3610
        %v3695 = vpack.c.b16 %v3689, %v3687
        %v3696 = vpack.c.b16 %v3690, %v3688
        %v3697 = vpack.c.b16 %v3693, %v3691
        %v3698 = vpack.c.b16 %v3694, %v3692
        %v3704 = vsel %vm1489, %v3671, 0
        %3706 = vmatprep.subr.bf16.mxu0 %v3696
        %3707 = vmatpush1.bf16.msra.mxu0 %v3695
        %3708 = vmatprep.subr.bf16.mxu0 %v3698
        %3709 = vmatpush1.bf16.msra.mxu0 %v3697
        %3710 = vmatprep.subr.bf16.mxu0 0
        %3711 = vmatpush1.bf16.msra.mxu0 0
        %3712 = vmatprep.subr.bf16.mxu0 0
        %3713 = vmatpush1.bf16.msra.mxu0 0
        %3714 = vmatprep.subr.bf16.mxu0 0
        %3715 = vmatpush1.bf16.msra.mxu0 0
        %3716 = vmatprep.subr.bf16.mxu0 0
        %3717 = vmatpush1.bf16.msra.mxu0 0
        %3718 = vmatprep.subr.bf16.mxu0 0
        %3719 = vmatpush1.bf16.msra.mxu0 0
        %3720 = vmatprep.subr.bf16.mxu0 0
        %3721 = vmatpush1.bf16.msra.mxu0 0
        %3722 = vmatprep.subr.bf16.mxu0 0
        %3723 = vmatpush1.bf16.msra.mxu0 0
        %3724 = vmatprep.subr.bf16.mxu0 0
        %3725 = vmatpush1.bf16.msra.mxu0 0
        %3726 = vmatprep.subr.bf16.mxu0 0
        %3727 = vmatpush1.bf16.msra.mxu0 0
        %3728 = vmatprep.subr.bf16.mxu0 0
        %3729 = vmatpush1.bf16.msra.mxu0 0
        %3730 = vmatprep.subr.bf16.mxu0 0
        %3731 = vmatpush1.bf16.msra.mxu0 0
        %3732 = vmatprep.subr.bf16.mxu0 0
        %3733 = vmatpush1.bf16.msra.mxu0 0
        %3734 = vmatprep.subr.bf16.mxu0 0
        %3735 = vmatpush1.bf16.msra.mxu0 0
        %3736 = vmatprep.subr.bf16.mxu0 0
        %3737 = vmatpush1.bf16.msra.mxu0 0
        %3738 = vmatprep.mubr.bf16.mxu0 0
        %3739 = vmatmul.mubr.bf16.gmra.mrb[0].mxu0 %v3704
        %v3740 = vpop.f32.mrb[0].mxu0
        %v3741 = vadd.f32 %v3676, %v3740
        %v3742 = vpop.f32.mrb[0].mxu0
        %v3743 = vadd.f32 %v3680, %v3742
        %v3744 = vpop.f32.mrb[0].mxu0
        %v3745 = vadd.f32 %v3676, %v3744
        %v3746 = vpop.f32.mrb[0].mxu0
        %v3747 = vadd.f32 %v3680, %v3746
        %3748 = vdwg.mxu0
        %v3749 = vmul.f32 %v3743, 0.5
        %v3750 = vmul.f32 %v3747, 0.5
        %v3751 = vmul.f32 %v3743, 0.044715
        %v3752 = vmul.f32 %v3747, 0.044715
        %v3753 = vmul.f32 %v3751, %v3743
        %v3754 = vmul.f32 %v3752, %v3747
        %v3755 = vmul.f32 %v3753, %v3743
        %v3756 = vmul.f32 %v3754, %v3747
        %v3757 = vadd.f32 %v3743, %v3755
        %v3758 = vadd.f32 %v3747, %v3756
        %v3759 = vmul.f32 %v3757, 0.7978846
        %v3760 = vmul.f32 %v3758, 0.7978846
        %v3761 = vtanh.pop %v3759
        %v3762 = vtanh.pop %v3760
        %v3763 = vadd.f32 %v3761, 1.0
        %v3764 = vadd.f32 %v3762, 1.0
        %v3765 = vmul.f32 %v3749, %v3763
        %v3766 = vmul.f32 %v3750, %v3764
        %v3767 = vmul.f32 %v3741, %v3765
        %v3768 = vmul.f32 %v3745, %v3766
        %v3769 = vpack.c.bf16 %v3768, %v3767
        %v3771 = vlaneseq
        %v3772 = vshrl.u32 %v3771, 7
        %v3773 = vsub.s32 0, %v3772
        %v3774 = vrot.slane %v3628, %v3773
        %v3792 = vunpack.c.l.b16 %v3612
        %v3793 = vunpack.c.l.b16 %v3613
        %v3794 = vunpack.c.l.b16 %v3614
        %v3795 = vunpack.c.l.b16 %v3615
        %v3796 = vunpack.c.l.b16 %v3616
        %v3797 = vunpack.c.l.b16 %v3617
        %v3798 = vunpack.c.l.b16 %v3618
        %v3799 = vunpack.c.l.b16 %v3619
        %v3800 = vunpack.c.l.b16 %v3620
        %v3801 = vunpack.c.l.b16 %v3621
        %v3802 = vunpack.c.l.b16 %v3622
        %v3803 = vunpack.c.l.b16 %v3623
        %v3804 = vunpack.c.l.b16 %v3624
        %v3805 = vunpack.c.l.b16 %v3625
        %v3806 = vunpack.c.l.b16 %v3626
        %v3807 = vunpack.c.l.b16 %v3627
        %v3808 = vpack.c.b16 %v3793, %v3792
        %v3809 = vpack.c.b16 %v3795, %v3794
        %v3810 = vpack.c.b16 %v3797, %v3796
        %v3811 = vpack.c.b16 %v3799, %v3798
        %v3812 = vpack.c.b16 %v3801, %v3800
        %v3813 = vpack.c.b16 %v3803, %v3802
        %v3814 = vpack.c.b16 %v3805, %v3804
        %v3815 = vpack.c.b16 %v3807, %v3806
        %3824 = vmatprep.subr.bf16.mxu0 0
        %3825 = vmatpush1.bf16.msra.mxu0 %v3808
        %3826 = vmatprep.subr.bf16.mxu0 0
        %3827 = vmatpush1.bf16.msra.mxu0 %v3809
        %3828 = vmatprep.subr.bf16.mxu0 0
        %3829 = vmatpush1.bf16.msra.mxu0 %v3810
        %3830 = vmatprep.subr.bf16.mxu0 0
        %3831 = vmatpush1.bf16.msra.mxu0 %v3811
        %3832 = vmatprep.subr.bf16.mxu0 0
        %3833 = vmatpush1.bf16.msra.mxu0 %v3812
        %3834 = vmatprep.subr.bf16.mxu0 0
        %3835 = vmatpush1.bf16.msra.mxu0 %v3813
        %3836 = vmatprep.subr.bf16.mxu0 0
        %3837 = vmatpush1.bf16.msra.mxu0 %v3814
        %3838 = vmatprep.subr.bf16.mxu0 0
        %3839 = vmatpush1.bf16.msra.mxu0 %v3815
        %3840 = vmatprep.subr.bf16.mxu0 0
        %3841 = vmatpush1.bf16.msra.mxu0 0
        %3842 = vmatprep.subr.bf16.mxu0 0
        %3843 = vmatpush1.bf16.msra.mxu0 0
        %3844 = vmatprep.subr.bf16.mxu0 0
        %3845 = vmatpush1.bf16.msra.mxu0 0
        %3846 = vmatprep.subr.bf16.mxu0 0
        %3847 = vmatpush1.bf16.msra.mxu0 0
        %3848 = vmatprep.subr.bf16.mxu0 0
        %3849 = vmatpush1.bf16.msra.mxu0 0
        %3850 = vmatprep.subr.bf16.mxu0 0
        %3851 = vmatpush1.bf16.msra.mxu0 0
        %3852 = vmatprep.subr.bf16.mxu0 0
        %3853 = vmatpush1.bf16.msra.mxu0 0
        %3854 = vmatprep.subr.bf16.mxu0 0
        %3855 = vmatpush1.bf16.msra.mxu0 0
        %3856 = vmatprep.mubr.bf16.mxu0 0
        %3857 = vmatmul.mubr.bf16.gmra.mrb[0].mxu0 %v3769
        %v3858 = vpop.f32.mrb[0].mxu0
        %v3859 = vadd.f32 %v3774, %v3858
        %v3860 = vpop.f32.mrb[0].mxu0
        %v3861 = vpop.f32.mrb[0].mxu0
        %v3862 = vadd.f32 %v3774, %v3861
        %v3863 = vpop.f32.mrb[0].mxu0
        %3864 = vdwg.mxu0
        %v3865 = vadd.f32 %v3669, %v3859
        %v3866 = vadd.f32 %v3670, %v3862
        %v3868 = vrot.slane %v3865, 1
        %3869 = vrot.lane.b32.xlu0 %v3868, 32
        %v3870 = vpop.permute.xlu0 %3869
        %v3872 = vrot.slane %v3865, 2
        %3873 = vrot.lane.b32.xlu0 %v3872, 64
        %v3874 = vpop.permute.xlu0 %3873
        %v3876 = vrot.slane %v3865, 3
        %3877 = vrot.lane.b32.xlu0 %v3876, 96
        %v3878 = vpop.permute.xlu0 %3877
        %v3880 = vrot.slane %v3865, 4
        %v3882 = vrot.slane %v3865, 5
        %3883 = vrot.lane.b32.xlu0 %v3882, 32
        %v3884 = vpop.permute.xlu0 %3883
        %v3886 = vrot.slane %v3865, 6
        %3887 = vrot.lane.b32.xlu0 %v3886, 64
        %v3888 = vpop.permute.xlu0 %3887
        %v3890 = vrot.slane %v3865, 7
        %3891 = vrot.lane.b32.xlu0 %v3890, 96
        %v3892 = vpop.permute.xlu0 %3891
        %v3894 = vsel %vm1489, %v3865, %v3870
        %v3895 = vsel %vm3495, %v3894, %v3874
        %v3896 = vsel %vm3501, %v3895, %v3878
        %v3897 = vsel %vm1489, %v3880, %v3884
        %v3898 = vsel %vm3495, %v3897, %v3888
        %v3899 = vsel %vm3501, %v3898, %v3892
        %v3901 = vrot.slane %v3866, 1
        %3902 = vrot.lane.b32.xlu0 %v3901, 32
        %v3903 = vpop.permute.xlu0 %3902
        %v3905 = vrot.slane %v3866, 2
        %3906 = vrot.lane.b32.xlu0 %v3905, 64
        %v3907 = vpop.permute.xlu0 %3906
        %v3909 = vrot.slane %v3866, 3
        %3910 = vrot.lane.b32.xlu0 %v3909, 96
        %v3911 = vpop.permute.xlu0 %3910
        %v3913 = vrot.slane %v3866, 4
        %v3915 = vrot.slane %v3866, 5
        %3916 = vrot.lane.b32.xlu0 %v3915, 32
        %v3917 = vpop.permute.xlu0 %3916
        %v3919 = vrot.slane %v3866, 6
        %3920 = vrot.lane.b32.xlu0 %v3919, 64
        %v3921 = vpop.permute.xlu0 %3920
        %v3923 = vrot.slane %v3866, 7
        %3924 = vrot.lane.b32.xlu0 %v3923, 96
        %v3925 = vpop.permute.xlu0 %3924
        %v3927 = vsel %vm1489, %v3866, %v3903
        %v3928 = vsel %vm3495, %v3927, %v3907
        %v3929 = vsel %vm3501, %v3928, %v3911
        %v3930 = vsel %vm1489, %v3913, %v3917
        %v3931 = vsel %vm3495, %v3930, %v3921
        %v3932 = vsel %vm3501, %v3931, %v3925
        %v3935 = vrot.slane %v3929, 7
        %v3936 = vrot.slane %v3932, 7
        %vm3939 = vcmask 1040384
        %v3940 = vsel %vm3939, %v3896, %v3935
        %v3941 = vsel %vm3939, %v3899, %v3936
        %v3942 = vld [vmem:[%s1193] sm:$0x3]
        %v3943 = vld [vmem:[%s1202] sm:$0x3]
        %v3944 = vld [vmem:[%s1211] sm:$0xff]
        %v3945 = vld [vmem:[%s1211 + $0x8] sm:$0xff]
        %v3946 = vld [vmem:[%s1211 + $0x10] sm:$0xff]
        %v3947 = vld [vmem:[%s1211 + $0x18] sm:$0xff]
        %v3948 = vld [vmem:[%s1211 + $0x20] sm:$0xff]
        %v3949 = vld [vmem:[%s1211 + $0x28] sm:$0xff]
        %v3950 = vld [vmem:[%s1211 + $0x30] sm:$0xff]
        %v3951 = vld [vmem:[%s1211 + $0x38] sm:$0xff]
        %v3952 = vld [vmem:[%s1211 + $0x40] sm:$0xff]
        %v3953 = vld [vmem:[%s1211 + $0x48] sm:$0xff]
        %v3954 = vld [vmem:[%s1211 + $0x50] sm:$0xff]
        %v3955 = vld [vmem:[%s1211 + $0x58] sm:$0xff]
        %v3956 = vld [vmem:[%s1211 + $0x60] sm:$0xff]
        %v3957 = vld [vmem:[%s1211 + $0x68] sm:$0xff]
        %v3958 = vld [vmem:[%s1211 + $0x70] sm:$0xff]
        %v3959 = vld [vmem:[%s1211 + $0x78] sm:$0xff]
        %v3960 = vld [vmem:[%s1211 + $0x80] sm:$0xff]
        %v3961 = vld [vmem:[%s1211 + $0x88] sm:$0xff]
        %v3962 = vld [vmem:[%s1211 + $0x90] sm:$0xff]
        %v3963 = vld [vmem:[%s1211 + $0x98] sm:$0xff]
        %v3964 = vld [vmem:[%s1211 + $0xa0] sm:$0xff]
        %v3965 = vld [vmem:[%s1211 + $0xa8] sm:$0xff]
        %v3966 = vld [vmem:[%s1211 + $0xb0] sm:$0xff]
        %v3967 = vld [vmem:[%s1211 + $0xb8] sm:$0xff]
        %v3968 = vld [vmem:[%s1211 + $0xc0] sm:$0xff]
        %v3969 = vld [vmem:[%s1211 + $0xc8] sm:$0xff]
        %v3970 = vld [vmem:[%s1211 + $0xd0] sm:$0xff]
        %v3971 = vld [vmem:[%s1211 + $0xd8] sm:$0xff]
        %v3972 = vld [vmem:[%s1211 + $0xe0] sm:$0xff]
        %v3973 = vld [vmem:[%s1211 + $0xe8] sm:$0xff]
        %v3974 = vld [vmem:[%s1211 + $0xf0] sm:$0xff]
        %v3975 = vld [vmem:[%s1211 + $0xf8] sm:$0xff]
        %v3976 = vld [vmem:[%s1211 + $0x100] sm:$0xff]
        %v3977 = vld [vmem:[%s1211 + $0x108] sm:$0xff]
        %v3978 = vld [vmem:[%s1211 + $0x110] sm:$0xff]
        %v3979 = vld [vmem:[%s1211 + $0x118] sm:$0xff]
        %v3980 = vld [vmem:[%s1211 + $0x120] sm:$0xff]
        %v3981 = vld [vmem:[%s1211 + $0x128] sm:$0xff]
        %v3982 = vld [vmem:[%s1211 + $0x130] sm:$0xff]
        %v3983 = vld [vmem:[%s1211 + $0x138] sm:$0xff]
        %v3984 = vld [vmem:[%s1211 + $0x140] sm:$0xff]
        %v3985 = vld [vmem:[%s1211 + $0x148] sm:$0xff]
        %v3986 = vld [vmem:[%s1211 + $0x150] sm:$0xff]
        %v3987 = vld [vmem:[%s1211 + $0x158] sm:$0xff]
        %v3988 = vld [vmem:[%s1211 + $0x160] sm:$0xff]
        %v3989 = vld [vmem:[%s1211 + $0x168] sm:$0xff]
        %v3990 = vld [vmem:[%s1211 + $0x170] sm:$0xff]
        %v3991 = vld [vmem:[%s1211 + $0x178] sm:$0xff]
        %v3992 = vld [vmem:[%s1211 + $0x180] sm:$0xff]
        %v3993 = vld [vmem:[%s1211 + $0x188] sm:$0xff]
        %v3994 = vld [vmem:[%s1211 + $0x190] sm:$0xff]
        %v3995 = vld [vmem:[%s1211 + $0x198] sm:$0xff]
        %v3996 = vld [vmem:[%s1211 + $0x1a0] sm:$0xff]
        %v3997 = vld [vmem:[%s1211 + $0x1a8] sm:$0xff]
        %v3998 = vld [vmem:[%s1211 + $0x1b0] sm:$0xff]
        %v3999 = vld [vmem:[%s1211 + $0x1b8] sm:$0xff]
        %v4000 = vld [vmem:[%s1211 + $0x1c0] sm:$0xff]
        %v4001 = vld [vmem:[%s1211 + $0x1c8] sm:$0xff]
        %v4002 = vld [vmem:[%s1211 + $0x1d0] sm:$0xff]
        %v4003 = vld [vmem:[%s1211 + $0x1d8] sm:$0xff]
        %v4004 = vld [vmem:[%s1211 + $0x1e0] sm:$0xff]
        %v4005 = vld [vmem:[%s1211 + $0x1e8] sm:$0xff]
        %v4006 = vld [vmem:[%s1211 + $0x1f0] sm:$0xff]
        %v4007 = vld [vmem:[%s1211 + $0x1f8] sm:$0xff]
        %v4008 = vld [vmem:[%s1211 + $0x200] sm:$0xff]
        %v4009 = vld [vmem:[%s1211 + $0x208] sm:$0xff]
        %v4010 = vld [vmem:[%s1211 + $0x210] sm:$0xff]
        %v4011 = vld [vmem:[%s1211 + $0x218] sm:$0xff]
        %v4012 = vld [vmem:[%s1211 + $0x220] sm:$0xff]
        %v4013 = vld [vmem:[%s1211 + $0x228] sm:$0xff]
        %v4014 = vld [vmem:[%s1211 + $0x230] sm:$0xff]
        %v4015 = vld [vmem:[%s1211 + $0x238] sm:$0xff]
        %v4016 = vld [vmem:[%s1211 + $0x240] sm:$0xff]
        %v4017 = vld [vmem:[%s1211 + $0x248] sm:$0xff]
        %v4018 = vld [vmem:[%s1211 + $0x250] sm:$0xff]
        %v4019 = vld [vmem:[%s1211 + $0x258] sm:$0xff]
        %v4020 = vld [vmem:[%s1211 + $0x260] sm:$0xff]
        %v4021 = vld [vmem:[%s1211 + $0x268] sm:$0xff]
        %v4022 = vld [vmem:[%s1211 + $0x270] sm:$0xff]
        %v4023 = vld [vmem:[%s1211 + $0x278] sm:$0xff]
        %v4024 = vld [vmem:[%s1211 + $0x280] sm:$0xff]
        %v4025 = vld [vmem:[%s1211 + $0x288] sm:$0xff]
        %v4026 = vld [vmem:[%s1211 + $0x290] sm:$0xff]
        %v4027 = vld [vmem:[%s1211 + $0x298] sm:$0xff]
        %v4028 = vld [vmem:[%s1211 + $0x2a0] sm:$0xff]
        %v4029 = vld [vmem:[%s1211 + $0x2a8] sm:$0xff]
        %v4030 = vld [vmem:[%s1211 + $0x2b0] sm:$0xff]
        %v4031 = vld [vmem:[%s1211 + $0x2b8] sm:$0xff]
        %v4032 = vld [vmem:[%s1211 + $0x2c0] sm:$0xff]
        %v4033 = vld [vmem:[%s1211 + $0x2c8] sm:$0xff]
        %v4034 = vld [vmem:[%s1211 + $0x2d0] sm:$0xff]
        %v4035 = vld [vmem:[%s1211 + $0x2d8] sm:$0xff]
        %v4036 = vld [vmem:[%s1211 + $0x2e0] sm:$0xff]
        %v4037 = vld [vmem:[%s1211 + $0x2e8] sm:$0xff]
        %v4038 = vld [vmem:[%s1211 + $0x2f0] sm:$0xff]
        %v4039 = vld [vmem:[%s1211 + $0x2f8] sm:$0xff]
        %v4040 = vld [vmem:[%s1211 + $0x300] sm:$0xff]
        %v4041 = vld [vmem:[%s1211 + $0x308] sm:$0xff]
        %v4042 = vld [vmem:[%s1211 + $0x310] sm:$0xff]
        %v4043 = vld [vmem:[%s1211 + $0x318] sm:$0xff]
        %v4044 = vld [vmem:[%s1211 + $0x320] sm:$0xff]
        %v4045 = vld [vmem:[%s1211 + $0x328] sm:$0xff]
        %v4046 = vld [vmem:[%s1211 + $0x330] sm:$0xff]
        %v4047 = vld [vmem:[%s1211 + $0x338] sm:$0xff]
        %v4048 = vld [vmem:[%s1211 + $0x340] sm:$0xff]
        %v4049 = vld [vmem:[%s1211 + $0x348] sm:$0xff]
        %v4050 = vld [vmem:[%s1211 + $0x350] sm:$0xff]
        %v4051 = vld [vmem:[%s1211 + $0x358] sm:$0xff]
        %v4052 = vld [vmem:[%s1211 + $0x360] sm:$0xff]
        %v4053 = vld [vmem:[%s1211 + $0x368] sm:$0xff]
        %v4054 = vld [vmem:[%s1211 + $0x370] sm:$0xff]
        %v4055 = vld [vmem:[%s1211 + $0x378] sm:$0xff]
        %v4056 = vld [vmem:[%s1211 + $0x380] sm:$0xff]
        %v4057 = vld [vmem:[%s1211 + $0x388] sm:$0xff]
        %v4058 = vld [vmem:[%s1211 + $0x390] sm:$0xff]
        %v4059 = vld [vmem:[%s1211 + $0x398] sm:$0xff]
        %v4060 = vld [vmem:[%s1211 + $0x3a0] sm:$0xff]
        %v4061 = vld [vmem:[%s1211 + $0x3a8] sm:$0xff]
        %v4062 = vld [vmem:[%s1211 + $0x3b0] sm:$0xff]
        %v4063 = vld [vmem:[%s1211 + $0x3b8] sm:$0xff]
        %v4064 = vld [vmem:[%s1211 + $0x3c0] sm:$0xff]
        %v4065 = vld [vmem:[%s1211 + $0x3c8] sm:$0xff]
        %v4066 = vld [vmem:[%s1211 + $0x3d0] sm:$0xff]
        %v4067 = vld [vmem:[%s1211 + $0x3d8] sm:$0xff]
        %v4068 = vld [vmem:[%s1211 + $0x3e0] sm:$0xff]
        %v4069 = vld [vmem:[%s1211 + $0x3e8] sm:$0xff]
        %v4070 = vld [vmem:[%s1211 + $0x3f0] sm:$0xff]
        %v4071 = vld [vmem:[%s1211 + $0x3f8] sm:$0xff]
        %v4072 = vld [vmem:[%s1211 + $0x400] sm:$0xff]
        %v4073 = vld [vmem:[%s1211 + $0x408] sm:$0xff]
        %v4074 = vld [vmem:[%s1211 + $0x410] sm:$0xff]
        %v4075 = vld [vmem:[%s1211 + $0x418] sm:$0xff]
        %v4076 = vld [vmem:[%s1211 + $0x420] sm:$0xff]
        %v4077 = vld [vmem:[%s1211 + $0x428] sm:$0xff]
        %v4078 = vld [vmem:[%s1211 + $0x430] sm:$0xff]
        %v4079 = vld [vmem:[%s1211 + $0x438] sm:$0xff]
        %v4080 = vld [vmem:[%s1211 + $0x440] sm:$0xff]
        %v4081 = vld [vmem:[%s1211 + $0x448] sm:$0xff]
        %v4082 = vld [vmem:[%s1211 + $0x450] sm:$0xff]
        %v4083 = vld [vmem:[%s1211 + $0x458] sm:$0xff]
        %v4084 = vld [vmem:[%s1211 + $0x460] sm:$0xff]
        %v4085 = vld [vmem:[%s1211 + $0x468] sm:$0xff]
        %v4086 = vld [vmem:[%s1211 + $0x470] sm:$0xff]
        %v4087 = vld [vmem:[%s1211 + $0x478] sm:$0xff]
        %v4088 = vld [vmem:[%s1211 + $0x480] sm:$0xff]
        %v4089 = vld [vmem:[%s1211 + $0x488] sm:$0xff]
        %v4090 = vld [vmem:[%s1211 + $0x490] sm:$0xff]
        %v4091 = vld [vmem:[%s1211 + $0x498] sm:$0xff]
        %v4092 = vld [vmem:[%s1211 + $0x4a0] sm:$0xff]
        %v4093 = vld [vmem:[%s1211 + $0x4a8] sm:$0xff]
        %v4094 = vld [vmem:[%s1211 + $0x4b0] sm:$0xff]
        %v4095 = vld [vmem:[%s1211 + $0x4b8] sm:$0xff]
        %v4096 = vld [vmem:[%s1211 + $0x4c0] sm:$0xff]
        %v4097 = vld [vmem:[%s1211 + $0x4c8] sm:$0xff]
        %v4098 = vld [vmem:[%s1211 + $0x4d0] sm:$0xff]
        %v4099 = vld [vmem:[%s1211 + $0x4d8] sm:$0xff]
        %v4100 = vld [vmem:[%s1211 + $0x4e0] sm:$0xff]
        %v4101 = vld [vmem:[%s1211 + $0x4e8] sm:$0xff]
        %v4102 = vld [vmem:[%s1211 + $0x4f0] sm:$0xff]
        %v4103 = vld [vmem:[%s1211 + $0x4f8] sm:$0xff]
        %v4104 = vld [vmem:[%s1211 + $0x500] sm:$0xff]
        %v4105 = vld [vmem:[%s1211 + $0x508] sm:$0xff]
        %v4106 = vld [vmem:[%s1211 + $0x510] sm:$0xff]
        %v4107 = vld [vmem:[%s1211 + $0x518] sm:$0xff]
        %v4108 = vld [vmem:[%s1211 + $0x520] sm:$0xff]
        %v4109 = vld [vmem:[%s1211 + $0x528] sm:$0xff]
        %v4110 = vld [vmem:[%s1211 + $0x530] sm:$0xff]
        %v4111 = vld [vmem:[%s1211 + $0x538] sm:$0xff]
        %v4112 = vld [vmem:[%s1211 + $0x540] sm:$0xff]
        %v4113 = vld [vmem:[%s1211 + $0x548] sm:$0xff]
        %v4114 = vld [vmem:[%s1211 + $0x550] sm:$0xff]
        %v4115 = vld [vmem:[%s1211 + $0x558] sm:$0xff]
        %v4116 = vld [vmem:[%s1211 + $0x560] sm:$0xff]
        %v4117 = vld [vmem:[%s1211 + $0x568] sm:$0xff]
        %v4118 = vld [vmem:[%s1211 + $0x570] sm:$0xff]
        %v4119 = vld [vmem:[%s1211 + $0x578] sm:$0xff]
        %v4120 = vld [vmem:[%s1211 + $0x580] sm:$0xff]
        %v4121 = vld [vmem:[%s1211 + $0x588] sm:$0xff]
        %v4122 = vld [vmem:[%s1211 + $0x590] sm:$0xff]
        %v4123 = vld [vmem:[%s1211 + $0x598] sm:$0xff]
        %v4124 = vld [vmem:[%s1211 + $0x5a0] sm:$0xff]
        %v4125 = vld [vmem:[%s1211 + $0x5a8] sm:$0xff]
        %v4126 = vld [vmem:[%s1211 + $0x5b0] sm:$0xff]
        %v4127 = vld [vmem:[%s1211 + $0x5b8] sm:$0xff]
        %v4128 = vld [vmem:[%s1211 + $0x5c0] sm:$0xff]
        %v4129 = vld [vmem:[%s1211 + $0x5c8] sm:$0xff]
        %v4130 = vld [vmem:[%s1211 + $0x5d0] sm:$0xff]
        %v4131 = vld [vmem:[%s1211 + $0x5d8] sm:$0xff]
        %v4132 = vld [vmem:[%s1211 + $0x5e0] sm:$0xff]
        %v4133 = vld [vmem:[%s1211 + $0x5e8] sm:$0xff]
        %v4134 = vld [vmem:[%s1211 + $0x5f0] sm:$0xff]
        %v4135 = vld [vmem:[%s1211 + $0x5f8] sm:$0xff]
        %v4136 = vld [vmem:[%s1220] sm:$0xff]
        %v4137 = vld [vmem:[%s1220 + $0x8] sm:$0xff]
        %v4138 = vld [vmem:[%s1220 + $0x10] sm:$0xff]
        %v4139 = vld [vmem:[%s1220 + $0x18] sm:$0xff]
        %v4140 = vld [vmem:[%s1220 + $0x20] sm:$0xff]
        %v4141 = vld [vmem:[%s1220 + $0x28] sm:$0xff]
        %v4142 = vld [vmem:[%s1220 + $0x30] sm:$0xff]
        %v4143 = vld [vmem:[%s1220 + $0x38] sm:$0xff]
        %v4144 = vld [vmem:[%s1220 + $0x40] sm:$0xff]
        %v4145 = vld [vmem:[%s1220 + $0x48] sm:$0xff]
        %v4146 = vld [vmem:[%s1220 + $0x50] sm:$0xff]
        %v4147 = vld [vmem:[%s1220 + $0x58] sm:$0xff]
        %v4148 = vld [vmem:[%s1220 + $0x60] sm:$0xff]
        %v4149 = vld [vmem:[%s1220 + $0x68] sm:$0xff]
        %v4150 = vld [vmem:[%s1220 + $0x70] sm:$0xff]
        %v4151 = vld [vmem:[%s1220 + $0x78] sm:$0xff]
        %v4152 = vld [vmem:[%s1220 + $0x80] sm:$0xff]
        %v4153 = vld [vmem:[%s1220 + $0x88] sm:$0xff]
        %v4154 = vld [vmem:[%s1220 + $0x90] sm:$0xff]
        %v4155 = vld [vmem:[%s1220 + $0x98] sm:$0xff]
        %v4156 = vld [vmem:[%s1220 + $0xa0] sm:$0xff]
        %v4157 = vld [vmem:[%s1220 + $0xa8] sm:$0xff]
        %v4158 = vld [vmem:[%s1220 + $0xb0] sm:$0xff]
        %v4159 = vld [vmem:[%s1220 + $0xb8] sm:$0xff]
        %v4160 = vld [vmem:[%s1220 + $0xc0] sm:$0xff]
        %v4161 = vld [vmem:[%s1220 + $0xc8] sm:$0xff]
        %v4162 = vld [vmem:[%s1220 + $0xd0] sm:$0xff]
        %v4163 = vld [vmem:[%s1220 + $0xd8] sm:$0xff]
        %v4164 = vld [vmem:[%s1220 + $0xe0] sm:$0xff]
        %v4165 = vld [vmem:[%s1220 + $0xe8] sm:$0xff]
        %v4166 = vld [vmem:[%s1220 + $0xf0] sm:$0xff]
        %v4167 = vld [vmem:[%s1220 + $0xf8] sm:$0xff]
        %v4168 = vld [vmem:[%s1220 + $0x100] sm:$0xff]
        %v4169 = vld [vmem:[%s1220 + $0x108] sm:$0xff]
        %v4170 = vld [vmem:[%s1220 + $0x110] sm:$0xff]
        %v4171 = vld [vmem:[%s1220 + $0x118] sm:$0xff]
        %v4172 = vld [vmem:[%s1220 + $0x120] sm:$0xff]
        %v4173 = vld [vmem:[%s1220 + $0x128] sm:$0xff]
        %v4174 = vld [vmem:[%s1220 + $0x130] sm:$0xff]
        %v4175 = vld [vmem:[%s1220 + $0x138] sm:$0xff]
        %v4176 = vld [vmem:[%s1220 + $0x140] sm:$0xff]
        %v4177 = vld [vmem:[%s1220 + $0x148] sm:$0xff]
        %v4178 = vld [vmem:[%s1220 + $0x150] sm:$0xff]
        %v4179 = vld [vmem:[%s1220 + $0x158] sm:$0xff]
        %v4180 = vld [vmem:[%s1220 + $0x160] sm:$0xff]
        %v4181 = vld [vmem:[%s1220 + $0x168] sm:$0xff]
        %v4182 = vld [vmem:[%s1220 + $0x170] sm:$0xff]
        %v4183 = vld [vmem:[%s1220 + $0x178] sm:$0xff]
        %v4184 = vld [vmem:[%s1220 + $0x180] sm:$0xff]
        %v4185 = vld [vmem:[%s1220 + $0x188] sm:$0xff]
        %v4186 = vld [vmem:[%s1220 + $0x190] sm:$0xff]
        %v4187 = vld [vmem:[%s1220 + $0x198] sm:$0xff]
        %v4188 = vld [vmem:[%s1220 + $0x1a0] sm:$0xff]
        %v4189 = vld [vmem:[%s1220 + $0x1a8] sm:$0xff]
        %v4190 = vld [vmem:[%s1220 + $0x1b0] sm:$0xff]
        %v4191 = vld [vmem:[%s1220 + $0x1b8] sm:$0xff]
        %v4192 = vld [vmem:[%s1220 + $0x1c0] sm:$0xff]
        %v4193 = vld [vmem:[%s1220 + $0x1c8] sm:$0xff]
        %v4194 = vld [vmem:[%s1220 + $0x1d0] sm:$0xff]
        %v4195 = vld [vmem:[%s1220 + $0x1d8] sm:$0xff]
        %v4196 = vld [vmem:[%s1220 + $0x1e0] sm:$0xff]
        %v4197 = vld [vmem:[%s1220 + $0x1e8] sm:$0xff]
        %v4198 = vld [vmem:[%s1220 + $0x1f0] sm:$0xff]
        %v4199 = vld [vmem:[%s1220 + $0x1f8] sm:$0xff]
        %v4200 = vld [vmem:[%s1229] sm:$0x3]
        %vm4201 = vcmask 1041408
        %v4202 = vsel %vm4201, %v3940, 0.0
        %v4203 = vsel %vm4201, %v3941, 0.0
        %v4204 = vadd.f32 %v4202, %v4203
        %4205 = vadd.xlane.f32.xlu0 %v4204
        %v4206 = vpop.xlane.xlu0 %4205
        %v4207 = vrcp.pop 256.0
        %v4208 = vmul.f32 %v4206, %v4207
        %v4209 = vsub.f32 %v3940, %v4208
        %v4210 = vsub.f32 %v3941, %v4208
        %v4211 = vmul.f32 %v4209, %v4209
        %v4212 = vmul.f32 %v4210, %v4210
        %v4213 = vsel %vm4201, %v4211, 0.0
        %v4214 = vsel %vm4201, %v4212, 0.0
        %v4215 = vadd.f32 %v4213, %v4214
        %4216 = vadd.xlane.f32.xlu0 %v4215
        %v4217 = vpop.xlane.xlu0 %4216
        %v4218 = vmul.f32 %v4217, %v4207
        %v4219 = vadd.f32 %v4218, 1e-05
        %v4220 = vrsqrt.pop %v4219
        %v4221 = vmul.f32 %v4209, %v4220
        %v4222 = vmul.f32 %v4210, %v4220
        %v4224 = vlaneseq
        %v4225 = vshrl.u32 %v4224, 7
        %v4226 = vsub.s32 0, %v4225
        %v4227 = vrot.slane %v3942, %v4226
        %v4228 = vlaneseq
        %v4229 = vshrl.u32 %v4228, 7
        %v4230 = vsub.s32 1, %v4229
        %v4231 = vrot.slane %v3942, %v4230
        %v4234 = vmul.f32 %v4221, %v4227
        %v4235 = vmul.f32 %v4222, %v4231
        %v4237 = vlaneseq
        %v4238 = vshrl.u32 %v4237, 7
        %v4239 = vsub.s32 0, %v4238
        %v4240 = vrot.slane %v3943, %v4239
        %v4241 = vlaneseq
        %v4242 = vshrl.u32 %v4241, 7
        %v4243 = vsub.s32 1, %v4242
        %v4244 = vrot.slane %v3943, %v4243
        %v4247 = vadd.f32 %v4234, %v4240
        %v4248 = vadd.f32 %v4235, %v4244
        %v4249 = vpack.c.bf16 %v4247, %v4247
        %v4250 = vpack.c.bf16 %v4248, %v4248
        %v4443 = vunpack.c.l.b16 %v3944
        %v4444 = vunpack.c.h.b16 %v3944
        %v4445 = vunpack.c.l.b16 %v3945
        %v4446 = vunpack.c.h.b16 %v3945
        %v4447 = vunpack.c.l.b16 %v3946
        %v4448 = vunpack.c.h.b16 %v3946
        %v4449 = vunpack.c.l.b16 %v3947
        %v4450 = vunpack.c.h.b16 %v3947
        %v4451 = vunpack.c.l.b16 %v3948
        %v4452 = vunpack.c.h.b16 %v3948
        %v4453 = vunpack.c.l.b16 %v3949
        %v4454 = vunpack.c.h.b16 %v3949
        %v4455 = vunpack.c.l.b16 %v3950
        %v4456 = vunpack.c.h.b16 %v3950
        %v4457 = vunpack.c.l.b16 %v3951
        %v4458 = vunpack.c.h.b16 %v3951
        %v4459 = vunpack.c.l.b16 %v3952
        %v4460 = vunpack.c.h.b16 %v3952
        %v4461 = vunpack.c.l.b16 %v3953
        %v4462 = vunpack.c.h.b16 %v3953
        %v4463 = vunpack.c.l.b16 %v3954
        %v4464 = vunpack.c.h.b16 %v3954
        %v4465 = vunpack.c.l.b16 %v3955
        %v4466 = vunpack.c.h.b16 %v3955
        %v4467 = vunpack.c.l.b16 %v3956
        %v4468 = vunpack.c.h.b16 %v3956
        %v4469 = vunpack.c.l.b16 %v3957
        %v4470 = vunpack.c.h.b16 %v3957
        %v4471 = vunpack.c.l.b16 %v3958
        %v4472 = vunpack.c.h.b16 %v3958
        %v4473 = vunpack.c.l.b16 %v3959
        %v4474 = vunpack.c.h.b16 %v3959
        %v4475 = vunpack.c.l.b16 %v3960
        %v4476 = vunpack.c.h.b16 %v3960
        %v4477 = vunpack.c.l.b16 %v3961
        %v4478 = vunpack.c.h.b16 %v3961
        %v4479 = vunpack.c.l.b16 %v3962
        %v4480 = vunpack.c.h.b16 %v3962
        %v4481 = vunpack.c.l.b16 %v3963
        %v4482 = vunpack.c.h.b16 %v3963
        %v4483 = vunpack.c.l.b16 %v3964
        %v4484 = vunpack.c.h.b16 %v3964
        %v4485 = vunpack.c.l.b16 %v3965
        %v4486 = vunpack.c.h.b16 %v3965
        %v4487 = vunpack.c.l.b16 %v3966
        %v4488 = vunpack.c.h.b16 %v3966
        %v4489 = vunpack.c.l.b16 %v3967
        %v4490 = vunpack.c.h.b16 %v3967
        %v4491 = vunpack.c.l.b16 %v3968
        %v4492 = vunpack.c.h.b16 %v3968
        %v4493 = vunpack.c.l.b16 %v3969
        %v4494 = vunpack.c.h.b16 %v3969
        %v4495 = vunpack.c.l.b16 %v3970
        %v4496 = vunpack.c.h.b16 %v3970
        %v4497 = vunpack.c.l.b16 %v3971
        %v4498 = vunpack.c.h.b16 %v3971
        %v4499 = vunpack.c.l.b16 %v3972
        %v4500 = vunpack.c.h.b16 %v3972
        %v4501 = vunpack.c.l.b16 %v3973
        %v4502 = vunpack.c.h.b16 %v3973
        %v4503 = vunpack.c.l.b16 %v3974
        %v4504 = vunpack.c.h.b16 %v3974
        %v4505 = vunpack.c.l.b16 %v3975
        %v4506 = vunpack.c.h.b16 %v3975
        %v4507 = vunpack.c.l.b16 %v3976
        %v4508 = vunpack.c.h.b16 %v3976
        %v4509 = vunpack.c.l.b16 %v3977
        %v4510 = vunpack.c.h.b16 %v3977
        %v4511 = vunpack.c.l.b16 %v3978
        %v4512 = vunpack.c.h.b16 %v3978
        %v4513 = vunpack.c.l.b16 %v3979
        %v4514 = vunpack.c.h.b16 %v3979
        %v4515 = vunpack.c.l.b16 %v3980
        %v4516 = vunpack.c.h.b16 %v3980
        %v4517 = vunpack.c.l.b16 %v3981
        %v4518 = vunpack.c.h.b16 %v3981
        %v4519 = vunpack.c.l.b16 %v3982
        %v4520 = vunpack.c.h.b16 %v3982
        %v4521 = vunpack.c.l.b16 %v3983
        %v4522 = vunpack.c.h.b16 %v3983
        %v4523 = vunpack.c.l.b16 %v3984
        %v4524 = vunpack.c.h.b16 %v3984
        %v4525 = vunpack.c.l.b16 %v3985
        %v4526 = vunpack.c.h.b16 %v3985
        %v4527 = vunpack.c.l.b16 %v3986
        %v4528 = vunpack.c.h.b16 %v3986
        %v4529 = vunpack.c.l.b16 %v3987
        %v4530 = vunpack.c.h.b16 %v3987
        %v4531 = vunpack.c.l.b16 %v3988
        %v4532 = vunpack.c.h.b16 %v3988
        %v4533 = vunpack.c.l.b16 %v3989
        %v4534 = vunpack.c.h.b16 %v3989
        %v4535 = vunpack.c.l.b16 %v3990
        %v4536 = vunpack.c.h.b16 %v3990
        %v4537 = vunpack.c.l.b16 %v3991
        %v4538 = vunpack.c.h.b16 %v3991
        %v4539 = vunpack.c.l.b16 %v3992
        %v4540 = vunpack.c.h.b16 %v3992
        %v4541 = vunpack.c.l.b16 %v3993
        %v4542 = vunpack.c.h.b16 %v3993
        %v4543 = vunpack.c.l.b16 %v3994
        %v4544 = vunpack.c.h.b16 %v3994
        %v4545 = vunpack.c.l.b16 %v3995
        %v4546 = vunpack.c.h.b16 %v3995
        %v4547 = vunpack.c.l.b16 %v3996
        %v4548 = vunpack.c.h.b16 %v3996
        %v4549 = vunpack.c.l.b16 %v3997
        %v4550 = vunpack.c.h.b16 %v3997
        %v4551 = vunpack.c.l.b16 %v3998
        %v4552 = vunpack.c.h.b16 %v3998
        %v4553 = vunpack.c.l.b16 %v3999
        %v4554 = vunpack.c.h.b16 %v3999
        %v4555 = vunpack.c.l.b16 %v4000
        %v4556 = vunpack.c.h.b16 %v4000
        %v4557 = vunpack.c.l.b16 %v4001
        %v4558 = vunpack.c.h.b16 %v4001
        %v4559 = vunpack.c.l.b16 %v4002
        %v4560 = vunpack.c.h.b16 %v4002
        %v4561 = vunpack.c.l.b16 %v4003
        %v4562 = vunpack.c.h.b16 %v4003
        %v4563 = vunpack.c.l.b16 %v4004
        %v4564 = vunpack.c.h.b16 %v4004
        %v4565 = vunpack.c.l.b16 %v4005
        %v4566 = vunpack.c.h.b16 %v4005
        %v4567 = vunpack.c.l.b16 %v4006
        %v4568 = vunpack.c.h.b16 %v4006
        %v4569 = vunpack.c.l.b16 %v4007
        %v4570 = vunpack.c.h.b16 %v4007
        %v4571 = vunpack.c.l.b16 %v4008
        %v4572 = vunpack.c.h.b16 %v4008
        %v4573 = vunpack.c.l.b16 %v4009
        %v4574 = vunpack.c.h.b16 %v4009
        %v4575 = vunpack.c.l.b16 %v4010
        %v4576 = vunpack.c.h.b16 %v4010
        %v4577 = vunpack.c.l.b16 %v4011
        %v4578 = vunpack.c.h.b16 %v4011
        %v4579 = vunpack.c.l.b16 %v4012
        %v4580 = vunpack.c.h.b16 %v4012
        %v4581 = vunpack.c.l.b16 %v4013
        %v4582 = vunpack.c.h.b16 %v4013
        %v4583 = vunpack.c.l.b16 %v4014
        %v4584 = vunpack.c.h.b16 %v4014
        %v4585 = vunpack.c.l.b16 %v4015
        %v4586 = vunpack.c.h.b16 %v4015
        %v4587 = vunpack.c.l.b16 %v4016
        %v4588 = vunpack.c.h.b16 %v4016
        %v4589 = vunpack.c.l.b16 %v4017
        %v4590 = vunpack.c.h.b16 %v4017
        %v4591 = vunpack.c.l.b16 %v4018
        %v4592 = vunpack.c.h.b16 %v4018
        %v4593 = vunpack.c.l.b16 %v4019
        %v4594 = vunpack.c.h.b16 %v4019
        %v4595 = vunpack.c.l.b16 %v4020
        %v4596 = vunpack.c.h.b16 %v4020
        %v4597 = vunpack.c.l.b16 %v4021
        %v4598 = vunpack.c.h.b16 %v4021
        %v4599 = vunpack.c.l.b16 %v4022
        %v4600 = vunpack.c.h.b16 %v4022
        %v4601 = vunpack.c.l.b16 %v4023
        %v4602 = vunpack.c.h.b16 %v4023
        %v4603 = vunpack.c.l.b16 %v4024
        %v4604 = vunpack.c.h.b16 %v4024
        %v4605 = vunpack.c.l.b16 %v4025
        %v4606 = vunpack.c.h.b16 %v4025
        %v4607 = vunpack.c.l.b16 %v4026
        %v4608 = vunpack.c.h.b16 %v4026
        %v4609 = vunpack.c.l.b16 %v4027
        %v4610 = vunpack.c.h.b16 %v4027
        %v4611 = vunpack.c.l.b16 %v4028
        %v4612 = vunpack.c.h.b16 %v4028
        %v4613 = vunpack.c.l.b16 %v4029
        %v4614 = vunpack.c.h.b16 %v4029
        %v4615 = vunpack.c.l.b16 %v4030
        %v4616 = vunpack.c.h.b16 %v4030
        %v4617 = vunpack.c.l.b16 %v4031
        %v4618 = vunpack.c.h.b16 %v4031
        %v4619 = vunpack.c.l.b16 %v4032
        %v4620 = vunpack.c.h.b16 %v4032
        %v4621 = vunpack.c.l.b16 %v4033
        %v4622 = vunpack.c.h.b16 %v4033
        %v4623 = vunpack.c.l.b16 %v4034
        %v4624 = vunpack.c.h.b16 %v4034
        %v4625 = vunpack.c.l.b16 %v4035
        %v4626 = vunpack.c.h.b16 %v4035
        %v4627 = vunpack.c.l.b16 %v4036
        %v4628 = vunpack.c.h.b16 %v4036
        %v4629 = vunpack.c.l.b16 %v4037
        %v4630 = vunpack.c.h.b16 %v4037
        %v4631 = vunpack.c.l.b16 %v4038
        %v4632 = vunpack.c.h.b16 %v4038
        %v4633 = vunpack.c.l.b16 %v4039
        %v4634 = vunpack.c.h.b16 %v4039
        %v4635 = vunpack.c.l.b16 %v4040
        %v4636 = vunpack.c.h.b16 %v4040
        %v4637 = vunpack.c.l.b16 %v4041
        %v4638 = vunpack.c.h.b16 %v4041
        %v4639 = vunpack.c.l.b16 %v4042
        %v4640 = vunpack.c.h.b16 %v4042
        %v4641 = vunpack.c.l.b16 %v4043
        %v4642 = vunpack.c.h.b16 %v4043
        %v4643 = vunpack.c.l.b16 %v4044
        %v4644 = vunpack.c.h.b16 %v4044
        %v4645 = vunpack.c.l.b16 %v4045
        %v4646 = vunpack.c.h.b16 %v4045
        %v4647 = vunpack.c.l.b16 %v4046
        %v4648 = vunpack.c.h.b16 %v4046
        %v4649 = vunpack.c.l.b16 %v4047
        %v4650 = vunpack.c.h.b16 %v4047
        %v4651 = vunpack.c.l.b16 %v4048
        %v4652 = vunpack.c.h.b16 %v4048
        %v4653 = vunpack.c.l.b16 %v4049
        %v4654 = vunpack.c.h.b16 %v4049
        %v4655 = vunpack.c.l.b16 %v4050
        %v4656 = vunpack.c.h.b16 %v4050
        %v4657 = vunpack.c.l.b16 %v4051
        %v4658 = vunpack.c.h.b16 %v4051
        %v4659 = vunpack.c.l.b16 %v4052
        %v4660 = vunpack.c.h.b16 %v4052
        %v4661 = vunpack.c.l.b16 %v4053
        %v4662 = vunpack.c.h.b16 %v4053
        %v4663 = vunpack.c.l.b16 %v4054
        %v4664 = vunpack.c.h.b16 %v4054
        %v4665 = vunpack.c.l.b16 %v4055
        %v4666 = vunpack.c.h.b16 %v4055
        %v4667 = vunpack.c.l.b16 %v4056
        %v4668 = vunpack.c.h.b16 %v4056
        %v4669 = vunpack.c.l.b16 %v4057
        %v4670 = vunpack.c.h.b16 %v4057
        %v4671 = vunpack.c.l.b16 %v4058
        %v4672 = vunpack.c.h.b16 %v4058
        %v4673 = vunpack.c.l.b16 %v4059
        %v4674 = vunpack.c.h.b16 %v4059
        %v4675 = vunpack.c.l.b16 %v4060
        %v4676 = vunpack.c.h.b16 %v4060
        %v4677 = vunpack.c.l.b16 %v4061
        %v4678 = vunpack.c.h.b16 %v4061
        %v4679 = vunpack.c.l.b16 %v4062
        %v4680 = vunpack.c.h.b16 %v4062
        %v4681 = vunpack.c.l.b16 %v4063
        %v4682 = vunpack.c.h.b16 %v4063
        %v4683 = vunpack.c.l.b16 %v4064
        %v4684 = vunpack.c.h.b16 %v4064
        %v4685 = vunpack.c.l.b16 %v4065
        %v4686 = vunpack.c.h.b16 %v4065
        %v4687 = vunpack.c.l.b16 %v4066
        %v4688 = vunpack.c.h.b16 %v4066
        %v4689 = vunpack.c.l.b16 %v4067
        %v4690 = vunpack.c.h.b16 %v4067
        %v4691 = vunpack.c.l.b16 %v4068
        %v4692 = vunpack.c.h.b16 %v4068
        %v4693 = vunpack.c.l.b16 %v4069
        %v4694 = vunpack.c.h.b16 %v4069
        %v4695 = vunpack.c.l.b16 %v4070
        %v4696 = vunpack.c.h.b16 %v4070
        %v4697 = vunpack.c.l.b16 %v4071
        %v4698 = vunpack.c.h.b16 %v4071
        %v4699 = vunpack.c.l.b16 %v4072
        %v4700 = vunpack.c.h.b16 %v4072
        %v4701 = vunpack.c.l.b16 %v4073
        %v4702 = vunpack.c.h.b16 %v4073
        %v4703 = vunpack.c.l.b16 %v4074
        %v4704 = vunpack.c.h.b16 %v4074
        %v4705 = vunpack.c.l.b16 %v4075
        %v4706 = vunpack.c.h.b16 %v4075
        %v4707 = vunpack.c.l.b16 %v4076
        %v4708 = vunpack.c.h.b16 %v4076
        %v4709 = vunpack.c.l.b16 %v4077
        %v4710 = vunpack.c.h.b16 %v4077
        %v4711 = vunpack.c.l.b16 %v4078
        %v4712 = vunpack.c.h.b16 %v4078
        %v4713 = vunpack.c.l.b16 %v4079
        %v4714 = vunpack.c.h.b16 %v4079
        %v4715 = vunpack.c.l.b16 %v4080
        %v4716 = vunpack.c.h.b16 %v4080
        %v4717 = vunpack.c.l.b16 %v4081
        %v4718 = vunpack.c.h.b16 %v4081
        %v4719 = vunpack.c.l.b16 %v4082
        %v4720 = vunpack.c.h.b16 %v4082
        %v4721 = vunpack.c.l.b16 %v4083
        %v4722 = vunpack.c.h.b16 %v4083
        %v4723 = vunpack.c.l.b16 %v4084
        %v4724 = vunpack.c.h.b16 %v4084
        %v4725 = vunpack.c.l.b16 %v4085
        %v4726 = vunpack.c.h.b16 %v4085
        %v4727 = vunpack.c.l.b16 %v4086
        %v4728 = vunpack.c.h.b16 %v4086
        %v4729 = vunpack.c.l.b16 %v4087
        %v4730 = vunpack.c.h.b16 %v4087
        %v4731 = vunpack.c.l.b16 %v4088
        %v4732 = vunpack.c.h.b16 %v4088
        %v4733 = vunpack.c.l.b16 %v4089
        %v4734 = vunpack.c.h.b16 %v4089
        %v4735 = vunpack.c.l.b16 %v4090
        %v4736 = vunpack.c.h.b16 %v4090
        %v4737 = vunpack.c.l.b16 %v4091
        %v4738 = vunpack.c.h.b16 %v4091
        %v4739 = vunpack.c.l.b16 %v4092
        %v4740 = vunpack.c.h.b16 %v4092
        %v4741 = vunpack.c.l.b16 %v4093
        %v4742 = vunpack.c.h.b16 %v4093
        %v4743 = vunpack.c.l.b16 %v4094
        %v4744 = vunpack.c.h.b16 %v4094
        %v4745 = vunpack.c.l.b16 %v4095
        %v4746 = vunpack.c.h.b16 %v4095
        %v4747 = vunpack.c.l.b16 %v4096
        %v4748 = vunpack.c.h.b16 %v4096
        %v4749 = vunpack.c.l.b16 %v4097
        %v4750 = vunpack.c.h.b16 %v4097
        %v4751 = vunpack.c.l.b16 %v4098
        %v4752 = vunpack.c.h.b16 %v4098
        %v4753 = vunpack.c.l.b16 %v4099
        %v4754 = vunpack.c.h.b16 %v4099
        %v4755 = vunpack.c.l.b16 %v4100
        %v4756 = vunpack.c.h.b16 %v4100
        %v4757 = vunpack.c.l.b16 %v4101
        %v4758 = vunpack.c.h.b16 %v4101
        %v4759 = vunpack.c.l.b16 %v4102
        %v4760 = vunpack.c.h.b16 %v4102
        %v4761 = vunpack.c.l.b16 %v4103
        %v4762 = vunpack.c.h.b16 %v4103
        %v4763 = vunpack.c.l.b16 %v4104
        %v4764 = vunpack.c.h.b16 %v4104
        %v4765 = vunpack.c.l.b16 %v4105
        %v4766 = vunpack.c.h.b16 %v4105
        %v4767 = vunpack.c.l.b16 %v4106
        %v4768 = vunpack.c.h.b16 %v4106
        %v4769 = vunpack.c.l.b16 %v4107
        %v4770 = vunpack.c.h.b16 %v4107
        %v4771 = vunpack.c.l.b16 %v4108
        %v4772 = vunpack.c.h.b16 %v4108
        %v4773 = vunpack.c.l.b16 %v4109
        %v4774 = vunpack.c.h.b16 %v4109
        %v4775 = vunpack.c.l.b16 %v4110
        %v4776 = vunpack.c.h.b16 %v4110
        %v4777 = vunpack.c.l.b16 %v4111
        %v4778 = vunpack.c.h.b16 %v4111
        %v4779 = vunpack.c.l.b16 %v4112
        %v4780 = vunpack.c.h.b16 %v4112
        %v4781 = vunpack.c.l.b16 %v4113
        %v4782 = vunpack.c.h.b16 %v4113
        %v4783 = vunpack.c.l.b16 %v4114
        %v4784 = vunpack.c.h.b16 %v4114
        %v4785 = vunpack.c.l.b16 %v4115
        %v4786 = vunpack.c.h.b16 %v4115
        %v4787 = vunpack.c.l.b16 %v4116
        %v4788 = vunpack.c.h.b16 %v4116
        %v4789 = vunpack.c.l.b16 %v4117
        %v4790 = vunpack.c.h.b16 %v4117
        %v4791 = vunpack.c.l.b16 %v4118
        %v4792 = vunpack.c.h.b16 %v4118
        %v4793 = vunpack.c.l.b16 %v4119
        %v4794 = vunpack.c.h.b16 %v4119
        %v4795 = vunpack.c.l.b16 %v4120
        %v4796 = vunpack.c.h.b16 %v4120
        %v4797 = vunpack.c.l.b16 %v4121
        %v4798 = vunpack.c.h.b16 %v4121
        %v4799 = vunpack.c.l.b16 %v4122
        %v4800 = vunpack.c.h.b16 %v4122
        %v4801 = vunpack.c.l.b16 %v4123
        %v4802 = vunpack.c.h.b16 %v4123
        %v4803 = vunpack.c.l.b16 %v4124
        %v4804 = vunpack.c.h.b16 %v4124
        %v4805 = vunpack.c.l.b16 %v4125
        %v4806 = vunpack.c.h.b16 %v4125
        %v4807 = vunpack.c.l.b16 %v4126
        %v4808 = vunpack.c.h.b16 %v4126
        %v4809 = vunpack.c.l.b16 %v4127
        %v4810 = vunpack.c.h.b16 %v4127
        %v4811 = vunpack.c.l.b16 %v4128
        %v4812 = vunpack.c.h.b16 %v4128
        %v4813 = vunpack.c.l.b16 %v4129
        %v4814 = vunpack.c.h.b16 %v4129
        %v4815 = vunpack.c.l.b16 %v4130
        %v4816 = vunpack.c.h.b16 %v4130
        %v4817 = vunpack.c.l.b16 %v4131
        %v4818 = vunpack.c.h.b16 %v4131
        %v4819 = vunpack.c.l.b16 %v4132
        %v4820 = vunpack.c.h.b16 %v4132
        %v4821 = vunpack.c.l.b16 %v4133
        %v4822 = vunpack.c.h.b16 %v4133
        %v4823 = vunpack.c.l.b16 %v4134
        %v4824 = vunpack.c.h.b16 %v4134
        %v4825 = vunpack.c.l.b16 %v4135
        %v4826 = vunpack.c.h.b16 %v4135
        %v4827 = vpack.c.b16 %v4455, %v4443
        %v4828 = vpack.c.b16 %v4456, %v4444
        %v4829 = vpack.c.b16 %v4457, %v4445
        %v4830 = vpack.c.b16 %v4458, %v4446
        %v4831 = vpack.c.b16 %v4459, %v4447
        %v4832 = vpack.c.b16 %v4460, %v4448
        %v4833 = vpack.c.b16 %v4461, %v4449
        %v4834 = vpack.c.b16 %v4462, %v4450
        %v4835 = vpack.c.b16 %v4463, %v4451
        %v4836 = vpack.c.b16 %v4464, %v4452
        %v4837 = vpack.c.b16 %v4465, %v4453
        %v4838 = vpack.c.b16 %v4466, %v4454
        %v4839 = vpack.c.b16 %v4479, %v4467
        %v4840 = vpack.c.b16 %v4480, %v4468
        %v4841 = vpack.c.b16 %v4481, %v4469
        %v4842 = vpack.c.b16 %v4482, %v4470
        %v4843 = vpack.c.b16 %v4483, %v4471
        %v4844 = vpack.c.b16 %v4484, %v4472
        %v4845 = vpack.c.b16 %v4485, %v4473
        %v4846 = vpack.c.b16 %v4486, %v4474
        %v4847 = vpack.c.b16 %v4487, %v4475
        %v4848 = vpack.c.b16 %v4488, %v4476
        %v4849 = vpack.c.b16 %v4489, %v4477
        %v4850 = vpack.c.b16 %v4490, %v4478
        %v4851 = vpack.c.b16 %v4503, %v4491
        %v4852 = vpack.c.b16 %v4504, %v4492
        %v4853 = vpack.c.b16 %v4505, %v4493
        %v4854 = vpack.c.b16 %v4506, %v4494
        %v4855 = vpack.c.b16 %v4507, %v4495
        %v4856 = vpack.c.b16 %v4508, %v4496
        %v4857 = vpack.c.b16 %v4509, %v4497
        %v4858 = vpack.c.b16 %v4510, %v4498
        %v4859 = vpack.c.b16 %v4511, %v4499
        %v4860 = vpack.c.b16 %v4512, %v4500
        %v4861 = vpack.c.b16 %v4513, %v4501
        %v4862 = vpack.c.b16 %v4514, %v4502
        %v4863 = vpack.c.b16 %v4527, %v4515
        %v4864 = vpack.c.b16 %v4528, %v4516
        %v4865 = vpack.c.b16 %v4529, %v4517
        %v4866 = vpack.c.b16 %v4530, %v4518
        %v4867 = vpack.c.b16 %v4531, %v4519
        %v4868 = vpack.c.b16 %v4532, %v4520
        %v4869 = vpack.c.b16 %v4533, %v4521
        %v4870 = vpack.c.b16 %v4534, %v4522
        %v4871 = vpack.c.b16 %v4535, %v4523
        %v4872 = vpack.c.b16 %v4536, %v4524
        %v4873 = vpack.c.b16 %v4537, %v4525
        %v4874 = vpack.c.b16 %v4538, %v4526
        %v4875 = vpack.c.b16 %v4551, %v4539
        %v4876 = vpack.c.b16 %v4552, %v4540
        %v4877 = vpack.c.b16 %v4553, %v4541
        %v4878 = vpack.c.b16 %v4554, %v4542
        %v4879 = vpack.c.b16 %v4555, %v4543
        %v4880 = vpack.c.b16 %v4556, %v4544
        %v4881 = vpack.c.b16 %v4557, %v4545
        %v4882 = vpack.c.b16 %v4558, %v4546
        %v4883 = vpack.c.b16 %v4559, %v4547
        %v4884 = vpack.c.b16 %v4560, %v4548
        %v4885 = vpack.c.b16 %v4561, %v4549
        %v4886 = vpack.c.b16 %v4562, %v4550
        %v4887 = vpack.c.b16 %v4575, %v4563
        %v4888 = vpack.c.b16 %v4576, %v4564
        %v4889 = vpack.c.b16 %v4577, %v4565
        %v4890 = vpack.c.b16 %v4578, %v4566
        %v4891 = vpack.c.b16 %v4579, %v4567
        %v4892 = vpack.c.b16 %v4580, %v4568
        %v4893 = vpack.c.b16 %v4581, %v4569
        %v4894 = vpack.c.b16 %v4582, %v4570
        %v4895 = vpack.c.b16 %v4583, %v4571
        %v4896 = vpack.c.b16 %v4584, %v4572
        %v4897 = vpack.c.b16 %v4585, %v4573
        %v4898 = vpack.c.b16 %v4586, %v4574
        %v4899 = vpack.c.b16 %v4599, %v4587
        %v4900 = vpack.c.b16 %v4600, %v4588
        %v4901 = vpack.c.b16 %v4601, %v4589
        %v4902 = vpack.c.b16 %v4602, %v4590
        %v4903 = vpack.c.b16 %v4603, %v4591
        %v4904 = vpack.c.b16 %v4604, %v4592
        %v4905 = vpack.c.b16 %v4605, %v4593
        %v4906 = vpack.c.b16 %v4606, %v4594
        %v4907 = vpack.c.b16 %v4607, %v4595
        %v4908 = vpack.c.b16 %v4608, %v4596
        %v4909 = vpack.c.b16 %v4609, %v4597
        %v4910 = vpack.c.b16 %v4610, %v4598
        %v4911 = vpack.c.b16 %v4623, %v4611
        %v4912 = vpack.c.b16 %v4624, %v4612
        %v4913 = vpack.c.b16 %v4625, %v4613
        %v4914 = vpack.c.b16 %v4626, %v4614
        %v4915 = vpack.c.b16 %v4627, %v4615
        %v4916 = vpack.c.b16 %v4628, %v4616
        %v4917 = vpack.c.b16 %v4629, %v4617
        %v4918 = vpack.c.b16 %v4630, %v4618
        %v4919 = vpack.c.b16 %v4631, %v4619
        %v4920 = vpack.c.b16 %v4632, %v4620
        %v4921 = vpack.c.b16 %v4633, %v4621
        %v4922 = vpack.c.b16 %v4634, %v4622
        %v4923 = vpack.c.b16 %v4647, %v4635
        %v4924 = vpack.c.b16 %v4648, %v4636
        %v4925 = vpack.c.b16 %v4649, %v4637
        %v4926 = vpack.c.b16 %v4650, %v4638
        %v4927 = vpack.c.b16 %v4651, %v4639
        %v4928 = vpack.c.b16 %v4652, %v4640
        %v4929 = vpack.c.b16 %v4653, %v4641
        %v4930 = vpack.c.b16 %v4654, %v4642
        %v4931 = vpack.c.b16 %v4655, %v4643
        %v4932 = vpack.c.b16 %v4656, %v4644
        %v4933 = vpack.c.b16 %v4657, %v4645
        %v4934 = vpack.c.b16 %v4658, %v4646
        %v4935 = vpack.c.b16 %v4671, %v4659
        %v4936 = vpack.c.b16 %v4672, %v4660
        %v4937 = vpack.c.b16 %v4673, %v4661
        %v4938 = vpack.c.b16 %v4674, %v4662
        %v4939 = vpack.c.b16 %v4675, %v4663
        %v4940 = vpack.c.b16 %v4676, %v4664
        %v4941 = vpack.c.b16 %v4677, %v4665
        %v4942 = vpack.c.b16 %v4678, %v4666
        %v4943 = vpack.c.b16 %v4679, %v4667
        %v4944 = vpack.c.b16 %v4680, %v4668
        %v4945 = vpack.c.b16 %v4681, %v4669
        %v4946 = vpack.c.b16 %v4682, %v4670
        %v4947 = vpack.c.b16 %v4695, %v4683
        %v4948 = vpack.c.b16 %v4696, %v4684
        %v4949 = vpack.c.b16 %v4697, %v4685
        %v4950 = vpack.c.b16 %v4698, %v4686
        %v4951 = vpack.c.b16 %v4699, %v4687
        %v4952 = vpack.c.b16 %v4700, %v4688
        %v4953 = vpack.c.b16 %v4701, %v4689
        %v4954 = vpack.c.b16 %v4702, %v4690
        %v4955 = vpack.c.b16 %v4703, %v4691
        %v4956 = vpack.c.b16 %v4704, %v4692
        %v4957 = vpack.c.b16 %v4705, %v4693
        %v4958 = vpack.c.b16 %v4706, %v4694
        %v4959 = vpack.c.b16 %v4719, %v4707
        %v4960 = vpack.c.b16 %v4720, %v4708
        %v4961 = vpack.c.b16 %v4721, %v4709
        %v4962 = vpack.c.b16 %v4722, %v4710
        %v4963 = vpack.c.b16 %v4723, %v4711
        %v4964 = vpack.c.b16 %v4724, %v4712
        %v4965 = vpack.c.b16 %v4725, %v4713
        %v4966 = vpack.c.b16 %v4726, %v4714
        %v4967 = vpack.c.b16 %v4727, %v4715
        %v4968 = vpack.c.b16 %v4728, %v4716
        %v4969 = vpack.c.b16 %v4729, %v4717
        %v4970 = vpack.c.b16 %v4730, %v4718
        %v4971 = vpack.c.b16 %v4743, %v4731
        %v4972 = vpack.c.b16 %v4744, %v4732
        %v4973 = vpack.c.b16 %v4745, %v4733
        %v4974 = vpack.c.b16 %v4746, %v4734
        %v4975 = vpack.c.b16 %v4747, %v4735
        %v4976 = vpack.c.b16 %v4748, %v4736
        %v4977 = vpack.c.b16 %v4749, %v4737
        %v4978 = vpack.c.b16 %v4750, %v4738
        %v4979 = vpack.c.b16 %v4751, %v4739
        %v4980 = vpack.c.b16 %v4752, %v4740
        %v4981 = vpack.c.b16 %v4753, %v4741
        %v4982 = vpack.c.b16 %v4754, %v4742
        %v4983 = vpack.c.b16 %v4767, %v4755
        %v4984 = vpack.c.b16 %v4768, %v4756
        %v4985 = vpack.c.b16 %v4769, %v4757
        %v4986 = vpack.c.b16 %v4770, %v4758
        %v4987 = vpack.c.b16 %v4771, %v4759
        %v4988 = vpack.c.b16 %v4772, %v4760
        %v4989 = vpack.c.b16 %v4773, %v4761
        %v4990 = vpack.c.b16 %v4774, %v4762
        %v4991 = vpack.c.b16 %v4775, %v4763
        %v4992 = vpack.c.b16 %v4776, %v4764
        %v4993 = vpack.c.b16 %v4777, %v4765
        %v4994 = vpack.c.b16 %v4778, %v4766
        %v4995 = vpack.c.b16 %v4791, %v4779
        %v4996 = vpack.c.b16 %v4792, %v4780
        %v4997 = vpack.c.b16 %v4793, %v4781
        %v4998 = vpack.c.b16 %v4794, %v4782
        %v4999 = vpack.c.b16 %v4795, %v4783
        %v5000 = vpack.c.b16 %v4796, %v4784
        %v5001 = vpack.c.b16 %v4797, %v4785
        %v5002 = vpack.c.b16 %v4798, %v4786
        %v5003 = vpack.c.b16 %v4799, %v4787
        %v5004 = vpack.c.b16 %v4800, %v4788
        %v5005 = vpack.c.b16 %v4801, %v4789
        %v5006 = vpack.c.b16 %v4802, %v4790
        %v5007 = vpack.c.b16 %v4815, %v4803
        %v5008 = vpack.c.b16 %v4816, %v4804
        %v5009 = vpack.c.b16 %v4817, %v4805
        %v5010 = vpack.c.b16 %v4818, %v4806
        %v5011 = vpack.c.b16 %v4819, %v4807
        %v5012 = vpack.c.b16 %v4820, %v4808
        %v5013 = vpack.c.b16 %v4821, %v4809
        %v5014 = vpack.c.b16 %v4822, %v4810
        %v5015 = vpack.c.b16 %v4823, %v4811
        %v5016 = vpack.c.b16 %v4824, %v4812
        %v5017 = vpack.c.b16 %v4825, %v4813
        %v5018 = vpack.c.b16 %v4826, %v4814
        %5211 = vmatprep.subr.bf16.mxu0 %v4828
        %5212 = vmatpush1.bf16.msra.mxu0 %v4827
        %5213 = vmatprep.subr.bf16.mxu0 %v4840
        %5214 = vmatpush1.bf16.msra.mxu0 %v4839
        %5215 = vmatprep.subr.bf16.mxu0 %v4852
        %5216 = vmatpush1.bf16.msra.mxu0 %v4851
        %5217 = vmatprep.subr.bf16.mxu0 %v4864
        %5218 = vmatpush1.bf16.msra.mxu0 %v4863
        %5219 = vmatprep.subr.bf16.mxu0 %v4876
        %5220 = vmatpush1.bf16.msra.mxu0 %v4875
        %5221 = vmatprep.subr.bf16.mxu0 %v4888
        %5222 = vmatpush1.bf16.msra.mxu0 %v4887
        %5223 = vmatprep.subr.bf16.mxu0 %v4900
        %5224 = vmatpush1.bf16.msra.mxu0 %v4899
        %5225 = vmatprep.subr.bf16.mxu0 %v4912
        %5226 = vmatpush1.bf16.msra.mxu0 %v4911
        %5227 = vmatprep.subr.bf16.mxu0 %v4924
        %5228 = vmatpush1.bf16.msra.mxu0 %v4923
        %5229 = vmatprep.subr.bf16.mxu0 %v4936
        %5230 = vmatpush1.bf16.msra.mxu0 %v4935
        %5231 = vmatprep.subr.bf16.mxu0 %v4948
        %5232 = vmatpush1.bf16.msra.mxu0 %v4947
        %5233 = vmatprep.subr.bf16.mxu0 %v4960
        %5234 = vmatpush1.bf16.msra.mxu0 %v4959
        %5235 = vmatprep.subr.bf16.mxu0 %v4972
        %5236 = vmatpush1.bf16.msra.mxu0 %v4971
        %5237 = vmatprep.subr.bf16.mxu0 %v4984
        %5238 = vmatpush1.bf16.msra.mxu0 %v4983
        %5239 = vmatprep.subr.bf16.mxu0 %v4996
        %5240 = vmatpush1.bf16.msra.mxu0 %v4995
        %5241 = vmatprep.subr.bf16.mxu0 %v5008
        %5242 = vmatpush1.bf16.msra.mxu0 %v5007
        %5243 = vmatprep.mubr.bf16.mxu0 %v4250
        %5244 = vmatmul.mubr.bf16.gmra.mrb[0].mxu0 %v4249
        %v5245 = vpop.f32.mrb[0].mxu0
        %v5246 = vadd.f32 0.0, %v5245
        %v5247 = vpop.f32.mrb[0].mxu0
        %v5248 = vadd.f32 0.0, %v5247
        %v5249 = vpop.f32.mrb[0].mxu0
        %v5250 = vpop.f32.mrb[0].mxu0
        %5251 = vdwg.mxu0
        %5252 = vmatprep.subr.bf16.mxu0 %v4830
        %5253 = vmatpush1.bf16.msra.mxu0 %v4829
        %5254 = vmatprep.subr.bf16.mxu0 %v4842
        %5255 = vmatpush1.bf16.msra.mxu0 %v4841
        %5256 = vmatprep.subr.bf16.mxu0 %v4854
        %5257 = vmatpush1.bf16.msra.mxu0 %v4853
        %5258 = vmatprep.subr.bf16.mxu0 %v4866
        %5259 = vmatpush1.bf16.msra.mxu0 %v4865
        %5260 = vmatprep.subr.bf16.mxu0 %v4878
        %5261 = vmatpush1.bf16.msra.mxu0 %v4877
        %5262 = vmatprep.subr.bf16.mxu0 %v4890
        %5263 = vmatpush1.bf16.msra.mxu0 %v4889
        %5264 = vmatprep.subr.bf16.mxu0 %v4902
        %5265 = vmatpush1.bf16.msra.mxu0 %v4901
        %5266 = vmatprep.subr.bf16.mxu0 %v4914
        %5267 = vmatpush1.bf16.msra.mxu0 %v4913
        %5268 = vmatprep.subr.bf16.mxu0 %v4926
        %5269 = vmatpush1.bf16.msra.mxu0 %v4925
        %5270 = vmatprep.subr.bf16.mxu0 %v4938
        %5271 = vmatpush1.bf16.msra.mxu0 %v4937
        %5272 = vmatprep.subr.bf16.mxu0 %v4950
        %5273 = vmatpush1.bf16.msra.mxu0 %v4949
        %5274 = vmatprep.subr.bf16.mxu0 %v4962
        %5275 = vmatpush1.bf16.msra.mxu0 %v4961
        %5276 = vmatprep.subr.bf16.mxu0 %v4974
        %5277 = vmatpush1.bf16.msra.mxu0 %v4973
        %5278 = vmatprep.subr.bf16.mxu0 %v4986
        %5279 = vmatpush1.bf16.msra.mxu0 %v4985
        %5280 = vmatprep.subr.bf16.mxu0 %v4998
        %5281 = vmatpush1.bf16.msra.mxu0 %v4997
        %5282 = vmatprep.subr.bf16.mxu0 %v5010
        %5283 = vmatpush1.bf16.msra.mxu0 %v5009
        %5284 = vmatprep.mubr.bf16.mxu0 %v4250
        %5285 = vmatmul.mubr.bf16.gmra.mrb[0].mxu0 %v4249
        %v5286 = vpop.f32.mrb[0].mxu0
        %v5287 = vadd.f32 0.0, %v5286
        %v5288 = vpop.f32.mrb[0].mxu0
        %v5289 = vadd.f32 0.0, %v5288
        %v5290 = vpop.f32.mrb[0].mxu0
        %v5291 = vpop.f32.mrb[0].mxu0
        %5292 = vdwg.mxu0
        %5293 = vmatprep.subr.bf16.mxu0 %v4832
        %5294 = vmatpush1.bf16.msra.mxu0 %v4831
        %5295 = vmatprep.subr.bf16.mxu0 %v4844
        %5296 = vmatpush1.bf16.msra.mxu0 %v4843
        %5297 = vmatprep.subr.bf16.mxu0 %v4856
        %5298 = vmatpush1.bf16.msra.mxu0 %v4855
        %5299 = vmatprep.subr.bf16.mxu0 %v4868
        %5300 = vmatpush1.bf16.msra.mxu0 %v4867
        %5301 = vmatprep.subr.bf16.mxu0 %v4880
        %5302 = vmatpush1.bf16.msra.mxu0 %v4879
        %5303 = vmatprep.subr.bf16.mxu0 %v4892
        %5304 = vmatpush1.bf16.msra.mxu0 %v4891
        %5305 = vmatprep.subr.bf16.mxu0 %v4904
        %5306 = vmatpush1.bf16.msra.mxu0 %v4903
        %5307 = vmatprep.subr.bf16.mxu0 %v4916
        %5308 = vmatpush1.bf16.msra.mxu0 %v4915
        %5309 = vmatprep.subr.bf16.mxu0 %v4928
        %5310 = vmatpush1.bf16.msra.mxu0 %v4927
        %5311 = vmatprep.subr.bf16.mxu0 %v4940
        %5312 = vmatpush1.bf16.msra.mxu0 %v4939
        %5313 = vmatprep.subr.bf16.mxu0 %v4952
        %5314 = vmatpush1.bf16.msra.mxu0 %v4951
        %5315 = vmatprep.subr.bf16.mxu0 %v4964
        %5316 = vmatpush1.bf16.msra.mxu0 %v4963
        %5317 = vmatprep.subr.bf16.mxu0 %v4976
        %5318 = vmatpush1.bf16.msra.mxu0 %v4975
        %5319 = vmatprep.subr.bf16.mxu0 %v4988
        %5320 = vmatpush1.bf16.msra.mxu0 %v4987
        %5321 = vmatprep.subr.bf16.mxu0 %v5000
        %5322 = vmatpush1.bf16.msra.mxu0 %v4999
        %5323 = vmatprep.subr.bf16.mxu0 %v5012
        %5324 = vmatpush1.bf16.msra.mxu0 %v5011
        %5325 = vmatprep.mubr.bf16.mxu0 %v4250
        %5326 = vmatmul.mubr.bf16.gmra.mrb[0].mxu0 %v4249
        %v5327 = vpop.f32.mrb[0].mxu0
        %v5328 = vadd.f32 0.0, %v5327
        %v5329 = vpop.f32.mrb[0].mxu0
        %v5330 = vadd.f32 0.0, %v5329
        %v5331 = vpop.f32.mrb[0].mxu0
        %v5332 = vpop.f32.mrb[0].mxu0
        %5333 = vdwg.mxu0
        %5334 = vmatprep.subr.bf16.mxu0 %v4834
        %5335 = vmatpush1.bf16.msra.mxu0 %v4833
        %5336 = vmatprep.subr.bf16.mxu0 %v4846
        %5337 = vmatpush1.bf16.msra.mxu0 %v4845
        %5338 = vmatprep.subr.bf16.mxu0 %v4858
        %5339 = vmatpush1.bf16.msra.mxu0 %v4857
        %5340 = vmatprep.subr.bf16.mxu0 %v4870
        %5341 = vmatpush1.bf16.msra.mxu0 %v4869
        %5342 = vmatprep.subr.bf16.mxu0 %v4882
        %5343 = vmatpush1.bf16.msra.mxu0 %v4881
        %5344 = vmatprep.subr.bf16.mxu0 %v4894
        %5345 = vmatpush1.bf16.msra.mxu0 %v4893
        %5346 = vmatprep.subr.bf16.mxu0 %v4906
        %5347 = vmatpush1.bf16.msra.mxu0 %v4905
        %5348 = vmatprep.subr.bf16.mxu0 %v4918
        %5349 = vmatpush1.bf16.msra.mxu0 %v4917
        %5350 = vmatprep.subr.bf16.mxu0 %v4930
        %5351 = vmatpush1.bf16.msra.mxu0 %v4929
        %5352 = vmatprep.subr.bf16.mxu0 %v4942
        %5353 = vmatpush1.bf16.msra.mxu0 %v4941
        %5354 = vmatprep.subr.bf16.mxu0 %v4954
        %5355 = vmatpush1.bf16.msra.mxu0 %v4953
        %5356 = vmatprep.subr.bf16.mxu0 %v4966
        %5357 = vmatpush1.bf16.msra.mxu0 %v4965
        %5358 = vmatprep.subr.bf16.mxu0 %v4978
        %5359 = vmatpush1.bf16.msra.mxu0 %v4977
        %5360 = vmatprep.subr.bf16.mxu0 %v4990
        %5361 = vmatpush1.bf16.msra.mxu0 %v4989
        %5362 = vmatprep.subr.bf16.mxu0 %v5002
        %5363 = vmatpush1.bf16.msra.mxu0 %v5001
        %5364 = vmatprep.subr.bf16.mxu0 %v5014
        %5365 = vmatpush1.bf16.msra.mxu0 %v5013
        %5366 = vmatprep.mubr.bf16.mxu0 %v4250
        %5367 = vmatmul.mubr.bf16.gmra.mrb[0].mxu0 %v4249
        %v5368 = vpop.f32.mrb[0].mxu0
        %v5369 = vadd.f32 0.0, %v5368
        %v5370 = vpop.f32.mrb[0].mxu0
        %v5371 = vadd.f32 0.0, %v5370
        %v5372 = vpop.f32.mrb[0].mxu0
        %v5373 = vpop.f32.mrb[0].mxu0
        %5374 = vdwg.mxu0
        %5375 = vmatprep.subr.bf16.mxu0 %v4836
        %5376 = vmatpush1.bf16.msra.mxu0 %v4835
        %5377 = vmatprep.subr.bf16.mxu0 %v4848
        %5378 = vmatpush1.bf16.msra.mxu0 %v4847
        %5379 = vmatprep.subr.bf16.mxu0 %v4860
        %5380 = vmatpush1.bf16.msra.mxu0 %v4859
        %5381 = vmatprep.subr.bf16.mxu0 %v4872
        %5382 = vmatpush1.bf16.msra.mxu0 %v4871
        %5383 = vmatprep.subr.bf16.mxu0 %v4884
        %5384 = vmatpush1.bf16.msra.mxu0 %v4883
        %5385 = vmatprep.subr.bf16.mxu0 %v4896
        %5386 = vmatpush1.bf16.msra.mxu0 %v4895
        %5387 = vmatprep.subr.bf16.mxu0 %v4908
        %5388 = vmatpush1.bf16.msra.mxu0 %v4907
        %5389 = vmatprep.subr.bf16.mxu0 %v4920
        %5390 = vmatpush1.bf16.msra.mxu0 %v4919
        %5391 = vmatprep.subr.bf16.mxu0 %v4932
        %5392 = vmatpush1.bf16.msra.mxu0 %v4931
        %5393 = vmatprep.subr.bf16.mxu0 %v4944
        %5394 = vmatpush1.bf16.msra.mxu0 %v4943
        %5395 = vmatprep.subr.bf16.mxu0 %v4956
        %5396 = vmatpush1.bf16.msra.mxu0 %v4955
        %5397 = vmatprep.subr.bf16.mxu0 %v4968
        %5398 = vmatpush1.bf16.msra.mxu0 %v4967
        %5399 = vmatprep.subr.bf16.mxu0 %v4980
        %5400 = vmatpush1.bf16.msra.mxu0 %v4979
        %5401 = vmatprep.subr.bf16.mxu0 %v4992
        %5402 = vmatpush1.bf16.msra.mxu0 %v4991
        %5403 = vmatprep.subr.bf16.mxu0 %v5004
        %5404 = vmatpush1.bf16.msra.mxu0 %v5003
        %5405 = vmatprep.subr.bf16.mxu0 %v5016
        %5406 = vmatpush1.bf16.msra.mxu0 %v5015
        %5407 = vmatprep.mubr.bf16.mxu0 %v4250
        %5408 = vmatmul.mubr.bf16.gmra.mrb[0].mxu0 %v4249
        %v5409 = vpop.f32.mrb[0].mxu0
        %v5410 = vadd.f32 0.0, %v5409
        %v5411 = vpop.f32.mrb[0].mxu0
        %v5412 = vadd.f32 0.0, %v5411
        %v5413 = vpop.f32.mrb[0].mxu0
        %v5414 = vpop.f32.mrb[0].mxu0
        %5415 = vdwg.mxu0
        %5416 = vmatprep.subr.bf16.mxu0 %v4838
        %5417 = vmatpush1.bf16.msra.mxu0 %v4837
        %5418 = vmatprep.subr.bf16.mxu0 %v4850
        %5419 = vmatpush1.bf16.msra.mxu0 %v4849
        %5420 = vmatprep.subr.bf16.mxu0 %v4862
        %5421 = vmatpush1.bf16.msra.mxu0 %v4861
        %5422 = vmatprep.subr.bf16.mxu0 %v4874
        %5423 = vmatpush1.bf16.msra.mxu0 %v4873
        %5424 = vmatprep.subr.bf16.mxu0 %v4886
        %5425 = vmatpush1.bf16.msra.mxu0 %v4885
        %5426 = vmatprep.subr.bf16.mxu0 %v4898
        %5427 = vmatpush1.bf16.msra.mxu0 %v4897
        %5428 = vmatprep.subr.bf16.mxu0 %v4910
        %5429 = vmatpush1.bf16.msra.mxu0 %v4909
        %5430 = vmatprep.subr.bf16.mxu0 %v4922
        %5431 = vmatpush1.bf16.msra.mxu0 %v4921
        %5432 = vmatprep.subr.bf16.mxu0 %v4934
        %5433 = vmatpush1.bf16.msra.mxu0 %v4933
        %5434 = vmatprep.subr.bf16.mxu0 %v4946
        %5435 = vmatpush1.bf16.msra.mxu0 %v4945
        %5436 = vmatprep.subr.bf16.mxu0 %v4958
        %5437 = vmatpush1.bf16.msra.mxu0 %v4957
        %5438 = vmatprep.subr.bf16.mxu0 %v4970
        %5439 = vmatpush1.bf16.msra.mxu0 %v4969
        %5440 = vmatprep.subr.bf16.mxu0 %v4982
        %5441 = vmatpush1.bf16.msra.mxu0 %v4981
        %5442 = vmatprep.subr.bf16.mxu0 %v4994
        %5443 = vmatpush1.bf16.msra.mxu0 %v4993
        %5444 = vmatprep.subr.bf16.mxu0 %v5006
        %5445 = vmatpush1.bf16.msra.mxu0 %v5005
        %5446 = vmatprep.subr.bf16.mxu0 %v5018
        %5447 = vmatpush1.bf16.msra.mxu0 %v5017
        %5448 = vmatprep.mubr.bf16.mxu0 %v4250
        %5449 = vmatmul.mubr.bf16.gmra.mrb[0].mxu0 %v4249
        %v5450 = vpop.f32.mrb[0].mxu0
        %v5451 = vadd.f32 0.0, %v5450
        %v5452 = vpop.f32.mrb[0].mxu0
        %v5453 = vadd.f32 0.0, %v5452
        %v5454 = vpop.f32.mrb[0].mxu0
        %v5455 = vpop.f32.mrb[0].mxu0
        %5456 = vdwg.mxu0
        %v5457 = vpack.c.bf16 %v5246, %v5246
        %v5458 = vpack.c.bf16 %v5328, %v5328
        %v5459 = vpack.c.bf16 %v5410, %v5410
        %v5461 = vsel %vm3495, %v5457, 0
        %v5464 = vsel %vm3495, %v5458, 0
        %5466 = vmatprep.subr.bf16.mxu0 0
        %5467 = vmatpush1.bf16.xpose.msra.mxu0 %v5464
        %5468 = vmatprep.subr.bf16.mxu0 0
        %5469 = vmatpush1.bf16.xpose.msra.mxu0 0
        %5470 = vmatprep.subr.bf16.mxu0 0
        %5471 = vmatpush1.bf16.xpose.msra.mxu0 0
        %5472 = vmatprep.subr.bf16.mxu0 0
        %5473 = vmatpush1.bf16.xpose.msra.mxu0 0
        %5474 = vmatprep.subr.bf16.mxu0 0
        %5475 = vmatpush1.bf16.xpose.msra.mxu0 0
        %5476 = vmatprep.subr.bf16.mxu0 0
        %5477 = vmatpush1.bf16.xpose.msra.mxu0 0
        %5478 = vmatprep.subr.bf16.mxu0 0
        %5479 = vmatpush1.bf16.xpose.msra.mxu0 0
        %5480 = vmatprep.subr.bf16.mxu0 0
        %5481 = vmatpush1.bf16.xpose.msra.mxu0 0
        %5482 = vmatprep.subr.bf16.mxu0 0
        %5483 = vmatpush1.bf16.xpose.msra.mxu0 0
        %5484 = vmatprep.subr.bf16.mxu0 0
        %5485 = vmatpush1.bf16.xpose.msra.mxu0 0
        %5486 = vmatprep.subr.bf16.mxu0 0
        %5487 = vmatpush1.bf16.xpose.msra.mxu0 0
        %5488 = vmatprep.subr.bf16.mxu0 0
        %5489 = vmatpush1.bf16.xpose.msra.mxu0 0
        %5490 = vmatprep.subr.bf16.mxu0 0
        %5491 = vmatpush1.bf16.xpose.msra.mxu0 0
        %5492 = vmatprep.subr.bf16.mxu0 0
        %5493 = vmatpush1.bf16.xpose.msra.mxu0 0
        %5494 = vmatprep.subr.bf16.mxu0 0
        %5495 = vmatpush1.bf16.xpose.msra.mxu0 0
        %5496 = vmatprep.subr.bf16.mxu0 0
        %5497 = vmatpush1.bf16.xpose.msra.mxu0 0
        %5498 = vmatprep.mubr.bf16.mxu0 0
        %5499 = vmatmul.mubr.bf16.gmra.mrb[0].mxu0 %v5461
        %v5500 = vpop.f32.mrb[0].mxu0
        %v5501 = vadd.f32 0.0, %v5500
        %v5502 = vpop.f32.mrb[0].mxu0
        %v5503 = vpop.f32.mrb[0].mxu0
        %v5504 = vpop.f32.mrb[0].mxu0
        %5505 = vdwg.mxu0
        %v5506 = vmul.f32 %v5501, 0.125
        %vm5507 = vcmask 9216
        %v5508 = vsel %vm5507, %v5506, -inf
        %5509 = vmax.xlane.f32.xlu0 %v5508
        %v5510 = vpop.xlane.xlu0 %5509
        %v5511 = vsub.f32 %v5506, %v5510
        %v5512 = vmul.f32 %v5511, 1.442695
        %v5513 = vpow.pop %v5512
        %v5514 = vsel %vm5507, %v5513, 0.0
        %5515 = vadd.xlane.f32.xlu0 %v5514
        %v5516 = vpop.xlane.xlu0 %5515
        %v5517 = vrcp.pop %v5516
        %v5518 = vmul.f32 %v5513, %v5517
        %v5519 = vpack.c.bf16 %v5518, %v5518
        %vm5520 = vcmask 15360
        %v5522 = vsel %vm5520, %v5519, 0
        %v5525 = vsel %vm3939, %v5459, 0
        %5527 = vmatprep.subr.bf16.mxu0 0
        %5528 = vmatpush1.bf16.msra.mxu0 %v5525
        %5529 = vmatprep.subr.bf16.mxu0 0
        %5530 = vmatpush1.bf16.msra.mxu0 0
        %5531 = vmatprep.subr.bf16.mxu0 0
        %5532 = vmatpush1.bf16.msra.mxu0 0
        %5533 = vmatprep.subr.bf16.mxu0 0
        %5534 = vmatpush1.bf16.msra.mxu0 0
        %5535 = vmatprep.subr.bf16.mxu0 0
        %5536 = vmatpush1.bf16.msra.mxu0 0
        %5537 = vmatprep.subr.bf16.mxu0 0
        %5538 = vmatpush1.bf16.msra.mxu0 0
        %5539 = vmatprep.subr.bf16.mxu0 0
        %5540 = vmatpush1.bf16.msra.mxu0 0
        %5541 = vmatprep.subr.bf16.mxu0 0
        %5542 = vmatpush1.bf16.msra.mxu0 0
        %5543 = vmatprep.subr.bf16.mxu0 0
        %5544 = vmatpush1.bf16.msra.mxu0 0
        %5545 = vmatprep.subr.bf16.mxu0 0
        %5546 = vmatpush1.bf16.msra.mxu0 0
        %5547 = vmatprep.subr.bf16.mxu0 0
        %5548 = vmatpush1.bf16.msra.mxu0 0
        %5549 = vmatprep.subr.bf16.mxu0 0
        %5550 = vmatpush1.bf16.msra.mxu0 0
        %5551 = vmatprep.subr.bf16.mxu0 0
        %5552 = vmatpush1.bf16.msra.mxu0 0
        %5553 = vmatprep.subr.bf16.mxu0 0
        %5554 = vmatpush1.bf16.msra.mxu0 0
        %5555 = vmatprep.subr.bf16.mxu0 0
        %5556 = vmatpush1.bf16.msra.mxu0 0
        %5557 = vmatprep.subr.bf16.mxu0 0
        %5558 = vmatpush1.bf16.msra.mxu0 0
        %5559 = vmatprep.mubr.bf16.mxu0 0
        %5560 = vmatmul.mubr.bf16.gmra.mrb[0].mxu0 %v5522
        %v5561 = vpop.f32.mrb[0].mxu0
        %v5562 = vadd.f32 0.0, %v5561
        %v5563 = vpop.f32.mrb[0].mxu0
        %v5564 = vpop.f32.mrb[0].mxu0
        %v5565 = vpop.f32.mrb[0].mxu0
        %5566 = vdwg.mxu0
        %5568 = vrot.lane.b32.xlu0 %v5457, 64
        %v5569 = vpop.permute.xlu0 %5568
        %5571 = vrot.lane.b32.xlu0 %v5458, 64
        %v5572 = vpop.permute.xlu0 %5571
        %v5574 = vsel %vm3495, %v5569, 0
        %v5577 = vsel %vm3495, %v5572, 0
        %5579 = vmatprep.subr.bf16.mxu0 0
        %5580 = vmatpush1.bf16.xpose.msra.mxu0 %v5577
        %5581 = vmatprep.subr.bf16.mxu0 0
        %5582 = vmatpush1.bf16.xpose.msra.mxu0 0
        %5583 = vmatprep.subr.bf16.mxu0 0
        %5584 = vmatpush1.bf16.xpose.msra.mxu0 0
        %5585 = vmatprep.subr.bf16.mxu0 0
        %5586 = vmatpush1.bf16.xpose.msra.mxu0 0
        %5587 = vmatprep.subr.bf16.mxu0 0
        %5588 = vmatpush1.bf16.xpose.msra.mxu0 0
        %5589 = vmatprep.subr.bf16.mxu0 0
        %5590 = vmatpush1.bf16.xpose.msra.mxu0 0
        %5591 = vmatprep.subr.bf16.mxu0 0
        %5592 = vmatpush1.bf16.xpose.msra.mxu0 0
        %5593 = vmatprep.subr.bf16.mxu0 0
        %5594 = vmatpush1.bf16.xpose.msra.mxu0 0
        %5595 = vmatprep.subr.bf16.mxu0 0
        %5596 = vmatpush1.bf16.xpose.msra.mxu0 0
        %5597 = vmatprep.subr.bf16.mxu0 0
        %5598 = vmatpush1.bf16.xpose.msra.mxu0 0
        %5599 = vmatprep.subr.bf16.mxu0 0
        %5600 = vmatpush1.bf16.xpose.msra.mxu0 0
        %5601 = vmatprep.subr.bf16.mxu0 0
        %5602 = vmatpush1.bf16.xpose.msra.mxu0 0
        %5603 = vmatprep.subr.bf16.mxu0 0
        %5604 = vmatpush1.bf16.xpose.msra.mxu0 0
        %5605 = vmatprep.subr.bf16.mxu0 0
        %5606 = vmatpush1.bf16.xpose.msra.mxu0 0
        %5607 = vmatprep.subr.bf16.mxu0 0
        %5608 = vmatpush1.bf16.xpose.msra.mxu0 0
        %5609 = vmatprep.subr.bf16.mxu0 0
        %5610 = vmatpush1.bf16.xpose.msra.mxu0 0
        %5611 = vmatprep.mubr.bf16.mxu0 0
        %5612 = vmatmul.mubr.bf16.gmra.mrb[0].mxu0 %v5574
        %v5613 = vpop.f32.mrb[0].mxu0
        %v5614 = vadd.f32 0.0, %v5613
        %v5615 = vpop.f32.mrb[0].mxu0
        %v5616 = vpop.f32.mrb[0].mxu0
        %v5617 = vpop.f32.mrb[0].mxu0
        %5618 = vdwg.mxu0
        %v5619 = vmul.f32 %v5614, 0.125
        %v5620 = vsel %vm5507, %v5619, -inf
        %5621 = vmax.xlane.f32.xlu0 %v5620
        %v5622 = vpop.xlane.xlu0 %5621
        %v5623 = vsub.f32 %v5619, %v5622
        %v5624 = vmul.f32 %v5623, 1.442695
        %v5625 = vpow.pop %v5624
        %v5626 = vsel %vm5507, %v5625, 0.0
        %5627 = vadd.xlane.f32.xlu0 %v5626
        %v5628 = vpop.xlane.xlu0 %5627
        %v5629 = vrcp.pop %v5628
        %v5630 = vmul.f32 %v5625, %v5629
        %v5631 = vpack.c.bf16 %v5630, %v5630
        %5633 = vrot.lane.b32.xlu0 %v5459, 64
        %v5634 = vpop.permute.xlu0 %5633
        %v5636 = vsel %vm5520, %v5631, 0
        %v5639 = vsel %vm3939, %v5634, 0
        %5641 = vmatprep.subr.bf16.mxu0 0
        %5642 = vmatpush1.bf16.msra.mxu0 %v5639
        %5643 = vmatprep.subr.bf16.mxu0 0
        %5644 = vmatpush1.bf16.msra.mxu0 0
        %5645 = vmatprep.subr.bf16.mxu0 0
        %5646 = vmatpush1.bf16.msra.mxu0 0
        %5647 = vmatprep.subr.bf16.mxu0 0
        %5648 = vmatpush1.bf16.msra.mxu0 0
        %5649 = vmatprep.subr.bf16.mxu0 0
        %5650 = vmatpush1.bf16.msra.mxu0 0
        %5651 = vmatprep.subr.bf16.mxu0 0
        %5652 = vmatpush1.bf16.msra.mxu0 0
        %5653 = vmatprep.subr.bf16.mxu0 0
        %5654 = vmatpush1.bf16.msra.mxu0 0
        %5655 = vmatprep.subr.bf16.mxu0 0
        %5656 = vmatpush1.bf16.msra.mxu0 0
        %5657 = vmatprep.subr.bf16.mxu0 0
        %5658 = vmatpush1.bf16.msra.mxu0 0
        %5659 = vmatprep.subr.bf16.mxu0 0
        %5660 = vmatpush1.bf16.msra.mxu0 0
        %5661 = vmatprep.subr.bf16.mxu0 0
        %5662 = vmatpush1.bf16.msra.mxu0 0
        %5663 = vmatprep.subr.bf16.mxu0 0
        %5664 = vmatpush1.bf16.msra.mxu0 0
        %5665 = vmatprep.subr.bf16.mxu0 0
        %5666 = vmatpush1.bf16.msra.mxu0 0
        %5667 = vmatprep.subr.bf16.mxu0 0
        %5668 = vmatpush1.bf16.msra.mxu0 0
        %5669 = vmatprep.subr.bf16.mxu0 0
        %5670 = vmatpush1.bf16.msra.mxu0 0
        %5671 = vmatprep.subr.bf16.mxu0 0
        %5672 = vmatpush1.bf16.msra.mxu0 0
        %5673 = vmatprep.mubr.bf16.mxu0 0
        %5674 = vmatmul.mubr.bf16.gmra.mrb[0].mxu0 %v5636
        %v5675 = vpop.f32.mrb[0].mxu0
        %v5676 = vadd.f32 0.0, %v5675
        %v5677 = vpop.f32.mrb[0].mxu0
        %v5678 = vpop.f32.mrb[0].mxu0
        %v5679 = vpop.f32.mrb[0].mxu0
        %5680 = vdwg.mxu0
        %v5681 = vpack.c.bf16 %v5248, %v5248
        %v5682 = vpack.c.bf16 %v5330, %v5330
        %v5683 = vpack.c.bf16 %v5412, %v5412
        %v5685 = vsel %vm3495, %v5681, 0
        %v5688 = vsel %vm3495, %v5682, 0
        %5690 = vmatprep.subr.bf16.mxu0 0
        %5691 = vmatpush1.bf16.xpose.msra.mxu0 %v5688
        %5692 = vmatprep.subr.bf16.mxu0 0
        %5693 = vmatpush1.bf16.xpose.msra.mxu0 0
        %5694 = vmatprep.subr.bf16.mxu0 0
        %5695 = vmatpush1.bf16.xpose.msra.mxu0 0
        %5696 = vmatprep.subr.bf16.mxu0 0
        %5697 = vmatpush1.bf16.xpose.msra.mxu0 0
        %5698 = vmatprep.subr.bf16.mxu0 0
        %5699 = vmatpush1.bf16.xpose.msra.mxu0 0
        %5700 = vmatprep.subr.bf16.mxu0 0
        %5701 = vmatpush1.bf16.xpose.msra.mxu0 0
        %5702 = vmatprep.subr.bf16.mxu0 0
        %5703 = vmatpush1.bf16.xpose.msra.mxu0 0
        %5704 = vmatprep.subr.bf16.mxu0 0
        %5705 = vmatpush1.bf16.xpose.msra.mxu0 0
        %5706 = vmatprep.subr.bf16.mxu0 0
        %5707 = vmatpush1.bf16.xpose.msra.mxu0 0
        %5708 = vmatprep.subr.bf16.mxu0 0
        %5709 = vmatpush1.bf16.xpose.msra.mxu0 0
        %5710 = vmatprep.subr.bf16.mxu0 0
        %5711 = vmatpush1.bf16.xpose.msra.mxu0 0
        %5712 = vmatprep.subr.bf16.mxu0 0
        %5713 = vmatpush1.bf16.xpose.msra.mxu0 0
        %5714 = vmatprep.subr.bf16.mxu0 0
        %5715 = vmatpush1.bf16.xpose.msra.mxu0 0
        %5716 = vmatprep.subr.bf16.mxu0 0
        %5717 = vmatpush1.bf16.xpose.msra.mxu0 0
        %5718 = vmatprep.subr.bf16.mxu0 0
        %5719 = vmatpush1.bf16.xpose.msra.mxu0 0
        %5720 = vmatprep.subr.bf16.mxu0 0
        %5721 = vmatpush1.bf16.xpose.msra.mxu0 0
        %5722 = vmatprep.mubr.bf16.mxu0 0
        %5723 = vmatmul.mubr.bf16.gmra.mrb[0].mxu0 %v5685
        %v5724 = vpop.f32.mrb[0].mxu0
        %v5725 = vadd.f32 0.0, %v5724
        %v5726 = vpop.f32.mrb[0].mxu0
        %v5727 = vpop.f32.mrb[0].mxu0
        %v5728 = vpop.f32.mrb[0].mxu0
        %5729 = vdwg.mxu0
        %v5730 = vmul.f32 %v5725, 0.125
        %v5731 = vsel %vm5507, %v5730, -inf
        %5732 = vmax.xlane.f32.xlu0 %v5731
        %v5733 = vpop.xlane.xlu0 %5732
        %v5734 = vsub.f32 %v5730, %v5733
        %v5735 = vmul.f32 %v5734, 1.442695
        %v5736 = vpow.pop %v5735
        %v5737 = vsel %vm5507, %v5736, 0.0
        %5738 = vadd.xlane.f32.xlu0 %v5737
        %v5739 = vpop.xlane.xlu0 %5738
        %v5740 = vrcp.pop %v5739
        %v5741 = vmul.f32 %v5736, %v5740
        %v5742 = vpack.c.bf16 %v5741, %v5741
        %v5744 = vsel %vm5520, %v5742, 0
        %v5747 = vsel %vm3939, %v5683, 0
        %5749 = vmatprep.subr.bf16.mxu0 0
        %5750 = vmatpush1.bf16.msra.mxu0 %v5747
        %5751 = vmatprep.subr.bf16.mxu0 0
        %5752 = vmatpush1.bf16.msra.mxu0 0
        %5753 = vmatprep.subr.bf16.mxu0 0
        %5754 = vmatpush1.bf16.msra.mxu0 0
        %5755 = vmatprep.subr.bf16.mxu0 0
        %5756 = vmatpush1.bf16.msra.mxu0 0
        %5757 = vmatprep.subr.bf16.mxu0 0
        %5758 = vmatpush1.bf16.msra.mxu0 0
        %5759 = vmatprep.subr.bf16.mxu0 0
        %5760 = vmatpush1.bf16.msra.mxu0 0
        %5761 = vmatprep.subr.bf16.mxu0 0
        %5762 = vmatpush1.bf16.msra.mxu0 0
        %5763 = vmatprep.subr.bf16.mxu0 0
        %5764 = vmatpush1.bf16.msra.mxu0 0
        %5765 = vmatprep.subr.bf16.mxu0 0
        %5766 = vmatpush1.bf16.msra.mxu0 0
        %5767 = vmatprep.subr.bf16.mxu0 0
        %5768 = vmatpush1.bf16.msra.mxu0 0
        %5769 = vmatprep.subr.bf16.mxu0 0
        %5770 = vmatpush1.bf16.msra.mxu0 0
        %5771 = vmatprep.subr.bf16.mxu0 0
        %5772 = vmatpush1.bf16.msra.mxu0 0
        %5773 = vmatprep.subr.bf16.mxu0 0
        %5774 = vmatpush1.bf16.msra.mxu0 0
        %5775 = vmatprep.subr.bf16.mxu0 0
        %5776 = vmatpush1.bf16.msra.mxu0 0
        %5777 = vmatprep.subr.bf16.mxu0 0
        %5778 = vmatpush1.bf16.msra.mxu0 0
        %5779 = vmatprep.subr.bf16.mxu0 0
        %5780 = vmatpush1.bf16.msra.mxu0 0
        %5781 = vmatprep.mubr.bf16.mxu0 0
        %5782 = vmatmul.mubr.bf16.gmra.mrb[0].mxu0 %v5744
        %v5783 = vpop.f32.mrb[0].mxu0
        %v5784 = vadd.f32 0.0, %v5783
        %v5785 = vpop.f32.mrb[0].mxu0
        %v5786 = vpop.f32.mrb[0].mxu0
        %v5787 = vpop.f32.mrb[0].mxu0
        %5788 = vdwg.mxu0
        %5790 = vrot.lane.b32.xlu0 %v5681, 64
        %v5791 = vpop.permute.xlu0 %5790
        %5793 = vrot.lane.b32.xlu0 %v5682, 64
        %v5794 = vpop.permute.xlu0 %5793
        %v5796 = vsel %vm3495, %v5791, 0
        %v5799 = vsel %vm3495, %v5794, 0
        %5801 = vmatprep.subr.bf16.mxu0 0
        %5802 = vmatpush1.bf16.xpose.msra.mxu0 %v5799
        %5803 = vmatprep.subr.bf16.mxu0 0
        %5804 = vmatpush1.bf16.xpose.msra.mxu0 0
        %5805 = vmatprep.subr.bf16.mxu0 0
        %5806 = vmatpush1.bf16.xpose.msra.mxu0 0
        %5807 = vmatprep.subr.bf16.mxu0 0
        %5808 = vmatpush1.bf16.xpose.msra.mxu0 0
        %5809 = vmatprep.subr.bf16.mxu0 0
        %5810 = vmatpush1.bf16.xpose.msra.mxu0 0
        %5811 = vmatprep.subr.bf16.mxu0 0
        %5812 = vmatpush1.bf16.xpose.msra.mxu0 0
        %5813 = vmatprep.subr.bf16.mxu0 0
        %5814 = vmatpush1.bf16.xpose.msra.mxu0 0
        %5815 = vmatprep.subr.bf16.mxu0 0
        %5816 = vmatpush1.bf16.xpose.msra.mxu0 0
        %5817 = vmatprep.subr.bf16.mxu0 0
        %5818 = vmatpush1.bf16.xpose.msra.mxu0 0
        %5819 = vmatprep.subr.bf16.mxu0 0
        %5820 = vmatpush1.bf16.xpose.msra.mxu0 0
        %5821 = vmatprep.subr.bf16.mxu0 0
        %5822 = vmatpush1.bf16.xpose.msra.mxu0 0
        %5823 = vmatprep.subr.bf16.mxu0 0
        %5824 = vmatpush1.bf16.xpose.msra.mxu0 0
        %5825 = vmatprep.subr.bf16.mxu0 0
        %5826 = vmatpush1.bf16.xpose.msra.mxu0 0
        %5827 = vmatprep.subr.bf16.mxu0 0
        %5828 = vmatpush1.bf16.xpose.msra.mxu0 0
        %5829 = vmatprep.subr.bf16.mxu0 0
        %5830 = vmatpush1.bf16.xpose.msra.mxu0 0
        %5831 = vmatprep.subr.bf16.mxu0 0
        %5832 = vmatpush1.bf16.xpose.msra.mxu0 0
        %5833 = vmatprep.mubr.bf16.mxu0 0
        %5834 = vmatmul.mubr.bf16.gmra.mrb[0].mxu0 %v5796
        %v5835 = vpop.f32.mrb[0].mxu0
        %v5836 = vadd.f32 0.0, %v5835
        %v5837 = vpop.f32.mrb[0].mxu0
        %v5838 = vpop.f32.mrb[0].mxu0
        %v5839 = vpop.f32.mrb[0].mxu0
        %5840 = vdwg.mxu0
        %v5841 = vmul.f32 %v5836, 0.125
        %v5842 = vsel %vm5507, %v5841, -inf
        %5843 = vmax.xlane.f32.xlu0 %v5842
        %v5844 = vpop.xlane.xlu0 %5843
        %v5845 = vsub.f32 %v5841, %v5844
        %v5846 = vmul.f32 %v5845, 1.442695
        %v5847 = vpow.pop %v5846
        %v5848 = vsel %vm5507, %v5847, 0.0
        %5849 = vadd.xlane.f32.xlu0 %v5848
        %v5850 = vpop.xlane.xlu0 %5849
        %v5851 = vrcp.pop %v5850
        %v5852 = vmul.f32 %v5847, %v5851
        %v5853 = vpack.c.bf16 %v5852, %v5852
        %5855 = vrot.lane.b32.xlu0 %v5683, 64
        %v5856 = vpop.permute.xlu0 %5855
        %v5858 = vsel %vm5520, %v5853, 0
        %v5861 = vsel %vm3939, %v5856, 0
        %5863 = vmatprep.subr.bf16.mxu0 0
        %5864 = vmatpush1.bf16.msra.mxu0 %v5861
        %5865 = vmatprep.subr.bf16.mxu0 0
        %5866 = vmatpush1.bf16.msra.mxu0 0
        %5867 = vmatprep.subr.bf16.mxu0 0
        %5868 = vmatpush1.bf16.msra.mxu0 0
        %5869 = vmatprep.subr.bf16.mxu0 0
        %5870 = vmatpush1.bf16.msra.mxu0 0
        %5871 = vmatprep.subr.bf16.mxu0 0
        %5872 = vmatpush1.bf16.msra.mxu0 0
        %5873 = vmatprep.subr.bf16.mxu0 0
        %5874 = vmatpush1.bf16.msra.mxu0 0
        %5875 = vmatprep.subr.bf16.mxu0 0
        %5876 = vmatpush1.bf16.msra.mxu0 0
        %5877 = vmatprep.subr.bf16.mxu0 0
        %5878 = vmatpush1.bf16.msra.mxu0 0
        %5879 = vmatprep.subr.bf16.mxu0 0
        %5880 = vmatpush1.bf16.msra.mxu0 0
        %5881 = vmatprep.subr.bf16.mxu0 0
        %5882 = vmatpush1.bf16.msra.mxu0 0
        %5883 = vmatprep.subr.bf16.mxu0 0
        %5884 = vmatpush1.bf16.msra.mxu0 0
        %5885 = vmatprep.subr.bf16.mxu0 0
        %5886 = vmatpush1.bf16.msra.mxu0 0
        %5887 = vmatprep.subr.bf16.mxu0 0
        %5888 = vmatpush1.bf16.msra.mxu0 0
        %5889 = vmatprep.subr.bf16.mxu0 0
        %5890 = vmatpush1.bf16.msra.mxu0 0
        %5891 = vmatprep.subr.bf16.mxu0 0
        %5892 = vmatpush1.bf16.msra.mxu0 0
        %5893 = vmatprep.subr.bf16.mxu0 0
        %5894 = vmatpush1.bf16.msra.mxu0 0
        %5895 = vmatprep.mubr.bf16.mxu0 0
        %5896 = vmatmul.mubr.bf16.gmra.mrb[0].mxu0 %v5858
        %v5897 = vpop.f32.mrb[0].mxu0
        %v5898 = vadd.f32 0.0, %v5897
        %v5899 = vpop.f32.mrb[0].mxu0
        %v5900 = vpop.f32.mrb[0].mxu0
        %v5901 = vpop.f32.mrb[0].mxu0
        %5902 = vdwg.mxu0
        %v5903 = vpack.c.bf16 %v5287, %v5287
        %v5904 = vpack.c.bf16 %v5369, %v5369
        %v5905 = vpack.c.bf16 %v5451, %v5451
        %v5907 = vsel %vm3495, %v5903, 0
        %v5910 = vsel %vm3495, %v5904, 0
        %5912 = vmatprep.subr.bf16.mxu0 0
        %5913 = vmatpush1.bf16.xpose.msra.mxu0 %v5910
        %5914 = vmatprep.subr.bf16.mxu0 0
        %5915 = vmatpush1.bf16.xpose.msra.mxu0 0
        %5916 = vmatprep.subr.bf16.mxu0 0
        %5917 = vmatpush1.bf16.xpose.msra.mxu0 0
        %5918 = vmatprep.subr.bf16.mxu0 0
        %5919 = vmatpush1.bf16.xpose.msra.mxu0 0
        %5920 = vmatprep.subr.bf16.mxu0 0
        %5921 = vmatpush1.bf16.xpose.msra.mxu0 0
        %5922 = vmatprep.subr.bf16.mxu0 0
        %5923 = vmatpush1.bf16.xpose.msra.mxu0 0
        %5924 = vmatprep.subr.bf16.mxu0 0
        %5925 = vmatpush1.bf16.xpose.msra.mxu0 0
        %5926 = vmatprep.subr.bf16.mxu0 0
        %5927 = vmatpush1.bf16.xpose.msra.mxu0 0
        %5928 = vmatprep.subr.bf16.mxu0 0
        %5929 = vmatpush1.bf16.xpose.msra.mxu0 0
        %5930 = vmatprep.subr.bf16.mxu0 0
        %5931 = vmatpush1.bf16.xpose.msra.mxu0 0
        %5932 = vmatprep.subr.bf16.mxu0 0
        %5933 = vmatpush1.bf16.xpose.msra.mxu0 0
        %5934 = vmatprep.subr.bf16.mxu0 0
        %5935 = vmatpush1.bf16.xpose.msra.mxu0 0
        %5936 = vmatprep.subr.bf16.mxu0 0
        %5937 = vmatpush1.bf16.xpose.msra.mxu0 0
        %5938 = vmatprep.subr.bf16.mxu0 0
        %5939 = vmatpush1.bf16.xpose.msra.mxu0 0
        %5940 = vmatprep.subr.bf16.mxu0 0
        %5941 = vmatpush1.bf16.xpose.msra.mxu0 0
        %5942 = vmatprep.subr.bf16.mxu0 0
        %5943 = vmatpush1.bf16.xpose.msra.mxu0 0
        %5944 = vmatprep.mubr.bf16.mxu0 0
        %5945 = vmatmul.mubr.bf16.gmra.mrb[0].mxu0 %v5907
        %v5946 = vpop.f32.mrb[0].mxu0
        %v5947 = vadd.f32 0.0, %v5946
        %v5948 = vpop.f32.mrb[0].mxu0
        %v5949 = vpop.f32.mrb[0].mxu0
        %v5950 = vpop.f32.mrb[0].mxu0
        %5951 = vdwg.mxu0
        %v5952 = vmul.f32 %v5947, 0.125
        %v5953 = vsel %vm5507, %v5952, -inf
        %5954 = vmax.xlane.f32.xlu0 %v5953
        %v5955 = vpop.xlane.xlu0 %5954
        %v5956 = vsub.f32 %v5952, %v5955
        %v5957 = vmul.f32 %v5956, 1.442695
        %v5958 = vpow.pop %v5957
        %v5959 = vsel %vm5507, %v5958, 0.0
        %5960 = vadd.xlane.f32.xlu0 %v5959
        %v5961 = vpop.xlane.xlu0 %5960
        %v5962 = vrcp.pop %v5961
        %v5963 = vmul.f32 %v5958, %v5962
        %v5964 = vpack.c.bf16 %v5963, %v5963
        %v5966 = vsel %vm5520, %v5964, 0
        %v5969 = vsel %vm3939, %v5905, 0
        %5971 = vmatprep.subr.bf16.mxu0 0
        %5972 = vmatpush1.bf16.msra.mxu0 %v5969
        %5973 = vmatprep.subr.bf16.mxu0 0
        %5974 = vmatpush1.bf16.msra.mxu0 0
        %5975 = vmatprep.subr.bf16.mxu0 0
        %5976 = vmatpush1.bf16.msra.mxu0 0
        %5977 = vmatprep.subr.bf16.mxu0 0
        %5978 = vmatpush1.bf16.msra.mxu0 0
        %5979 = vmatprep.subr.bf16.mxu0 0
        %5980 = vmatpush1.bf16.msra.mxu0 0
        %5981 = vmatprep.subr.bf16.mxu0 0
        %5982 = vmatpush1.bf16.msra.mxu0 0
        %5983 = vmatprep.subr.bf16.mxu0 0
        %5984 = vmatpush1.bf16.msra.mxu0 0
        %5985 = vmatprep.subr.bf16.mxu0 0
        %5986 = vmatpush1.bf16.msra.mxu0 0
        %5987 = vmatprep.subr.bf16.mxu0 0
        %5988 = vmatpush1.bf16.msra.mxu0 0
        %5989 = vmatprep.subr.bf16.mxu0 0
        %5990 = vmatpush1.bf16.msra.mxu0 0
        %5991 = vmatprep.subr.bf16.mxu0 0
        %5992 = vmatpush1.bf16.msra.mxu0 0
        %5993 = vmatprep.subr.bf16.mxu0 0
        %5994 = vmatpush1.bf16.msra.mxu0 0
        %5995 = vmatprep.subr.bf16.mxu0 0
        %5996 = vmatpush1.bf16.msra.mxu0 0
        %5997 = vmatprep.subr.bf16.mxu0 0
        %5998 = vmatpush1.bf16.msra.mxu0 0
        %5999 = vmatprep.subr.bf16.mxu0 0
        %6000 = vmatpush1.bf16.msra.mxu0 0
        %6001 = vmatprep.subr.bf16.mxu0 0
        %6002 = vmatpush1.bf16.msra.mxu0 0
        %6003 = vmatprep.mubr.bf16.mxu0 0
        %6004 = vmatmul.mubr.bf16.gmra.mrb[0].mxu0 %v5966
        %v6005 = vpop.f32.mrb[0].mxu0
        %v6006 = vadd.f32 0.0, %v6005
        %v6007 = vpop.f32.mrb[0].mxu0
        %v6008 = vpop.f32.mrb[0].mxu0
        %v6009 = vpop.f32.mrb[0].mxu0
        %6010 = vdwg.mxu0
        %6012 = vrot.lane.b32.xlu0 %v5903, 64
        %v6013 = vpop.permute.xlu0 %6012
        %6015 = vrot.lane.b32.xlu0 %v5904, 64
        %v6016 = vpop.permute.xlu0 %6015
        %v6018 = vsel %vm3495, %v6013, 0
        %v6021 = vsel %vm3495, %v6016, 0
        %6023 = vmatprep.subr.bf16.mxu0 0
        %6024 = vmatpush1.bf16.xpose.msra.mxu0 %v6021
        %6025 = vmatprep.subr.bf16.mxu0 0
        %6026 = vmatpush1.bf16.xpose.msra.mxu0 0
        %6027 = vmatprep.subr.bf16.mxu0 0
        %6028 = vmatpush1.bf16.xpose.msra.mxu0 0
        %6029 = vmatprep.subr.bf16.mxu0 0
        %6030 = vmatpush1.bf16.xpose.msra.mxu0 0
        %6031 = vmatprep.subr.bf16.mxu0 0
        %6032 = vmatpush1.bf16.xpose.msra.mxu0 0
        %6033 = vmatprep.subr.bf16.mxu0 0
        %6034 = vmatpush1.bf16.xpose.msra.mxu0 0
        %6035 = vmatprep.subr.bf16.mxu0 0
        %6036 = vmatpush1.bf16.xpose.msra.mxu0 0
        %6037 = vmatprep.subr.bf16.mxu0 0
        %6038 = vmatpush1.bf16.xpose.msra.mxu0 0
        %6039 = vmatprep.subr.bf16.mxu0 0
        %6040 = vmatpush1.bf16.xpose.msra.mxu0 0
        %6041 = vmatprep.subr.bf16.mxu0 0
        %6042 = vmatpush1.bf16.xpose.msra.mxu0 0
        %6043 = vmatprep.subr.bf16.mxu0 0
        %6044 = vmatpush1.bf16.xpose.msra.mxu0 0
        %6045 = vmatprep.subr.bf16.mxu0 0
        %6046 = vmatpush1.bf16.xpose.msra.mxu0 0
        %6047 = vmatprep.subr.bf16.mxu0 0
        %6048 = vmatpush1.bf16.xpose.msra.mxu0 0
        %6049 = vmatprep.subr.bf16.mxu0 0
        %6050 = vmatpush1.bf16.xpose.msra.mxu0 0
        %6051 = vmatprep.subr.bf16.mxu0 0
        %6052 = vmatpush1.bf16.xpose.msra.mxu0 0
        %6053 = vmatprep.subr.bf16.mxu0 0
        %6054 = vmatpush1.bf16.xpose.msra.mxu0 0
        %6055 = vmatprep.mubr.bf16.mxu0 0
        %6056 = vmatmul.mubr.bf16.gmra.mrb[0].mxu0 %v6018
        %v6057 = vpop.f32.mrb[0].mxu0
        %v6058 = vadd.f32 0.0, %v6057
        %v6059 = vpop.f32.mrb[0].mxu0
        %v6060 = vpop.f32.mrb[0].mxu0
        %v6061 = vpop.f32.mrb[0].mxu0
        %6062 = vdwg.mxu0
        %v6063 = vmul.f32 %v6058, 0.125
        %v6064 = vsel %vm5507, %v6063, -inf
        %6065 = vmax.xlane.f32.xlu0 %v6064
        %v6066 = vpop.xlane.xlu0 %6065
        %v6067 = vsub.f32 %v6063, %v6066
        %v6068 = vmul.f32 %v6067, 1.442695
        %v6069 = vpow.pop %v6068
        %v6070 = vsel %vm5507, %v6069, 0.0
        %6071 = vadd.xlane.f32.xlu0 %v6070
        %v6072 = vpop.xlane.xlu0 %6071
        %v6073 = vrcp.pop %v6072
        %v6074 = vmul.f32 %v6069, %v6073
        %v6075 = vpack.c.bf16 %v6074, %v6074
        %6077 = vrot.lane.b32.xlu0 %v5905, 64
        %v6078 = vpop.permute.xlu0 %6077
        %v6080 = vsel %vm5520, %v6075, 0
        %v6083 = vsel %vm3939, %v6078, 0
        %6085 = vmatprep.subr.bf16.mxu0 0
        %6086 = vmatpush1.bf16.msra.mxu0 %v6083
        %6087 = vmatprep.subr.bf16.mxu0 0
        %6088 = vmatpush1.bf16.msra.mxu0 0
        %6089 = vmatprep.subr.bf16.mxu0 0
        %6090 = vmatpush1.bf16.msra.mxu0 0
        %6091 = vmatprep.subr.bf16.mxu0 0
        %6092 = vmatpush1.bf16.msra.mxu0 0
        %6093 = vmatprep.subr.bf16.mxu0 0
        %6094 = vmatpush1.bf16.msra.mxu0 0
        %6095 = vmatprep.subr.bf16.mxu0 0
        %6096 = vmatpush1.bf16.msra.mxu0 0
        %6097 = vmatprep.subr.bf16.mxu0 0
        %6098 = vmatpush1.bf16.msra.mxu0 0
        %6099 = vmatprep.subr.bf16.mxu0 0
        %6100 = vmatpush1.bf16.msra.mxu0 0
        %6101 = vmatprep.subr.bf16.mxu0 0
        %6102 = vmatpush1.bf16.msra.mxu0 0
        %6103 = vmatprep.subr.bf16.mxu0 0
        %6104 = vmatpush1.bf16.msra.mxu0 0
        %6105 = vmatprep.subr.bf16.mxu0 0
        %6106 = vmatpush1.bf16.msra.mxu0 0
        %6107 = vmatprep.subr.bf16.mxu0 0
        %6108 = vmatpush1.bf16.msra.mxu0 0
        %6109 = vmatprep.subr.bf16.mxu0 0
        %6110 = vmatpush1.bf16.msra.mxu0 0
        %6111 = vmatprep.subr.bf16.mxu0 0
        %6112 = vmatpush1.bf16.msra.mxu0 0
        %6113 = vmatprep.subr.bf16.mxu0 0
        %6114 = vmatpush1.bf16.msra.mxu0 0
        %6115 = vmatprep.subr.bf16.mxu0 0
        %6116 = vmatpush1.bf16.msra.mxu0 0
        %6117 = vmatprep.mubr.bf16.mxu0 0
        %6118 = vmatmul.mubr.bf16.gmra.mrb[0].mxu0 %v6080
        %v6119 = vpop.f32.mrb[0].mxu0
        %v6120 = vadd.f32 0.0, %v6119
        %v6121 = vpop.f32.mrb[0].mxu0
        %v6122 = vpop.f32.mrb[0].mxu0
        %v6123 = vpop.f32.mrb[0].mxu0
        %6124 = vdwg.mxu0
        %v6125 = vpack.c.bf16 %v5289, %v5289
        %v6126 = vpack.c.bf16 %v5371, %v5371
        %v6127 = vpack.c.bf16 %v5453, %v5453
        %v6129 = vsel %vm3495, %v6125, 0
        %v6132 = vsel %vm3495, %v6126, 0
        %6134 = vmatprep.subr.bf16.mxu0 0
        %6135 = vmatpush1.bf16.xpose.msra.mxu0 %v6132
        %6136 = vmatprep.subr.bf16.mxu0 0
        %6137 = vmatpush1.bf16.xpose.msra.mxu0 0
        %6138 = vmatprep.subr.bf16.mxu0 0
        %6139 = vmatpush1.bf16.xpose.msra.mxu0 0
        %6140 = vmatprep.subr.bf16.mxu0 0
        %6141 = vmatpush1.bf16.xpose.msra.mxu0 0
        %6142 = vmatprep.subr.bf16.mxu0 0
        %6143 = vmatpush1.bf16.xpose.msra.mxu0 0
        %6144 = vmatprep.subr.bf16.mxu0 0
        %6145 = vmatpush1.bf16.xpose.msra.mxu0 0
        %6146 = vmatprep.subr.bf16.mxu0 0
        %6147 = vmatpush1.bf16.xpose.msra.mxu0 0
        %6148 = vmatprep.subr.bf16.mxu0 0
        %6149 = vmatpush1.bf16.xpose.msra.mxu0 0
        %6150 = vmatprep.subr.bf16.mxu0 0
        %6151 = vmatpush1.bf16.xpose.msra.mxu0 0
        %6152 = vmatprep.subr.bf16.mxu0 0
        %6153 = vmatpush1.bf16.xpose.msra.mxu0 0
        %6154 = vmatprep.subr.bf16.mxu0 0
        %6155 = vmatpush1.bf16.xpose.msra.mxu0 0
        %6156 = vmatprep.subr.bf16.mxu0 0
        %6157 = vmatpush1.bf16.xpose.msra.mxu0 0
        %6158 = vmatprep.subr.bf16.mxu0 0
        %6159 = vmatpush1.bf16.xpose.msra.mxu0 0
        %6160 = vmatprep.subr.bf16.mxu0 0
        %6161 = vmatpush1.bf16.xpose.msra.mxu0 0
        %6162 = vmatprep.subr.bf16.mxu0 0
        %6163 = vmatpush1.bf16.xpose.msra.mxu0 0
        %6164 = vmatprep.subr.bf16.mxu0 0
        %6165 = vmatpush1.bf16.xpose.msra.mxu0 0
        %6166 = vmatprep.mubr.bf16.mxu0 0
        %6167 = vmatmul.mubr.bf16.gmra.mrb[0].mxu0 %v6129
        %v6168 = vpop.f32.mrb[0].mxu0
        %v6169 = vadd.f32 0.0, %v6168
        %v6170 = vpop.f32.mrb[0].mxu0
        %v6171 = vpop.f32.mrb[0].mxu0
        %v6172 = vpop.f32.mrb[0].mxu0
        %6173 = vdwg.mxu0
        %v6174 = vmul.f32 %v6169, 0.125
        %v6175 = vsel %vm5507, %v6174, -inf
        %6176 = vmax.xlane.f32.xlu0 %v6175
        %v6177 = vpop.xlane.xlu0 %6176
        %v6178 = vsub.f32 %v6174, %v6177
        %v6179 = vmul.f32 %v6178, 1.442695
        %v6180 = vpow.pop %v6179
        %v6181 = vsel %vm5507, %v6180, 0.0
        %6182 = vadd.xlane.f32.xlu0 %v6181
        %v6183 = vpop.xlane.xlu0 %6182
        %v6184 = vrcp.pop %v6183
        %v6185 = vmul.f32 %v6180, %v6184
        %v6186 = vpack.c.bf16 %v6185, %v6185
        %v6188 = vsel %vm5520, %v6186, 0
        %v6191 = vsel %vm3939, %v6127, 0
        %6193 = vmatprep.subr.bf16.mxu0 0
        %6194 = vmatpush1.bf16.msra.mxu0 %v6191
        %6195 = vmatprep.subr.bf16.mxu0 0
        %6196 = vmatpush1.bf16.msra.mxu0 0
        %6197 = vmatprep.subr.bf16.mxu0 0
        %6198 = vmatpush1.bf16.msra.mxu0 0
        %6199 = vmatprep.subr.bf16.mxu0 0
        %6200 = vmatpush1.bf16.msra.mxu0 0
        %6201 = vmatprep.subr.bf16.mxu0 0
        %6202 = vmatpush1.bf16.msra.mxu0 0
        %6203 = vmatprep.subr.bf16.mxu0 0
        %6204 = vmatpush1.bf16.msra.mxu0 0
        %6205 = vmatprep.subr.bf16.mxu0 0
        %6206 = vmatpush1.bf16.msra.mxu0 0
        %6207 = vmatprep.subr.bf16.mxu0 0
        %6208 = vmatpush1.bf16.msra.mxu0 0
        %6209 = vmatprep.subr.bf16.mxu0 0
        %6210 = vmatpush1.bf16.msra.mxu0 0
        %6211 = vmatprep.subr.bf16.mxu0 0
        %6212 = vmatpush1.bf16.msra.mxu0 0
        %6213 = vmatprep.subr.bf16.mxu0 0
        %6214 = vmatpush1.bf16.msra.mxu0 0
        %6215 = vmatprep.subr.bf16.mxu0 0
        %6216 = vmatpush1.bf16.msra.mxu0 0
        %6217 = vmatprep.subr.bf16.mxu0 0
        %6218 = vmatpush1.bf16.msra.mxu0 0
        %6219 = vmatprep.subr.bf16.mxu0 0
        %6220 = vmatpush1.bf16.msra.mxu0 0
        %6221 = vmatprep.subr.bf16.mxu0 0
        %6222 = vmatpush1.bf16.msra.mxu0 0
        %6223 = vmatprep.subr.bf16.mxu0 0
        %6224 = vmatpush1.bf16.msra.mxu0 0
        %6225 = vmatprep.mubr.bf16.mxu0 0
        %6226 = vmatmul.mubr.bf16.gmra.mrb[0].mxu0 %v6188
        %v6227 = vpop.f32.mrb[0].mxu0
        %v6228 = vadd.f32 0.0, %v6227
        %v6229 = vpop.f32.mrb[0].mxu0
        %v6230 = vpop.f32.mrb[0].mxu0
        %v6231 = vpop.f32.mrb[0].mxu0
        %6232 = vdwg.mxu0
        %6234 = vrot.lane.b32.xlu0 %v6125, 64
        %v6235 = vpop.permute.xlu0 %6234
        %6237 = vrot.lane.b32.xlu0 %v6126, 64
        %v6238 = vpop.permute.xlu0 %6237
        %v6240 = vsel %vm3495, %v6235, 0
        %v6243 = vsel %vm3495, %v6238, 0
        %6245 = vmatprep.subr.bf16.mxu0 0
        %6246 = vmatpush1.bf16.xpose.msra.mxu0 %v6243
        %6247 = vmatprep.subr.bf16.mxu0 0
        %6248 = vmatpush1.bf16.xpose.msra.mxu0 0
        %6249 = vmatprep.subr.bf16.mxu0 0
        %6250 = vmatpush1.bf16.xpose.msra.mxu0 0
        %6251 = vmatprep.subr.bf16.mxu0 0
        %6252 = vmatpush1.bf16.xpose.msra.mxu0 0
        %6253 = vmatprep.subr.bf16.mxu0 0
        %6254 = vmatpush1.bf16.xpose.msra.mxu0 0
        %6255 = vmatprep.subr.bf16.mxu0 0
        %6256 = vmatpush1.bf16.xpose.msra.mxu0 0
        %6257 = vmatprep.subr.bf16.mxu0 0
        %6258 = vmatpush1.bf16.xpose.msra.mxu0 0
        %6259 = vmatprep.subr.bf16.mxu0 0
        %6260 = vmatpush1.bf16.xpose.msra.mxu0 0
        %6261 = vmatprep.subr.bf16.mxu0 0
        %6262 = vmatpush1.bf16.xpose.msra.mxu0 0
        %6263 = vmatprep.subr.bf16.mxu0 0
        %6264 = vmatpush1.bf16.xpose.msra.mxu0 0
        %6265 = vmatprep.subr.bf16.mxu0 0
        %6266 = vmatpush1.bf16.xpose.msra.mxu0 0
        %6267 = vmatprep.subr.bf16.mxu0 0
        %6268 = vmatpush1.bf16.xpose.msra.mxu0 0
        %6269 = vmatprep.subr.bf16.mxu0 0
        %6270 = vmatpush1.bf16.xpose.msra.mxu0 0
        %6271 = vmatprep.subr.bf16.mxu0 0
        %6272 = vmatpush1.bf16.xpose.msra.mxu0 0
        %6273 = vmatprep.subr.bf16.mxu0 0
        %6274 = vmatpush1.bf16.xpose.msra.mxu0 0
        %6275 = vmatprep.subr.bf16.mxu0 0
        %6276 = vmatpush1.bf16.xpose.msra.mxu0 0
        %6277 = vmatprep.mubr.bf16.mxu0 0
        %6278 = vmatmul.mubr.bf16.gmra.mrb[0].mxu0 %v6240
        %v6279 = vpop.f32.mrb[0].mxu0
        %v6280 = vadd.f32 0.0, %v6279
        %v6281 = vpop.f32.mrb[0].mxu0
        %v6282 = vpop.f32.mrb[0].mxu0
        %v6283 = vpop.f32.mrb[0].mxu0
        %6284 = vdwg.mxu0
        %v6285 = vmul.f32 %v6280, 0.125
        %v6286 = vsel %vm5507, %v6285, -inf
        %6287 = vmax.xlane.f32.xlu0 %v6286
        %v6288 = vpop.xlane.xlu0 %6287
        %v6289 = vsub.f32 %v6285, %v6288
        %v6290 = vmul.f32 %v6289, 1.442695
        %v6291 = vpow.pop %v6290
        %v6292 = vsel %vm5507, %v6291, 0.0
        %6293 = vadd.xlane.f32.xlu0 %v6292
        %v6294 = vpop.xlane.xlu0 %6293
        %v6295 = vrcp.pop %v6294
        %v6296 = vmul.f32 %v6291, %v6295
        %v6297 = vpack.c.bf16 %v6296, %v6296
        %6299 = vrot.lane.b32.xlu0 %v6127, 64
        %v6300 = vpop.permute.xlu0 %6299
        %v6302 = vsel %vm5520, %v6297, 0
        %v6305 = vsel %vm3939, %v6300, 0
        %6307 = vmatprep.subr.bf16.mxu0 0
        %6308 = vmatpush1.bf16.msra.mxu0 %v6305
        %6309 = vmatprep.subr.bf16.mxu0 0
        %6310 = vmatpush1.bf16.msra.mxu0 0
        %6311 = vmatprep.subr.bf16.mxu0 0
        %6312 = vmatpush1.bf16.msra.mxu0 0
        %6313 = vmatprep.subr.bf16.mxu0 0
        %6314 = vmatpush1.bf16.msra.mxu0 0
        %6315 = vmatprep.subr.bf16.mxu0 0
        %6316 = vmatpush1.bf16.msra.mxu0 0
        %6317 = vmatprep.subr.bf16.mxu0 0
        %6318 = vmatpush1.bf16.msra.mxu0 0
        %6319 = vmatprep.subr.bf16.mxu0 0
        %6320 = vmatpush1.bf16.msra.mxu0 0
        %6321 = vmatprep.subr.bf16.mxu0 0
        %6322 = vmatpush1.bf16.msra.mxu0 0
        %6323 = vmatprep.subr.bf16.mxu0 0
        %6324 = vmatpush1.bf16.msra.mxu0 0
        %6325 = vmatprep.subr.bf16.mxu0 0
        %6326 = vmatpush1.bf16.msra.mxu0 0
        %6327 = vmatprep.subr.bf16.mxu0 0
        %6328 = vmatpush1.bf16.msra.mxu0 0
        %6329 = vmatprep.subr.bf16.mxu0 0
        %6330 = vmatpush1.bf16.msra.mxu0 0
        %6331 = vmatprep.subr.bf16.mxu0 0
        %6332 = vmatpush1.bf16.msra.mxu0 0
        %6333 = vmatprep.subr.bf16.mxu0 0
        %6334 = vmatpush1.bf16.msra.mxu0 0
        %6335 = vmatprep.subr.bf16.mxu0 0
        %6336 = vmatpush1.bf16.msra.mxu0 0
        %6337 = vmatprep.subr.bf16.mxu0 0
        %6338 = vmatpush1.bf16.msra.mxu0 0
        %6339 = vmatprep.mubr.bf16.mxu0 0
        %6340 = vmatmul.mubr.bf16.gmra.mrb[0].mxu0 %v6302
        %v6341 = vpop.f32.mrb[0].mxu0
        %v6342 = vadd.f32 0.0, %v6341
        %v6343 = vpop.f32.mrb[0].mxu0
        %v6344 = vpop.f32.mrb[0].mxu0
        %v6345 = vpop.f32.mrb[0].mxu0
        %6346 = vdwg.mxu0
        %6348 = vrot.lane.b32.xlu0 %v5676, 64
        %v6349 = vpop.permute.xlu0 %6348
        %6352 = vrot.lane.b32.xlu0 %v5898, 64
        %v6353 = vpop.permute.xlu0 %6352
        %6356 = vrot.lane.b32.xlu0 %v6120, 64
        %v6357 = vpop.permute.xlu0 %6356
        %6360 = vrot.lane.b32.xlu0 %v6342, 64
        %v6361 = vpop.permute.xlu0 %6360
        %v6363 = vsel %vm3495, %v5562, %v6349
        %v6364 = vsel %vm3495, %v5784, %v6353
        %v6365 = vsel %vm3495, %v6006, %v6357
        %v6366 = vsel %vm3495, %v6228, %v6361
        %v6367 = vpack.c.bf16 %v6363, %v6363
        %v6368 = vpack.c.bf16 %v6364, %v6364
        %v6369 = vpack.c.bf16 %v6365, %v6365
        %v6370 = vpack.c.bf16 %v6366, %v6366
        %v6372 = vlaneseq
        %v6373 = vshrl.u32 %v6372, 7
        %v6374 = vsub.s32 0, %v6373
        %v6375 = vrot.slane %v4200, %v6374
        %v6376 = vlaneseq
        %v6377 = vshrl.u32 %v6376, 7
        %v6378 = vsub.s32 1, %v6377
        %v6379 = vrot.slane %v4200, %v6378
        %v6446 = vunpack.c.l.b16 %v4136
        %v6447 = vunpack.c.h.b16 %v4136
        %v6448 = vunpack.c.l.b16 %v4137
        %v6449 = vunpack.c.h.b16 %v4137
        %v6450 = vunpack.c.l.b16 %v4138
        %v6451 = vunpack.c.h.b16 %v4138
        %v6452 = vunpack.c.l.b16 %v4139
        %v6453 = vunpack.c.h.b16 %v4139
        %v6454 = vunpack.c.l.b16 %v4140
        %v6455 = vunpack.c.h.b16 %v4140
        %v6456 = vunpack.c.l.b16 %v4141
        %v6457 = vunpack.c.h.b16 %v4141
        %v6458 = vunpack.c.l.b16 %v4142
        %v6459 = vunpack.c.h.b16 %v4142
        %v6460 = vunpack.c.l.b16 %v4143
        %v6461 = vunpack.c.h.b16 %v4143
        %v6462 = vunpack.c.l.b16 %v4144
        %v6463 = vunpack.c.h.b16 %v4144
        %v6464 = vunpack.c.l.b16 %v4145
        %v6465 = vunpack.c.h.b16 %v4145
        %v6466 = vunpack.c.l.b16 %v4146
        %v6467 = vunpack.c.h.b16 %v4146
        %v6468 = vunpack.c.l.b16 %v4147
        %v6469 = vunpack.c.h.b16 %v4147
        %v6470 = vunpack.c.l.b16 %v4148
        %v6471 = vunpack.c.h.b16 %v4148
        %v6472 = vunpack.c.l.b16 %v4149
        %v6473 = vunpack.c.h.b16 %v4149
        %v6474 = vunpack.c.l.b16 %v4150
        %v6475 = vunpack.c.h.b16 %v4150
        %v6476 = vunpack.c.l.b16 %v4151
        %v6477 = vunpack.c.h.b16 %v4151
        %v6478 = vunpack.c.l.b16 %v4152
        %v6479 = vunpack.c.h.b16 %v4152
        %v6480 = vunpack.c.l.b16 %v4153
        %v6481 = vunpack.c.h.b16 %v4153
        %v6482 = vunpack.c.l.b16 %v4154
        %v6483 = vunpack.c.h.b16 %v4154
        %v6484 = vunpack.c.l.b16 %v4155
        %v6485 = vunpack.c.h.b16 %v4155
        %v6486 = vunpack.c.l.b16 %v4156
        %v6487 = vunpack.c.h.b16 %v4156
        %v6488 = vunpack.c.l.b16 %v4157
        %v6489 = vunpack.c.h.b16 %v4157
        %v6490 = vunpack.c.l.b16 %v4158
        %v6491 = vunpack.c.h.b16 %v4158
        %v6492 = vunpack.c.l.b16 %v4159
        %v6493 = vunpack.c.h.b16 %v4159
        %v6494 = vunpack.c.l.b16 %v4160
        %v6495 = vunpack.c.h.b16 %v4160
        %v6496 = vunpack.c.l.b16 %v4161
        %v6497 = vunpack.c.h.b16 %v4161
        %v6498 = vunpack.c.l.b16 %v4162
        %v6499 = vunpack.c.h.b16 %v4162
        %v6500 = vunpack.c.l.b16 %v4163
        %v6501 = vunpack.c.h.b16 %v4163
        %v6502 = vunpack.c.l.b16 %v4164
        %v6503 = vunpack.c.h.b16 %v4164
        %v6504 = vunpack.c.l.b16 %v4165
        %v6505 = vunpack.c.h.b16 %v4165
        %v6506 = vunpack.c.l.b16 %v4166
        %v6507 = vunpack.c.h.b16 %v4166
        %v6508 = vunpack.c.l.b16 %v4167
        %v6509 = vunpack.c.h.b16 %v4167
        %v6510 = vunpack.c.l.b16 %v4168
        %v6511 = vunpack.c.h.b16 %v4168
        %v6512 = vunpack.c.l.b16 %v4169
        %v6513 = vunpack.c.h.b16 %v4169
        %v6514 = vunpack.c.l.b16 %v4170
        %v6515 = vunpack.c.h.b16 %v4170
        %v6516 = vunpack.c.l.b16 %v4171
        %v6517 = vunpack.c.h.b16 %v4171
        %v6518 = vunpack.c.l.b16 %v4172
        %v6519 = vunpack.c.h.b16 %v4172
        %v6520 = vunpack.c.l.b16 %v4173
        %v6521 = vunpack.c.h.b16 %v4173
        %v6522 = vunpack.c.l.b16 %v4174
        %v6523 = vunpack.c.h.b16 %v4174
        %v6524 = vunpack.c.l.b16 %v4175
        %v6525 = vunpack.c.h.b16 %v4175
        %v6526 = vunpack.c.l.b16 %v4176
        %v6527 = vunpack.c.h.b16 %v4176
        %v6528 = vunpack.c.l.b16 %v4177
        %v6529 = vunpack.c.h.b16 %v4177
        %v6530 = vunpack.c.l.b16 %v4178
        %v6531 = vunpack.c.h.b16 %v4178
        %v6532 = vunpack.c.l.b16 %v4179
        %v6533 = vunpack.c.h.b16 %v4179
        %v6534 = vunpack.c.l.b16 %v4180
        %v6535 = vunpack.c.h.b16 %v4180
        %v6536 = vunpack.c.l.b16 %v4181
        %v6537 = vunpack.c.h.b16 %v4181
        %v6538 = vunpack.c.l.b16 %v4182
        %v6539 = vunpack.c.h.b16 %v4182
        %v6540 = vunpack.c.l.b16 %v4183
        %v6541 = vunpack.c.h.b16 %v4183
        %v6542 = vunpack.c.l.b16 %v4184
        %v6543 = vunpack.c.h.b16 %v4184
        %v6544 = vunpack.c.l.b16 %v4185
        %v6545 = vunpack.c.h.b16 %v4185
        %v6546 = vunpack.c.l.b16 %v4186
        %v6547 = vunpack.c.h.b16 %v4186
        %v6548 = vunpack.c.l.b16 %v4187
        %v6549 = vunpack.c.h.b16 %v4187
        %v6550 = vunpack.c.l.b16 %v4188
        %v6551 = vunpack.c.h.b16 %v4188
        %v6552 = vunpack.c.l.b16 %v4189
        %v6553 = vunpack.c.h.b16 %v4189
        %v6554 = vunpack.c.l.b16 %v4190
        %v6555 = vunpack.c.h.b16 %v4190
        %v6556 = vunpack.c.l.b16 %v4191
        %v6557 = vunpack.c.h.b16 %v4191
        %v6558 = vunpack.c.l.b16 %v4192
        %v6559 = vunpack.c.h.b16 %v4192
        %v6560 = vunpack.c.l.b16 %v4193
        %v6561 = vunpack.c.h.b16 %v4193
        %v6562 = vunpack.c.l.b16 %v4194
        %v6563 = vunpack.c.h.b16 %v4194
        %v6564 = vunpack.c.l.b16 %v4195
        %v6565 = vunpack.c.h.b16 %v4195
        %v6566 = vunpack.c.l.b16 %v4196
        %v6567 = vunpack.c.h.b16 %v4196
        %v6568 = vunpack.c.l.b16 %v4197
        %v6569 = vunpack.c.h.b16 %v4197
        %v6570 = vunpack.c.l.b16 %v4198
        %v6571 = vunpack.c.h.b16 %v4198
        %v6572 = vunpack.c.l.b16 %v4199
        %v6573 = vunpack.c.h.b16 %v4199
        %v6574 = vpack.c.b16 %v6448, %v6446
        %v6575 = vpack.c.b16 %v6449, %v6447
        %v6576 = vpack.c.b16 %v6452, %v6450
        %v6577 = vpack.c.b16 %v6453, %v6451
        %v6578 = vpack.c.b16 %v6456, %v6454
        %v6579 = vpack.c.b16 %v6457, %v6455
        %v6580 = vpack.c.b16 %v6460, %v6458
        %v6581 = vpack.c.b16 %v6461, %v6459
        %v6582 = vpack.c.b16 %v6464, %v6462
        %v6583 = vpack.c.b16 %v6465, %v6463
        %v6584 = vpack.c.b16 %v6468, %v6466
        %v6585 = vpack.c.b16 %v6469, %v6467
        %v6586 = vpack.c.b16 %v6472, %v6470
        %v6587 = vpack.c.b16 %v6473, %v6471
        %v6588 = vpack.c.b16 %v6476, %v6474
        %v6589 = vpack.c.b16 %v6477, %v6475
        %v6590 = vpack.c.b16 %v6480, %v6478
        %v6591 = vpack.c.b16 %v6481, %v6479
        %v6592 = vpack.c.b16 %v6484, %v6482
        %v6593 = vpack.c.b16 %v6485, %v6483
        %v6594 = vpack.c.b16 %v6488, %v6486
        %v6595 = vpack.c.b16 %v6489, %v6487
        %v6596 = vpack.c.b16 %v6492, %v6490
        %v6597 = vpack.c.b16 %v6493, %v6491
        %v6598 = vpack.c.b16 %v6496, %v6494
        %v6599 = vpack.c.b16 %v6497, %v6495
        %v6600 = vpack.c.b16 %v6500, %v6498
        %v6601 = vpack.c.b16 %v6501, %v6499
        %v6602 = vpack.c.b16 %v6504, %v6502
        %v6603 = vpack.c.b16 %v6505, %v6503
        %v6604 = vpack.c.b16 %v6508, %v6506
        %v6605 = vpack.c.b16 %v6509, %v6507
        %v6606 = vpack.c.b16 %v6512, %v6510
        %v6607 = vpack.c.b16 %v6513, %v6511
        %v6608 = vpack.c.b16 %v6516, %v6514
        %v6609 = vpack.c.b16 %v6517, %v6515
        %v6610 = vpack.c.b16 %v6520, %v6518
        %v6611 = vpack.c.b16 %v6521, %v6519
        %v6612 = vpack.c.b16 %v6524, %v6522
        %v6613 = vpack.c.b16 %v6525, %v6523
        %v6614 = vpack.c.b16 %v6528, %v6526
        %v6615 = vpack.c.b16 %v6529, %v6527
        %v6616 = vpack.c.b16 %v6532, %v6530
        %v6617 = vpack.c.b16 %v6533, %v6531
        %v6618 = vpack.c.b16 %v6536, %v6534
        %v6619 = vpack.c.b16 %v6537, %v6535
        %v6620 = vpack.c.b16 %v6540, %v6538
        %v6621 = vpack.c.b16 %v6541, %v6539
        %v6622 = vpack.c.b16 %v6544, %v6542
        %v6623 = vpack.c.b16 %v6545, %v6543
        %v6624 = vpack.c.b16 %v6548, %v6546
        %v6625 = vpack.c.b16 %v6549, %v6547
        %v6626 = vpack.c.b16 %v6552, %v6550
        %v6627 = vpack.c.b16 %v6553, %v6551
        %v6628 = vpack.c.b16 %v6556, %v6554
        %v6629 = vpack.c.b16 %v6557, %v6555
        %v6630 = vpack.c.b16 %v6560, %v6558
        %v6631 = vpack.c.b16 %v6561, %v6559
        %v6632 = vpack.c.b16 %v6564, %v6562
        %v6633 = vpack.c.b16 %v6565, %v6563
        %v6634 = vpack.c.b16 %v6568, %v6566
        %v6635 = vpack.c.b16 %v6569, %v6567
        %v6636 = vpack.c.b16 %v6572, %v6570
        %v6637 = vpack.c.b16 %v6573, %v6571
        %6702 = vmatprep.subr.bf16.mxu0 %v6575
        %6703 = vmatpush1.bf16.msra.mxu0 %v6574
        %6704 = vmatprep.subr.bf16.mxu0 %v6577
        %6705 = vmatpush1.bf16.msra.mxu0 %v6576
        %6706 = vmatprep.subr.bf16.mxu0 %v6579
        %6707 = vmatpush1.bf16.msra.mxu0 %v6578
        %6708 = vmatprep.subr.bf16.mxu0 %v6581
        %6709 = vmatpush1.bf16.msra.mxu0 %v6580
        %6710 = vmatprep.subr.bf16.mxu0 %v6583
        %6711 = vmatpush1.bf16.msra.mxu0 %v6582
        %6712 = vmatprep.subr.bf16.mxu0 %v6585
        %6713 = vmatpush1.bf16.msra.mxu0 %v6584
        %6714 = vmatprep.subr.bf16.mxu0 %v6587
        %6715 = vmatpush1.bf16.msra.mxu0 %v6586
        %6716 = vmatprep.subr.bf16.mxu0 %v6589
        %6717 = vmatpush1.bf16.msra.mxu0 %v6588
        %6718 = vmatprep.subr.bf16.mxu0 %v6591
        %6719 = vmatpush1.bf16.msra.mxu0 %v6590
        %6720 = vmatprep.subr.bf16.mxu0 %v6593
        %6721 = vmatpush1.bf16.msra.mxu0 %v6592
        %6722 = vmatprep.subr.bf16.mxu0 %v6595
        %6723 = vmatpush1.bf16.msra.mxu0 %v6594
        %6724 = vmatprep.subr.bf16.mxu0 %v6597
        %6725 = vmatpush1.bf16.msra.mxu0 %v6596
        %6726 = vmatprep.subr.bf16.mxu0 %v6599
        %6727 = vmatpush1.bf16.msra.mxu0 %v6598
        %6728 = vmatprep.subr.bf16.mxu0 %v6601
        %6729 = vmatpush1.bf16.msra.mxu0 %v6600
        %6730 = vmatprep.subr.bf16.mxu0 %v6603
        %6731 = vmatpush1.bf16.msra.mxu0 %v6602
        %6732 = vmatprep.subr.bf16.mxu0 %v6605
        %6733 = vmatpush1.bf16.msra.mxu0 %v6604
        %6734 = vmatprep.mubr.bf16.mxu0 %v6368
        %6735 = vmatmul.mubr.bf16.gmra.mrb[0].mxu0 %v6367
        %v6736 = vpop.f32.mrb[0].mxu0
        %v6737 = vadd.f32 %v6375, %v6736
        %v6738 = vpop.f32.mrb[0].mxu0
        %v6739 = vadd.f32 %v6379, %v6738
        %v6740 = vpop.f32.mrb[0].mxu0
        %v6741 = vpop.f32.mrb[0].mxu0
        %6742 = vdwg.mxu0
        %6743 = vmatprep.subr.bf16.mxu0 %v6607
        %6744 = vmatpush1.bf16.msra.mxu0 %v6606
        %6745 = vmatprep.subr.bf16.mxu0 %v6609
        %6746 = vmatpush1.bf16.msra.mxu0 %v6608
        %6747 = vmatprep.subr.bf16.mxu0 %v6611
        %6748 = vmatpush1.bf16.msra.mxu0 %v6610
        %6749 = vmatprep.subr.bf16.mxu0 %v6613
        %6750 = vmatpush1.bf16.msra.mxu0 %v6612
        %6751 = vmatprep.subr.bf16.mxu0 %v6615
        %6752 = vmatpush1.bf16.msra.mxu0 %v6614
        %6753 = vmatprep.subr.bf16.mxu0 %v6617
        %6754 = vmatpush1.bf16.msra.mxu0 %v6616
        %6755 = vmatprep.subr.bf16.mxu0 %v6619
        %6756 = vmatpush1.bf16.msra.mxu0 %v6618
        %6757 = vmatprep.subr.bf16.mxu0 %v6621
        %6758 = vmatpush1.bf16.msra.mxu0 %v6620
        %6759 = vmatprep.subr.bf16.mxu0 %v6623
        %6760 = vmatpush1.bf16.msra.mxu0 %v6622
        %6761 = vmatprep.subr.bf16.mxu0 %v6625
        %6762 = vmatpush1.bf16.msra.mxu0 %v6624
        %6763 = vmatprep.subr.bf16.mxu0 %v6627
        %6764 = vmatpush1.bf16.msra.mxu0 %v6626
        %6765 = vmatprep.subr.bf16.mxu0 %v6629
        %6766 = vmatpush1.bf16.msra.mxu0 %v6628
        %6767 = vmatprep.subr.bf16.mxu0 %v6631
        %6768 = vmatpush1.bf16.msra.mxu0 %v6630
        %6769 = vmatprep.subr.bf16.mxu0 %v6633
        %6770 = vmatpush1.bf16.msra.mxu0 %v6632
        %6771 = vmatprep.subr.bf16.mxu0 %v6635
        %6772 = vmatpush1.bf16.msra.mxu0 %v6634
        %6773 = vmatprep.subr.bf16.mxu0 %v6637
        %6774 = vmatpush1.bf16.msra.mxu0 %v6636
        %6775 = vmatprep.mubr.bf16.mxu0 %v6370
        %6776 = vmatmul.mubr.bf16.gmra.mrb[0].mxu0 %v6369
        %v6777 = vpop.f32.mrb[0].mxu0
        %v6778 = vadd.f32 %v6737, %v6777
        %v6779 = vpop.f32.mrb[0].mxu0
        %v6780 = vadd.f32 %v6739, %v6779
        %v6781 = vpop.f32.mrb[0].mxu0
        %v6782 = vpop.f32.mrb[0].mxu0
        %6783 = vdwg.mxu0
        %v6784 = vadd.f32 %v4247, %v6778
        %v6785 = vadd.f32 %v4248, %v6780
        %v6786 = vld [vmem:[%s1238] sm:$0x3]
        %v6787 = vld [vmem:[%s1247] sm:$0x3]
        %v6788 = vld [vmem:[%s1256] sm:$0xff]
        %v6789 = vld [vmem:[%s1256 + $0x8] sm:$0xff]
        %v6790 = vld [vmem:[%s1256 + $0x10] sm:$0xff]
        %v6791 = vld [vmem:[%s1256 + $0x18] sm:$0xff]
        %v6792 = vld [vmem:[%s1256 + $0x20] sm:$0xff]
        %v6793 = vld [vmem:[%s1256 + $0x28] sm:$0xff]
        %v6794 = vld [vmem:[%s1256 + $0x30] sm:$0xff]
        %v6795 = vld [vmem:[%s1256 + $0x38] sm:$0xff]
        %v6796 = vld [vmem:[%s1256 + $0x40] sm:$0xff]
        %v6797 = vld [vmem:[%s1256 + $0x48] sm:$0xff]
        %v6798 = vld [vmem:[%s1256 + $0x50] sm:$0xff]
        %v6799 = vld [vmem:[%s1256 + $0x58] sm:$0xff]
        %v6800 = vld [vmem:[%s1256 + $0x60] sm:$0xff]
        %v6801 = vld [vmem:[%s1256 + $0x68] sm:$0xff]
        %v6802 = vld [vmem:[%s1256 + $0x70] sm:$0xff]
        %v6803 = vld [vmem:[%s1256 + $0x78] sm:$0xff]
        %v6804 = vld [vmem:[%s1256 + $0x80] sm:$0xff]
        %v6805 = vld [vmem:[%s1256 + $0x88] sm:$0xff]
        %v6806 = vld [vmem:[%s1256 + $0x90] sm:$0xff]
        %v6807 = vld [vmem:[%s1256 + $0x98] sm:$0xff]
        %v6808 = vld [vmem:[%s1256 + $0xa0] sm:$0xff]
        %v6809 = vld [vmem:[%s1256 + $0xa8] sm:$0xff]
        %v6810 = vld [vmem:[%s1256 + $0xb0] sm:$0xff]
        %v6811 = vld [vmem:[%s1256 + $0xb8] sm:$0xff]
        %v6812 = vld [vmem:[%s1256 + $0xc0] sm:$0xff]
        %v6813 = vld [vmem:[%s1256 + $0xc8] sm:$0xff]
        %v6814 = vld [vmem:[%s1256 + $0xd0] sm:$0xff]
        %v6815 = vld [vmem:[%s1256 + $0xd8] sm:$0xff]
        %v6816 = vld [vmem:[%s1256 + $0xe0] sm:$0xff]
        %v6817 = vld [vmem:[%s1256 + $0xe8] sm:$0xff]
        %v6818 = vld [vmem:[%s1256 + $0xf0] sm:$0xff]
        %v6819 = vld [vmem:[%s1256 + $0xf8] sm:$0xff]
        %v6820 = vld [vmem:[%s1256 + $0x100] sm:$0xff]
        %v6821 = vld [vmem:[%s1256 + $0x108] sm:$0xff]
        %v6822 = vld [vmem:[%s1256 + $0x110] sm:$0xff]
        %v6823 = vld [vmem:[%s1256 + $0x118] sm:$0xff]
        %v6824 = vld [vmem:[%s1256 + $0x120] sm:$0xff]
        %v6825 = vld [vmem:[%s1256 + $0x128] sm:$0xff]
        %v6826 = vld [vmem:[%s1256 + $0x130] sm:$0xff]
        %v6827 = vld [vmem:[%s1256 + $0x138] sm:$0xff]
        %v6828 = vld [vmem:[%s1256 + $0x140] sm:$0xff]
        %v6829 = vld [vmem:[%s1256 + $0x148] sm:$0xff]
        %v6830 = vld [vmem:[%s1256 + $0x150] sm:$0xff]
        %v6831 = vld [vmem:[%s1256 + $0x158] sm:$0xff]
        %v6832 = vld [vmem:[%s1256 + $0x160] sm:$0xff]
        %v6833 = vld [vmem:[%s1256 + $0x168] sm:$0xff]
        %v6834 = vld [vmem:[%s1256 + $0x170] sm:$0xff]
        %v6835 = vld [vmem:[%s1256 + $0x178] sm:$0xff]
        %v6836 = vld [vmem:[%s1256 + $0x180] sm:$0xff]
        %v6837 = vld [vmem:[%s1256 + $0x188] sm:$0xff]
        %v6838 = vld [vmem:[%s1256 + $0x190] sm:$0xff]
        %v6839 = vld [vmem:[%s1256 + $0x198] sm:$0xff]
        %v6840 = vld [vmem:[%s1256 + $0x1a0] sm:$0xff]
        %v6841 = vld [vmem:[%s1256 + $0x1a8] sm:$0xff]
        %v6842 = vld [vmem:[%s1256 + $0x1b0] sm:$0xff]
        %v6843 = vld [vmem:[%s1256 + $0x1b8] sm:$0xff]
        %v6844 = vld [vmem:[%s1256 + $0x1c0] sm:$0xff]
        %v6845 = vld [vmem:[%s1256 + $0x1c8] sm:$0xff]
        %v6846 = vld [vmem:[%s1256 + $0x1d0] sm:$0xff]
        %v6847 = vld [vmem:[%s1256 + $0x1d8] sm:$0xff]
        %v6848 = vld [vmem:[%s1256 + $0x1e0] sm:$0xff]
        %v6849 = vld [vmem:[%s1256 + $0x1e8] sm:$0xff]
        %v6850 = vld [vmem:[%s1256 + $0x1f0] sm:$0xff]
        %v6851 = vld [vmem:[%s1256 + $0x1f8] sm:$0xff]
        %v6852 = vld [vmem:[%s1256 + $0x200] sm:$0xff]
        %v6853 = vld [vmem:[%s1256 + $0x208] sm:$0xff]
        %v6854 = vld [vmem:[%s1256 + $0x210] sm:$0xff]
        %v6855 = vld [vmem:[%s1256 + $0x218] sm:$0xff]
        %v6856 = vld [vmem:[%s1256 + $0x220] sm:$0xff]
        %v6857 = vld [vmem:[%s1256 + $0x228] sm:$0xff]
        %v6858 = vld [vmem:[%s1256 + $0x230] sm:$0xff]
        %v6859 = vld [vmem:[%s1256 + $0x238] sm:$0xff]
        %v6860 = vld [vmem:[%s1256 + $0x240] sm:$0xff]
        %v6861 = vld [vmem:[%s1256 + $0x248] sm:$0xff]
        %v6862 = vld [vmem:[%s1256 + $0x250] sm:$0xff]
        %v6863 = vld [vmem:[%s1256 + $0x258] sm:$0xff]
        %v6864 = vld [vmem:[%s1256 + $0x260] sm:$0xff]
        %v6865 = vld [vmem:[%s1256 + $0x268] sm:$0xff]
        %v6866 = vld [vmem:[%s1256 + $0x270] sm:$0xff]
        %v6867 = vld [vmem:[%s1256 + $0x278] sm:$0xff]
        %v6868 = vld [vmem:[%s1256 + $0x280] sm:$0xff]
        %v6869 = vld [vmem:[%s1256 + $0x288] sm:$0xff]
        %v6870 = vld [vmem:[%s1256 + $0x290] sm:$0xff]
        %v6871 = vld [vmem:[%s1256 + $0x298] sm:$0xff]
        %v6872 = vld [vmem:[%s1256 + $0x2a0] sm:$0xff]
        %v6873 = vld [vmem:[%s1256 + $0x2a8] sm:$0xff]
        %v6874 = vld [vmem:[%s1256 + $0x2b0] sm:$0xff]
        %v6875 = vld [vmem:[%s1256 + $0x2b8] sm:$0xff]
        %v6876 = vld [vmem:[%s1256 + $0x2c0] sm:$0xff]
        %v6877 = vld [vmem:[%s1256 + $0x2c8] sm:$0xff]
        %v6878 = vld [vmem:[%s1256 + $0x2d0] sm:$0xff]
        %v6879 = vld [vmem:[%s1256 + $0x2d8] sm:$0xff]
        %v6880 = vld [vmem:[%s1256 + $0x2e0] sm:$0xff]
        %v6881 = vld [vmem:[%s1256 + $0x2e8] sm:$0xff]
        %v6882 = vld [vmem:[%s1256 + $0x2f0] sm:$0xff]
        %v6883 = vld [vmem:[%s1256 + $0x2f8] sm:$0xff]
        %v6884 = vld [vmem:[%s1256 + $0x300] sm:$0xff]
        %v6885 = vld [vmem:[%s1256 + $0x308] sm:$0xff]
        %v6886 = vld [vmem:[%s1256 + $0x310] sm:$0xff]
        %v6887 = vld [vmem:[%s1256 + $0x318] sm:$0xff]
        %v6888 = vld [vmem:[%s1256 + $0x320] sm:$0xff]
        %v6889 = vld [vmem:[%s1256 + $0x328] sm:$0xff]
        %v6890 = vld [vmem:[%s1256 + $0x330] sm:$0xff]
        %v6891 = vld [vmem:[%s1256 + $0x338] sm:$0xff]
        %v6892 = vld [vmem:[%s1256 + $0x340] sm:$0xff]
        %v6893 = vld [vmem:[%s1256 + $0x348] sm:$0xff]
        %v6894 = vld [vmem:[%s1256 + $0x350] sm:$0xff]
        %v6895 = vld [vmem:[%s1256 + $0x358] sm:$0xff]
        %v6896 = vld [vmem:[%s1256 + $0x360] sm:$0xff]
        %v6897 = vld [vmem:[%s1256 + $0x368] sm:$0xff]
        %v6898 = vld [vmem:[%s1256 + $0x370] sm:$0xff]
        %v6899 = vld [vmem:[%s1256 + $0x378] sm:$0xff]
        %v6900 = vld [vmem:[%s1256 + $0x380] sm:$0xff]
        %v6901 = vld [vmem:[%s1256 + $0x388] sm:$0xff]
        %v6902 = vld [vmem:[%s1256 + $0x390] sm:$0xff]
        %v6903 = vld [vmem:[%s1256 + $0x398] sm:$0xff]
        %v6904 = vld [vmem:[%s1256 + $0x3a0] sm:$0xff]
        %v6905 = vld [vmem:[%s1256 + $0x3a8] sm:$0xff]
        %v6906 = vld [vmem:[%s1256 + $0x3b0] sm:$0xff]
        %v6907 = vld [vmem:[%s1256 + $0x3b8] sm:$0xff]
        %v6908 = vld [vmem:[%s1256 + $0x3c0] sm:$0xff]
        %v6909 = vld [vmem:[%s1256 + $0x3c8] sm:$0xff]
        %v6910 = vld [vmem:[%s1256 + $0x3d0] sm:$0xff]
        %v6911 = vld [vmem:[%s1256 + $0x3d8] sm:$0xff]
        %v6912 = vld [vmem:[%s1256 + $0x3e0] sm:$0xff]
        %v6913 = vld [vmem:[%s1256 + $0x3e8] sm:$0xff]
        %v6914 = vld [vmem:[%s1256 + $0x3f0] sm:$0xff]
        %v6915 = vld [vmem:[%s1256 + $0x3f8] sm:$0xff]
        %v6916 = vld [vmem:[%s1256 + $0x400] sm:$0xff]
        %v6917 = vld [vmem:[%s1256 + $0x408] sm:$0xff]
        %v6918 = vld [vmem:[%s1256 + $0x410] sm:$0xff]
        %v6919 = vld [vmem:[%s1256 + $0x418] sm:$0xff]
        %v6920 = vld [vmem:[%s1256 + $0x420] sm:$0xff]
        %v6921 = vld [vmem:[%s1256 + $0x428] sm:$0xff]
        %v6922 = vld [vmem:[%s1256 + $0x430] sm:$0xff]
        %v6923 = vld [vmem:[%s1256 + $0x438] sm:$0xff]
        %v6924 = vld [vmem:[%s1256 + $0x440] sm:$0xff]
        %v6925 = vld [vmem:[%s1256 + $0x448] sm:$0xff]
        %v6926 = vld [vmem:[%s1256 + $0x450] sm:$0xff]
        %v6927 = vld [vmem:[%s1256 + $0x458] sm:$0xff]
        %v6928 = vld [vmem:[%s1256 + $0x460] sm:$0xff]
        %v6929 = vld [vmem:[%s1256 + $0x468] sm:$0xff]
        %v6930 = vld [vmem:[%s1256 + $0x470] sm:$0xff]
        %v6931 = vld [vmem:[%s1256 + $0x478] sm:$0xff]
        %v6932 = vld [vmem:[%s1256 + $0x480] sm:$0xff]
        %v6933 = vld [vmem:[%s1256 + $0x488] sm:$0xff]
        %v6934 = vld [vmem:[%s1256 + $0x490] sm:$0xff]
        %v6935 = vld [vmem:[%s1256 + $0x498] sm:$0xff]
        %v6936 = vld [vmem:[%s1256 + $0x4a0] sm:$0xff]
        %v6937 = vld [vmem:[%s1256 + $0x4a8] sm:$0xff]
        %v6938 = vld [vmem:[%s1256 + $0x4b0] sm:$0xff]
        %v6939 = vld [vmem:[%s1256 + $0x4b8] sm:$0xff]
        %v6940 = vld [vmem:[%s1256 + $0x4c0] sm:$0xff]
        %v6941 = vld [vmem:[%s1256 + $0x4c8] sm:$0xff]
        %v6942 = vld [vmem:[%s1256 + $0x4d0] sm:$0xff]
        %v6943 = vld [vmem:[%s1256 + $0x4d8] sm:$0xff]
        %v6944 = vld [vmem:[%s1256 + $0x4e0] sm:$0xff]
        %v6945 = vld [vmem:[%s1256 + $0x4e8] sm:$0xff]
        %v6946 = vld [vmem:[%s1256 + $0x4f0] sm:$0xff]
        %v6947 = vld [vmem:[%s1256 + $0x4f8] sm:$0xff]
        %v6948 = vld [vmem:[%s1256 + $0x500] sm:$0xff]
        %v6949 = vld [vmem:[%s1256 + $0x508] sm:$0xff]
        %v6950 = vld [vmem:[%s1256 + $0x510] sm:$0xff]
        %v6951 = vld [vmem:[%s1256 + $0x518] sm:$0xff]
        %v6952 = vld [vmem:[%s1256 + $0x520] sm:$0xff]
        %v6953 = vld [vmem:[%s1256 + $0x528] sm:$0xff]
        %v6954 = vld [vmem:[%s1256 + $0x530] sm:$0xff]
        %v6955 = vld [vmem:[%s1256 + $0x538] sm:$0xff]
        %v6956 = vld [vmem:[%s1256 + $0x540] sm:$0xff]
        %v6957 = vld [vmem:[%s1256 + $0x548] sm:$0xff]
        %v6958 = vld [vmem:[%s1256 + $0x550] sm:$0xff]
        %v6959 = vld [vmem:[%s1256 + $0x558] sm:$0xff]
        %v6960 = vld [vmem:[%s1256 + $0x560] sm:$0xff]
        %v6961 = vld [vmem:[%s1256 + $0x568] sm:$0xff]
        %v6962 = vld [vmem:[%s1256 + $0x570] sm:$0xff]
        %v6963 = vld [vmem:[%s1256 + $0x578] sm:$0xff]
        %v6964 = vld [vmem:[%s1256 + $0x580] sm:$0xff]
        %v6965 = vld [vmem:[%s1256 + $0x588] sm:$0xff]
        %v6966 = vld [vmem:[%s1256 + $0x590] sm:$0xff]
        %v6967 = vld [vmem:[%s1256 + $0x598] sm:$0xff]
        %v6968 = vld [vmem:[%s1256 + $0x5a0] sm:$0xff]
        %v6969 = vld [vmem:[%s1256 + $0x5a8] sm:$0xff]
        %v6970 = vld [vmem:[%s1256 + $0x5b0] sm:$0xff]
        %v6971 = vld [vmem:[%s1256 + $0x5b8] sm:$0xff]
        %v6972 = vld [vmem:[%s1256 + $0x5c0] sm:$0xff]
        %v6973 = vld [vmem:[%s1256 + $0x5c8] sm:$0xff]
        %v6974 = vld [vmem:[%s1256 + $0x5d0] sm:$0xff]
        %v6975 = vld [vmem:[%s1256 + $0x5d8] sm:$0xff]
        %v6976 = vld [vmem:[%s1256 + $0x5e0] sm:$0xff]
        %v6977 = vld [vmem:[%s1256 + $0x5e8] sm:$0xff]
        %v6978 = vld [vmem:[%s1256 + $0x5f0] sm:$0xff]
        %v6979 = vld [vmem:[%s1256 + $0x5f8] sm:$0xff]
        %v6980 = vld [vmem:[%s1256 + $0x600] sm:$0xff]
        %v6981 = vld [vmem:[%s1256 + $0x608] sm:$0xff]
        %v6982 = vld [vmem:[%s1256 + $0x610] sm:$0xff]
        %v6983 = vld [vmem:[%s1256 + $0x618] sm:$0xff]
        %v6984 = vld [vmem:[%s1256 + $0x620] sm:$0xff]
        %v6985 = vld [vmem:[%s1256 + $0x628] sm:$0xff]
        %v6986 = vld [vmem:[%s1256 + $0x630] sm:$0xff]
        %v6987 = vld [vmem:[%s1256 + $0x638] sm:$0xff]
        %v6988 = vld [vmem:[%s1256 + $0x640] sm:$0xff]
        %v6989 = vld [vmem:[%s1256 + $0x648] sm:$0xff]
        %v6990 = vld [vmem:[%s1256 + $0x650] sm:$0xff]
        %v6991 = vld [vmem:[%s1256 + $0x658] sm:$0xff]
        %v6992 = vld [vmem:[%s1256 + $0x660] sm:$0xff]
        %v6993 = vld [vmem:[%s1256 + $0x668] sm:$0xff]
        %v6994 = vld [vmem:[%s1256 + $0x670] sm:$0xff]
        %v6995 = vld [vmem:[%s1256 + $0x678] sm:$0xff]
        %v6996 = vld [vmem:[%s1256 + $0x680] sm:$0xff]
        %v6997 = vld [vmem:[%s1256 + $0x688] sm:$0xff]
        %v6998 = vld [vmem:[%s1256 + $0x690] sm:$0xff]
        %v6999 = vld [vmem:[%s1256 + $0x698] sm:$0xff]
        %v7000 = vld [vmem:[%s1256 + $0x6a0] sm:$0xff]
        %v7001 = vld [vmem:[%s1256 + $0x6a8] sm:$0xff]
        %v7002 = vld [vmem:[%s1256 + $0x6b0] sm:$0xff]
        %v7003 = vld [vmem:[%s1256 + $0x6b8] sm:$0xff]
        %v7004 = vld [vmem:[%s1256 + $0x6c0] sm:$0xff]
        %v7005 = vld [vmem:[%s1256 + $0x6c8] sm:$0xff]
        %v7006 = vld [vmem:[%s1256 + $0x6d0] sm:$0xff]
        %v7007 = vld [vmem:[%s1256 + $0x6d8] sm:$0xff]
        %v7008 = vld [vmem:[%s1256 + $0x6e0] sm:$0xff]
        %v7009 = vld [vmem:[%s1256 + $0x6e8] sm:$0xff]
        %v7010 = vld [vmem:[%s1256 + $0x6f0] sm:$0xff]
        %v7011 = vld [vmem:[%s1256 + $0x6f8] sm:$0xff]
        %v7012 = vld [vmem:[%s1256 + $0x700] sm:$0xff]
        %v7013 = vld [vmem:[%s1256 + $0x708] sm:$0xff]
        %v7014 = vld [vmem:[%s1256 + $0x710] sm:$0xff]
        %v7015 = vld [vmem:[%s1256 + $0x718] sm:$0xff]
        %v7016 = vld [vmem:[%s1256 + $0x720] sm:$0xff]
        %v7017 = vld [vmem:[%s1256 + $0x728] sm:$0xff]
        %v7018 = vld [vmem:[%s1256 + $0x730] sm:$0xff]
        %v7019 = vld [vmem:[%s1256 + $0x738] sm:$0xff]
        %v7020 = vld [vmem:[%s1256 + $0x740] sm:$0xff]
        %v7021 = vld [vmem:[%s1256 + $0x748] sm:$0xff]
        %v7022 = vld [vmem:[%s1256 + $0x750] sm:$0xff]
        %v7023 = vld [vmem:[%s1256 + $0x758] sm:$0xff]
        %v7024 = vld [vmem:[%s1256 + $0x760] sm:$0xff]
        %v7025 = vld [vmem:[%s1256 + $0x768] sm:$0xff]
        %v7026 = vld [vmem:[%s1256 + $0x770] sm:$0xff]
        %v7027 = vld [vmem:[%s1256 + $0x778] sm:$0xff]
        %v7028 = vld [vmem:[%s1256 + $0x780] sm:$0xff]
        %v7029 = vld [vmem:[%s1256 + $0x788] sm:$0xff]
        %v7030 = vld [vmem:[%s1256 + $0x790] sm:$0xff]
        %v7031 = vld [vmem:[%s1256 + $0x798] sm:$0xff]
        %v7032 = vld [vmem:[%s1256 + $0x7a0] sm:$0xff]
        %v7033 = vld [vmem:[%s1256 + $0x7a8] sm:$0xff]
        %v7034 = vld [vmem:[%s1256 + $0x7b0] sm:$0xff]
        %v7035 = vld [vmem:[%s1256 + $0x7b8] sm:$0xff]
        %v7036 = vld [vmem:[%s1256 + $0x7c0] sm:$0xff]
        %v7037 = vld [vmem:[%s1256 + $0x7c8] sm:$0xff]
        %v7038 = vld [vmem:[%s1256 + $0x7d0] sm:$0xff]
        %v7039 = vld [vmem:[%s1256 + $0x7d8] sm:$0xff]
        %v7040 = vld [vmem:[%s1256 + $0x7e0] sm:$0xff]
        %v7041 = vld [vmem:[%s1256 + $0x7e8] sm:$0xff]
        %v7042 = vld [vmem:[%s1256 + $0x7f0] sm:$0xff]
        %v7043 = vld [vmem:[%s1256 + $0x7f8] sm:$0xff]
        %v7044 = vld [vmem:[%s1265] sm:$0xff]
        %v7045 = vld [vmem:[%s1265 + $0x8] sm:$0xff]
        %v7046 = vld [vmem:[%s1274] sm:$0xff]
        %v7047 = vld [vmem:[%s1274 + $0x8] sm:$0xff]
        %v7048 = vld [vmem:[%s1274 + $0x10] sm:$0xff]
        %v7049 = vld [vmem:[%s1274 + $0x18] sm:$0xff]
        %v7050 = vld [vmem:[%s1274 + $0x20] sm:$0xff]
        %v7051 = vld [vmem:[%s1274 + $0x28] sm:$0xff]
        %v7052 = vld [vmem:[%s1274 + $0x30] sm:$0xff]
        %v7053 = vld [vmem:[%s1274 + $0x38] sm:$0xff]
        %v7054 = vld [vmem:[%s1274 + $0x40] sm:$0xff]
        %v7055 = vld [vmem:[%s1274 + $0x48] sm:$0xff]
        %v7056 = vld [vmem:[%s1274 + $0x50] sm:$0xff]
        %v7057 = vld [vmem:[%s1274 + $0x58] sm:$0xff]
        %v7058 = vld [vmem:[%s1274 + $0x60] sm:$0xff]
        %v7059 = vld [vmem:[%s1274 + $0x68] sm:$0xff]
        %v7060 = vld [vmem:[%s1274 + $0x70] sm:$0xff]
        %v7061 = vld [vmem:[%s1274 + $0x78] sm:$0xff]
        %v7062 = vld [vmem:[%s1274 + $0x80] sm:$0xff]
        %v7063 = vld [vmem:[%s1274 + $0x88] sm:$0xff]
        %v7064 = vld [vmem:[%s1274 + $0x90] sm:$0xff]
        %v7065 = vld [vmem:[%s1274 + $0x98] sm:$0xff]
        %v7066 = vld [vmem:[%s1274 + $0xa0] sm:$0xff]
        %v7067 = vld [vmem:[%s1274 + $0xa8] sm:$0xff]
        %v7068 = vld [vmem:[%s1274 + $0xb0] sm:$0xff]
        %v7069 = vld [vmem:[%s1274 + $0xb8] sm:$0xff]
        %v7070 = vld [vmem:[%s1274 + $0xc0] sm:$0xff]
        %v7071 = vld [vmem:[%s1274 + $0xc8] sm:$0xff]
        %v7072 = vld [vmem:[%s1274 + $0xd0] sm:$0xff]
        %v7073 = vld [vmem:[%s1274 + $0xd8] sm:$0xff]
        %v7074 = vld [vmem:[%s1274 + $0xe0] sm:$0xff]
        %v7075 = vld [vmem:[%s1274 + $0xe8] sm:$0xff]
        %v7076 = vld [vmem:[%s1274 + $0xf0] sm:$0xff]
        %v7077 = vld [vmem:[%s1274 + $0xf8] sm:$0xff]
        %v7078 = vld [vmem:[%s1274 + $0x100] sm:$0xff]
        %v7079 = vld [vmem:[%s1274 + $0x108] sm:$0xff]
        %v7080 = vld [vmem:[%s1274 + $0x110] sm:$0xff]
        %v7081 = vld [vmem:[%s1274 + $0x118] sm:$0xff]
        %v7082 = vld [vmem:[%s1274 + $0x120] sm:$0xff]
        %v7083 = vld [vmem:[%s1274 + $0x128] sm:$0xff]
        %v7084 = vld [vmem:[%s1274 + $0x130] sm:$0xff]
        %v7085 = vld [vmem:[%s1274 + $0x138] sm:$0xff]
        %v7086 = vld [vmem:[%s1274 + $0x140] sm:$0xff]
        %v7087 = vld [vmem:[%s1274 + $0x148] sm:$0xff]
        %v7088 = vld [vmem:[%s1274 + $0x150] sm:$0xff]
        %v7089 = vld [vmem:[%s1274 + $0x158] sm:$0xff]
        %v7090 = vld [vmem:[%s1274 + $0x160] sm:$0xff]
        %v7091 = vld [vmem:[%s1274 + $0x168] sm:$0xff]
        %v7092 = vld [vmem:[%s1274 + $0x170] sm:$0xff]
        %v7093 = vld [vmem:[%s1274 + $0x178] sm:$0xff]
        %v7094 = vld [vmem:[%s1274 + $0x180] sm:$0xff]
        %v7095 = vld [vmem:[%s1274 + $0x188] sm:$0xff]
        %v7096 = vld [vmem:[%s1274 + $0x190] sm:$0xff]
        %v7097 = vld [vmem:[%s1274 + $0x198] sm:$0xff]
        %v7098 = vld [vmem:[%s1274 + $0x1a0] sm:$0xff]
        %v7099 = vld [vmem:[%s1274 + $0x1a8] sm:$0xff]
        %v7100 = vld [vmem:[%s1274 + $0x1b0] sm:$0xff]
        %v7101 = vld [vmem:[%s1274 + $0x1b8] sm:$0xff]
        %v7102 = vld [vmem:[%s1274 + $0x1c0] sm:$0xff]
        %v7103 = vld [vmem:[%s1274 + $0x1c8] sm:$0xff]
        %v7104 = vld [vmem:[%s1274 + $0x1d0] sm:$0xff]
        %v7105 = vld [vmem:[%s1274 + $0x1d8] sm:$0xff]
        %v7106 = vld [vmem:[%s1274 + $0x1e0] sm:$0xff]
        %v7107 = vld [vmem:[%s1274 + $0x1e8] sm:$0xff]
        %v7108 = vld [vmem:[%s1274 + $0x1f0] sm:$0xff]
        %v7109 = vld [vmem:[%s1274 + $0x1f8] sm:$0xff]
        %v7110 = vld [vmem:[%s1274 + $0x200] sm:$0xff]
        %v7111 = vld [vmem:[%s1274 + $0x208] sm:$0xff]
        %v7112 = vld [vmem:[%s1274 + $0x210] sm:$0xff]
        %v7113 = vld [vmem:[%s1274 + $0x218] sm:$0xff]
        %v7114 = vld [vmem:[%s1274 + $0x220] sm:$0xff]
        %v7115 = vld [vmem:[%s1274 + $0x228] sm:$0xff]
        %v7116 = vld [vmem:[%s1274 + $0x230] sm:$0xff]
        %v7117 = vld [vmem:[%s1274 + $0x238] sm:$0xff]
        %v7118 = vld [vmem:[%s1274 + $0x240] sm:$0xff]
        %v7119 = vld [vmem:[%s1274 + $0x248] sm:$0xff]
        %v7120 = vld [vmem:[%s1274 + $0x250] sm:$0xff]
        %v7121 = vld [vmem:[%s1274 + $0x258] sm:$0xff]
        %v7122 = vld [vmem:[%s1274 + $0x260] sm:$0xff]
        %v7123 = vld [vmem:[%s1274 + $0x268] sm:$0xff]
        %v7124 = vld [vmem:[%s1274 + $0x270] sm:$0xff]
        %v7125 = vld [vmem:[%s1274 + $0x278] sm:$0xff]
        %v7126 = vld [vmem:[%s1274 + $0x280] sm:$0xff]
        %v7127 = vld [vmem:[%s1274 + $0x288] sm:$0xff]
        %v7128 = vld [vmem:[%s1274 + $0x290] sm:$0xff]
        %v7129 = vld [vmem:[%s1274 + $0x298] sm:$0xff]
        %v7130 = vld [vmem:[%s1274 + $0x2a0] sm:$0xff]
        %v7131 = vld [vmem:[%s1274 + $0x2a8] sm:$0xff]
        %v7132 = vld [vmem:[%s1274 + $0x2b0] sm:$0xff]
        %v7133 = vld [vmem:[%s1274 + $0x2b8] sm:$0xff]
        %v7134 = vld [vmem:[%s1274 + $0x2c0] sm:$0xff]
        %v7135 = vld [vmem:[%s1274 + $0x2c8] sm:$0xff]
        %v7136 = vld [vmem:[%s1274 + $0x2d0] sm:$0xff]
        %v7137 = vld [vmem:[%s1274 + $0x2d8] sm:$0xff]
        %v7138 = vld [vmem:[%s1274 + $0x2e0] sm:$0xff]
        %v7139 = vld [vmem:[%s1274 + $0x2e8] sm:$0xff]
        %v7140 = vld [vmem:[%s1274 + $0x2f0] sm:$0xff]
        %v7141 = vld [vmem:[%s1274 + $0x2f8] sm:$0xff]
        %v7142 = vld [vmem:[%s1274 + $0x300] sm:$0xff]
        %v7143 = vld [vmem:[%s1274 + $0x308] sm:$0xff]
        %v7144 = vld [vmem:[%s1274 + $0x310] sm:$0xff]
        %v7145 = vld [vmem:[%s1274 + $0x318] sm:$0xff]
        %v7146 = vld [vmem:[%s1274 + $0x320] sm:$0xff]
        %v7147 = vld [vmem:[%s1274 + $0x328] sm:$0xff]
        %v7148 = vld [vmem:[%s1274 + $0x330] sm:$0xff]
        %v7149 = vld [vmem:[%s1274 + $0x338] sm:$0xff]
        %v7150 = vld [vmem:[%s1274 + $0x340] sm:$0xff]
        %v7151 = vld [vmem:[%s1274 + $0x348] sm:$0xff]
        %v7152 = vld [vmem:[%s1274 + $0x350] sm:$0xff]
        %v7153 = vld [vmem:[%s1274 + $0x358] sm:$0xff]
        %v7154 = vld [vmem:[%s1274 + $0x360] sm:$0xff]
        %v7155 = vld [vmem:[%s1274 + $0x368] sm:$0xff]
        %v7156 = vld [vmem:[%s1274 + $0x370] sm:$0xff]
        %v7157 = vld [vmem:[%s1274 + $0x378] sm:$0xff]
        %v7158 = vld [vmem:[%s1274 + $0x380] sm:$0xff]
        %v7159 = vld [vmem:[%s1274 + $0x388] sm:$0xff]
        %v7160 = vld [vmem:[%s1274 + $0x390] sm:$0xff]
        %v7161 = vld [vmem:[%s1274 + $0x398] sm:$0xff]
        %v7162 = vld [vmem:[%s1274 + $0x3a0] sm:$0xff]
        %v7163 = vld [vmem:[%s1274 + $0x3a8] sm:$0xff]
        %v7164 = vld [vmem:[%s1274 + $0x3b0] sm:$0xff]
        %v7165 = vld [vmem:[%s1274 + $0x3b8] sm:$0xff]
        %v7166 = vld [vmem:[%s1274 + $0x3c0] sm:$0xff]
        %v7167 = vld [vmem:[%s1274 + $0x3c8] sm:$0xff]
        %v7168 = vld [vmem:[%s1274 + $0x3d0] sm:$0xff]
        %v7169 = vld [vmem:[%s1274 + $0x3d8] sm:$0xff]
        %v7170 = vld [vmem:[%s1274 + $0x3e0] sm:$0xff]
        %v7171 = vld [vmem:[%s1274 + $0x3e8] sm:$0xff]
        %v7172 = vld [vmem:[%s1274 + $0x3f0] sm:$0xff]
        %v7173 = vld [vmem:[%s1274 + $0x3f8] sm:$0xff]
        %v7174 = vld [vmem:[%s1283] sm:$0x3]
        %v7175 = vsel %vm4201, %v6784, 0.0
        %v7176 = vsel %vm4201, %v6785, 0.0
        %v7177 = vadd.f32 %v7175, %v7176
        %7178 = vadd.xlane.f32.xlu0 %v7177
        %v7179 = vpop.xlane.xlu0 %7178
        %v7180 = vmul.f32 %v7179, %v4207
        %v7181 = vsub.f32 %v6784, %v7180
        %v7182 = vsub.f32 %v6785, %v7180
        %v7183 = vmul.f32 %v7181, %v7181
        %v7184 = vmul.f32 %v7182, %v7182
        %v7185 = vsel %vm4201, %v7183, 0.0
        %v7186 = vsel %vm4201, %v7184, 0.0
        %v7187 = vadd.f32 %v7185, %v7186
        %7188 = vadd.xlane.f32.xlu0 %v7187
        %v7189 = vpop.xlane.xlu0 %7188
        %v7190 = vmul.f32 %v7189, %v4207
        %v7191 = vadd.f32 %v7190, 1e-05
        %v7192 = vrsqrt.pop %v7191
        %v7193 = vmul.f32 %v7181, %v7192
        %v7194 = vmul.f32 %v7182, %v7192
        %v7196 = vlaneseq
        %v7197 = vshrl.u32 %v7196, 7
        %v7198 = vsub.s32 0, %v7197
        %v7199 = vrot.slane %v6786, %v7198
        %v7200 = vlaneseq
        %v7201 = vshrl.u32 %v7200, 7
        %v7202 = vsub.s32 1, %v7201
        %v7203 = vrot.slane %v6786, %v7202
        %v7206 = vmul.f32 %v7193, %v7199
        %v7207 = vmul.f32 %v7194, %v7203
        %v7209 = vlaneseq
        %v7210 = vshrl.u32 %v7209, 7
        %v7211 = vsub.s32 0, %v7210
        %v7212 = vrot.slane %v6787, %v7211
        %v7213 = vlaneseq
        %v7214 = vshrl.u32 %v7213, 7
        %v7215 = vsub.s32 1, %v7214
        %v7216 = vrot.slane %v6787, %v7215
        %v7219 = vadd.f32 %v7206, %v7212
        %v7220 = vadd.f32 %v7207, %v7216
        %v7221 = vpack.c.bf16 %v7219, %v7219
        %v7222 = vpack.c.bf16 %v7220, %v7220
        %v7225 = vlaneseq
        %v7226 = vshrl.u32 %v7225, 7
        %v7227 = vsub.s32 0, %v7226
        %v7228 = vrot.slane %v7044, %v7227
        %v7229 = vlaneseq
        %v7230 = vshrl.u32 %v7229, 7
        %v7231 = vsub.s32 1, %v7230
        %v7232 = vrot.slane %v7044, %v7231
        %v7233 = vlaneseq
        %v7234 = vshrl.u32 %v7233, 7
        %v7235 = vsub.s32 2, %v7234
        %v7236 = vrot.slane %v7044, %v7235
        %v7237 = vlaneseq
        %v7238 = vshrl.u32 %v7237, 7
        %v7239 = vsub.s32 3, %v7238
        %v7240 = vrot.slane %v7044, %v7239
        %v7241 = vlaneseq
        %v7242 = vshrl.u32 %v7241, 7
        %v7243 = vsub.s32 4, %v7242
        %v7244 = vrot.slane %v7044, %v7243
        %v7245 = vlaneseq
        %v7246 = vshrl.u32 %v7245, 7
        %v7247 = vsub.s32 5, %v7246
        %v7248 = vrot.slane %v7044, %v7247
        %v7249 = vlaneseq
        %v7250 = vshrl.u32 %v7249, 7
        %v7251 = vsub.s32 6, %v7250
        %v7252 = vrot.slane %v7044, %v7251
        %v7253 = vlaneseq
        %v7254 = vshrl.u32 %v7253, 7
        %v7255 = vsub.s32 7, %v7254
        %v7256 = vrot.slane %v7044, %v7255
        %v7257 = vlaneseq
        %v7258 = vshrl.u32 %v7257, 7
        %v7259 = vsub.s32 0, %v7258
        %v7260 = vrot.slane %v7045, %v7259
        %v7261 = vlaneseq
        %v7262 = vshrl.u32 %v7261, 7
        %v7263 = vsub.s32 1, %v7262
        %v7264 = vrot.slane %v7045, %v7263
        %v7265 = vlaneseq
        %v7266 = vshrl.u32 %v7265, 7
        %v7267 = vsub.s32 2, %v7266
        %v7268 = vrot.slane %v7045, %v7267
        %v7269 = vlaneseq
        %v7270 = vshrl.u32 %v7269, 7
        %v7271 = vsub.s32 3, %v7270
        %v7272 = vrot.slane %v7045, %v7271
        %v7273 = vlaneseq
        %v7274 = vshrl.u32 %v7273, 7
        %v7275 = vsub.s32 4, %v7274
        %v7276 = vrot.slane %v7045, %v7275
        %v7277 = vlaneseq
        %v7278 = vshrl.u32 %v7277, 7
        %v7279 = vsub.s32 5, %v7278
        %v7280 = vrot.slane %v7045, %v7279
        %v7281 = vlaneseq
        %v7282 = vshrl.u32 %v7281, 7
        %v7283 = vsub.s32 6, %v7282
        %v7284 = vrot.slane %v7045, %v7283
        %v7285 = vlaneseq
        %v7286 = vshrl.u32 %v7285, 7
        %v7287 = vsub.s32 7, %v7286
        %v7288 = vrot.slane %v7045, %v7287
        %v7561 = vunpack.c.l.b16 %v6788
        %v7562 = vunpack.c.h.b16 %v6788
        %v7563 = vunpack.c.l.b16 %v6789
        %v7564 = vunpack.c.h.b16 %v6789
        %v7565 = vunpack.c.l.b16 %v6790
        %v7566 = vunpack.c.h.b16 %v6790
        %v7567 = vunpack.c.l.b16 %v6791
        %v7568 = vunpack.c.h.b16 %v6791
        %v7569 = vunpack.c.l.b16 %v6792
        %v7570 = vunpack.c.h.b16 %v6792
        %v7571 = vunpack.c.l.b16 %v6793
        %v7572 = vunpack.c.h.b16 %v6793
        %v7573 = vunpack.c.l.b16 %v6794
        %v7574 = vunpack.c.h.b16 %v6794
        %v7575 = vunpack.c.l.b16 %v6795
        %v7576 = vunpack.c.h.b16 %v6795
        %v7577 = vunpack.c.l.b16 %v6796
        %v7578 = vunpack.c.h.b16 %v6796
        %v7579 = vunpack.c.l.b16 %v6797
        %v7580 = vunpack.c.h.b16 %v6797
        %v7581 = vunpack.c.l.b16 %v6798
        %v7582 = vunpack.c.h.b16 %v6798
        %v7583 = vunpack.c.l.b16 %v6799
        %v7584 = vunpack.c.h.b16 %v6799
        %v7585 = vunpack.c.l.b16 %v6800
        %v7586 = vunpack.c.h.b16 %v6800
        %v7587 = vunpack.c.l.b16 %v6801
        %v7588 = vunpack.c.h.b16 %v6801
        %v7589 = vunpack.c.l.b16 %v6802
        %v7590 = vunpack.c.h.b16 %v6802
        %v7591 = vunpack.c.l.b16 %v6803
        %v7592 = vunpack.c.h.b16 %v6803
        %v7593 = vunpack.c.l.b16 %v6804
        %v7594 = vunpack.c.h.b16 %v6804
        %v7595 = vunpack.c.l.b16 %v6805
        %v7596 = vunpack.c.h.b16 %v6805
        %v7597 = vunpack.c.l.b16 %v6806
        %v7598 = vunpack.c.h.b16 %v6806
        %v7599 = vunpack.c.l.b16 %v6807
        %v7600 = vunpack.c.h.b16 %v6807
        %v7601 = vunpack.c.l.b16 %v6808
        %v7602 = vunpack.c.h.b16 %v6808
        %v7603 = vunpack.c.l.b16 %v6809
        %v7604 = vunpack.c.h.b16 %v6809
        %v7605 = vunpack.c.l.b16 %v6810
        %v7606 = vunpack.c.h.b16 %v6810
        %v7607 = vunpack.c.l.b16 %v6811
        %v7608 = vunpack.c.h.b16 %v6811
        %v7609 = vunpack.c.l.b16 %v6812
        %v7610 = vunpack.c.h.b16 %v6812
        %v7611 = vunpack.c.l.b16 %v6813
        %v7612 = vunpack.c.h.b16 %v6813
        %v7613 = vunpack.c.l.b16 %v6814
        %v7614 = vunpack.c.h.b16 %v6814
        %v7615 = vunpack.c.l.b16 %v6815
        %v7616 = vunpack.c.h.b16 %v6815
        %v7617 = vunpack.c.l.b16 %v6816
        %v7618 = vunpack.c.h.b16 %v6816
        %v7619 = vunpack.c.l.b16 %v6817
        %v7620 = vunpack.c.h.b16 %v6817
        %v7621 = vunpack.c.l.b16 %v6818
        %v7622 = vunpack.c.h.b16 %v6818
        %v7623 = vunpack.c.l.b16 %v6819
        %v7624 = vunpack.c.h.b16 %v6819
        %v7625 = vunpack.c.l.b16 %v6820
        %v7626 = vunpack.c.h.b16 %v6820
        %v7627 = vunpack.c.l.b16 %v6821
        %v7628 = vunpack.c.h.b16 %v6821
        %v7629 = vunpack.c.l.b16 %v6822
        %v7630 = vunpack.c.h.b16 %v6822
        %v7631 = vunpack.c.l.b16 %v6823
        %v7632 = vunpack.c.h.b16 %v6823
        %v7633 = vunpack.c.l.b16 %v6824
        %v7634 = vunpack.c.h.b16 %v6824
        %v7635 = vunpack.c.l.b16 %v6825
        %v7636 = vunpack.c.h.b16 %v6825
        %v7637 = vunpack.c.l.b16 %v6826
        %v7638 = vunpack.c.h.b16 %v6826
        %v7639 = vunpack.c.l.b16 %v6827
        %v7640 = vunpack.c.h.b16 %v6827
        %v7641 = vunpack.c.l.b16 %v6828
        %v7642 = vunpack.c.h.b16 %v6828
        %v7643 = vunpack.c.l.b16 %v6829
        %v7644 = vunpack.c.h.b16 %v6829
        %v7645 = vunpack.c.l.b16 %v6830
        %v7646 = vunpack.c.h.b16 %v6830
        %v7647 = vunpack.c.l.b16 %v6831
        %v7648 = vunpack.c.h.b16 %v6831
        %v7649 = vunpack.c.l.b16 %v6832
        %v7650 = vunpack.c.h.b16 %v6832
        %v7651 = vunpack.c.l.b16 %v6833
        %v7652 = vunpack.c.h.b16 %v6833
        %v7653 = vunpack.c.l.b16 %v6834
        %v7654 = vunpack.c.h.b16 %v6834
        %v7655 = vunpack.c.l.b16 %v6835
        %v7656 = vunpack.c.h.b16 %v6835
        %v7657 = vunpack.c.l.b16 %v6836
        %v7658 = vunpack.c.h.b16 %v6836
        %v7659 = vunpack.c.l.b16 %v6837
        %v7660 = vunpack.c.h.b16 %v6837
        %v7661 = vunpack.c.l.b16 %v6838
        %v7662 = vunpack.c.h.b16 %v6838
        %v7663 = vunpack.c.l.b16 %v6839
        %v7664 = vunpack.c.h.b16 %v6839
        %v7665 = vunpack.c.l.b16 %v6840
        %v7666 = vunpack.c.h.b16 %v6840
        %v7667 = vunpack.c.l.b16 %v6841
        %v7668 = vunpack.c.h.b16 %v6841
        %v7669 = vunpack.c.l.b16 %v6842
        %v7670 = vunpack.c.h.b16 %v6842
        %v7671 = vunpack.c.l.b16 %v6843
        %v7672 = vunpack.c.h.b16 %v6843
        %v7673 = vunpack.c.l.b16 %v6844
        %v7674 = vunpack.c.h.b16 %v6844
        %v7675 = vunpack.c.l.b16 %v6845
        %v7676 = vunpack.c.h.b16 %v6845
        %v7677 = vunpack.c.l.b16 %v6846
        %v7678 = vunpack.c.h.b16 %v6846
        %v7679 = vunpack.c.l.b16 %v6847
        %v7680 = vunpack.c.h.b16 %v6847
        %v7681 = vunpack.c.l.b16 %v6848
        %v7682 = vunpack.c.h.b16 %v6848
        %v7683 = vunpack.c.l.b16 %v6849
        %v7684 = vunpack.c.h.b16 %v6849
        %v7685 = vunpack.c.l.b16 %v6850
        %v7686 = vunpack.c.h.b16 %v6850
        %v7687 = vunpack.c.l.b16 %v6851
        %v7688 = vunpack.c.h.b16 %v6851
        %v7689 = vunpack.c.l.b16 %v6852
        %v7690 = vunpack.c.h.b16 %v6852
        %v7691 = vunpack.c.l.b16 %v6853
        %v7692 = vunpack.c.h.b16 %v6853
        %v7693 = vunpack.c.l.b16 %v6854
        %v7694 = vunpack.c.h.b16 %v6854
        %v7695 = vunpack.c.l.b16 %v6855
        %v7696 = vunpack.c.h.b16 %v6855
        %v7697 = vunpack.c.l.b16 %v6856
        %v7698 = vunpack.c.h.b16 %v6856
        %v7699 = vunpack.c.l.b16 %v6857
        %v7700 = vunpack.c.h.b16 %v6857
        %v7701 = vunpack.c.l.b16 %v6858
        %v7702 = vunpack.c.h.b16 %v6858
        %v7703 = vunpack.c.l.b16 %v6859
        %v7704 = vunpack.c.h.b16 %v6859
        %v7705 = vunpack.c.l.b16 %v6860
        %v7706 = vunpack.c.h.b16 %v6860
        %v7707 = vunpack.c.l.b16 %v6861
        %v7708 = vunpack.c.h.b16 %v6861
        %v7709 = vunpack.c.l.b16 %v6862
        %v7710 = vunpack.c.h.b16 %v6862
        %v7711 = vunpack.c.l.b16 %v6863
        %v7712 = vunpack.c.h.b16 %v6863
        %v7713 = vunpack.c.l.b16 %v6864
        %v7714 = vunpack.c.h.b16 %v6864
        %v7715 = vunpack.c.l.b16 %v6865
        %v7716 = vunpack.c.h.b16 %v6865
        %v7717 = vunpack.c.l.b16 %v6866
        %v7718 = vunpack.c.h.b16 %v6866
        %v7719 = vunpack.c.l.b16 %v6867
        %v7720 = vunpack.c.h.b16 %v6867
        %v7721 = vunpack.c.l.b16 %v6868
        %v7722 = vunpack.c.h.b16 %v6868
        %v7723 = vunpack.c.l.b16 %v6869
        %v7724 = vunpack.c.h.b16 %v6869
        %v7725 = vunpack.c.l.b16 %v6870
        %v7726 = vunpack.c.h.b16 %v6870
        %v7727 = vunpack.c.l.b16 %v6871
        %v7728 = vunpack.c.h.b16 %v6871
        %v7729 = vunpack.c.l.b16 %v6872
        %v7730 = vunpack.c.h.b16 %v6872
        %v7731 = vunpack.c.l.b16 %v6873
        %v7732 = vunpack.c.h.b16 %v6873
        %v7733 = vunpack.c.l.b16 %v6874
        %v7734 = vunpack.c.h.b16 %v6874
        %v7735 = vunpack.c.l.b16 %v6875
        %v7736 = vunpack.c.h.b16 %v6875
        %v7737 = vunpack.c.l.b16 %v6876
        %v7738 = vunpack.c.h.b16 %v6876
        %v7739 = vunpack.c.l.b16 %v6877
        %v7740 = vunpack.c.h.b16 %v6877
        %v7741 = vunpack.c.l.b16 %v6878
        %v7742 = vunpack.c.h.b16 %v6878
        %v7743 = vunpack.c.l.b16 %v6879
        %v7744 = vunpack.c.h.b16 %v6879
        %v7745 = vunpack.c.l.b16 %v6880
        %v7746 = vunpack.c.h.b16 %v6880
        %v7747 = vunpack.c.l.b16 %v6881
        %v7748 = vunpack.c.h.b16 %v6881
        %v7749 = vunpack.c.l.b16 %v6882
        %v7750 = vunpack.c.h.b16 %v6882
        %v7751 = vunpack.c.l.b16 %v6883
        %v7752 = vunpack.c.h.b16 %v6883
        %v7753 = vunpack.c.l.b16 %v6884
        %v7754 = vunpack.c.h.b16 %v6884
        %v7755 = vunpack.c.l.b16 %v6885
        %v7756 = vunpack.c.h.b16 %v6885
        %v7757 = vunpack.c.l.b16 %v6886
        %v7758 = vunpack.c.h.b16 %v6886
        %v7759 = vunpack.c.l.b16 %v6887
        %v7760 = vunpack.c.h.b16 %v6887
        %v7761 = vunpack.c.l.b16 %v6888
        %v7762 = vunpack.c.h.b16 %v6888
        %v7763 = vunpack.c.l.b16 %v6889
        %v7764 = vunpack.c.h.b16 %v6889
        %v7765 = vunpack.c.l.b16 %v6890
        %v7766 = vunpack.c.h.b16 %v6890
        %v7767 = vunpack.c.l.b16 %v6891
        %v7768 = vunpack.c.h.b16 %v6891
        %v7769 = vunpack.c.l.b16 %v6892
        %v7770 = vunpack.c.h.b16 %v6892
        %v7771 = vunpack.c.l.b16 %v6893
        %v7772 = vunpack.c.h.b16 %v6893
        %v7773 = vunpack.c.l.b16 %v6894
        %v7774 = vunpack.c.h.b16 %v6894
        %v7775 = vunpack.c.l.b16 %v6895
        %v7776 = vunpack.c.h.b16 %v6895
        %v7777 = vunpack.c.l.b16 %v6896
        %v7778 = vunpack.c.h.b16 %v6896
        %v7779 = vunpack.c.l.b16 %v6897
        %v7780 = vunpack.c.h.b16 %v6897
        %v7781 = vunpack.c.l.b16 %v6898
        %v7782 = vunpack.c.h.b16 %v6898
        %v7783 = vunpack.c.l.b16 %v6899
        %v7784 = vunpack.c.h.b16 %v6899
        %v7785 = vunpack.c.l.b16 %v6900
        %v7786 = vunpack.c.h.b16 %v6900
        %v7787 = vunpack.c.l.b16 %v6901
        %v7788 = vunpack.c.h.b16 %v6901
        %v7789 = vunpack.c.l.b16 %v6902
        %v7790 = vunpack.c.h.b16 %v6902
        %v7791 = vunpack.c.l.b16 %v6903
        %v7792 = vunpack.c.h.b16 %v6903
        %v7793 = vunpack.c.l.b16 %v6904
        %v7794 = vunpack.c.h.b16 %v6904
        %v7795 = vunpack.c.l.b16 %v6905
        %v7796 = vunpack.c.h.b16 %v6905
        %v7797 = vunpack.c.l.b16 %v6906
        %v7798 = vunpack.c.h.b16 %v6906
        %v7799 = vunpack.c.l.b16 %v6907
        %v7800 = vunpack.c.h.b16 %v6907
        %v7801 = vunpack.c.l.b16 %v6908
        %v7802 = vunpack.c.h.b16 %v6908
        %v7803 = vunpack.c.l.b16 %v6909
        %v7804 = vunpack.c.h.b16 %v6909
        %v7805 = vunpack.c.l.b16 %v6910
        %v7806 = vunpack.c.h.b16 %v6910
        %v7807 = vunpack.c.l.b16 %v6911
        %v7808 = vunpack.c.h.b16 %v6911
        %v7809 = vunpack.c.l.b16 %v6912
        %v7810 = vunpack.c.h.b16 %v6912
        %v7811 = vunpack.c.l.b16 %v6913
        %v7812 = vunpack.c.h.b16 %v6913
        %v7813 = vunpack.c.l.b16 %v6914
        %v7814 = vunpack.c.h.b16 %v6914
        %v7815 = vunpack.c.l.b16 %v6915
        %v7816 = vunpack.c.h.b16 %v6915
        %v7817 = vunpack.c.l.b16 %v6916
        %v7818 = vunpack.c.h.b16 %v6916
        %v7819 = vunpack.c.l.b16 %v6917
        %v7820 = vunpack.c.h.b16 %v6917
        %v7821 = vunpack.c.l.b16 %v6918
        %v7822 = vunpack.c.h.b16 %v6918
        %v7823 = vunpack.c.l.b16 %v6919
        %v7824 = vunpack.c.h.b16 %v6919
        %v7825 = vunpack.c.l.b16 %v6920
        %v7826 = vunpack.c.h.b16 %v6920
        %v7827 = vunpack.c.l.b16 %v6921
        %v7828 = vunpack.c.h.b16 %v6921
        %v7829 = vunpack.c.l.b16 %v6922
        %v7830 = vunpack.c.h.b16 %v6922
        %v7831 = vunpack.c.l.b16 %v6923
        %v7832 = vunpack.c.h.b16 %v6923
        %v7833 = vunpack.c.l.b16 %v6924
        %v7834 = vunpack.c.h.b16 %v6924
        %v7835 = vunpack.c.l.b16 %v6925
        %v7836 = vunpack.c.h.b16 %v6925
        %v7837 = vunpack.c.l.b16 %v6926
        %v7838 = vunpack.c.h.b16 %v6926
        %v7839 = vunpack.c.l.b16 %v6927
        %v7840 = vunpack.c.h.b16 %v6927
        %v7841 = vunpack.c.l.b16 %v6928
        %v7842 = vunpack.c.h.b16 %v6928
        %v7843 = vunpack.c.l.b16 %v6929
        %v7844 = vunpack.c.h.b16 %v6929
        %v7845 = vunpack.c.l.b16 %v6930
        %v7846 = vunpack.c.h.b16 %v6930
        %v7847 = vunpack.c.l.b16 %v6931
        %v7848 = vunpack.c.h.b16 %v6931
        %v7849 = vunpack.c.l.b16 %v6932
        %v7850 = vunpack.c.h.b16 %v6932
        %v7851 = vunpack.c.l.b16 %v6933
        %v7852 = vunpack.c.h.b16 %v6933
        %v7853 = vunpack.c.l.b16 %v6934
        %v7854 = vunpack.c.h.b16 %v6934
        %v7855 = vunpack.c.l.b16 %v6935
        %v7856 = vunpack.c.h.b16 %v6935
        %v7857 = vunpack.c.l.b16 %v6936
        %v7858 = vunpack.c.h.b16 %v6936
        %v7859 = vunpack.c.l.b16 %v6937
        %v7860 = vunpack.c.h.b16 %v6937
        %v7861 = vunpack.c.l.b16 %v6938
        %v7862 = vunpack.c.h.b16 %v6938
        %v7863 = vunpack.c.l.b16 %v6939
        %v7864 = vunpack.c.h.b16 %v6939
        %v7865 = vunpack.c.l.b16 %v6940
        %v7866 = vunpack.c.h.b16 %v6940
        %v7867 = vunpack.c.l.b16 %v6941
        %v7868 = vunpack.c.h.b16 %v6941
        %v7869 = vunpack.c.l.b16 %v6942
        %v7870 = vunpack.c.h.b16 %v6942
        %v7871 = vunpack.c.l.b16 %v6943
        %v7872 = vunpack.c.h.b16 %v6943
        %v7873 = vunpack.c.l.b16 %v6944
        %v7874 = vunpack.c.h.b16 %v6944
        %v7875 = vunpack.c.l.b16 %v6945
        %v7876 = vunpack.c.h.b16 %v6945
        %v7877 = vunpack.c.l.b16 %v6946
        %v7878 = vunpack.c.h.b16 %v6946
        %v7879 = vunpack.c.l.b16 %v6947
        %v7880 = vunpack.c.h.b16 %v6947
        %v7881 = vunpack.c.l.b16 %v6948
        %v7882 = vunpack.c.h.b16 %v6948
        %v7883 = vunpack.c.l.b16 %v6949
        %v7884 = vunpack.c.h.b16 %v6949
        %v7885 = vunpack.c.l.b16 %v6950
        %v7886 = vunpack.c.h.b16 %v6950
        %v7887 = vunpack.c.l.b16 %v6951
        %v7888 = vunpack.c.h.b16 %v6951
        %v7889 = vunpack.c.l.b16 %v6952
        %v7890 = vunpack.c.h.b16 %v6952
        %v7891 = vunpack.c.l.b16 %v6953
        %v7892 = vunpack.c.h.b16 %v6953
        %v7893 = vunpack.c.l.b16 %v6954
        %v7894 = vunpack.c.h.b16 %v6954
        %v7895 = vunpack.c.l.b16 %v6955
        %v7896 = vunpack.c.h.b16 %v6955
        %v7897 = vunpack.c.l.b16 %v6956
        %v7898 = vunpack.c.h.b16 %v6956
        %v7899 = vunpack.c.l.b16 %v6957
        %v7900 = vunpack.c.h.b16 %v6957
        %v7901 = vunpack.c.l.b16 %v6958
        %v7902 = vunpack.c.h.b16 %v6958
        %v7903 = vunpack.c.l.b16 %v6959
        %v7904 = vunpack.c.h.b16 %v6959
        %v7905 = vunpack.c.l.b16 %v6960
        %v7906 = vunpack.c.h.b16 %v6960
        %v7907 = vunpack.c.l.b16 %v6961
        %v7908 = vunpack.c.h.b16 %v6961
        %v7909 = vunpack.c.l.b16 %v6962
        %v7910 = vunpack.c.h.b16 %v6962
        %v7911 = vunpack.c.l.b16 %v6963
        %v7912 = vunpack.c.h.b16 %v6963
        %v7913 = vunpack.c.l.b16 %v6964
        %v7914 = vunpack.c.h.b16 %v6964
        %v7915 = vunpack.c.l.b16 %v6965
        %v7916 = vunpack.c.h.b16 %v6965
        %v7917 = vunpack.c.l.b16 %v6966
        %v7918 = vunpack.c.h.b16 %v6966
        %v7919 = vunpack.c.l.b16 %v6967
        %v7920 = vunpack.c.h.b16 %v6967
        %v7921 = vunpack.c.l.b16 %v6968
        %v7922 = vunpack.c.h.b16 %v6968
        %v7923 = vunpack.c.l.b16 %v6969
        %v7924 = vunpack.c.h.b16 %v6969
        %v7925 = vunpack.c.l.b16 %v6970
        %v7926 = vunpack.c.h.b16 %v6970
        %v7927 = vunpack.c.l.b16 %v6971
        %v7928 = vunpack.c.h.b16 %v6971
        %v7929 = vunpack.c.l.b16 %v6972
        %v7930 = vunpack.c.h.b16 %v6972
        %v7931 = vunpack.c.l.b16 %v6973
        %v7932 = vunpack.c.h.b16 %v6973
        %v7933 = vunpack.c.l.b16 %v6974
        %v7934 = vunpack.c.h.b16 %v6974
        %v7935 = vunpack.c.l.b16 %v6975
        %v7936 = vunpack.c.h.b16 %v6975
        %v7937 = vunpack.c.l.b16 %v6976
        %v7938 = vunpack.c.h.b16 %v6976
        %v7939 = vunpack.c.l.b16 %v6977
        %v7940 = vunpack.c.h.b16 %v6977
        %v7941 = vunpack.c.l.b16 %v6978
        %v7942 = vunpack.c.h.b16 %v6978
        %v7943 = vunpack.c.l.b16 %v6979
        %v7944 = vunpack.c.h.b16 %v6979
        %v7945 = vunpack.c.l.b16 %v6980
        %v7946 = vunpack.c.h.b16 %v6980
        %v7947 = vunpack.c.l.b16 %v6981
        %v7948 = vunpack.c.h.b16 %v6981
        %v7949 = vunpack.c.l.b16 %v6982
        %v7950 = vunpack.c.h.b16 %v6982
        %v7951 = vunpack.c.l.b16 %v6983
        %v7952 = vunpack.c.h.b16 %v6983
        %v7953 = vunpack.c.l.b16 %v6984
        %v7954 = vunpack.c.h.b16 %v6984
        %v7955 = vunpack.c.l.b16 %v6985
        %v7956 = vunpack.c.h.b16 %v6985
        %v7957 = vunpack.c.l.b16 %v6986
        %v7958 = vunpack.c.h.b16 %v6986
        %v7959 = vunpack.c.l.b16 %v6987
        %v7960 = vunpack.c.h.b16 %v6987
        %v7961 = vunpack.c.l.b16 %v6988
        %v7962 = vunpack.c.h.b16 %v6988
        %v7963 = vunpack.c.l.b16 %v6989
        %v7964 = vunpack.c.h.b16 %v6989
        %v7965 = vunpack.c.l.b16 %v6990
        %v7966 = vunpack.c.h.b16 %v6990
        %v7967 = vunpack.c.l.b16 %v6991
        %v7968 = vunpack.c.h.b16 %v6991
        %v7969 = vunpack.c.l.b16 %v6992
        %v7970 = vunpack.c.h.b16 %v6992
        %v7971 = vunpack.c.l.b16 %v6993
        %v7972 = vunpack.c.h.b16 %v6993
        %v7973 = vunpack.c.l.b16 %v6994
        %v7974 = vunpack.c.h.b16 %v6994
        %v7975 = vunpack.c.l.b16 %v6995
        %v7976 = vunpack.c.h.b16 %v6995
        %v7977 = vunpack.c.l.b16 %v6996
        %v7978 = vunpack.c.h.b16 %v6996
        %v7979 = vunpack.c.l.b16 %v6997
        %v7980 = vunpack.c.h.b16 %v6997
        %v7981 = vunpack.c.l.b16 %v6998
        %v7982 = vunpack.c.h.b16 %v6998
        %v7983 = vunpack.c.l.b16 %v6999
        %v7984 = vunpack.c.h.b16 %v6999
        %v7985 = vunpack.c.l.b16 %v7000
        %v7986 = vunpack.c.h.b16 %v7000
        %v7987 = vunpack.c.l.b16 %v7001
        %v7988 = vunpack.c.h.b16 %v7001
        %v7989 = vunpack.c.l.b16 %v7002
        %v7990 = vunpack.c.h.b16 %v7002
        %v7991 = vunpack.c.l.b16 %v7003
        %v7992 = vunpack.c.h.b16 %v7003
        %v7993 = vunpack.c.l.b16 %v7004
        %v7994 = vunpack.c.h.b16 %v7004
        %v7995 = vunpack.c.l.b16 %v7005
        %v7996 = vunpack.c.h.b16 %v7005
        %v7997 = vunpack.c.l.b16 %v7006
        %v7998 = vunpack.c.h.b16 %v7006
        %v7999 = vunpack.c.l.b16 %v7007
        %v8000 = vunpack.c.h.b16 %v7007
        %v8001 = vunpack.c.l.b16 %v7008
        %v8002 = vunpack.c.h.b16 %v7008
        %v8003 = vunpack.c.l.b16 %v7009
        %v8004 = vunpack.c.h.b16 %v7009
        %v8005 = vunpack.c.l.b16 %v7010
        %v8006 = vunpack.c.h.b16 %v7010
        %v8007 = vunpack.c.l.b16 %v7011
        %v8008 = vunpack.c.h.b16 %v7011
        %v8009 = vunpack.c.l.b16 %v7012
        %v8010 = vunpack.c.h.b16 %v7012
        %v8011 = vunpack.c.l.b16 %v7013
        %v8012 = vunpack.c.h.b16 %v7013
        %v8013 = vunpack.c.l.b16 %v7014
        %v8014 = vunpack.c.h.b16 %v7014
        %v8015 = vunpack.c.l.b16 %v7015
        %v8016 = vunpack.c.h.b16 %v7015
        %v8017 = vunpack.c.l.b16 %v7016
        %v8018 = vunpack.c.h.b16 %v7016
        %v8019 = vunpack.c.l.b16 %v7017
        %v8020 = vunpack.c.h.b16 %v7017
        %v8021 = vunpack.c.l.b16 %v7018
        %v8022 = vunpack.c.h.b16 %v7018
        %v8023 = vunpack.c.l.b16 %v7019
        %v8024 = vunpack.c.h.b16 %v7019
        %v8025 = vunpack.c.l.b16 %v7020
        %v8026 = vunpack.c.h.b16 %v7020
        %v8027 = vunpack.c.l.b16 %v7021
        %v8028 = vunpack.c.h.b16 %v7021
        %v8029 = vunpack.c.l.b16 %v7022
        %v8030 = vunpack.c.h.b16 %v7022
        %v8031 = vunpack.c.l.b16 %v7023
        %v8032 = vunpack.c.h.b16 %v7023
        %v8033 = vunpack.c.l.b16 %v7024
        %v8034 = vunpack.c.h.b16 %v7024
        %v8035 = vunpack.c.l.b16 %v7025
        %v8036 = vunpack.c.h.b16 %v7025
        %v8037 = vunpack.c.l.b16 %v7026
        %v8038 = vunpack.c.h.b16 %v7026
        %v8039 = vunpack.c.l.b16 %v7027
        %v8040 = vunpack.c.h.b16 %v7027
        %v8041 = vunpack.c.l.b16 %v7028
        %v8042 = vunpack.c.h.b16 %v7028
        %v8043 = vunpack.c.l.b16 %v7029
        %v8044 = vunpack.c.h.b16 %v7029
        %v8045 = vunpack.c.l.b16 %v7030
        %v8046 = vunpack.c.h.b16 %v7030
        %v8047 = vunpack.c.l.b16 %v7031
        %v8048 = vunpack.c.h.b16 %v7031
        %v8049 = vunpack.c.l.b16 %v7032
        %v8050 = vunpack.c.h.b16 %v7032
        %v8051 = vunpack.c.l.b16 %v7033
        %v8052 = vunpack.c.h.b16 %v7033
        %v8053 = vunpack.c.l.b16 %v7034
        %v8054 = vunpack.c.h.b16 %v7034
        %v8055 = vunpack.c.l.b16 %v7035
        %v8056 = vunpack.c.h.b16 %v7035
        %v8057 = vunpack.c.l.b16 %v7036
        %v8058 = vunpack.c.h.b16 %v7036
        %v8059 = vunpack.c.l.b16 %v7037
        %v8060 = vunpack.c.h.b16 %v7037
        %v8061 = vunpack.c.l.b16 %v7038
        %v8062 = vunpack.c.h.b16 %v7038
        %v8063 = vunpack.c.l.b16 %v7039
        %v8064 = vunpack.c.h.b16 %v7039
        %v8065 = vunpack.c.l.b16 %v7040
        %v8066 = vunpack.c.h.b16 %v7040
        %v8067 = vunpack.c.l.b16 %v7041
        %v8068 = vunpack.c.h.b16 %v7041
        %v8069 = vunpack.c.l.b16 %v7042
        %v8070 = vunpack.c.h.b16 %v7042
        %v8071 = vunpack.c.l.b16 %v7043
        %v8072 = vunpack.c.h.b16 %v7043
        %v8073 = vpack.c.b16 %v7577, %v7561
        %v8074 = vpack.c.b16 %v7578, %v7562
        %v8075 = vpack.c.b16 %v7579, %v7563
        %v8076 = vpack.c.b16 %v7580, %v7564
        %v8077 = vpack.c.b16 %v7581, %v7565
        %v8078 = vpack.c.b16 %v7582, %v7566
        %v8079 = vpack.c.b16 %v7583, %v7567
        %v8080 = vpack.c.b16 %v7584, %v7568
        %v8081 = vpack.c.b16 %v7585, %v7569
        %v8082 = vpack.c.b16 %v7586, %v7570
        %v8083 = vpack.c.b16 %v7587, %v7571
        %v8084 = vpack.c.b16 %v7588, %v7572
        %v8085 = vpack.c.b16 %v7589, %v7573
        %v8086 = vpack.c.b16 %v7590, %v7574
        %v8087 = vpack.c.b16 %v7591, %v7575
        %v8088 = vpack.c.b16 %v7592, %v7576
        %v8089 = vpack.c.b16 %v7609, %v7593
        %v8090 = vpack.c.b16 %v7610, %v7594
        %v8091 = vpack.c.b16 %v7611, %v7595
        %v8092 = vpack.c.b16 %v7612, %v7596
        %v8093 = vpack.c.b16 %v7613, %v7597
        %v8094 = vpack.c.b16 %v7614, %v7598
        %v8095 = vpack.c.b16 %v7615, %v7599
        %v8096 = vpack.c.b16 %v7616, %v7600
        %v8097 = vpack.c.b16 %v7617, %v7601
        %v8098 = vpack.c.b16 %v7618, %v7602
        %v8099 = vpack.c.b16 %v7619, %v7603
        %v8100 = vpack.c.b16 %v7620, %v7604
        %v8101 = vpack.c.b16 %v7621, %v7605
        %v8102 = vpack.c.b16 %v7622, %v7606
        %v8103 = vpack.c.b16 %v7623, %v7607
        %v8104 = vpack.c.b16 %v7624, %v7608
        %v8105 = vpack.c.b16 %v7641, %v7625
        %v8106 = vpack.c.b16 %v7642, %v7626
        %v8107 = vpack.c.b16 %v7643, %v7627
        %v8108 = vpack.c.b16 %v7644, %v7628
        %v8109 = vpack.c.b16 %v7645, %v7629
        %v8110 = vpack.c.b16 %v7646, %v7630
        %v8111 = vpack.c.b16 %v7647, %v7631
        %v8112 = vpack.c.b16 %v7648, %v7632
        %v8113 = vpack.c.b16 %v7649, %v7633
        %v8114 = vpack.c.b16 %v7650, %v7634
        %v8115 = vpack.c.b16 %v7651, %v7635
        %v8116 = vpack.c.b16 %v7652, %v7636
        %v8117 = vpack.c.b16 %v7653, %v7637
        %v8118 = vpack.c.b16 %v7654, %v7638
        %v8119 = vpack.c.b16 %v7655, %v7639
        %v8120 = vpack.c.b16 %v7656, %v7640
        %v8121 = vpack.c.b16 %v7673, %v7657
        %v8122 = vpack.c.b16 %v7674, %v7658
        %v8123 = vpack.c.b16 %v7675, %v7659
        %v8124 = vpack.c.b16 %v7676, %v7660
        %v8125 = vpack.c.b16 %v7677, %v7661
        %v8126 = vpack.c.b16 %v7678, %v7662
        %v8127 = vpack.c.b16 %v7679, %v7663
        %v8128 = vpack.c.b16 %v7680, %v7664
        %v8129 = vpack.c.b16 %v7681, %v7665
        %v8130 = vpack.c.b16 %v7682, %v7666
        %v8131 = vpack.c.b16 %v7683, %v7667
        %v8132 = vpack.c.b16 %v7684, %v7668
        %v8133 = vpack.c.b16 %v7685, %v7669
        %v8134 = vpack.c.b16 %v7686, %v7670
        %v8135 = vpack.c.b16 %v7687, %v7671
        %v8136 = vpack.c.b16 %v7688, %v7672
        %v8137 = vpack.c.b16 %v7705, %v7689
        %v8138 = vpack.c.b16 %v7706, %v7690
        %v8139 = vpack.c.b16 %v7707, %v7691
        %v8140 = vpack.c.b16 %v7708, %v7692
        %v8141 = vpack.c.b16 %v7709, %v7693
        %v8142 = vpack.c.b16 %v7710, %v7694
        %v8143 = vpack.c.b16 %v7711, %v7695
        %v8144 = vpack.c.b16 %v7712, %v7696
        %v8145 = vpack.c.b16 %v7713, %v7697
        %v8146 = vpack.c.b16 %v7714, %v7698
        %v8147 = vpack.c.b16 %v7715, %v7699
        %v8148 = vpack.c.b16 %v7716, %v7700
        %v8149 = vpack.c.b16 %v7717, %v7701
        %v8150 = vpack.c.b16 %v7718, %v7702
        %v8151 = vpack.c.b16 %v7719, %v7703
        %v8152 = vpack.c.b16 %v7720, %v7704
        %v8153 = vpack.c.b16 %v7737, %v7721
        %v8154 = vpack.c.b16 %v7738, %v7722
        %v8155 = vpack.c.b16 %v7739, %v7723
        %v8156 = vpack.c.b16 %v7740, %v7724
        %v8157 = vpack.c.b16 %v7741, %v7725
        %v8158 = vpack.c.b16 %v7742, %v7726
        %v8159 = vpack.c.b16 %v7743, %v7727
        %v8160 = vpack.c.b16 %v7744, %v7728
        %v8161 = vpack.c.b16 %v7745, %v7729
        %v8162 = vpack.c.b16 %v7746, %v7730
        %v8163 = vpack.c.b16 %v7747, %v7731
        %v8164 = vpack.c.b16 %v7748, %v7732
        %v8165 = vpack.c.b16 %v7749, %v7733
        %v8166 = vpack.c.b16 %v7750, %v7734
        %v8167 = vpack.c.b16 %v7751, %v7735
        %v8168 = vpack.c.b16 %v7752, %v7736
        %v8169 = vpack.c.b16 %v7769, %v7753
        %v8170 = vpack.c.b16 %v7770, %v7754
        %v8171 = vpack.c.b16 %v7771, %v7755
        %v8172 = vpack.c.b16 %v7772, %v7756
        %v8173 = vpack.c.b16 %v7773, %v7757
        %v8174 = vpack.c.b16 %v7774, %v7758
        %v8175 = vpack.c.b16 %v7775, %v7759
        %v8176 = vpack.c.b16 %v7776, %v7760
        %v8177 = vpack.c.b16 %v7777, %v7761
        %v8178 = vpack.c.b16 %v7778, %v7762
        %v8179 = vpack.c.b16 %v7779, %v7763
        %v8180 = vpack.c.b16 %v7780, %v7764
        %v8181 = vpack.c.b16 %v7781, %v7765
        %v8182 = vpack.c.b16 %v7782, %v7766
        %v8183 = vpack.c.b16 %v7783, %v7767
        %v8184 = vpack.c.b16 %v7784, %v7768
        %v8185 = vpack.c.b16 %v7801, %v7785
        %v8186 = vpack.c.b16 %v7802, %v7786
        %v8187 = vpack.c.b16 %v7803, %v7787
        %v8188 = vpack.c.b16 %v7804, %v7788
        %v8189 = vpack.c.b16 %v7805, %v7789
        %v8190 = vpack.c.b16 %v7806, %v7790
        %v8191 = vpack.c.b16 %v7807, %v7791
        %v8192 = vpack.c.b16 %v7808, %v7792
        %v8193 = vpack.c.b16 %v7809, %v7793
        %v8194 = vpack.c.b16 %v7810, %v7794
        %v8195 = vpack.c.b16 %v7811, %v7795
        %v8196 = vpack.c.b16 %v7812, %v7796
        %v8197 = vpack.c.b16 %v7813, %v7797
        %v8198 = vpack.c.b16 %v7814, %v7798
        %v8199 = vpack.c.b16 %v7815, %v7799
        %v8200 = vpack.c.b16 %v7816, %v7800
        %v8201 = vpack.c.b16 %v7833, %v7817
        %v8202 = vpack.c.b16 %v7834, %v7818
        %v8203 = vpack.c.b16 %v7835, %v7819
        %v8204 = vpack.c.b16 %v7836, %v7820
        %v8205 = vpack.c.b16 %v7837, %v7821
        %v8206 = vpack.c.b16 %v7838, %v7822
        %v8207 = vpack.c.b16 %v7839, %v7823
        %v8208 = vpack.c.b16 %v7840, %v7824
        %v8209 = vpack.c.b16 %v7841, %v7825
        %v8210 = vpack.c.b16 %v7842, %v7826
        %v8211 = vpack.c.b16 %v7843, %v7827
        %v8212 = vpack.c.b16 %v7844, %v7828
        %v8213 = vpack.c.b16 %v7845, %v7829
        %v8214 = vpack.c.b16 %v7846, %v7830
        %v8215 = vpack.c.b16 %v7847, %v7831
        %v8216 = vpack.c.b16 %v7848, %v7832
        %v8217 = vpack.c.b16 %v7865, %v7849
        %v8218 = vpack.c.b16 %v7866, %v7850
        %v8219 = vpack.c.b16 %v7867, %v7851
        %v8220 = vpack.c.b16 %v7868, %v7852
        %v8221 = vpack.c.b16 %v7869, %v7853
        %v8222 = vpack.c.b16 %v7870, %v7854
        %v8223 = vpack.c.b16 %v7871, %v7855
        %v8224 = vpack.c.b16 %v7872, %v7856
        %v8225 = vpack.c.b16 %v7873, %v7857
        %v8226 = vpack.c.b16 %v7874, %v7858
        %v8227 = vpack.c.b16 %v7875, %v7859
        %v8228 = vpack.c.b16 %v7876, %v7860
        %v8229 = vpack.c.b16 %v7877, %v7861
        %v8230 = vpack.c.b16 %v7878, %v7862
        %v8231 = vpack.c.b16 %v7879, %v7863
        %v8232 = vpack.c.b16 %v7880, %v7864
        %v8233 = vpack.c.b16 %v7897, %v7881
        %v8234 = vpack.c.b16 %v7898, %v7882
        %v8235 = vpack.c.b16 %v7899, %v7883
        %v8236 = vpack.c.b16 %v7900, %v7884
        %v8237 = vpack.c.b16 %v7901, %v7885
        %v8238 = vpack.c.b16 %v7902, %v7886
        %v8239 = vpack.c.b16 %v7903, %v7887
        %v8240 = vpack.c.b16 %v7904, %v7888
        %v8241 = vpack.c.b16 %v7905, %v7889
        %v8242 = vpack.c.b16 %v7906, %v7890
        %v8243 = vpack.c.b16 %v7907, %v7891
        %v8244 = vpack.c.b16 %v7908, %v7892
        %v8245 = vpack.c.b16 %v7909, %v7893
        %v8246 = vpack.c.b16 %v7910, %v7894
        %v8247 = vpack.c.b16 %v7911, %v7895
        %v8248 = vpack.c.b16 %v7912, %v7896
        %v8249 = vpack.c.b16 %v7929, %v7913
        %v8250 = vpack.c.b16 %v7930, %v7914
        %v8251 = vpack.c.b16 %v7931, %v7915
        %v8252 = vpack.c.b16 %v7932, %v7916
        %v8253 = vpack.c.b16 %v7933, %v7917
        %v8254 = vpack.c.b16 %v7934, %v7918
        %v8255 = vpack.c.b16 %v7935, %v7919
        %v8256 = vpack.c.b16 %v7936, %v7920
        %v8257 = vpack.c.b16 %v7937, %v7921
        %v8258 = vpack.c.b16 %v7938, %v7922
        %v8259 = vpack.c.b16 %v7939, %v7923
        %v8260 = vpack.c.b16 %v7940, %v7924
        %v8261 = vpack.c.b16 %v7941, %v7925
        %v8262 = vpack.c.b16 %v7942, %v7926
        %v8263 = vpack.c.b16 %v7943, %v7927
        %v8264 = vpack.c.b16 %v7944, %v7928
        %v8265 = vpack.c.b16 %v7961, %v7945
        %v8266 = vpack.c.b16 %v7962, %v7946
        %v8267 = vpack.c.b16 %v7963, %v7947
        %v8268 = vpack.c.b16 %v7964, %v7948
        %v8269 = vpack.c.b16 %v7965, %v7949
        %v8270 = vpack.c.b16 %v7966, %v7950
        %v8271 = vpack.c.b16 %v7967, %v7951
        %v8272 = vpack.c.b16 %v7968, %v7952
        %v8273 = vpack.c.b16 %v7969, %v7953
        %v8274 = vpack.c.b16 %v7970, %v7954
        %v8275 = vpack.c.b16 %v7971, %v7955
        %v8276 = vpack.c.b16 %v7972, %v7956
        %v8277 = vpack.c.b16 %v7973, %v7957
        %v8278 = vpack.c.b16 %v7974, %v7958
        %v8279 = vpack.c.b16 %v7975, %v7959
        %v8280 = vpack.c.b16 %v7976, %v7960
        %v8281 = vpack.c.b16 %v7993, %v7977
        %v8282 = vpack.c.b16 %v7994, %v7978
        %v8283 = vpack.c.b16 %v7995, %v7979
        %v8284 = vpack.c.b16 %v7996, %v7980
        %v8285 = vpack.c.b16 %v7997, %v7981
        %v8286 = vpack.c.b16 %v7998, %v7982
        %v8287 = vpack.c.b16 %v7999, %v7983
        %v8288 = vpack.c.b16 %v8000, %v7984
        %v8289 = vpack.c.b16 %v8001, %v7985
        %v8290 = vpack.c.b16 %v8002, %v7986
        %v8291 = vpack.c.b16 %v8003, %v7987
        %v8292 = vpack.c.b16 %v8004, %v7988
        %v8293 = vpack.c.b16 %v8005, %v7989
        %v8294 = vpack.c.b16 %v8006, %v7990
        %v8295 = vpack.c.b16 %v8007, %v7991
        %v8296 = vpack.c.b16 %v8008, %v7992
        %v8297 = vpack.c.b16 %v8025, %v8009
        %v8298 = vpack.c.b16 %v8026, %v8010
        %v8299 = vpack.c.b16 %v8027, %v8011
        %v8300 = vpack.c.b16 %v8028, %v8012
        %v8301 = vpack.c.b16 %v8029, %v8013
        %v8302 = vpack.c.b16 %v8030, %v8014
        %v8303 = vpack.c.b16 %v8031, %v8015
        %v8304 = vpack.c.b16 %v8032, %v8016
        %v8305 = vpack.c.b16 %v8033, %v8017
        %v8306 = vpack.c.b16 %v8034, %v8018
        %v8307 = vpack.c.b16 %v8035, %v8019
        %v8308 = vpack.c.b16 %v8036, %v8020
        %v8309 = vpack.c.b16 %v8037, %v8021
        %v8310 = vpack.c.b16 %v8038, %v8022
        %v8311 = vpack.c.b16 %v8039, %v8023
        %v8312 = vpack.c.b16 %v8040, %v8024
        %v8313 = vpack.c.b16 %v8057, %v8041
        %v8314 = vpack.c.b16 %v8058, %v8042
        %v8315 = vpack.c.b16 %v8059, %v8043
        %v8316 = vpack.c.b16 %v8060, %v8044
        %v8317 = vpack.c.b16 %v8061, %v8045
        %v8318 = vpack.c.b16 %v8062, %v8046
        %v8319 = vpack.c.b16 %v8063, %v8047
        %v8320 = vpack.c.b16 %v8064, %v8048
        %v8321 = vpack.c.b16 %v8065, %v8049
        %v8322 = vpack.c.b16 %v8066, %v8050
        %v8323 = vpack.c.b16 %v8067, %v8051
        %v8324 = vpack.c.b16 %v8068, %v8052
        %v8325 = vpack.c.b16 %v8069, %v8053
        %v8326 = vpack.c.b16 %v8070, %v8054
        %v8327 = vpack.c.b16 %v8071, %v8055
        %v8328 = vpack.c.b16 %v8072, %v8056
        %8585 = vmatprep.subr.bf16.mxu0 %v8074
        %8586 = vmatpush1.bf16.msra.mxu0 %v8073
        %8587 = vmatprep.subr.bf16.mxu0 %v8090
        %8588 = vmatpush1.bf16.msra.mxu0 %v8089
        %8589 = vmatprep.subr.bf16.mxu0 %v8106
        %8590 = vmatpush1.bf16.msra.mxu0 %v8105
        %8591 = vmatprep.subr.bf16.mxu0 %v8122
        %8592 = vmatpush1.bf16.msra.mxu0 %v8121
        %8593 = vmatprep.subr.bf16.mxu0 %v8138
        %8594 = vmatpush1.bf16.msra.mxu0 %v8137
        %8595 = vmatprep.subr.bf16.mxu0 %v8154
        %8596 = vmatpush1.bf16.msra.mxu0 %v8153
        %8597 = vmatprep.subr.bf16.mxu0 %v8170
        %8598 = vmatpush1.bf16.msra.mxu0 %v8169
        %8599 = vmatprep.subr.bf16.mxu0 %v8186
        %8600 = vmatpush1.bf16.msra.mxu0 %v8185
        %8601 = vmatprep.subr.bf16.mxu0 %v8202
        %8602 = vmatpush1.bf16.msra.mxu0 %v8201
        %8603 = vmatprep.subr.bf16.mxu0 %v8218
        %8604 = vmatpush1.bf16.msra.mxu0 %v8217
        %8605 = vmatprep.subr.bf16.mxu0 %v8234
        %8606 = vmatpush1.bf16.msra.mxu0 %v8233
        %8607 = vmatprep.subr.bf16.mxu0 %v8250
        %8608 = vmatpush1.bf16.msra.mxu0 %v8249
        %8609 = vmatprep.subr.bf16.mxu0 %v8266
        %8610 = vmatpush1.bf16.msra.mxu0 %v8265
        %8611 = vmatprep.subr.bf16.mxu0 %v8282
        %8612 = vmatpush1.bf16.msra.mxu0 %v8281
        %8613 = vmatprep.subr.bf16.mxu0 %v8298
        %8614 = vmatpush1.bf16.msra.mxu0 %v8297
        %8615 = vmatprep.subr.bf16.mxu0 %v8314
        %8616 = vmatpush1.bf16.msra.mxu0 %v8313
        %8617 = vmatprep.mubr.bf16.mxu0 %v7222
        %8618 = vmatmul.mubr.bf16.gmra.mrb[0].mxu0 %v7221
        %v8619 = vpop.f32.mrb[0].mxu0
        %v8620 = vadd.f32 %v7228, %v8619
        %v8621 = vpop.f32.mrb[0].mxu0
        %v8622 = vadd.f32 %v7232, %v8621
        %v8623 = vpop.f32.mrb[0].mxu0
        %v8624 = vpop.f32.mrb[0].mxu0
        %8625 = vdwg.mxu0
        %8626 = vmatprep.subr.bf16.mxu0 %v8076
        %8627 = vmatpush1.bf16.msra.mxu0 %v8075
        %8628 = vmatprep.subr.bf16.mxu0 %v8092
        %8629 = vmatpush1.bf16.msra.mxu0 %v8091
        %8630 = vmatprep.subr.bf16.mxu0 %v8108
        %8631 = vmatpush1.bf16.msra.mxu0 %v8107
        %8632 = vmatprep.subr.bf16.mxu0 %v8124
        %8633 = vmatpush1.bf16.msra.mxu0 %v8123
        %8634 = vmatprep.subr.bf16.mxu0 %v8140
        %8635 = vmatpush1.bf16.msra.mxu0 %v8139
        %8636 = vmatprep.subr.bf16.mxu0 %v8156
        %8637 = vmatpush1.bf16.msra.mxu0 %v8155
        %8638 = vmatprep.subr.bf16.mxu0 %v8172
        %8639 = vmatpush1.bf16.msra.mxu0 %v8171
        %8640 = vmatprep.subr.bf16.mxu0 %v8188
        %8641 = vmatpush1.bf16.msra.mxu0 %v8187
        %8642 = vmatprep.subr.bf16.mxu0 %v8204
        %8643 = vmatpush1.bf16.msra.mxu0 %v8203
        %8644 = vmatprep.subr.bf16.mxu0 %v8220
        %8645 = vmatpush1.bf16.msra.mxu0 %v8219
        %8646 = vmatprep.subr.bf16.mxu0 %v8236
        %8647 = vmatpush1.bf16.msra.mxu0 %v8235
        %8648 = vmatprep.subr.bf16.mxu0 %v8252
        %8649 = vmatpush1.bf16.msra.mxu0 %v8251
        %8650 = vmatprep.subr.bf16.mxu0 %v8268
        %8651 = vmatpush1.bf16.msra.mxu0 %v8267
        %8652 = vmatprep.subr.bf16.mxu0 %v8284
        %8653 = vmatpush1.bf16.msra.mxu0 %v8283
        %8654 = vmatprep.subr.bf16.mxu0 %v8300
        %8655 = vmatpush1.bf16.msra.mxu0 %v8299
        %8656 = vmatprep.subr.bf16.mxu0 %v8316
        %8657 = vmatpush1.bf16.msra.mxu0 %v8315
        %8658 = vmatprep.mubr.bf16.mxu0 %v7222
        %8659 = vmatmul.mubr.bf16.gmra.mrb[0].mxu0 %v7221
        %v8660 = vpop.f32.mrb[0].mxu0
        %v8661 = vadd.f32 %v7236, %v8660
        %v8662 = vpop.f32.mrb[0].mxu0
        %v8663 = vadd.f32 %v7240, %v8662
        %v8664 = vpop.f32.mrb[0].mxu0
        %v8665 = vpop.f32.mrb[0].mxu0
        %8666 = vdwg.mxu0
        %8667 = vmatprep.subr.bf16.mxu0 %v8078
        %8668 = vmatpush1.bf16.msra.mxu0 %v8077
        %8669 = vmatprep.subr.bf16.mxu0 %v8094
        %8670 = vmatpush1.bf16.msra.mxu0 %v8093
        %8671 = vmatprep.subr.bf16.mxu0 %v8110
        %8672 = vmatpush1.bf16.msra.mxu0 %v8109
        %8673 = vmatprep.subr.bf16.mxu0 %v8126
        %8674 = vmatpush1.bf16.msra.mxu0 %v8125
        %8675 = vmatprep.subr.bf16.mxu0 %v8142
        %8676 = vmatpush1.bf16.msra.mxu0 %v8141
        %8677 = vmatprep.subr.bf16.mxu0 %v8158
        %8678 = vmatpush1.bf16.msra.mxu0 %v8157
        %8679 = vmatprep.subr.bf16.mxu0 %v8174
        %8680 = vmatpush1.bf16.msra.mxu0 %v8173
        %8681 = vmatprep.subr.bf16.mxu0 %v8190
        %8682 = vmatpush1.bf16.msra.mxu0 %v8189
        %8683 = vmatprep.subr.bf16.mxu0 %v8206
        %8684 = vmatpush1.bf16.msra.mxu0 %v8205
        %8685 = vmatprep.subr.bf16.mxu0 %v8222
        %8686 = vmatpush1.bf16.msra.mxu0 %v8221
        %8687 = vmatprep.subr.bf16.mxu0 %v8238
        %8688 = vmatpush1.bf16.msra.mxu0 %v8237
        %8689 = vmatprep.subr.bf16.mxu0 %v8254
        %8690 = vmatpush1.bf16.msra.mxu0 %v8253
        %8691 = vmatprep.subr.bf16.mxu0 %v8270
        %8692 = vmatpush1.bf16.msra.mxu0 %v8269
        %8693 = vmatprep.subr.bf16.mxu0 %v8286
        %8694 = vmatpush1.bf16.msra.mxu0 %v8285
        %8695 = vmatprep.subr.bf16.mxu0 %v8302
        %8696 = vmatpush1.bf16.msra.mxu0 %v8301
        %8697 = vmatprep.subr.bf16.mxu0 %v8318
        %8698 = vmatpush1.bf16.msra.mxu0 %v8317
        %8699 = vmatprep.mubr.bf16.mxu0 %v7222
        %8700 = vmatmul.mubr.bf16.gmra.mrb[0].mxu0 %v7221
        %v8701 = vpop.f32.mrb[0].mxu0
        %v8702 = vadd.f32 %v7244, %v8701
        %v8703 = vpop.f32.mrb[0].mxu0
        %v8704 = vadd.f32 %v7248, %v8703
        %v8705 = vpop.f32.mrb[0].mxu0
        %v8706 = vpop.f32.mrb[0].mxu0
        %8707 = vdwg.mxu0
        %8708 = vmatprep.subr.bf16.mxu0 %v8080
        %8709 = vmatpush1.bf16.msra.mxu0 %v8079
        %8710 = vmatprep.subr.bf16.mxu0 %v8096
        %8711 = vmatpush1.bf16.msra.mxu0 %v8095
        %8712 = vmatprep.subr.bf16.mxu0 %v8112
        %8713 = vmatpush1.bf16.msra.mxu0 %v8111
        %8714 = vmatprep.subr.bf16.mxu0 %v8128
        %8715 = vmatpush1.bf16.msra.mxu0 %v8127
        %8716 = vmatprep.subr.bf16.mxu0 %v8144
        %8717 = vmatpush1.bf16.msra.mxu0 %v8143
        %8718 = vmatprep.subr.bf16.mxu0 %v8160
        %8719 = vmatpush1.bf16.msra.mxu0 %v8159
        %8720 = vmatprep.subr.bf16.mxu0 %v8176
        %8721 = vmatpush1.bf16.msra.mxu0 %v8175
        %8722 = vmatprep.subr.bf16.mxu0 %v8192
        %8723 = vmatpush1.bf16.msra.mxu0 %v8191
        %8724 = vmatprep.subr.bf16.mxu0 %v8208
        %8725 = vmatpush1.bf16.msra.mxu0 %v8207
        %8726 = vmatprep.subr.bf16.mxu0 %v8224
        %8727 = vmatpush1.bf16.msra.mxu0 %v8223
        %8728 = vmatprep.subr.bf16.mxu0 %v8240
        %8729 = vmatpush1.bf16.msra.mxu0 %v8239
        %8730 = vmatprep.subr.bf16.mxu0 %v8256
        %8731 = vmatpush1.bf16.msra.mxu0 %v8255
        %8732 = vmatprep.subr.bf16.mxu0 %v8272
        %8733 = vmatpush1.bf16.msra.mxu0 %v8271
        %8734 = vmatprep.subr.bf16.mxu0 %v8288
        %8735 = vmatpush1.bf16.msra.mxu0 %v8287
        %8736 = vmatprep.subr.bf16.mxu0 %v8304
        %8737 = vmatpush1.bf16.msra.mxu0 %v8303
        %8738 = vmatprep.subr.bf16.mxu0 %v8320
        %8739 = vmatpush1.bf16.msra.mxu0 %v8319
        %8740 = vmatprep.mubr.bf16.mxu0 %v7222
        %8741 = vmatmul.mubr.bf16.gmra.mrb[0].mxu0 %v7221
        %v8742 = vpop.f32.mrb[0].mxu0
        %v8743 = vadd.f32 %v7252, %v8742
        %v8744 = vpop.f32.mrb[0].mxu0
        %v8745 = vadd.f32 %v7256, %v8744
        %v8746 = vpop.f32.mrb[0].mxu0
        %v8747 = vpop.f32.mrb[0].mxu0
        %8748 = vdwg.mxu0
        %8749 = vmatprep.subr.bf16.mxu0 %v8082
        %8750 = vmatpush1.bf16.msra.mxu0 %v8081
        %8751 = vmatprep.subr.bf16.mxu0 %v8098
        %8752 = vmatpush1.bf16.msra.mxu0 %v8097
        %8753 = vmatprep.subr.bf16.mxu0 %v8114
        %8754 = vmatpush1.bf16.msra.mxu0 %v8113
        %8755 = vmatprep.subr.bf16.mxu0 %v8130
        %8756 = vmatpush1.bf16.msra.mxu0 %v8129
        %8757 = vmatprep.subr.bf16.mxu0 %v8146
        %8758 = vmatpush1.bf16.msra.mxu0 %v8145
        %8759 = vmatprep.subr.bf16.mxu0 %v8162
        %8760 = vmatpush1.bf16.msra.mxu0 %v8161
        %8761 = vmatprep.subr.bf16.mxu0 %v8178
        %8762 = vmatpush1.bf16.msra.mxu0 %v8177
        %8763 = vmatprep.subr.bf16.mxu0 %v8194
        %8764 = vmatpush1.bf16.msra.mxu0 %v8193
        %8765 = vmatprep.subr.bf16.mxu0 %v8210
        %8766 = vmatpush1.bf16.msra.mxu0 %v8209
        %8767 = vmatprep.subr.bf16.mxu0 %v8226
        %8768 = vmatpush1.bf16.msra.mxu0 %v8225
        %8769 = vmatprep.subr.bf16.mxu0 %v8242
        %8770 = vmatpush1.bf16.msra.mxu0 %v8241
        %8771 = vmatprep.subr.bf16.mxu0 %v8258
        %8772 = vmatpush1.bf16.msra.mxu0 %v8257
        %8773 = vmatprep.subr.bf16.mxu0 %v8274
        %8774 = vmatpush1.bf16.msra.mxu0 %v8273
        %8775 = vmatprep.subr.bf16.mxu0 %v8290
        %8776 = vmatpush1.bf16.msra.mxu0 %v8289
        %8777 = vmatprep.subr.bf16.mxu0 %v8306
        %8778 = vmatpush1.bf16.msra.mxu0 %v8305
        %8779 = vmatprep.subr.bf16.mxu0 %v8322
        %8780 = vmatpush1.bf16.msra.mxu0 %v8321
        %8781 = vmatprep.mubr.bf16.mxu0 %v7222
        %8782 = vmatmul.mubr.bf16.gmra.mrb[0].mxu0 %v7221
        %v8783 = vpop.f32.mrb[0].mxu0
        %v8784 = vadd.f32 %v7260, %v8783
        %v8785 = vpop.f32.mrb[0].mxu0
        %v8786 = vadd.f32 %v7264, %v8785
        %v8787 = vpop.f32.mrb[0].mxu0
        %v8788 = vpop.f32.mrb[0].mxu0
        %8789 = vdwg.mxu0
        %8790 = vmatprep.subr.bf16.mxu0 %v8084
        %8791 = vmatpush1.bf16.msra.mxu0 %v8083
        %8792 = vmatprep.subr.bf16.mxu0 %v8100
        %8793 = vmatpush1.bf16.msra.mxu0 %v8099
        %8794 = vmatprep.subr.bf16.mxu0 %v8116
        %8795 = vmatpush1.bf16.msra.mxu0 %v8115
        %8796 = vmatprep.subr.bf16.mxu0 %v8132
        %8797 = vmatpush1.bf16.msra.mxu0 %v8131
        %8798 = vmatprep.subr.bf16.mxu0 %v8148
        %8799 = vmatpush1.bf16.msra.mxu0 %v8147
        %8800 = vmatprep.subr.bf16.mxu0 %v8164
        %8801 = vmatpush1.bf16.msra.mxu0 %v8163
        %8802 = vmatprep.subr.bf16.mxu0 %v8180
        %8803 = vmatpush1.bf16.msra.mxu0 %v8179
        %8804 = vmatprep.subr.bf16.mxu0 %v8196
        %8805 = vmatpush1.bf16.msra.mxu0 %v8195
        %8806 = vmatprep.subr.bf16.mxu0 %v8212
        %8807 = vmatpush1.bf16.msra.mxu0 %v8211
        %8808 = vmatprep.subr.bf16.mxu0 %v8228
        %8809 = vmatpush1.bf16.msra.mxu0 %v8227
        %8810 = vmatprep.subr.bf16.mxu0 %v8244
        %8811 = vmatpush1.bf16.msra.mxu0 %v8243
        %8812 = vmatprep.subr.bf16.mxu0 %v8260
        %8813 = vmatpush1.bf16.msra.mxu0 %v8259
        %8814 = vmatprep.subr.bf16.mxu0 %v8276
        %8815 = vmatpush1.bf16.msra.mxu0 %v8275
        %8816 = vmatprep.subr.bf16.mxu0 %v8292
        %8817 = vmatpush1.bf16.msra.mxu0 %v8291
        %8818 = vmatprep.subr.bf16.mxu0 %v8308
        %8819 = vmatpush1.bf16.msra.mxu0 %v8307
        %8820 = vmatprep.subr.bf16.mxu0 %v8324
        %8821 = vmatpush1.bf16.msra.mxu0 %v8323
        %8822 = vmatprep.mubr.bf16.mxu0 %v7222
        %8823 = vmatmul.mubr.bf16.gmra.mrb[0].mxu0 %v7221
        %v8824 = vpop.f32.mrb[0].mxu0
        %v8825 = vadd.f32 %v7268, %v8824
        %v8826 = vpop.f32.mrb[0].mxu0
        %v8827 = vadd.f32 %v7272, %v8826
        %v8828 = vpop.f32.mrb[0].mxu0
        %v8829 = vpop.f32.mrb[0].mxu0
        %8830 = vdwg.mxu0
        %8831 = vmatprep.subr.bf16.mxu0 %v8086
        %8832 = vmatpush1.bf16.msra.mxu0 %v8085
        %8833 = vmatprep.subr.bf16.mxu0 %v8102
        %8834 = vmatpush1.bf16.msra.mxu0 %v8101
        %8835 = vmatprep.subr.bf16.mxu0 %v8118
        %8836 = vmatpush1.bf16.msra.mxu0 %v8117
        %8837 = vmatprep.subr.bf16.mxu0 %v8134
        %8838 = vmatpush1.bf16.msra.mxu0 %v8133
        %8839 = vmatprep.subr.bf16.mxu0 %v8150
        %8840 = vmatpush1.bf16.msra.mxu0 %v8149
        %8841 = vmatprep.subr.bf16.mxu0 %v8166
        %8842 = vmatpush1.bf16.msra.mxu0 %v8165
        %8843 = vmatprep.subr.bf16.mxu0 %v8182
        %8844 = vmatpush1.bf16.msra.mxu0 %v8181
        %8845 = vmatprep.subr.bf16.mxu0 %v8198
        %8846 = vmatpush1.bf16.msra.mxu0 %v8197
        %8847 = vmatprep.subr.bf16.mxu0 %v8214
        %8848 = vmatpush1.bf16.msra.mxu0 %v8213
        %8849 = vmatprep.subr.bf16.mxu0 %v8230
        %8850 = vmatpush1.bf16.msra.mxu0 %v8229
        %8851 = vmatprep.subr.bf16.mxu0 %v8246
        %8852 = vmatpush1.bf16.msra.mxu0 %v8245
        %8853 = vmatprep.subr.bf16.mxu0 %v8262
        %8854 = vmatpush1.bf16.msra.mxu0 %v8261
        %8855 = vmatprep.subr.bf16.mxu0 %v8278
        %8856 = vmatpush1.bf16.msra.mxu0 %v8277
        %8857 = vmatprep.subr.bf16.mxu0 %v8294
        %8858 = vmatpush1.bf16.msra.mxu0 %v8293
        %8859 = vmatprep.subr.bf16.mxu0 %v8310
        %8860 = vmatpush1.bf16.msra.mxu0 %v8309
        %8861 = vmatprep.subr.bf16.mxu0 %v8326
        %8862 = vmatpush1.bf16.msra.mxu0 %v8325
        %8863 = vmatprep.mubr.bf16.mxu0 %v7222
        %8864 = vmatmul.mubr.bf16.gmra.mrb[0].mxu0 %v7221
        %v8865 = vpop.f32.mrb[0].mxu0
        %v8866 = vadd.f32 %v7276, %v8865
        %v8867 = vpop.f32.mrb[0].mxu0
        %v8868 = vadd.f32 %v7280, %v8867
        %v8869 = vpop.f32.mrb[0].mxu0
        %v8870 = vpop.f32.mrb[0].mxu0
        %8871 = vdwg.mxu0
        %8872 = vmatprep.subr.bf16.mxu0 %v8088
        %8873 = vmatpush1.bf16.msra.mxu0 %v8087
        %8874 = vmatprep.subr.bf16.mxu0 %v8104
        %8875 = vmatpush1.bf16.msra.mxu0 %v8103
        %8876 = vmatprep.subr.bf16.mxu0 %v8120
        %8877 = vmatpush1.bf16.msra.mxu0 %v8119
        %8878 = vmatprep.subr.bf16.mxu0 %v8136
        %8879 = vmatpush1.bf16.msra.mxu0 %v8135
        %8880 = vmatprep.subr.bf16.mxu0 %v8152
        %8881 = vmatpush1.bf16.msra.mxu0 %v8151
        %8882 = vmatprep.subr.bf16.mxu0 %v8168
        %8883 = vmatpush1.bf16.msra.mxu0 %v8167
        %8884 = vmatprep.subr.bf16.mxu0 %v8184
        %8885 = vmatpush1.bf16.msra.mxu0 %v8183
        %8886 = vmatprep.subr.bf16.mxu0 %v8200
        %8887 = vmatpush1.bf16.msra.mxu0 %v8199
        %8888 = vmatprep.subr.bf16.mxu0 %v8216
        %8889 = vmatpush1.bf16.msra.mxu0 %v8215
        %8890 = vmatprep.subr.bf16.mxu0 %v8232
        %8891 = vmatpush1.bf16.msra.mxu0 %v8231
        %8892 = vmatprep.subr.bf16.mxu0 %v8248
        %8893 = vmatpush1.bf16.msra.mxu0 %v8247
        %8894 = vmatprep.subr.bf16.mxu0 %v8264
        %8895 = vmatpush1.bf16.msra.mxu0 %v8263
        %8896 = vmatprep.subr.bf16.mxu0 %v8280
        %8897 = vmatpush1.bf16.msra.mxu0 %v8279
        %8898 = vmatprep.subr.bf16.mxu0 %v8296
        %8899 = vmatpush1.bf16.msra.mxu0 %v8295
        %8900 = vmatprep.subr.bf16.mxu0 %v8312
        %8901 = vmatpush1.bf16.msra.mxu0 %v8311
        %8902 = vmatprep.subr.bf16.mxu0 %v8328
        %8903 = vmatpush1.bf16.msra.mxu0 %v8327
        %8904 = vmatprep.mubr.bf16.mxu0 %v7222
        %8905 = vmatmul.mubr.bf16.gmra.mrb[0].mxu0 %v7221
        %v8906 = vpop.f32.mrb[0].mxu0
        %v8907 = vadd.f32 %v7284, %v8906
        %v8908 = vpop.f32.mrb[0].mxu0
        %v8909 = vadd.f32 %v7288, %v8908
        %v8910 = vpop.f32.mrb[0].mxu0
        %v8911 = vpop.f32.mrb[0].mxu0
        %8912 = vdwg.mxu0
        %v8913 = vmul.f32 %v8784, 0.5
        %v8914 = vmul.f32 %v8786, 0.5
        %v8915 = vmul.f32 %v8825, 0.5
        %v8916 = vmul.f32 %v8827, 0.5
        %v8917 = vmul.f32 %v8866, 0.5
        %v8918 = vmul.f32 %v8868, 0.5
        %v8919 = vmul.f32 %v8907, 0.5
        %v8920 = vmul.f32 %v8909, 0.5
        %v8921 = vmul.f32 %v8784, 0.044715
        %v8922 = vmul.f32 %v8786, 0.044715
        %v8923 = vmul.f32 %v8825, 0.044715
        %v8924 = vmul.f32 %v8827, 0.044715
        %v8925 = vmul.f32 %v8866, 0.044715
        %v8926 = vmul.f32 %v8868, 0.044715
        %v8927 = vmul.f32 %v8907, 0.044715
        %v8928 = vmul.f32 %v8909, 0.044715
        %v8929 = vmul.f32 %v8921, %v8784
        %v8930 = vmul.f32 %v8922, %v8786
        %v8931 = vmul.f32 %v8923, %v8825
        %v8932 = vmul.f32 %v8924, %v8827
        %v8933 = vmul.f32 %v8925, %v8866
        %v8934 = vmul.f32 %v8926, %v8868
        %v8935 = vmul.f32 %v8927, %v8907
        %v8936 = vmul.f32 %v8928, %v8909
        %v8937 = vmul.f32 %v8929, %v8784
        %v8938 = vmul.f32 %v8930, %v8786
        %v8939 = vmul.f32 %v8931, %v8825
        %v8940 = vmul.f32 %v8932, %v8827
        %v8941 = vmul.f32 %v8933, %v8866
        %v8942 = vmul.f32 %v8934, %v8868
        %v8943 = vmul.f32 %v8935, %v8907
        %v8944 = vmul.f32 %v8936, %v8909
        %v8945 = vadd.f32 %v8784, %v8937
        %v8946 = vadd.f32 %v8786, %v8938
        %v8947 = vadd.f32 %v8825, %v8939
        %v8948 = vadd.f32 %v8827, %v8940
        %v8949 = vadd.f32 %v8866, %v8941
        %v8950 = vadd.f32 %v8868, %v8942
        %v8951 = vadd.f32 %v8907, %v8943
        %v8952 = vadd.f32 %v8909, %v8944
        %v8953 = vmul.f32 %v8945, 0.7978846
        %v8954 = vmul.f32 %v8946, 0.7978846
        %v8955 = vmul.f32 %v8947, 0.7978846
        %v8956 = vmul.f32 %v8948, 0.7978846
        %v8957 = vmul.f32 %v8949, 0.7978846
        %v8958 = vmul.f32 %v8950, 0.7978846
        %v8959 = vmul.f32 %v8951, 0.7978846
        %v8960 = vmul.f32 %v8952, 0.7978846
        %v8961 = vtanh.pop %v8953
        %v8962 = vtanh.pop %v8954
        %v8963 = vtanh.pop %v8955
        %v8964 = vtanh.pop %v8956
        %v8965 = vtanh.pop %v8957
        %v8966 = vtanh.pop %v8958
        %v8967 = vtanh.pop %v8959
        %v8968 = vtanh.pop %v8960
        %v8969 = vadd.f32 %v8961, 1.0
        %v8970 = vadd.f32 %v8962, 1.0
        %v8971 = vadd.f32 %v8963, 1.0
        %v8972 = vadd.f32 %v8964, 1.0
        %v8973 = vadd.f32 %v8965, 1.0
        %v8974 = vadd.f32 %v8966, 1.0
        %v8975 = vadd.f32 %v8967, 1.0
        %v8976 = vadd.f32 %v8968, 1.0
        %v8977 = vmul.f32 %v8913, %v8969
        %v8978 = vmul.f32 %v8914, %v8970
        %v8979 = vmul.f32 %v8915, %v8971
        %v8980 = vmul.f32 %v8916, %v8972
        %v8981 = vmul.f32 %v8917, %v8973
        %v8982 = vmul.f32 %v8918, %v8974
        %v8983 = vmul.f32 %v8919, %v8975
        %v8984 = vmul.f32 %v8920, %v8976
        %v8985 = vmul.f32 %v8620, %v8977
        %v8986 = vmul.f32 %v8622, %v8978
        %v8987 = vmul.f32 %v8661, %v8979
        %v8988 = vmul.f32 %v8663, %v8980
        %v8989 = vmul.f32 %v8702, %v8981
        %v8990 = vmul.f32 %v8704, %v8982
        %v8991 = vmul.f32 %v8743, %v8983
        %v8992 = vmul.f32 %v8745, %v8984
        %v8993 = vpack.c.bf16 %v8985, %v8985
        %v8994 = vpack.c.bf16 %v8986, %v8986
        %v8995 = vpack.c.bf16 %v8987, %v8987
        %v8996 = vpack.c.bf16 %v8988, %v8988
        %v8997 = vpack.c.bf16 %v8989, %v8989
        %v8998 = vpack.c.bf16 %v8990, %v8990
        %v8999 = vpack.c.bf16 %v8991, %v8991
        %v9000 = vpack.c.bf16 %v8992, %v8992
        %v9002 = vlaneseq
        %v9003 = vshrl.u32 %v9002, 7
        %v9004 = vsub.s32 0, %v9003
        %v9005 = vrot.slane %v7174, %v9004
        %v9006 = vlaneseq
        %v9007 = vshrl.u32 %v9006, 7
        %v9008 = vsub.s32 1, %v9007
        %v9009 = vrot.slane %v7174, %v9008
        %v9140 = vunpack.c.l.b16 %v7046
        %v9141 = vunpack.c.h.b16 %v7046
        %v9142 = vunpack.c.l.b16 %v7047
        %v9143 = vunpack.c.h.b16 %v7047
        %v9144 = vunpack.c.l.b16 %v7048
        %v9145 = vunpack.c.h.b16 %v7048
        %v9146 = vunpack.c.l.b16 %v7049
        %v9147 = vunpack.c.h.b16 %v7049
        %v9148 = vunpack.c.l.b16 %v7050
        %v9149 = vunpack.c.h.b16 %v7050
        %v9150 = vunpack.c.l.b16 %v7051
        %v9151 = vunpack.c.h.b16 %v7051
        %v9152 = vunpack.c.l.b16 %v7052
        %v9153 = vunpack.c.h.b16 %v7052
        %v9154 = vunpack.c.l.b16 %v7053
        %v9155 = vunpack.c.h.b16 %v7053
        %v9156 = vunpack.c.l.b16 %v7054
        %v9157 = vunpack.c.h.b16 %v7054
        %v9158 = vunpack.c.l.b16 %v7055
        %v9159 = vunpack.c.h.b16 %v7055
        %v9160 = vunpack.c.l.b16 %v7056
        %v9161 = vunpack.c.h.b16 %v7056
        %v9162 = vunpack.c.l.b16 %v7057
        %v9163 = vunpack.c.h.b16 %v7057
        %v9164 = vunpack.c.l.b16 %v7058
        %v9165 = vunpack.c.h.b16 %v7058
        %v9166 = vunpack.c.l.b16 %v7059
        %v9167 = vunpack.c.h.b16 %v7059
        %v9168 = vunpack.c.l.b16 %v7060
        %v9169 = vunpack.c.h.b16 %v7060
        %v9170 = vunpack.c.l.b16 %v7061
        %v9171 = vunpack.c.h.b16 %v7061
        %v9172 = vunpack.c.l.b16 %v7062
        %v9173 = vunpack.c.h.b16 %v7062
        %v9174 = vunpack.c.l.b16 %v7063
        %v9175 = vunpack.c.h.b16 %v7063
        %v9176 = vunpack.c.l.b16 %v7064
        %v9177 = vunpack.c.h.b16 %v7064
        %v9178 = vunpack.c.l.b16 %v7065
        %v9179 = vunpack.c.h.b16 %v7065
        %v9180 = vunpack.c.l.b16 %v7066
        %v9181 = vunpack.c.h.b16 %v7066
        %v9182 = vunpack.c.l.b16 %v7067
        %v9183 = vunpack.c.h.b16 %v7067
        %v9184 = vunpack.c.l.b16 %v7068
        %v9185 = vunpack.c.h.b16 %v7068
        %v9186 = vunpack.c.l.b16 %v7069
        %v9187 = vunpack.c.h.b16 %v7069
        %v9188 = vunpack.c.l.b16 %v7070
        %v9189 = vunpack.c.h.b16 %v7070
        %v9190 = vunpack.c.l.b16 %v7071
        %v9191 = vunpack.c.h.b16 %v7071
        %v9192 = vunpack.c.l.b16 %v7072
        %v9193 = vunpack.c.h.b16 %v7072
        %v9194 = vunpack.c.l.b16 %v7073
        %v9195 = vunpack.c.h.b16 %v7073
        %v9196 = vunpack.c.l.b16 %v7074
        %v9197 = vunpack.c.h.b16 %v7074
        %v9198 = vunpack.c.l.b16 %v7075
        %v9199 = vunpack.c.h.b16 %v7075
        %v9200 = vunpack.c.l.b16 %v7076
        %v9201 = vunpack.c.h.b16 %v7076
        %v9202 = vunpack.c.l.b16 %v7077
        %v9203 = vunpack.c.h.b16 %v7077
        %v9204 = vunpack.c.l.b16 %v7078
        %v9205 = vunpack.c.h.b16 %v7078
        %v9206 = vunpack.c.l.b16 %v7079
        %v9207 = vunpack.c.h.b16 %v7079
        %v9208 = vunpack.c.l.b16 %v7080
        %v9209 = vunpack.c.h.b16 %v7080
        %v9210 = vunpack.c.l.b16 %v7081
        %v9211 = vunpack.c.h.b16 %v7081
        %v9212 = vunpack.c.l.b16 %v7082
        %v9213 = vunpack.c.h.b16 %v7082
        %v9214 = vunpack.c.l.b16 %v7083
        %v9215 = vunpack.c.h.b16 %v7083
        %v9216 = vunpack.c.l.b16 %v7084
        %v9217 = vunpack.c.h.b16 %v7084
        %v9218 = vunpack.c.l.b16 %v7085
        %v9219 = vunpack.c.h.b16 %v7085
        %v9220 = vunpack.c.l.b16 %v7086
        %v9221 = vunpack.c.h.b16 %v7086
        %v9222 = vunpack.c.l.b16 %v7087
        %v9223 = vunpack.c.h.b16 %v7087
        %v9224 = vunpack.c.l.b16 %v7088
        %v9225 = vunpack.c.h.b16 %v7088
        %v9226 = vunpack.c.l.b16 %v7089
        %v9227 = vunpack.c.h.b16 %v7089
        %v9228 = vunpack.c.l.b16 %v7090
        %v9229 = vunpack.c.h.b16 %v7090
        %v9230 = vunpack.c.l.b16 %v7091
        %v9231 = vunpack.c.h.b16 %v7091
        %v9232 = vunpack.c.l.b16 %v7092
        %v9233 = vunpack.c.h.b16 %v7092
        %v9234 = vunpack.c.l.b16 %v7093
        %v9235 = vunpack.c.h.b16 %v7093
        %v9236 = vunpack.c.l.b16 %v7094
        %v9237 = vunpack.c.h.b16 %v7094
        %v9238 = vunpack.c.l.b16 %v7095
        %v9239 = vunpack.c.h.b16 %v7095
        %v9240 = vunpack.c.l.b16 %v7096
        %v9241 = vunpack.c.h.b16 %v7096
        %v9242 = vunpack.c.l.b16 %v7097
        %v9243 = vunpack.c.h.b16 %v7097
        %v9244 = vunpack.c.l.b16 %v7098
        %v9245 = vunpack.c.h.b16 %v7098
        %v9246 = vunpack.c.l.b16 %v7099
        %v9247 = vunpack.c.h.b16 %v7099
        %v9248 = vunpack.c.l.b16 %v7100
        %v9249 = vunpack.c.h.b16 %v7100
        %v9250 = vunpack.c.l.b16 %v7101
        %v9251 = vunpack.c.h.b16 %v7101
        %v9252 = vunpack.c.l.b16 %v7102
        %v9253 = vunpack.c.h.b16 %v7102
        %v9254 = vunpack.c.l.b16 %v7103
        %v9255 = vunpack.c.h.b16 %v7103
        %v9256 = vunpack.c.l.b16 %v7104
        %v9257 = vunpack.c.h.b16 %v7104
        %v9258 = vunpack.c.l.b16 %v7105
        %v9259 = vunpack.c.h.b16 %v7105
        %v9260 = vunpack.c.l.b16 %v7106
        %v9261 = vunpack.c.h.b16 %v7106
        %v9262 = vunpack.c.l.b16 %v7107
        %v9263 = vunpack.c.h.b16 %v7107
        %v9264 = vunpack.c.l.b16 %v7108
        %v9265 = vunpack.c.h.b16 %v7108
        %v9266 = vunpack.c.l.b16 %v7109
        %v9267 = vunpack.c.h.b16 %v7109
        %v9268 = vunpack.c.l.b16 %v7110
        %v9269 = vunpack.c.h.b16 %v7110
        %v9270 = vunpack.c.l.b16 %v7111
        %v9271 = vunpack.c.h.b16 %v7111
        %v9272 = vunpack.c.l.b16 %v7112
        %v9273 = vunpack.c.h.b16 %v7112
        %v9274 = vunpack.c.l.b16 %v7113
        %v9275 = vunpack.c.h.b16 %v7113
        %v9276 = vunpack.c.l.b16 %v7114
        %v9277 = vunpack.c.h.b16 %v7114
        %v9278 = vunpack.c.l.b16 %v7115
        %v9279 = vunpack.c.h.b16 %v7115
        %v9280 = vunpack.c.l.b16 %v7116
        %v9281 = vunpack.c.h.b16 %v7116
        %v9282 = vunpack.c.l.b16 %v7117
        %v9283 = vunpack.c.h.b16 %v7117
        %v9284 = vunpack.c.l.b16 %v7118
        %v9285 = vunpack.c.h.b16 %v7118
        %v9286 = vunpack.c.l.b16 %v7119
        %v9287 = vunpack.c.h.b16 %v7119
        %v9288 = vunpack.c.l.b16 %v7120
        %v9289 = vunpack.c.h.b16 %v7120
        %v9290 = vunpack.c.l.b16 %v7121
        %v9291 = vunpack.c.h.b16 %v7121
        %v9292 = vunpack.c.l.b16 %v7122
        %v9293 = vunpack.c.h.b16 %v7122
        %v9294 = vunpack.c.l.b16 %v7123
        %v9295 = vunpack.c.h.b16 %v7123
        %v9296 = vunpack.c.l.b16 %v7124
        %v9297 = vunpack.c.h.b16 %v7124
        %v9298 = vunpack.c.l.b16 %v7125
        %v9299 = vunpack.c.h.b16 %v7125
        %v9300 = vunpack.c.l.b16 %v7126
        %v9301 = vunpack.c.h.b16 %v7126
        %v9302 = vunpack.c.l.b16 %v7127
        %v9303 = vunpack.c.h.b16 %v7127
        %v9304 = vunpack.c.l.b16 %v7128
        %v9305 = vunpack.c.h.b16 %v7128
        %v9306 = vunpack.c.l.b16 %v7129
        %v9307 = vunpack.c.h.b16 %v7129
        %v9308 = vunpack.c.l.b16 %v7130
        %v9309 = vunpack.c.h.b16 %v7130
        %v9310 = vunpack.c.l.b16 %v7131
        %v9311 = vunpack.c.h.b16 %v7131
        %v9312 = vunpack.c.l.b16 %v7132
        %v9313 = vunpack.c.h.b16 %v7132
        %v9314 = vunpack.c.l.b16 %v7133
        %v9315 = vunpack.c.h.b16 %v7133
        %v9316 = vunpack.c.l.b16 %v7134
        %v9317 = vunpack.c.h.b16 %v7134
        %v9318 = vunpack.c.l.b16 %v7135
        %v9319 = vunpack.c.h.b16 %v7135
        %v9320 = vunpack.c.l.b16 %v7136
        %v9321 = vunpack.c.h.b16 %v7136
        %v9322 = vunpack.c.l.b16 %v7137
        %v9323 = vunpack.c.h.b16 %v7137
        %v9324 = vunpack.c.l.b16 %v7138
        %v9325 = vunpack.c.h.b16 %v7138
        %v9326 = vunpack.c.l.b16 %v7139
        %v9327 = vunpack.c.h.b16 %v7139
        %v9328 = vunpack.c.l.b16 %v7140
        %v9329 = vunpack.c.h.b16 %v7140
        %v9330 = vunpack.c.l.b16 %v7141
        %v9331 = vunpack.c.h.b16 %v7141
        %v9332 = vunpack.c.l.b16 %v7142
        %v9333 = vunpack.c.h.b16 %v7142
        %v9334 = vunpack.c.l.b16 %v7143
        %v9335 = vunpack.c.h.b16 %v7143
        %v9336 = vunpack.c.l.b16 %v7144
        %v9337 = vunpack.c.h.b16 %v7144
        %v9338 = vunpack.c.l.b16 %v7145
        %v9339 = vunpack.c.h.b16 %v7145
        %v9340 = vunpack.c.l.b16 %v7146
        %v9341 = vunpack.c.h.b16 %v7146
        %v9342 = vunpack.c.l.b16 %v7147
        %v9343 = vunpack.c.h.b16 %v7147
        %v9344 = vunpack.c.l.b16 %v7148
        %v9345 = vunpack.c.h.b16 %v7148
        %v9346 = vunpack.c.l.b16 %v7149
        %v9347 = vunpack.c.h.b16 %v7149
        %v9348 = vunpack.c.l.b16 %v7150
        %v9349 = vunpack.c.h.b16 %v7150
        %v9350 = vunpack.c.l.b16 %v7151
        %v9351 = vunpack.c.h.b16 %v7151
        %v9352 = vunpack.c.l.b16 %v7152
        %v9353 = vunpack.c.h.b16 %v7152
        %v9354 = vunpack.c.l.b16 %v7153
        %v9355 = vunpack.c.h.b16 %v7153
        %v9356 = vunpack.c.l.b16 %v7154
        %v9357 = vunpack.c.h.b16 %v7154
        %v9358 = vunpack.c.l.b16 %v7155
        %v9359 = vunpack.c.h.b16 %v7155
        %v9360 = vunpack.c.l.b16 %v7156
        %v9361 = vunpack.c.h.b16 %v7156
        %v9362 = vunpack.c.l.b16 %v7157
        %v9363 = vunpack.c.h.b16 %v7157
        %v9364 = vunpack.c.l.b16 %v7158
        %v9365 = vunpack.c.h.b16 %v7158
        %v9366 = vunpack.c.l.b16 %v7159
        %v9367 = vunpack.c.h.b16 %v7159
        %v9368 = vunpack.c.l.b16 %v7160
        %v9369 = vunpack.c.h.b16 %v7160
        %v9370 = vunpack.c.l.b16 %v7161
        %v9371 = vunpack.c.h.b16 %v7161
        %v9372 = vunpack.c.l.b16 %v7162
        %v9373 = vunpack.c.h.b16 %v7162
        %v9374 = vunpack.c.l.b16 %v7163
        %v9375 = vunpack.c.h.b16 %v7163
        %v9376 = vunpack.c.l.b16 %v7164
        %v9377 = vunpack.c.h.b16 %v7164
        %v9378 = vunpack.c.l.b16 %v7165
        %v9379 = vunpack.c.h.b16 %v7165
        %v9380 = vunpack.c.l.b16 %v7166
        %v9381 = vunpack.c.h.b16 %v7166
        %v9382 = vunpack.c.l.b16 %v7167
        %v9383 = vunpack.c.h.b16 %v7167
        %v9384 = vunpack.c.l.b16 %v7168
        %v9385 = vunpack.c.h.b16 %v7168
        %v9386 = vunpack.c.l.b16 %v7169
        %v9387 = vunpack.c.h.b16 %v7169
        %v9388 = vunpack.c.l.b16 %v7170
        %v9389 = vunpack.c.h.b16 %v7170
        %v9390 = vunpack.c.l.b16 %v7171
        %v9391 = vunpack.c.h.b16 %v7171
        %v9392 = vunpack.c.l.b16 %v7172
        %v9393 = vunpack.c.h.b16 %v7172
        %v9394 = vunpack.c.l.b16 %v7173
        %v9395 = vunpack.c.h.b16 %v7173
        %v9396 = vpack.c.b16 %v9142, %v9140
        %v9397 = vpack.c.b16 %v9143, %v9141
        %v9398 = vpack.c.b16 %v9146, %v9144
        %v9399 = vpack.c.b16 %v9147, %v9145
        %v9400 = vpack.c.b16 %v9150, %v9148
        %v9401 = vpack.c.b16 %v9151, %v9149
        %v9402 = vpack.c.b16 %v9154, %v9152
        %v9403 = vpack.c.b16 %v9155, %v9153
        %v9404 = vpack.c.b16 %v9158, %v9156
        %v9405 = vpack.c.b16 %v9159, %v9157
        %v9406 = vpack.c.b16 %v9162, %v9160
        %v9407 = vpack.c.b16 %v9163, %v9161
        %v9408 = vpack.c.b16 %v9166, %v9164
        %v9409 = vpack.c.b16 %v9167, %v9165
        %v9410 = vpack.c.b16 %v9170, %v9168
        %v9411 = vpack.c.b16 %v9171, %v9169
        %v9412 = vpack.c.b16 %v9174, %v9172
        %v9413 = vpack.c.b16 %v9175, %v9173
        %v9414 = vpack.c.b16 %v9178, %v9176
        %v9415 = vpack.c.b16 %v9179, %v9177
        %v9416 = vpack.c.b16 %v9182, %v9180
        %v9417 = vpack.c.b16 %v9183, %v9181
        %v9418 = vpack.c.b16 %v9186, %v9184
        %v9419 = vpack.c.b16 %v9187, %v9185
        %v9420 = vpack.c.b16 %v9190, %v9188
        %v9421 = vpack.c.b16 %v9191, %v9189
        %v9422 = vpack.c.b16 %v9194, %v9192
        %v9423 = vpack.c.b16 %v9195, %v9193
        %v9424 = vpack.c.b16 %v9198, %v9196
        %v9425 = vpack.c.b16 %v9199, %v9197
        %v9426 = vpack.c.b16 %v9202, %v9200
        %v9427 = vpack.c.b16 %v9203, %v9201
        %v9428 = vpack.c.b16 %v9206, %v9204
        %v9429 = vpack.c.b16 %v9207, %v9205
        %v9430 = vpack.c.b16 %v9210, %v9208
        %v9431 = vpack.c.b16 %v9211, %v9209
        %v9432 = vpack.c.b16 %v9214, %v9212
        %v9433 = vpack.c.b16 %v9215, %v9213
        %v9434 = vpack.c.b16 %v9218, %v9216
        %v9435 = vpack.c.b16 %v9219, %v9217
        %v9436 = vpack.c.b16 %v9222, %v9220
        %v9437 = vpack.c.b16 %v9223, %v9221
        %v9438 = vpack.c.b16 %v9226, %v9224
        %v9439 = vpack.c.b16 %v9227, %v9225
        %v9440 = vpack.c.b16 %v9230, %v9228
        %v9441 = vpack.c.b16 %v9231, %v9229
        %v9442 = vpack.c.b16 %v9234, %v9232
        %v9443 = vpack.c.b16 %v9235, %v9233
        %v9444 = vpack.c.b16 %v9238, %v9236
        %v9445 = vpack.c.b16 %v9239, %v9237
        %v9446 = vpack.c.b16 %v9242, %v9240
        %v9447 = vpack.c.b16 %v9243, %v9241
        %v9448 = vpack.c.b16 %v9246, %v9244
        %v9449 = vpack.c.b16 %v9247, %v9245
        %v9450 = vpack.c.b16 %v9250, %v9248
        %v9451 = vpack.c.b16 %v9251, %v9249
        %v9452 = vpack.c.b16 %v9254, %v9252
        %v9453 = vpack.c.b16 %v9255, %v9253
        %v9454 = vpack.c.b16 %v9258, %v9256
        %v9455 = vpack.c.b16 %v9259, %v9257
        %v9456 = vpack.c.b16 %v9262, %v9260
        %v9457 = vpack.c.b16 %v9263, %v9261
        %v9458 = vpack.c.b16 %v9266, %v9264
        %v9459 = vpack.c.b16 %v9267, %v9265
        %v9460 = vpack.c.b16 %v9270, %v9268
        %v9461 = vpack.c.b16 %v9271, %v9269
        %v9462 = vpack.c.b16 %v9274, %v9272
        %v9463 = vpack.c.b16 %v9275, %v9273
        %v9464 = vpack.c.b16 %v9278, %v9276
        %v9465 = vpack.c.b16 %v9279, %v9277
        %v9466 = vpack.c.b16 %v9282, %v9280
        %v9467 = vpack.c.b16 %v9283, %v9281
        %v9468 = vpack.c.b16 %v9286, %v9284
        %v9469 = vpack.c.b16 %v9287, %v9285
        %v9470 = vpack.c.b16 %v9290, %v9288
        %v9471 = vpack.c.b16 %v9291, %v9289
        %v9472 = vpack.c.b16 %v9294, %v9292
        %v9473 = vpack.c.b16 %v9295, %v9293
        %v9474 = vpack.c.b16 %v9298, %v9296
        %v9475 = vpack.c.b16 %v9299, %v9297
        %v9476 = vpack.c.b16 %v9302, %v9300
        %v9477 = vpack.c.b16 %v9303, %v9301
        %v9478 = vpack.c.b16 %v9306, %v9304
        %v9479 = vpack.c.b16 %v9307, %v9305
        %v9480 = vpack.c.b16 %v9310, %v9308
        %v9481 = vpack.c.b16 %v9311, %v9309
        %v9482 = vpack.c.b16 %v9314, %v9312
        %v9483 = vpack.c.b16 %v9315, %v9313
        %v9484 = vpack.c.b16 %v9318, %v9316
        %v9485 = vpack.c.b16 %v9319, %v9317
        %v9486 = vpack.c.b16 %v9322, %v9320
        %v9487 = vpack.c.b16 %v9323, %v9321
        %v9488 = vpack.c.b16 %v9326, %v9324
        %v9489 = vpack.c.b16 %v9327, %v9325
        %v9490 = vpack.c.b16 %v9330, %v9328
        %v9491 = vpack.c.b16 %v9331, %v9329
        %v9492 = vpack.c.b16 %v9334, %v9332
        %v9493 = vpack.c.b16 %v9335, %v9333
        %v9494 = vpack.c.b16 %v9338, %v9336
        %v9495 = vpack.c.b16 %v9339, %v9337
        %v9496 = vpack.c.b16 %v9342, %v9340
        %v9497 = vpack.c.b16 %v9343, %v9341
        %v9498 = vpack.c.b16 %v9346, %v9344
        %v9499 = vpack.c.b16 %v9347, %v9345
        %v9500 = vpack.c.b16 %v9350, %v9348
        %v9501 = vpack.c.b16 %v9351, %v9349
        %v9502 = vpack.c.b16 %v9354, %v9352
        %v9503 = vpack.c.b16 %v9355, %v9353
        %v9504 = vpack.c.b16 %v9358, %v9356
        %v9505 = vpack.c.b16 %v9359, %v9357
        %v9506 = vpack.c.b16 %v9362, %v9360
        %v9507 = vpack.c.b16 %v9363, %v9361
        %v9508 = vpack.c.b16 %v9366, %v9364
        %v9509 = vpack.c.b16 %v9367, %v9365
        %v9510 = vpack.c.b16 %v9370, %v9368
        %v9511 = vpack.c.b16 %v9371, %v9369
        %v9512 = vpack.c.b16 %v9374, %v9372
        %v9513 = vpack.c.b16 %v9375, %v9373
        %v9514 = vpack.c.b16 %v9378, %v9376
        %v9515 = vpack.c.b16 %v9379, %v9377
        %v9516 = vpack.c.b16 %v9382, %v9380
        %v9517 = vpack.c.b16 %v9383, %v9381
        %v9518 = vpack.c.b16 %v9386, %v9384
        %v9519 = vpack.c.b16 %v9387, %v9385
        %v9520 = vpack.c.b16 %v9390, %v9388
        %v9521 = vpack.c.b16 %v9391, %v9389
        %v9522 = vpack.c.b16 %v9394, %v9392
        %v9523 = vpack.c.b16 %v9395, %v9393
        %9652 = vmatprep.subr.bf16.mxu0 %v9397
        %9653 = vmatpush1.bf16.msra.mxu0 %v9396
        %9654 = vmatprep.subr.bf16.mxu0 %v9399
        %9655 = vmatpush1.bf16.msra.mxu0 %v9398
        %9656 = vmatprep.subr.bf16.mxu0 %v9401
        %9657 = vmatpush1.bf16.msra.mxu0 %v9400
        %9658 = vmatprep.subr.bf16.mxu0 %v9403
        %9659 = vmatpush1.bf16.msra.mxu0 %v9402
        %9660 = vmatprep.subr.bf16.mxu0 %v9405
        %9661 = vmatpush1.bf16.msra.mxu0 %v9404
        %9662 = vmatprep.subr.bf16.mxu0 %v9407
        %9663 = vmatpush1.bf16.msra.mxu0 %v9406
        %9664 = vmatprep.subr.bf16.mxu0 %v9409
        %9665 = vmatpush1.bf16.msra.mxu0 %v9408
        %9666 = vmatprep.subr.bf16.mxu0 %v9411
        %9667 = vmatpush1.bf16.msra.mxu0 %v9410
        %9668 = vmatprep.subr.bf16.mxu0 %v9413
        %9669 = vmatpush1.bf16.msra.mxu0 %v9412
        %9670 = vmatprep.subr.bf16.mxu0 %v9415
        %9671 = vmatpush1.bf16.msra.mxu0 %v9414
        %9672 = vmatprep.subr.bf16.mxu0 %v9417
        %9673 = vmatpush1.bf16.msra.mxu0 %v9416
        %9674 = vmatprep.subr.bf16.mxu0 %v9419
        %9675 = vmatpush1.bf16.msra.mxu0 %v9418
        %9676 = vmatprep.subr.bf16.mxu0 %v9421
        %9677 = vmatpush1.bf16.msra.mxu0 %v9420
        %9678 = vmatprep.subr.bf16.mxu0 %v9423
        %9679 = vmatpush1.bf16.msra.mxu0 %v9422
        %9680 = vmatprep.subr.bf16.mxu0 %v9425
        %9681 = vmatpush1.bf16.msra.mxu0 %v9424
        %9682 = vmatprep.subr.bf16.mxu0 %v9427
        %9683 = vmatpush1.bf16.msra.mxu0 %v9426
        %9684 = vmatprep.mubr.bf16.mxu0 %v8994
        %9685 = vmatmul.mubr.bf16.gmra.mrb[0].mxu0 %v8993
        %v9686 = vpop.f32.mrb[0].mxu0
        %v9687 = vadd.f32 %v9005, %v9686
        %v9688 = vpop.f32.mrb[0].mxu0
        %v9689 = vadd.f32 %v9009, %v9688
        %v9690 = vpop.f32.mrb[0].mxu0
        %v9691 = vpop.f32.mrb[0].mxu0
        %9692 = vdwg.mxu0
        %9693 = vmatprep.subr.bf16.mxu0 %v9429
        %9694 = vmatpush1.bf16.msra.mxu0 %v9428
        %9695 = vmatprep.subr.bf16.mxu0 %v9431
        %9696 = vmatpush1.bf16.msra.mxu0 %v9430
        %9697 = vmatprep.subr.bf16.mxu0 %v9433
        %9698 = vmatpush1.bf16.msra.mxu0 %v9432
        %9699 = vmatprep.subr.bf16.mxu0 %v9435
        %9700 = vmatpush1.bf16.msra.mxu0 %v9434
        %9701 = vmatprep.subr.bf16.mxu0 %v9437
        %9702 = vmatpush1.bf16.msra.mxu0 %v9436
        %9703 = vmatprep.subr.bf16.mxu0 %v9439
        %9704 = vmatpush1.bf16.msra.mxu0 %v9438
        %9705 = vmatprep.subr.bf16.mxu0 %v9441
        %9706 = vmatpush1.bf16.msra.mxu0 %v9440
        %9707 = vmatprep.subr.bf16.mxu0 %v9443
        %9708 = vmatpush1.bf16.msra.mxu0 %v9442
        %9709 = vmatprep.subr.bf16.mxu0 %v9445
        %9710 = vmatpush1.bf16.msra.mxu0 %v9444
        %9711 = vmatprep.subr.bf16.mxu0 %v9447
        %9712 = vmatpush1.bf16.msra.mxu0 %v9446
        %9713 = vmatprep.subr.bf16.mxu0 %v9449
        %9714 = vmatpush1.bf16.msra.mxu0 %v9448
        %9715 = vmatprep.subr.bf16.mxu0 %v9451
        %9716 = vmatpush1.bf16.msra.mxu0 %v9450
        %9717 = vmatprep.subr.bf16.mxu0 %v9453
        %9718 = vmatpush1.bf16.msra.mxu0 %v9452
        %9719 = vmatprep.subr.bf16.mxu0 %v9455
        %9720 = vmatpush1.bf16.msra.mxu0 %v9454
        %9721 = vmatprep.subr.bf16.mxu0 %v9457
        %9722 = vmatpush1.bf16.msra.mxu0 %v9456
        %9723 = vmatprep.subr.bf16.mxu0 %v9459
        %9724 = vmatpush1.bf16.msra.mxu0 %v9458
        %9725 = vmatprep.mubr.bf16.mxu0 %v8996
        %9726 = vmatmul.mubr.bf16.gmra.mrb[0].mxu0 %v8995
        %v9727 = vpop.f32.mrb[0].mxu0
        %v9728 = vadd.f32 %v9687, %v9727
        %v9729 = vpop.f32.mrb[0].mxu0
        %v9730 = vadd.f32 %v9689, %v9729
        %v9731 = vpop.f32.mrb[0].mxu0
        %v9732 = vpop.f32.mrb[0].mxu0
        %9733 = vdwg.mxu0
        %9734 = vmatprep.subr.bf16.mxu0 %v9461
        %9735 = vmatpush1.bf16.msra.mxu0 %v9460
        %9736 = vmatprep.subr.bf16.mxu0 %v9463
        %9737 = vmatpush1.bf16.msra.mxu0 %v9462
        %9738 = vmatprep.subr.bf16.mxu0 %v9465
        %9739 = vmatpush1.bf16.msra.mxu0 %v9464
        %9740 = vmatprep.subr.bf16.mxu0 %v9467
        %9741 = vmatpush1.bf16.msra.mxu0 %v9466
        %9742 = vmatprep.subr.bf16.mxu0 %v9469
        %9743 = vmatpush1.bf16.msra.mxu0 %v9468
        %9744 = vmatprep.subr.bf16.mxu0 %v9471
        %9745 = vmatpush1.bf16.msra.mxu0 %v9470
        %9746 = vmatprep.subr.bf16.mxu0 %v9473
        %9747 = vmatpush1.bf16.msra.mxu0 %v9472
        %9748 = vmatprep.subr.bf16.mxu0 %v9475
        %9749 = vmatpush1.bf16.msra.mxu0 %v9474
        %9750 = vmatprep.subr.bf16.mxu0 %v9477
        %9751 = vmatpush1.bf16.msra.mxu0 %v9476
        %9752 = vmatprep.subr.bf16.mxu0 %v9479
        %9753 = vmatpush1.bf16.msra.mxu0 %v9478
        %9754 = vmatprep.subr.bf16.mxu0 %v9481
        %9755 = vmatpush1.bf16.msra.mxu0 %v9480
        %9756 = vmatprep.subr.bf16.mxu0 %v9483
        %9757 = vmatpush1.bf16.msra.mxu0 %v9482
        %9758 = vmatprep.subr.bf16.mxu0 %v9485
        %9759 = vmatpush1.bf16.msra.mxu0 %v9484
        %9760 = vmatprep.subr.bf16.mxu0 %v9487
        %9761 = vmatpush1.bf16.msra.mxu0 %v9486
        %9762 = vmatprep.subr.bf16.mxu0 %v9489
        %9763 = vmatpush1.bf16.msra.mxu0 %v9488
        %9764 = vmatprep.subr.bf16.mxu0 %v9491
        %9765 = vmatpush1.bf16.msra.mxu0 %v9490
        %9766 = vmatprep.mubr.bf16.mxu0 %v8998
        %9767 = vmatmul.mubr.bf16.gmra.mrb[0].mxu0 %v8997
        %v9768 = vpop.f32.mrb[0].mxu0
        %v9769 = vadd.f32 %v9728, %v9768
        %v9770 = vpop.f32.mrb[0].mxu0
        %v9771 = vadd.f32 %v9730, %v9770
        %v9772 = vpop.f32.mrb[0].mxu0
        %v9773 = vpop.f32.mrb[0].mxu0
        %9774 = vdwg.mxu0
        %9775 = vmatprep.subr.bf16.mxu0 %v9493
        %9776 = vmatpush1.bf16.msra.mxu0 %v9492
        %9777 = vmatprep.subr.bf16.mxu0 %v9495
        %9778 = vmatpush1.bf16.msra.mxu0 %v9494
        %9779 = vmatprep.subr.bf16.mxu0 %v9497
        %9780 = vmatpush1.bf16.msra.mxu0 %v9496
        %9781 = vmatprep.subr.bf16.mxu0 %v9499
        %9782 = vmatpush1.bf16.msra.mxu0 %v9498
        %9783 = vmatprep.subr.bf16.mxu0 %v9501
        %9784 = vmatpush1.bf16.msra.mxu0 %v9500
        %9785 = vmatprep.subr.bf16.mxu0 %v9503
        %9786 = vmatpush1.bf16.msra.mxu0 %v9502
        %9787 = vmatprep.subr.bf16.mxu0 %v9505
        %9788 = vmatpush1.bf16.msra.mxu0 %v9504
        %9789 = vmatprep.subr.bf16.mxu0 %v9507
        %9790 = vmatpush1.bf16.msra.mxu0 %v9506
        %9791 = vmatprep.subr.bf16.mxu0 %v9509
        %9792 = vmatpush1.bf16.msra.mxu0 %v9508
        %9793 = vmatprep.subr.bf16.mxu0 %v9511
        %9794 = vmatpush1.bf16.msra.mxu0 %v9510
        %9795 = vmatprep.subr.bf16.mxu0 %v9513
        %9796 = vmatpush1.bf16.msra.mxu0 %v9512
        %9797 = vmatprep.subr.bf16.mxu0 %v9515
        %9798 = vmatpush1.bf16.msra.mxu0 %v9514
        %9799 = vmatprep.subr.bf16.mxu0 %v9517
        %9800 = vmatpush1.bf16.msra.mxu0 %v9516
        %9801 = vmatprep.subr.bf16.mxu0 %v9519
        %9802 = vmatpush1.bf16.msra.mxu0 %v9518
        %9803 = vmatprep.subr.bf16.mxu0 %v9521
        %9804 = vmatpush1.bf16.msra.mxu0 %v9520
        %9805 = vmatprep.subr.bf16.mxu0 %v9523
        %9806 = vmatpush1.bf16.msra.mxu0 %v9522
        %9807 = vmatprep.mubr.bf16.mxu0 %v9000
        %9808 = vmatmul.mubr.bf16.gmra.mrb[0].mxu0 %v8999
        %v9809 = vpop.f32.mrb[0].mxu0
        %v9810 = vadd.f32 %v9769, %v9809
        %v9811 = vpop.f32.mrb[0].mxu0
        %v9812 = vadd.f32 %v9771, %v9811
        %v9813 = vpop.f32.mrb[0].mxu0
        %v9814 = vpop.f32.mrb[0].mxu0
        %9815 = vdwg.mxu0
        %v9816 = vadd.f32 %v7219, %v9810
        %v9817 = vadd.f32 %v7220, %v9812
        %v9819 = vrot.slane %v9816, 7
        %9820 = vrot.lane.b32.xlu0 %v9819, 96
        %v9821 = vpop.permute.xlu0 %9820
        %v9823 = vrot.slane %v9816, 6
        %9824 = vrot.lane.b32.xlu0 %v9823, 64
        %v9825 = vpop.permute.xlu0 %9824
        %v9827 = vrot.slane %v9816, 5
        %9828 = vrot.lane.b32.xlu0 %v9827, 32
        %v9829 = vpop.permute.xlu0 %9828
        %v9832 = vrot.slane %v9817, 4
        %v9834 = vrot.slane %v9817, 3
        %9835 = vrot.lane.b32.xlu0 %v9834, 96
        %v9836 = vpop.permute.xlu0 %9835
        %v9838 = vrot.slane %v9817, 2
        %9839 = vrot.lane.b32.xlu0 %v9838, 64
        %v9840 = vpop.permute.xlu0 %9839
        %v9842 = vrot.slane %v9817, 1
        %9843 = vrot.lane.b32.xlu0 %v9842, 32
        %v9844 = vpop.permute.xlu0 %9843
        %v9846 = vrot.slane %v9816, 1
        %9848 = vrot.lane.b32.xlu0 %v9816, 96
        %v9849 = vpop.permute.xlu0 %9848
        %9851 = vrot.lane.b32.xlu0 %v9819, 64
        %v9852 = vpop.permute.xlu0 %9851
        %9854 = vrot.lane.b32.xlu0 %v9823, 32
        %v9855 = vpop.permute.xlu0 %9854
        %v9857 = vrot.slane %v9817, 5
        %9859 = vrot.lane.b32.xlu0 %v9832, 96
        %v9860 = vpop.permute.xlu0 %9859
        %9862 = vrot.lane.b32.xlu0 %v9834, 64
        %v9863 = vpop.permute.xlu0 %9862
        %9865 = vrot.lane.b32.xlu0 %v9838, 32
        %v9866 = vpop.permute.xlu0 %9865
        %v9868 = vsel %vm3939, %v9816, %v9821
        %v9869 = vsel %vm4201, %v9868, %v9825
        %vm9870 = vcmask 1042432
        %v9871 = vsel %vm9870, %v9869, %v9829
        %v9872 = vsel %vm1782, %v9871, %v9832
        %vm9873 = vcmask 1044480
        %v9874 = vsel %vm9873, %v9872, %v9836
        %vm9875 = vcmask 1045504
        %v9876 = vsel %vm9875, %v9874, %v9840
        %vm9877 = vcmask 1046528
        %v9878 = vsel %vm9877, %v9876, %v9844
        %v9879 = vsel %vm3939, %v9846, %v9849
        %v9880 = vsel %vm4201, %v9879, %v9852
        %v9881 = vsel %vm9870, %v9880, %v9855
        %v9882 = vsel %vm1782, %v9881, %v9857
        %v9883 = vsel %vm9873, %v9882, %v9860
        %v9884 = vsel %vm9875, %v9883, %v9863
        %v9885 = vsel %vm9877, %v9884, %v9866
        %9886 = vst.msk [vmem:[#allocation2] sm:$0xff] %vm1489, %v9878
        %9887 = vst.msk [vmem:[#allocation2 + $0x8] sm:$0xff] %vm1489, %v9885
        %p9888 = scmp.eq.s32.totalorder %s66, 1
        // Predicated region
        $region201: #{rowcol_transformer_forward.1} parent=111 // pred_check
          %p9889 = pneg %p9888
        $region202: #{rowcol_transformer_forward.1} parent=111 // pred_check_branch
          %9891 = sbr.rel (%p9889) target = $region204
        $region203: #{rowcol_transformer_forward.1} parent=111 // pred_region
          %9892 = vst.msk [vmem:[#allocation36] sm:$0xff] %vm1489, %v9878
          %9893 = vst.msk [vmem:[#allocation36 + $0x8] sm:$0xff] %vm1489, %v9885
        $region204: #{rowcol_transformer_forward.1} parent=111 // pred_fallthru
          _
        // Predicated region
        $region205: #{rowcol_transformer_forward.1} parent=111 // pred_check
          %p9894 = pneg %p672
        $region206: #{rowcol_transformer_forward.1} parent=111 // pred_check_branch
          %9896 = sbr.rel (%p9894) target = $region208
        $region207: #{rowcol_transformer_forward.1} parent=111 // pred_region
          %s9898 = ssub.s32 256, 256
          %9899 = vsyncadd [#allocation5], %s9898
          %s9900 = sshll.u32 [#allocation36], 4
          %s9901 = int_to_ptr.vmem [resolvable:$true] %s9900
          %9906 = dma.vmem_to_hbm [thread:$0]  %s9901, 256, %s23, [#allocation5], 128, 128, 8
        $region208: #{rowcol_transformer_forward.1} parent=111 // pred_fallthru
          _
        // Predicated region
        $region209: #{rowcol_transformer_forward.1} parent=111 // pred_check
          %p9907 = pneg %p672
        $region210: #{rowcol_transformer_forward.1} parent=111 // pred_check_branch
          %9909 = sbr.rel (%p9907) target = $region212
        $region211: #{rowcol_transformer_forward.1} parent=111 // pred_region
          %9910 = dma.done [#allocation5], 256
        $region212: #{rowcol_transformer_forward.1} parent=111 // pred_fallthru
          _
      $region112: #{rowcol_transformer_forward.1} parent=5 // pred_fallthru
        _
      %p9911 = scmp.le.s32.totalorder 2, %s61
      // Predicated region
      $region213: #{rowcol_transformer_forward.1} parent=5 // pred_check
        %p9912 = pneg %p9911
      $region214: #{rowcol_transformer_forward.1} parent=5 // pred_check_branch
        %9914 = sbr.rel (%p9912) target = $region216
      $region215: #{rowcol_transformer_forward.1} parent=5 // pred_region
        %s9915 = ssub.s32 %s61, 2
      $region216: #{rowcol_transformer_forward.1} parent=5 // pred_fallthru
        _
    $region6: #{rowcol_transformer_forward.1} parent=1 // loop_footer
      %s65 = sadd.s32 1, %s61
    $region7: #{rowcol_transformer_forward.1} parent=1 // loop_footer_branch
      %60 = sbr.rel target = $region3
    $region8: #{rowcol_transformer_forward.1} parent=1 // loop_exit
      _
    %9916 = vsyncpa [#allocation4], 1
    %s9917 = scalar_lea.sflag [#allocation4], 1
    %9918 = vsyncpa %s9917, 1
    %9919 = vsyncpa [#allocation7], 1
    %s9920 = scalar_lea.sflag [#allocation7], 1
    %9921 = vsyncpa %s9920, 1
    %9922 = vsyncpa [#allocation10], 1
    %s9923 = scalar_lea.sflag [#allocation10], 1
    %9924 = vsyncpa %s9923, 1
    %9925 = vsyncpa [#allocation13], 1
    %s9926 = scalar_lea.sflag [#allocation13], 1
    %9927 = vsyncpa %s9926, 1
    %9928 = vsyncpa [#allocation16], 1
    %s9929 = scalar_lea.sflag [#allocation16], 1
    %9930 = vsyncpa %s9929, 1
    %9931 = vsyncpa [#allocation19], 1
    %s9932 = scalar_lea.sflag [#allocation19], 1
    %9933 = vsyncpa %s9932, 1
    %9934 = vsyncpa [#allocation22], 1
    %s9935 = scalar_lea.sflag [#allocation22], 1
    %9936 = vsyncpa %s9935, 1
    %9937 = vsyncpa [#allocation25], 1
    %s9938 = scalar_lea.sflag [#allocation25], 1
    %9939 = vsyncpa %s9938, 1
    %9940 = vsyncpa [#allocation28], 1
    %s9941 = scalar_lea.sflag [#allocation28], 1
    %9942 = vsyncpa %s9941, 1
    %9943 = vsyncpa [#allocation31], 1
    %s9944 = scalar_lea.sflag [#allocation31], 1
    %9945 = vsyncpa %s9944, 1
    %9946 = vsyncpa [#allocation34], 1
    %s9947 = scalar_lea.sflag [#allocation34], 1
    %9948 = vsyncpa %s9947, 1
    %9949 = vsyncpa [#allocation5], 1
    %s9950 = scalar_lea.sflag [#allocation5], 1
    %9951 = vsyncpa %s9950, 1

</llo_original>
